<compile_context>
chip_gen: v7x
topology: tpu7x:2x2x1
jax: 0.10.0
libtpu: 0.0.40
codegen_flags: <defaults>
</compile_context>

<pallas_src>
import functools

import jax
import jax.numpy as jnp
from jax import lax
from jax.experimental import pallas as pl
from jax.experimental.pallas import tpu as pltpu

EPS = 1e-10
_HP = lax.Precision.HIGHEST  # true-f32 MXU passes (0/1 matrices + f32 data)


def _raymarch_kernel(lt_ref, expand_ref, sel_ref, z_ref, dens_ref, rgb_ref,
                     *out_refs, eps, include_depth):
    """One ray tile: rays on sublanes, points on lanes.

    lt_ref     : (P, P)    lt[q, p]      = 1 iff q < p   (exclusive prefix sum)
    expand_ref : (P, 3P)   expand[p, j]  = 1 iff j // 3 == p
    sel_ref    : (3P, 3)   sel[j, c]     = 1 iff j %  3 == c
    z_ref      : (1, P)    linspace(near, far, P)
    dens_ref   : (T, P)    rgb_ref: (T, 3P) with lane j = 3*p + c
    out_refs   : rgb (T,3), opacity (T,1)[, depth (T,1)]
    """
    rgb_out_ref, opac_out_ref = out_refs[0], out_refs[1]

    d = dens_ref[...].astype(jnp.float32)        # (T, P)
    rgbs = rgb_ref[...].astype(jnp.float32)      # (T, 3P)
    P = d.shape[-1]

    x = (1.0 + eps) - d
    logx = jnp.log(x)                            # EUP

    # Exclusive prefix-sum over points (lane axis) on the MXU:
    #   cums[t, p] = sum_{q < p} logx[t, q]
    cums = jnp.dot(logx, lt_ref[...], precision=_HP,
                   preferred_element_type=jnp.float32)
    t = jnp.exp(cums)                            # exclusive transmittance (T, P)
    w = d * t                                    # weights (T, P)

    # rgb: expand weights to the (3p + c) lane layout, multiply, reduce per channel.
    w3 = jnp.dot(w, expand_ref[...], precision=_HP,
                 preferred_element_type=jnp.float32)           # (T, 3P)
    rgb_out_ref[...] = jnp.dot(w3 * rgbs, sel_ref[...], precision=_HP,
                               preferred_element_type=jnp.float32)  # (T, 3)

    # opacity = 1 - prod_p (1 + eps - d_p) = 1 - t_excl[:, P-1] * x[:, P-1]
    opac_out_ref[...] = 1.0 - t[:, P - 1:P] * x[:, P - 1:P]

    if include_depth:
        out_refs[2][...] = jnp.sum(w * z_ref[...], axis=-1, keepdims=True)


def _pick_ray_tile(num_rays, num_pts, ray_tile):
    """Rays-per-tile: multiple of 8, even (>=2) step count, VMEM-bounded."""
    if num_rays <= 8:
        return num_rays
    steps = max(2, pl.cdiv(num_rays, max(8, int(ray_tile))))
    if steps % 2:
        steps += 1                      # even step count balances v7x's 2 TCs
    rt = pl.cdiv(pl.cdiv(num_rays, steps), 8) * 8
    # Keep one (dens + rgb) block copy under ~12 MiB so 2-deep pipelining fits
    # v7x's 64 MiB physical VMEM with headroom (lanes pad to 128 in VMEM).
    lane_pad = lambda n: pl.cdiv(n, 128) * 128
    per_row = 4 * (lane_pad(num_pts) + lane_pad(3 * num_pts))
    cap = max(8, ((12 << 20) // per_row) // 8 * 8)
    return max(8, min(rt, cap))


def ray_marcher(densities, rgb, *, near=0.1, far=6.0, include_depth=True,
                ray_tile=8192):
    """densities: (N,R,P,1), rgb: (N,R,P,3) ->
       (rgb (N,R,3), opacity (N,R,1)[, depth (N,R)])  -- all float32."""
    N, R, P, C = rgb.shape
    assert C == 3 and densities.shape == (N, R, P, 1)
    NR = N * R

    # Zero-copy reshapes of the native layouts (no HBM transpose pass).
    dens2 = densities.reshape(NR, P)               # (NR, P)
    rgb2 = rgb.reshape(NR, 3 * P)                  # (NR, 3P), lane j = 3p + c

    # Tiny constant 0/1 matrices + depth values (built on host, passed in so the
    # kernel needs no iota / integer div-mod).
    f32 = jnp.float32
    p_idx = jnp.arange(P)
    j_idx = jnp.arange(3 * P)
    lt = (p_idx[:, None] < p_idx[None, :]).astype(f32)                  # (P, P)
    expand = (j_idx[None, :] // 3 == p_idx[:, None]).astype(f32)        # (P, 3P)
    sel = (j_idx[:, None] % 3 == jnp.arange(3)[None, :]).astype(f32)    # (3P, 3)
    zvals = jnp.linspace(near, far, P, dtype=f32).reshape(1, P)

    rt = _pick_ray_tile(NR, P, ray_tile)
    grid = (pl.cdiv(NR, rt),)

    lane_pad = lambda n: pl.cdiv(n, 128) * 128
    blk_bytes = 4 * rt * (lane_pad(P) + lane_pad(3 * P) + 3 * 128)
    vmem_limit = int(min(48 << 20, max(32 << 20, 3 * blk_bytes)))

    kernel = functools.partial(_raymarch_kernel, eps=float(EPS),
                               include_depth=bool(include_depth))

    out_shape = [jax.ShapeDtypeStruct((NR, 3), f32),
                 jax.ShapeDtypeStruct((NR, 1), f32)]
    out_specs = [pl.BlockSpec((rt, 3), lambda i: (i, 0)),
                 pl.BlockSpec((rt, 1), lambda i: (i, 0))]
    if include_depth:
        out_shape.append(jax.ShapeDtypeStruct((NR, 1), f32))
        out_specs.append(pl.BlockSpec((rt, 1), lambda i: (i, 0)))

    in_specs = [
        pl.BlockSpec((P, P), lambda i: (0, 0)),
        pl.BlockSpec((P, 3 * P), lambda i: (0, 0)),
        pl.BlockSpec((3 * P, 3), lambda i: (0, 0)),
        pl.BlockSpec((1, P), lambda i: (0, 0)),
        pl.BlockSpec((rt, P), lambda i: (i, 0)),
        pl.BlockSpec((rt, 3 * P), lambda i: (i, 0)),
    ]

    outs = pl.pallas_call(
        kernel,
        out_shape=tuple(out_shape),
        grid_spec=pltpu.PrefetchScalarGridSpec(
            num_scalar_prefetch=0,
            grid=grid,
            in_specs=in_specs,
            out_specs=out_specs,
        ),
        compiler_params=pltpu.CompilerParams(
            dimension_semantics=("parallel",),
            vmem_limit_bytes=vmem_limit,
        ),
    )(lt, expand, sel, zvals, dens2, rgb2)

    rgb_calc = outs[0].reshape(N, R, 3)            # free reshapes, no transpose
    opacity = outs[1].reshape(N, R, 1)
    if include_depth:
        depth = outs[2].reshape(N, R)
        return rgb_calc, opacity, depth
    return rgb_calc, opacity


def ray_marcher_reference(densities, rgb, *, near=0.1, far=6.0):
    """Pure-JAX reference mirroring the PyTorch forward."""
    d = jnp.squeeze(densities, -1)
    N, R, P = d.shape
    trans = jnp.cumprod(1.0 + EPS - d, axis=-1)
    trans = jnp.concatenate([jnp.ones((N, R, 1), d.dtype), trans], axis=-1)[..., :P]
    w = d * trans
    rgb_calc = jnp.sum(w[..., None] * rgb, axis=-2)
    opacity = 1.0 - jnp.prod(1.0 - d, axis=-1, keepdims=True)
    dvals = jnp.linspace(near, far, P, dtype=jnp.float32)
    depth = jnp.sum(w * dvals[None, None, :], axis=-1)
    return rgb_calc, opacity, depth


if __name__ == "__main__":
    key = jax.random.PRNGKey(0)
    k1, k2 = jax.random.split(key)

    N, R, P = 2, 512, 16  # num_images, num_rays, num_pts  (NR = 1024 -> 2 grid steps)
    densities = jax.random.uniform(k1, (N, R, P, 1), dtype=jnp.float32)  # alphas in [0,1)
    rgb = jax.random.uniform(k2, (N, R, P, 3), dtype=jnp.float32)

    rgb_calc, opacity, depth = jax.block_until_ready(
        jax.jit(ray_marcher)(densities, rgb))

    ref_rgb, ref_op, ref_depth = ray_marcher_reference(densities, rgb)
    assert rgb_calc.shape == (N, R, 3)
    assert opacity.shape == (N, R, 1)
    assert depth.shape == (N, R)
    assert jnp.allclose(rgb_calc, ref_rgb, atol=3e-5, rtol=1e-4)
    assert jnp.allclose(opacity, ref_op, atol=3e-5, rtol=1e-4)
    assert jnp.allclose(depth, ref_depth, atol=2e-4, rtol=1e-4)

    # Exercise the include_depth=False specialization as well.
    rgb_nd, op_nd = jax.block_until_ready(
        jax.jit(functools.partial(ray_marcher, include_depth=False))(densities, rgb))
    assert jnp.allclose(rgb_nd, ref_rgb, atol=3e-5, rtol=1e-4)
    assert jnp.allclose(op_nd, ref_op, atol=3e-5, rtol=1e-4)

    print("KERNEL_OK")
</pallas_src>

<mosaic_0001>
module attributes {stable_mosaic.version = 11 : i64} {
  func.func @_raymarch_kernel(%arg0: i32, %arg1: memref<16x16xf32, #tpu.memory_space<vmem>>, %arg2: memref<16x48xf32, #tpu.memory_space<vmem>>, %arg3: memref<48x3xf32, #tpu.memory_space<vmem>>, %arg4: memref<1x16xf32, #tpu.memory_space<vmem>>, %arg5: memref<512x16xf32, #tpu.memory_space<vmem>>, %arg6: memref<512x48xf32, #tpu.memory_space<vmem>>, %arg7: memref<512x3xf32, #tpu.memory_space<vmem>>, %arg8: memref<512x1xf32, #tpu.memory_space<vmem>>, %arg9: memref<512x1xf32, #tpu.memory_space<vmem>>) attributes {dimension_semantics = [#tpu.dimension_semantics<parallel>], iteration_bounds = array<i64: 2>, scalar_prefetch = 0 : i64, scratch_operands = 0 : i64, tpu.core_type = #tpu.core_type<tc>, window_params = [{pipeline_mode = #tpu.pipeline_mode<synchronous>, transform_indices = @transform_0, window_bounds = array<i64: 16, 16>}, {pipeline_mode = #tpu.pipeline_mode<synchronous>, transform_indices = @transform_1, window_bounds = array<i64: 16, 48>}, {pipeline_mode = #tpu.pipeline_mode<synchronous>, transform_indices = @transform_2, window_bounds = array<i64: 48, 3>}, {pipeline_mode = #tpu.pipeline_mode<synchronous>, transform_indices = @transform_3, window_bounds = array<i64: 1, 16>}, {transform_indices = @transform_4, window_bounds = array<i64: 512, 16>}, {transform_indices = @transform_5, window_bounds = array<i64: 512, 48>}, {transform_indices = @transform_6, window_bounds = array<i64: 512, 3>}, {transform_indices = @transform_7, window_bounds = array<i64: 512, 1>}, {transform_indices = @transform_8, window_bounds = array<i64: 512, 1>}]} {
    %c0 = arith.constant 0 : index
    %c0_0 = arith.constant 0 : index
    %0 = vector.load %arg5[%c0, %c0_0] : memref<512x16xf32, #tpu.memory_space<vmem>>, vector<512x16xf32>
    %c0_1 = arith.constant 0 : index
    %c0_2 = arith.constant 0 : index
    %1 = vector.load %arg6[%c0_1, %c0_2] : memref<512x48xf32, #tpu.memory_space<vmem>>, vector<512x48xf32>
    %cst = arith.constant 1.000000e+00 : f32
    %2 = vector.broadcast %cst : f32 to vector<512x16xf32>
    %3 = arith.subf %2, %0 : vector<512x16xf32>
    %4 = math.log %3 : vector<512x16xf32>
    %c0_3 = arith.constant 0 : index
    %c0_4 = arith.constant 0 : index
    %5 = vector.load %arg1[%c0_3, %c0_4] : memref<16x16xf32, #tpu.memory_space<vmem>>, vector<16x16xf32>
    %cst_5 = arith.constant dense<0.000000e+00> : vector<512x16xf32>
    %6 = tpu.matmul %4, %5, %cst_5 {dimension_numbers = #tpu.dot_dimension_numbers<[1], [0], [0], [1], [0, 0, 1, 1], [], []>, precision = #tpu.contract_precision<fp32>} : vector<512x16xf32>, vector<16x16xf32>, vector<512x16xf32> -> vector<512x16xf32>
    %7 = math.exp %6 : vector<512x16xf32>
    %8 = arith.mulf %0, %7 : vector<512x16xf32>
    %c0_6 = arith.constant 0 : index
    %c0_7 = arith.constant 0 : index
    %9 = vector.load %arg2[%c0_6, %c0_7] : memref<16x48xf32, #tpu.memory_space<vmem>>, vector<16x48xf32>
    %cst_8 = arith.constant dense<0.000000e+00> : vector<512x48xf32>
    %10 = tpu.matmul %8, %9, %cst_8 {dimension_numbers = #tpu.dot_dimension_numbers<[1], [0], [0], [1], [0, 0, 1, 1], [], []>, precision = #tpu.contract_precision<fp32>} : vector<512x16xf32>, vector<16x48xf32>, vector<512x48xf32> -> vector<512x48xf32>
    %11 = arith.mulf %10, %1 : vector<512x48xf32>
    %c0_9 = arith.constant 0 : index
    %c0_10 = arith.constant 0 : index
    %12 = vector.load %arg3[%c0_9, %c0_10] : memref<48x3xf32, #tpu.memory_space<vmem>>, vector<48x3xf32>
    %cst_11 = arith.constant dense<0.000000e+00> : vector<512x3xf32>
    %13 = tpu.matmul %11, %12, %cst_11 {dimension_numbers = #tpu.dot_dimension_numbers<[1], [0], [0], [1], [0, 0, 1, 1], [], []>, precision = #tpu.contract_precision<fp32>} : vector<512x48xf32>, vector<48x3xf32>, vector<512x3xf32> -> vector<512x3xf32>
    %c0_12 = arith.constant 0 : index
    %c0_13 = arith.constant 0 : index
    %14 = vector.load %arg7[%c0_12, %c0_13] : memref<512x3xf32, #tpu.memory_space<vmem>>, vector<512x3xf32>
    tpu.vector_store %arg7[%c0_12, %c0_13], %13 {strides = array<i32>} : memref<512x3xf32, #tpu.memory_space<vmem>>, vector<512x3xf32>,
    %15 = vector.extract_strided_slice %7 {offsets = [0, 15], sizes = [512, 1], strides = [1, 1]} : vector<512x16xf32> to vector<512x1xf32>
    %16 = vector.extract_strided_slice %3 {offsets = [0, 15], sizes = [512, 1], strides = [1, 1]} : vector<512x16xf32> to vector<512x1xf32>
    %17 = arith.mulf %15, %16 : vector<512x1xf32>
    %cst_14 = arith.constant 1.000000e+00 : f32
    %18 = vector.broadcast %cst_14 : f32 to vector<512x1xf32>
    %19 = arith.subf %18, %17 : vector<512x1xf32>
    %c0_15 = arith.constant 0 : index
    %c0_16 = arith.constant 0 : index
    %20 = vector.load %arg8[%c0_15, %c0_16] : memref<512x1xf32, #tpu.memory_space<vmem>>, vector<512x1xf32>
    tpu.vector_store %arg8[%c0_15, %c0_16], %19 {strides = array<i32>} : memref<512x1xf32, #tpu.memory_space<vmem>>, vector<512x1xf32>,
    %c0_17 = arith.constant 0 : index
    %c0_18 = arith.constant 0 : index
    %21 = vector.load %arg4[%c0_17, %c0_18] : memref<1x16xf32, #tpu.memory_space<vmem>>, vector<1x16xf32>
    %22 = vector.broadcast %21 : vector<1x16xf32> to vector<512x16xf32>
    %23 = arith.mulf %8, %22 : vector<512x16xf32>
    %cst_19 = arith.constant dense<0.000000e+00> : vector<512xf32>
    %24 = vector.multi_reduction <add>, %23, %cst_19 [1] : vector<512x16xf32> to vector<512xf32>
    %25 = vector.shape_cast %24 : vector<512xf32> to vector<512x1xf32>
    %c0_20 = arith.constant 0 : index
    %c0_21 = arith.constant 0 : index
    %26 = vector.load %arg9[%c0_20, %c0_21] : memref<512x1xf32, #tpu.memory_space<vmem>>, vector<512x1xf32>
    tpu.vector_store %arg9[%c0_20, %c0_21], %25 {strides = array<i32>} : memref<512x1xf32, #tpu.memory_space<vmem>>, vector<512x1xf32>,
    return
  }
  func.func @transform_0(%arg0: i32) -> (i32, i32) {
    %c0_i32 = arith.constant 0 : i32
    %c0_i32_0 = arith.constant 0 : i32
    %c0_i32_1 = arith.constant 0 : i32
    return %c0_i32, %c0_i32_0 : i32, i32
  }
  func.func @transform_1(%arg0: i32) -> (i32, i32) {
    %c0_i32 = arith.constant 0 : i32
    %c0_i32_0 = arith.constant 0 : i32
    %c0_i32_1 = arith.constant 0 : i32
    return %c0_i32, %c0_i32_0 : i32, i32
  }
  func.func @transform_2(%arg0: i32) -> (i32, i32) {
    %c0_i32 = arith.constant 0 : i32
    %c0_i32_0 = arith.constant 0 : i32
    %c0_i32_1 = arith.constant 0 : i32
    return %c0_i32, %c0_i32_0 : i32, i32
  }
  func.func @transform_3(%arg0: i32) -> (i32, i32) {
    %c0_i32 = arith.constant 0 : i32
    %c0_i32_0 = arith.constant 0 : i32
    %c0_i32_1 = arith.constant 0 : i32
    return %c0_i32, %c0_i32_0 : i32, i32
  }
  func.func @transform_4(%arg0: i32) -> (i32, i32) {
    %c0_i32 = arith.constant 0 : i32
    %c0_i32_0 = arith.constant 0 : i32
    return %arg0, %c0_i32 : i32, i32
  }
  func.func @transform_5(%arg0: i32) -> (i32, i32) {
    %c0_i32 = arith.constant 0 : i32
    %c0_i32_0 = arith.constant 0 : i32
    return %arg0, %c0_i32 : i32, i32
  }
  func.func @transform_6(%arg0: i32) -> (i32, i32) {
    %c0_i32 = arith.constant 0 : i32
    %c0_i32_0 = arith.constant 0 : i32
    return %arg0, %c0_i32 : i32, i32
  }
  func.func @transform_7(%arg0: i32) -> (i32, i32) {
    %c0_i32 = arith.constant 0 : i32
    %c0_i32_0 = arith.constant 0 : i32
    return %arg0, %c0_i32 : i32, i32
  }
  func.func @transform_8(%arg0: i32) -> (i32, i32) {
    %c0_i32 = arith.constant 0 : i32
    %c0_i32_0 = arith.constant 0 : i32
    return %arg0, %c0_i32 : i32, i32
  }
}

</mosaic_0001>

<llo_original>
// kernel: ray_marcher.1
$region0: #{ray_marcher.1}
  #allocation0 [shape = 'u32[]', space=smem, size = 0x4, offset = 0x4, fixed_abs, tag = 'smem constant byte address 0x4 - core index']
  #allocation1 [shape = 'u32[144,128]{1,0:T(1,128)}', space=vmem, size = 0x12000, scoped, tag = 'internal scratch']
  %s0 = inlined_call_operand.vmem [shape: f32[16,16], index: 0, kind: input, shape index: {}]
  %s1 = inlined_call_operand.vmem [shape: f32[16,48], index: 1, kind: input, shape index: {}]
  %s2 = inlined_call_operand.vmem [shape: f32[48,3], index: 2, kind: input, shape index: {}]
  %s3 = inlined_call_operand.vmem [shape: f32[1,16], index: 3, kind: input, shape index: {}]
  %s4 = inlined_call_operand.vmem [shape: f32[1024,16], index: 4, kind: input, shape index: {}]
  %s5 = inlined_call_operand.vmem [shape: f32[1024,48], index: 5, kind: input, shape index: {}]
  %s6 = inlined_call_operand.vmem [shape: f32[1024,3], index: 6, kind: output, shape index: {0}]
  %s7 = inlined_call_operand.vmem [shape: f32[1024,1], index: 7, kind: output, shape index: {1}]
  %s8 = inlined_call_operand.vmem [shape: f32[1024,1], index: 8, kind: output, shape index: {2}]
  %9 = xla_tuple %s6, %s7, %s8
  %s10 = sld [smem:[#allocation0]]
  $region73: #{ray_marcher.1} parent=0
    _
  %s12 = ssub.s32 1, %s10
  %s13 = scalar_select 0, %s12, %s10
  loop: start=0, step=1, limit=4
  $region2: #{ray_marcher.1} parent=0 // loop_pre_header
    _
  $region3: #{ray_marcher.1} parent=0 // loop_header
    %s15 = sphi 0, %s19
    %p16 = scmp.ge.s32.totalorder %s15, 4
    %s23 = sphi 0, %s23
    %s25 = sphi 0, %s23
    %s26 = sphi 0, %s25
    %s40 = sphi 0, %s26
    %s44 = sphi 0, %s44
    %s46 = sphi 0, %s44
    %s47 = sphi 0, %s46
    %s61 = sphi 0, %s47
    %s65 = sphi 0, %s65
    %s67 = sphi 0, %s65
    %s68 = sphi 0, %s67
    %s82 = sphi 0, %s68
    %s86 = sphi 0, %s86
    %s88 = sphi 0, %s86
    %s89 = sphi 0, %s88
    %s103 = sphi 0, %s89
    %s109 = sphi 0, %s111
    %s112 = sphi 0, %s109
    %s113 = sphi 0, %s112
    %s129 = sphi 0, %s113
    %s135 = sphi 0, %s137
    %s138 = sphi 0, %s135
    %s139 = sphi 0, %s138
    %s155 = sphi 0, %s139
    %s161 = sphi 0, %s163
    %s164 = sphi 0, %s161
    %s165 = sphi 0, %s164
    %s181 = sphi 0, %s165
    %s187 = sphi 0, %s189
    %s190 = sphi 0, %s187
    %s191 = sphi 0, %s190
    %s207 = sphi 0, %s191
    %s213 = sphi 0, %s215
    %s216 = sphi 0, %s213
    %s217 = sphi 0, %s216
    %s233 = sphi 0, %s217
  $region4: #{ray_marcher.1} parent=0 // loop_header_branch
    %18 = sbr.rel (%p16) target = $region8
  $region5: #{ray_marcher.1} parent=0 // loop_body
    %s20 = ssub.s32 %s15, 1
    %s21 = ssub.s32 %s15, 2
    %s22 = sadd.s32 %s15, 1
    %s24 = sadd.s32 %s23, 1
    %p27 = scmp.eq.s32.totalorder %s15, 1
    %p28 = scmp.ne.s32.totalorder %s23, %s25
    %p29 = scmp.eq.s32.totalorder %s15, 0
    %p30 = por %p28, %p29
    %p31 = scmp.ne.s32.totalorder %s23, %s25
    %p32 = scmp.eq.s32.totalorder %s20, 1
    %p33 = por %p31, %p32
    %p34 = scmp.ne.s32.totalorder %s25, %s26
    %p35 = scmp.eq.s32.totalorder %s20, 0
    %p36 = por %p34, %p35
    %p37 = scmp.ne.s32.totalorder %s25, %s26
    %p38 = scmp.eq.s32.totalorder %s21, 1
    %p39 = por %p37, %p38
    %p41 = scmp.ne.s32.totalorder %s26, %s40
    %p42 = scmp.eq.s32.totalorder %s21, 0
    %p43 = por %p41, %p42
    %s45 = sadd.s32 %s44, 1
    %p48 = scmp.eq.s32.totalorder %s15, 1
    %p49 = scmp.ne.s32.totalorder %s44, %s46
    %p50 = scmp.eq.s32.totalorder %s15, 0
    %p51 = por %p49, %p50
    %p52 = scmp.ne.s32.totalorder %s44, %s46
    %p53 = scmp.eq.s32.totalorder %s20, 1
    %p54 = por %p52, %p53
    %p55 = scmp.ne.s32.totalorder %s46, %s47
    %p56 = scmp.eq.s32.totalorder %s20, 0
    %p57 = por %p55, %p56
    %p58 = scmp.ne.s32.totalorder %s46, %s47
    %p59 = scmp.eq.s32.totalorder %s21, 1
    %p60 = por %p58, %p59
    %p62 = scmp.ne.s32.totalorder %s47, %s61
    %p63 = scmp.eq.s32.totalorder %s21, 0
    %p64 = por %p62, %p63
    %s66 = sadd.s32 %s65, 1
    %p69 = scmp.eq.s32.totalorder %s15, 1
    %p70 = scmp.ne.s32.totalorder %s65, %s67
    %p71 = scmp.eq.s32.totalorder %s15, 0
    %p72 = por %p70, %p71
    %p73 = scmp.ne.s32.totalorder %s65, %s67
    %p74 = scmp.eq.s32.totalorder %s20, 1
    %p75 = por %p73, %p74
    %p76 = scmp.ne.s32.totalorder %s67, %s68
    %p77 = scmp.eq.s32.totalorder %s20, 0
    %p78 = por %p76, %p77
    %p79 = scmp.ne.s32.totalorder %s67, %s68
    %p80 = scmp.eq.s32.totalorder %s21, 1
    %p81 = por %p79, %p80
    %p83 = scmp.ne.s32.totalorder %s68, %s82
    %p84 = scmp.eq.s32.totalorder %s21, 0
    %p85 = por %p83, %p84
    %s87 = sadd.s32 %s86, 1
    %p90 = scmp.eq.s32.totalorder %s15, 1
    %p91 = scmp.ne.s32.totalorder %s86, %s88
    %p92 = scmp.eq.s32.totalorder %s15, 0
    %p93 = por %p91, %p92
    %p94 = scmp.ne.s32.totalorder %s86, %s88
    %p95 = scmp.eq.s32.totalorder %s20, 1
    %p96 = por %p94, %p95
    %p97 = scmp.ne.s32.totalorder %s88, %s89
    %p98 = scmp.eq.s32.totalorder %s20, 0
    %p99 = por %p97, %p98
    %p100 = scmp.ne.s32.totalorder %s88, %s89
    %p101 = scmp.eq.s32.totalorder %s21, 1
    %p102 = por %p100, %p101
    %p104 = scmp.ne.s32.totalorder %s89, %s103
    %p105 = scmp.eq.s32.totalorder %s21, 0
    %p106 = por %p104, %p105
    %s107 = ssub.s32 %s15, %s22
    %p108 = scmp.eq.s32.totalorder %s107, 0
    %s110 = sadd.s32 %s109, 1
    %s111 = scalar_select %p108, %s109, %s110
    %p114 = pneg %p108
    %p115 = scmp.eq.s32.totalorder %s15, 1
    %p116 = por %p114, %p115
    %p117 = scmp.ne.s32.totalorder %s109, %s112
    %p118 = scmp.eq.s32.totalorder %s15, 0
    %p119 = por %p117, %p118
    %p120 = scmp.ne.s32.totalorder %s109, %s112
    %p121 = scmp.eq.s32.totalorder %s20, 1
    %p122 = por %p120, %p121
    %p123 = scmp.ne.s32.totalorder %s112, %s113
    %p124 = scmp.eq.s32.totalorder %s20, 0
    %p125 = por %p123, %p124
    %p126 = scmp.ne.s32.totalorder %s112, %s113
    %p127 = scmp.eq.s32.totalorder %s21, 1
    %p128 = por %p126, %p127
    %p130 = scmp.ne.s32.totalorder %s113, %s129
    %p131 = scmp.eq.s32.totalorder %s21, 0
    %p132 = por %p130, %p131
    %s133 = ssub.s32 %s15, %s22
    %p134 = scmp.eq.s32.totalorder %s133, 0
    %s136 = sadd.s32 %s135, 1
    %s137 = scalar_select %p134, %s135, %s136
    %p140 = pneg %p134
    %p141 = scmp.eq.s32.totalorder %s15, 1
    %p142 = por %p140, %p141
    %p143 = scmp.ne.s32.totalorder %s135, %s138
    %p144 = scmp.eq.s32.totalorder %s15, 0
    %p145 = por %p143, %p144
    %p146 = scmp.ne.s32.totalorder %s135, %s138
    %p147 = scmp.eq.s32.totalorder %s20, 1
    %p148 = por %p146, %p147
    %p149 = scmp.ne.s32.totalorder %s138, %s139
    %p150 = scmp.eq.s32.totalorder %s20, 0
    %p151 = por %p149, %p150
    %p152 = scmp.ne.s32.totalorder %s138, %s139
    %p153 = scmp.eq.s32.totalorder %s21, 1
    %p154 = por %p152, %p153
    %p156 = scmp.ne.s32.totalorder %s139, %s155
    %p157 = scmp.eq.s32.totalorder %s21, 0
    %p158 = por %p156, %p157
    %s159 = ssub.s32 %s15, %s22
    %p160 = scmp.eq.s32.totalorder %s159, 0
    %s162 = sadd.s32 %s161, 1
    %s163 = scalar_select %p160, %s161, %s162
    %p166 = pneg %p160
    %p167 = scmp.eq.s32.totalorder %s15, 1
    %p168 = por %p166, %p167
    %p169 = scmp.ne.s32.totalorder %s161, %s164
    %p170 = scmp.eq.s32.totalorder %s15, 0
    %p171 = por %p169, %p170
    %p172 = scmp.ne.s32.totalorder %s161, %s164
    %p173 = scmp.eq.s32.totalorder %s20, 1
    %p174 = por %p172, %p173
    %p175 = scmp.ne.s32.totalorder %s164, %s165
    %p176 = scmp.eq.s32.totalorder %s20, 0
    %p177 = por %p175, %p176
    %p178 = scmp.ne.s32.totalorder %s164, %s165
    %p179 = scmp.eq.s32.totalorder %s21, 1
    %p180 = por %p178, %p179
    %p182 = scmp.ne.s32.totalorder %s165, %s181
    %p183 = scmp.eq.s32.totalorder %s21, 0
    %p184 = por %p182, %p183
    %s185 = ssub.s32 %s15, %s22
    %p186 = scmp.eq.s32.totalorder %s185, 0
    %s188 = sadd.s32 %s187, 1
    %s189 = scalar_select %p186, %s187, %s188
    %p192 = pneg %p186
    %p193 = scmp.eq.s32.totalorder %s15, 1
    %p194 = por %p192, %p193
    %p195 = scmp.ne.s32.totalorder %s187, %s190
    %p196 = scmp.eq.s32.totalorder %s15, 0
    %p197 = por %p195, %p196
    %p198 = scmp.ne.s32.totalorder %s187, %s190
    %p199 = scmp.eq.s32.totalorder %s20, 1
    %p200 = por %p198, %p199
    %p201 = scmp.ne.s32.totalorder %s190, %s191
    %p202 = scmp.eq.s32.totalorder %s20, 0
    %p203 = por %p201, %p202
    %p204 = scmp.ne.s32.totalorder %s190, %s191
    %p205 = scmp.eq.s32.totalorder %s21, 1
    %p206 = por %p204, %p205
    %p208 = scmp.ne.s32.totalorder %s191, %s207
    %p209 = scmp.eq.s32.totalorder %s21, 0
    %p210 = por %p208, %p209
    %s211 = ssub.s32 %s15, %s22
    %p212 = scmp.eq.s32.totalorder %s211, 0
    %s214 = sadd.s32 %s213, 1
    %s215 = scalar_select %p212, %s213, %s214
    %p218 = pneg %p212
    %p219 = scmp.eq.s32.totalorder %s15, 1
    %p220 = por %p218, %p219
    %p221 = scmp.ne.s32.totalorder %s213, %s216
    %p222 = scmp.eq.s32.totalorder %s15, 0
    %p223 = por %p221, %p222
    %p224 = scmp.ne.s32.totalorder %s213, %s216
    %p225 = scmp.eq.s32.totalorder %s20, 1
    %p226 = por %p224, %p225
    %p227 = scmp.ne.s32.totalorder %s216, %s217
    %p228 = scmp.eq.s32.totalorder %s20, 0
    %p229 = por %p227, %p228
    %p230 = scmp.ne.s32.totalorder %s216, %s217
    %p231 = scmp.eq.s32.totalorder %s21, 1
    %p232 = por %p230, %p231
    %p234 = scmp.ne.s32.totalorder %s217, %s233
    %p235 = scmp.eq.s32.totalorder %s21, 0
    %p236 = por %p234, %p235
    %p237 = scmp.le.s32.totalorder 1, %s15
    %p238 = scmp.lt.s32.totalorder %s15, 3
    %p239 = pnand %p237, %p238
    %p240 = pneg %p239
    // Predicated region
    $region9: #{ray_marcher.1} parent=5 // pred_check
      _
    $region10: #{ray_marcher.1} parent=5 // pred_check_branch
      %242 = sbr.rel (%p239) target = $region12
    $region11: #{ray_marcher.1} parent=5 // pred_region
      %s243 = ssub.s32 %s15, 1
      // Predicated region
      $region13: #{ray_marcher.1} parent=11 // pred_check
        %p244 = pneg %p36
      $region14: #{ray_marcher.1} parent=11 // pred_check_branch
        %246 = sbr.rel (%p244) target = $region16
      $region15: #{ray_marcher.1} parent=11 // pred_region
        _
      $region16: #{ray_marcher.1} parent=11 // pred_fallthru
        _
      // Predicated region
      $region17: #{ray_marcher.1} parent=11 // pred_check
        %p247 = pneg %p57
      $region18: #{ray_marcher.1} parent=11 // pred_check_branch
        %249 = sbr.rel (%p247) target = $region20
      $region19: #{ray_marcher.1} parent=11 // pred_region
        _
      $region20: #{ray_marcher.1} parent=11 // pred_fallthru
        _
      // Predicated region
      $region21: #{ray_marcher.1} parent=11 // pred_check
        %p250 = pneg %p78
      $region22: #{ray_marcher.1} parent=11 // pred_check_branch
        %252 = sbr.rel (%p250) target = $region24
      $region23: #{ray_marcher.1} parent=11 // pred_region
        _
      $region24: #{ray_marcher.1} parent=11 // pred_fallthru
        _
      // Predicated region
      $region25: #{ray_marcher.1} parent=11 // pred_check
        %p253 = pneg %p99
      $region26: #{ray_marcher.1} parent=11 // pred_check_branch
        %255 = sbr.rel (%p253) target = $region28
      $region27: #{ray_marcher.1} parent=11 // pred_region
        _
      $region28: #{ray_marcher.1} parent=11 // pred_fallthru
        _
    $region12: #{ray_marcher.1} parent=5 // pred_fallthru
      _
    %p256 = scmp.lt.s32.totalorder %s15, 2
    // Predicated region
    $region29: #{ray_marcher.1} parent=5 // pred_check
      %p257 = pneg %p256
    $region30: #{ray_marcher.1} parent=5 // pred_check_branch
      %259 = sbr.rel (%p257) target = $region32
    $region31: #{ray_marcher.1} parent=5 // pred_region
      // Predicated region
      $region33: #{ray_marcher.1} parent=31 // pred_check
        %p260 = pneg %p119
      $region34: #{ray_marcher.1} parent=31 // pred_check_branch
        %262 = sbr.rel (%p260) target = $region36
      $region35: #{ray_marcher.1} parent=31 // pred_region
        %s263 = smul.u32 64, %s15
        %p264 = scmp.lt.s32.totalorder %s263, 127
        %s265 = scalar_select %p264, %s263, 127
        %s266 = smul.addr %s265, 8
        %s267 = scalar_lea.vmem %s4, %s266
        %s268 = smul.u32 64, %s15
      $region36: #{ray_marcher.1} parent=31 // pred_fallthru
        _
      // Predicated region
      $region37: #{ray_marcher.1} parent=31 // pred_check
        %p269 = pneg %p145
      $region38: #{ray_marcher.1} parent=31 // pred_check_branch
        %271 = sbr.rel (%p269) target = $region40
      $region39: #{ray_marcher.1} parent=31 // pred_region
        %s272 = smul.u32 64, %s15
        %p273 = scmp.lt.s32.totalorder %s272, 127
        %s274 = scalar_select %p273, %s272, 127
        %s275 = smul.addr %s274, 8
        %s276 = scalar_lea.vmem %s5, %s275
        %s277 = smul.u32 64, %s15
      $region40: #{ray_marcher.1} parent=31 // pred_fallthru
        _
    $region32: #{ray_marcher.1} parent=5 // pred_fallthru
      _
    %p278 = scmp.le.s32.totalorder 1, %s15
    %p279 = scmp.lt.s32.totalorder %s15, 3
    %p280 = pnand %p278, %p279
    %p281 = pneg %p280
    // Predicated region
    $region41: #{ray_marcher.1} parent=5 // pred_check
      _
    $region42: #{ray_marcher.1} parent=5 // pred_check_branch
      %283 = sbr.rel (%p280) target = $region44
    $region43: #{ray_marcher.1} parent=5 // pred_region
      %s284 = ssub.s32 %s15, 1
      %p285 = pneg %p36
      %p286 = pneg %p33
      %p287 = pneg %p57
      %p288 = pneg %p54
      %p289 = pneg %p78
      %p290 = pneg %p75
      %p291 = pneg %p99
      %p292 = pneg %p96
      %s293 = smul.u32 64, %s20
      %p294 = scmp.lt.s32.totalorder %s293, 127
      %s295 = scalar_select %p294, %s293, 127
      %s296 = smul.addr %s295, 8
      %s297 = scalar_lea.vmem %s4, %s296
      %p298 = pneg %p125
      %p299 = pneg %p122
      %s300 = smul.u32 64, %s20
      %p301 = scmp.lt.s32.totalorder %s300, 127
      %s302 = scalar_select %p301, %s300, 127
      %s303 = smul.addr %s302, 8
      %s304 = scalar_lea.vmem %s5, %s303
      %p305 = pneg %p151
      %p306 = pneg %p148
      %p307 = pneg %p177
      %p308 = pneg %p174
      %s309 = smul.u32 64, %s20
      %p310 = scmp.lt.s32.totalorder %s309, 127
      %s311 = scalar_select %p310, %s309, 127
      %s312 = smul.addr %s311, 8
      %s313 = scalar_lea.vmem %s6, %s312
      %p314 = pneg %p203
      %p315 = pneg %p200
      %s316 = smul.u32 64, %s20
      %p317 = scmp.lt.s32.totalorder %s316, 127
      %s318 = scalar_select %p317, %s316, 127
      %s319 = smul.addr %s318, 8
      %s320 = scalar_lea.vmem %s7, %s319
      %p321 = pneg %p229
      %p322 = pneg %p226
      %s323 = smul.u32 64, %s20
      %p324 = scmp.lt.s32.totalorder %s323, 127
      %s325 = scalar_select %p324, %s323, 127
      %s326 = smul.addr %s325, 8
      %s327 = scalar_lea.vmem %s8, %s326
      %s328 = smul.u32 64, %s20
      %p329 = scmp.lt.s32.totalorder %s328, 127
      %s330 = scalar_select %p329, %s328, 127
      %s331 = smul.addr %s330, 8
      %s332 = scalar_lea.vmem %s4, %s331
      %s333 = smul.u32 64, %s20
      %s334 = smul.u32 64, %s20
      %p335 = scmp.lt.s32.totalorder %s334, 127
      %s336 = scalar_select %p335, %s334, 127
      %s337 = smul.addr %s336, 8
      %s338 = scalar_lea.vmem %s5, %s337
      %s339 = smul.u32 64, %s20
      %s340 = smul.u32 64, %s20
      %p341 = scmp.lt.s32.totalorder %s340, 127
      %s342 = scalar_select %p341, %s340, 127
      %s343 = smul.addr %s342, 8
      %s344 = scalar_lea.vmem %s6, %s343
      %s345 = smul.u32 64, %s20
      %s346 = smul.u32 64, %s20
      %p347 = scmp.lt.s32.totalorder %s346, 127
      %s348 = scalar_select %p347, %s346, 127
      %s349 = smul.addr %s348, 8
      %s350 = scalar_lea.vmem %s7, %s349
      %s351 = smul.u32 64, %s20
      %s352 = smul.u32 64, %s20
      %p353 = scmp.lt.s32.totalorder %s352, 127
      %s354 = scalar_select %p353, %s352, 127
      %s355 = smul.addr %s354, 8
      %s356 = scalar_lea.vmem %s8, %s355
      %s357 = smul.u32 64, %s20
      %v358 = vld [vmem:[%s332] sm:$0xff]
      %v359 = vld [vmem:[%s332 + $0x8] sm:$0xff]
      %v360 = vld [vmem:[%s332 + $0x10] sm:$0xff]
      %v361 = vld [vmem:[%s332 + $0x18] sm:$0xff]
      %v362 = vld [vmem:[%s332 + $0x20] sm:$0xff]
      %v363 = vld [vmem:[%s332 + $0x28] sm:$0xff]
      %v364 = vld [vmem:[%s332 + $0x30] sm:$0xff]
      %v365 = vld [vmem:[%s332 + $0x38] sm:$0xff]
      %v366 = vld [vmem:[%s332 + $0x40] sm:$0xff]
      %v367 = vld [vmem:[%s332 + $0x48] sm:$0xff]
      %v368 = vld [vmem:[%s332 + $0x50] sm:$0xff]
      %v369 = vld [vmem:[%s332 + $0x58] sm:$0xff]
      %v370 = vld [vmem:[%s332 + $0x60] sm:$0xff]
      %v371 = vld [vmem:[%s332 + $0x68] sm:$0xff]
      %v372 = vld [vmem:[%s332 + $0x70] sm:$0xff]
      %v373 = vld [vmem:[%s332 + $0x78] sm:$0xff]
      %v374 = vld [vmem:[%s332 + $0x80] sm:$0xff]
      %v375 = vld [vmem:[%s332 + $0x88] sm:$0xff]
      %v376 = vld [vmem:[%s332 + $0x90] sm:$0xff]
      %v377 = vld [vmem:[%s332 + $0x98] sm:$0xff]
      %v378 = vld [vmem:[%s332 + $0xa0] sm:$0xff]
      %v379 = vld [vmem:[%s332 + $0xa8] sm:$0xff]
      %v380 = vld [vmem:[%s332 + $0xb0] sm:$0xff]
      %v381 = vld [vmem:[%s332 + $0xb8] sm:$0xff]
      %v382 = vld [vmem:[%s332 + $0xc0] sm:$0xff]
      %v383 = vld [vmem:[%s332 + $0xc8] sm:$0xff]
      %v384 = vld [vmem:[%s332 + $0xd0] sm:$0xff]
      %v385 = vld [vmem:[%s332 + $0xd8] sm:$0xff]
      %v386 = vld [vmem:[%s332 + $0xe0] sm:$0xff]
      %v387 = vld [vmem:[%s332 + $0xe8] sm:$0xff]
      %v388 = vld [vmem:[%s332 + $0xf0] sm:$0xff]
      %v389 = vld [vmem:[%s332 + $0xf8] sm:$0xff]
      %v390 = vld [vmem:[%s332 + $0x100] sm:$0xff]
      %v391 = vld [vmem:[%s332 + $0x108] sm:$0xff]
      %v392 = vld [vmem:[%s332 + $0x110] sm:$0xff]
      %v393 = vld [vmem:[%s332 + $0x118] sm:$0xff]
      %v394 = vld [vmem:[%s332 + $0x120] sm:$0xff]
      %v395 = vld [vmem:[%s332 + $0x128] sm:$0xff]
      %v396 = vld [vmem:[%s332 + $0x130] sm:$0xff]
      %v397 = vld [vmem:[%s332 + $0x138] sm:$0xff]
      %v398 = vld [vmem:[%s332 + $0x140] sm:$0xff]
      %v399 = vld [vmem:[%s332 + $0x148] sm:$0xff]
      %v400 = vld [vmem:[%s332 + $0x150] sm:$0xff]
      %v401 = vld [vmem:[%s332 + $0x158] sm:$0xff]
      %v402 = vld [vmem:[%s332 + $0x160] sm:$0xff]
      %v403 = vld [vmem:[%s332 + $0x168] sm:$0xff]
      %v404 = vld [vmem:[%s332 + $0x170] sm:$0xff]
      %v405 = vld [vmem:[%s332 + $0x178] sm:$0xff]
      %v406 = vld [vmem:[%s332 + $0x180] sm:$0xff]
      %v407 = vld [vmem:[%s332 + $0x188] sm:$0xff]
      %v408 = vld [vmem:[%s332 + $0x190] sm:$0xff]
      %v409 = vld [vmem:[%s332 + $0x198] sm:$0xff]
      %v410 = vld [vmem:[%s332 + $0x1a0] sm:$0xff]
      %v411 = vld [vmem:[%s332 + $0x1a8] sm:$0xff]
      %v412 = vld [vmem:[%s332 + $0x1b0] sm:$0xff]
      %v413 = vld [vmem:[%s332 + $0x1b8] sm:$0xff]
      %v414 = vld [vmem:[%s332 + $0x1c0] sm:$0xff]
      %v415 = vld [vmem:[%s332 + $0x1c8] sm:$0xff]
      %v416 = vld [vmem:[%s332 + $0x1d0] sm:$0xff]
      %v417 = vld [vmem:[%s332 + $0x1d8] sm:$0xff]
      %v418 = vld [vmem:[%s332 + $0x1e0] sm:$0xff]
      %v419 = vld [vmem:[%s332 + $0x1e8] sm:$0xff]
      %v420 = vld [vmem:[%s332 + $0x1f0] sm:$0xff]
      %v421 = vld [vmem:[%s332 + $0x1f8] sm:$0xff]
      %v422 = vld [vmem:[%s338] sm:$0xff]
      %v423 = vld [vmem:[%s338 + $0x8] sm:$0xff]
      %v424 = vld [vmem:[%s338 + $0x10] sm:$0xff]
      %v425 = vld [vmem:[%s338 + $0x18] sm:$0xff]
      %v426 = vld [vmem:[%s338 + $0x20] sm:$0xff]
      %v427 = vld [vmem:[%s338 + $0x28] sm:$0xff]
      %v428 = vld [vmem:[%s338 + $0x30] sm:$0xff]
      %v429 = vld [vmem:[%s338 + $0x38] sm:$0xff]
      %v430 = vld [vmem:[%s338 + $0x40] sm:$0xff]
      %v431 = vld [vmem:[%s338 + $0x48] sm:$0xff]
      %v432 = vld [vmem:[%s338 + $0x50] sm:$0xff]
      %v433 = vld [vmem:[%s338 + $0x58] sm:$0xff]
      %v434 = vld [vmem:[%s338 + $0x60] sm:$0xff]
      %v435 = vld [vmem:[%s338 + $0x68] sm:$0xff]
      %v436 = vld [vmem:[%s338 + $0x70] sm:$0xff]
      %v437 = vld [vmem:[%s338 + $0x78] sm:$0xff]
      %v438 = vld [vmem:[%s338 + $0x80] sm:$0xff]
      %v439 = vld [vmem:[%s338 + $0x88] sm:$0xff]
      %v440 = vld [vmem:[%s338 + $0x90] sm:$0xff]
      %v441 = vld [vmem:[%s338 + $0x98] sm:$0xff]
      %v442 = vld [vmem:[%s338 + $0xa0] sm:$0xff]
      %v443 = vld [vmem:[%s338 + $0xa8] sm:$0xff]
      %v444 = vld [vmem:[%s338 + $0xb0] sm:$0xff]
      %v445 = vld [vmem:[%s338 + $0xb8] sm:$0xff]
      %v446 = vld [vmem:[%s338 + $0xc0] sm:$0xff]
      %v447 = vld [vmem:[%s338 + $0xc8] sm:$0xff]
      %v448 = vld [vmem:[%s338 + $0xd0] sm:$0xff]
      %v449 = vld [vmem:[%s338 + $0xd8] sm:$0xff]
      %v450 = vld [vmem:[%s338 + $0xe0] sm:$0xff]
      %v451 = vld [vmem:[%s338 + $0xe8] sm:$0xff]
      %v452 = vld [vmem:[%s338 + $0xf0] sm:$0xff]
      %v453 = vld [vmem:[%s338 + $0xf8] sm:$0xff]
      %v454 = vld [vmem:[%s338 + $0x100] sm:$0xff]
      %v455 = vld [vmem:[%s338 + $0x108] sm:$0xff]
      %v456 = vld [vmem:[%s338 + $0x110] sm:$0xff]
      %v457 = vld [vmem:[%s338 + $0x118] sm:$0xff]
      %v458 = vld [vmem:[%s338 + $0x120] sm:$0xff]
      %v459 = vld [vmem:[%s338 + $0x128] sm:$0xff]
      %v460 = vld [vmem:[%s338 + $0x130] sm:$0xff]
      %v461 = vld [vmem:[%s338 + $0x138] sm:$0xff]
      %v462 = vld [vmem:[%s338 + $0x140] sm:$0xff]
      %v463 = vld [vmem:[%s338 + $0x148] sm:$0xff]
      %v464 = vld [vmem:[%s338 + $0x150] sm:$0xff]
      %v465 = vld [vmem:[%s338 + $0x158] sm:$0xff]
      %v466 = vld [vmem:[%s338 + $0x160] sm:$0xff]
      %v467 = vld [vmem:[%s338 + $0x168] sm:$0xff]
      %v468 = vld [vmem:[%s338 + $0x170] sm:$0xff]
      %v469 = vld [vmem:[%s338 + $0x178] sm:$0xff]
      %v470 = vld [vmem:[%s338 + $0x180] sm:$0xff]
      %v471 = vld [vmem:[%s338 + $0x188] sm:$0xff]
      %v472 = vld [vmem:[%s338 + $0x190] sm:$0xff]
      %v473 = vld [vmem:[%s338 + $0x198] sm:$0xff]
      %v474 = vld [vmem:[%s338 + $0x1a0] sm:$0xff]
      %v475 = vld [vmem:[%s338 + $0x1a8] sm:$0xff]
      %v476 = vld [vmem:[%s338 + $0x1b0] sm:$0xff]
      %v477 = vld [vmem:[%s338 + $0x1b8] sm:$0xff]
      %v478 = vld [vmem:[%s338 + $0x1c0] sm:$0xff]
      %v479 = vld [vmem:[%s338 + $0x1c8] sm:$0xff]
      %v480 = vld [vmem:[%s338 + $0x1d0] sm:$0xff]
      %v481 = vld [vmem:[%s338 + $0x1d8] sm:$0xff]
      %v482 = vld [vmem:[%s338 + $0x1e0] sm:$0xff]
      %v483 = vld [vmem:[%s338 + $0x1e8] sm:$0xff]
      %v484 = vld [vmem:[%s338 + $0x1f0] sm:$0xff]
      %v485 = vld [vmem:[%s338 + $0x1f8] sm:$0xff]
      %v486 = vsub.f32 1.0, %v358
      %v487 = vsub.f32 1.0, %v359
      %v488 = vsub.f32 1.0, %v360
      %v489 = vsub.f32 1.0, %v361
      %v490 = vsub.f32 1.0, %v362
      %v491 = vsub.f32 1.0, %v363
      %v492 = vsub.f32 1.0, %v364
      %v493 = vsub.f32 1.0, %v365
      %v494 = vsub.f32 1.0, %v366
      %v495 = vsub.f32 1.0, %v367
      %v496 = vsub.f32 1.0, %v368
      %v497 = vsub.f32 1.0, %v369
      %v498 = vsub.f32 1.0, %v370
      %v499 = vsub.f32 1.0, %v371
      %v500 = vsub.f32 1.0, %v372
      %v501 = vsub.f32 1.0, %v373
      %v502 = vsub.f32 1.0, %v374
      %v503 = vsub.f32 1.0, %v375
      %v504 = vsub.f32 1.0, %v376
      %v505 = vsub.f32 1.0, %v377
      %v506 = vsub.f32 1.0, %v378
      %v507 = vsub.f32 1.0, %v379
      %v508 = vsub.f32 1.0, %v380
      %v509 = vsub.f32 1.0, %v381
      %v510 = vsub.f32 1.0, %v382
      %v511 = vsub.f32 1.0, %v383
      %v512 = vsub.f32 1.0, %v384
      %v513 = vsub.f32 1.0, %v385
      %v514 = vsub.f32 1.0, %v386
      %v515 = vsub.f32 1.0, %v387
      %v516 = vsub.f32 1.0, %v388
      %v517 = vsub.f32 1.0, %v389
      %v518 = vsub.f32 1.0, %v390
      %v519 = vsub.f32 1.0, %v391
      %v520 = vsub.f32 1.0, %v392
      %v521 = vsub.f32 1.0, %v393
      %v522 = vsub.f32 1.0, %v394
      %v523 = vsub.f32 1.0, %v395
      %v524 = vsub.f32 1.0, %v396
      %v525 = vsub.f32 1.0, %v397
      %v526 = vsub.f32 1.0, %v398
      %v527 = vsub.f32 1.0, %v399
      %v528 = vsub.f32 1.0, %v400
      %v529 = vsub.f32 1.0, %v401
      %v530 = vsub.f32 1.0, %v402
      %v531 = vsub.f32 1.0, %v403
      %v532 = vsub.f32 1.0, %v404
      %v533 = vsub.f32 1.0, %v405
      %v534 = vsub.f32 1.0, %v406
      %v535 = vsub.f32 1.0, %v407
      %v536 = vsub.f32 1.0, %v408
      %v537 = vsub.f32 1.0, %v409
      %v538 = vsub.f32 1.0, %v410
      %v539 = vsub.f32 1.0, %v411
      %v540 = vsub.f32 1.0, %v412
      %v541 = vsub.f32 1.0, %v413
      %v542 = vsub.f32 1.0, %v414
      %v543 = vsub.f32 1.0, %v415
      %v544 = vsub.f32 1.0, %v416
      %v545 = vsub.f32 1.0, %v417
      %v546 = vsub.f32 1.0, %v418
      %v547 = vsub.f32 1.0, %v419
      %v548 = vsub.f32 1.0, %v420
      %v549 = vsub.f32 1.0, %v421
      %v550 = vlog2.pop %v486
      %v551 = vmul.f32 %v550, 0.6931472
      %v552 = vlog2.pop %v487
      %v553 = vmul.f32 %v552, 0.6931472
      %v554 = vlog2.pop %v488
      %v555 = vmul.f32 %v554, 0.6931472
      %v556 = vlog2.pop %v489
      %v557 = vmul.f32 %v556, 0.6931472
      %v558 = vlog2.pop %v490
      %v559 = vmul.f32 %v558, 0.6931472
      %v560 = vlog2.pop %v491
      %v561 = vmul.f32 %v560, 0.6931472
      %v562 = vlog2.pop %v492
      %v563 = vmul.f32 %v562, 0.6931472
      %v564 = vlog2.pop %v493
      %v565 = vmul.f32 %v564, 0.6931472
      %v566 = vlog2.pop %v494
      %v567 = vmul.f32 %v566, 0.6931472
      %v568 = vlog2.pop %v495
      %v569 = vmul.f32 %v568, 0.6931472
      %v570 = vlog2.pop %v496
      %v571 = vmul.f32 %v570, 0.6931472
      %v572 = vlog2.pop %v497
      %v573 = vmul.f32 %v572, 0.6931472
      %v574 = vlog2.pop %v498
      %v575 = vmul.f32 %v574, 0.6931472
      %v576 = vlog2.pop %v499
      %v577 = vmul.f32 %v576, 0.6931472
      %v578 = vlog2.pop %v500
      %v579 = vmul.f32 %v578, 0.6931472
      %v580 = vlog2.pop %v501
      %v581 = vmul.f32 %v580, 0.6931472
      %v582 = vlog2.pop %v502
      %v583 = vmul.f32 %v582, 0.6931472
      %v584 = vlog2.pop %v503
      %v585 = vmul.f32 %v584, 0.6931472
      %v586 = vlog2.pop %v504
      %v587 = vmul.f32 %v586, 0.6931472
      %v588 = vlog2.pop %v505
      %v589 = vmul.f32 %v588, 0.6931472
      %v590 = vlog2.pop %v506
      %v591 = vmul.f32 %v590, 0.6931472
      %v592 = vlog2.pop %v507
      %v593 = vmul.f32 %v592, 0.6931472
      %v594 = vlog2.pop %v508
      %v595 = vmul.f32 %v594, 0.6931472
      %v596 = vlog2.pop %v509
      %v597 = vmul.f32 %v596, 0.6931472
      %v598 = vlog2.pop %v510
      %v599 = vmul.f32 %v598, 0.6931472
      %v600 = vlog2.pop %v511
      %v601 = vmul.f32 %v600, 0.6931472
      %v602 = vlog2.pop %v512
      %v603 = vmul.f32 %v602, 0.6931472
      %v604 = vlog2.pop %v513
      %v605 = vmul.f32 %v604, 0.6931472
      %v606 = vlog2.pop %v514
      %v607 = vmul.f32 %v606, 0.6931472
      %v608 = vlog2.pop %v515
      %v609 = vmul.f32 %v608, 0.6931472
      %v610 = vlog2.pop %v516
      %v611 = vmul.f32 %v610, 0.6931472
      %v612 = vlog2.pop %v517
      %v613 = vmul.f32 %v612, 0.6931472
      %v614 = vlog2.pop %v518
      %v615 = vmul.f32 %v614, 0.6931472
      %v616 = vlog2.pop %v519
      %v617 = vmul.f32 %v616, 0.6931472
      %v618 = vlog2.pop %v520
      %v619 = vmul.f32 %v618, 0.6931472
      %v620 = vlog2.pop %v521
      %v621 = vmul.f32 %v620, 0.6931472
      %v622 = vlog2.pop %v522
      %v623 = vmul.f32 %v622, 0.6931472
      %v624 = vlog2.pop %v523
      %v625 = vmul.f32 %v624, 0.6931472
      %v626 = vlog2.pop %v524
      %v627 = vmul.f32 %v626, 0.6931472
      %v628 = vlog2.pop %v525
      %v629 = vmul.f32 %v628, 0.6931472
      %v630 = vlog2.pop %v526
      %v631 = vmul.f32 %v630, 0.6931472
      %v632 = vlog2.pop %v527
      %v633 = vmul.f32 %v632, 0.6931472
      %v634 = vlog2.pop %v528
      %v635 = vmul.f32 %v634, 0.6931472
      %v636 = vlog2.pop %v529
      %v637 = vmul.f32 %v636, 0.6931472
      %v638 = vlog2.pop %v530
      %v639 = vmul.f32 %v638, 0.6931472
      %v640 = vlog2.pop %v531
      %v641 = vmul.f32 %v640, 0.6931472
      %v642 = vlog2.pop %v532
      %v643 = vmul.f32 %v642, 0.6931472
      %v644 = vlog2.pop %v533
      %v645 = vmul.f32 %v644, 0.6931472
      %v646 = vlog2.pop %v534
      %v647 = vmul.f32 %v646, 0.6931472
      %v648 = vlog2.pop %v535
      %v649 = vmul.f32 %v648, 0.6931472
      %v650 = vlog2.pop %v536
      %v651 = vmul.f32 %v650, 0.6931472
      %v652 = vlog2.pop %v537
      %v653 = vmul.f32 %v652, 0.6931472
      %v654 = vlog2.pop %v538
      %v655 = vmul.f32 %v654, 0.6931472
      %v656 = vlog2.pop %v539
      %v657 = vmul.f32 %v656, 0.6931472
      %v658 = vlog2.pop %v540
      %v659 = vmul.f32 %v658, 0.6931472
      %v660 = vlog2.pop %v541
      %v661 = vmul.f32 %v660, 0.6931472
      %v662 = vlog2.pop %v542
      %v663 = vmul.f32 %v662, 0.6931472
      %v664 = vlog2.pop %v543
      %v665 = vmul.f32 %v664, 0.6931472
      %v666 = vlog2.pop %v544
      %v667 = vmul.f32 %v666, 0.6931472
      %v668 = vlog2.pop %v545
      %v669 = vmul.f32 %v668, 0.6931472
      %v670 = vlog2.pop %v546
      %v671 = vmul.f32 %v670, 0.6931472
      %v672 = vlog2.pop %v547
      %v673 = vmul.f32 %v672, 0.6931472
      %v674 = vlog2.pop %v548
      %v675 = vmul.f32 %v674, 0.6931472
      %v676 = vlog2.pop %v549
      %v677 = vmul.f32 %v676, 0.6931472
      %v678 = vld [vmem:[%s0] sm:$0xff]
      %v679 = vld [vmem:[%s0 + $0x8] sm:$0xff]
      %vm680 = vcmask 130048
      %v682 = vsel %vm680, %v551, 0
      %v685 = vsel %vm680, %v553, 0
      %v688 = vsel %vm680, %v555, 0
      %v691 = vsel %vm680, %v557, 0
      %v694 = vsel %vm680, %v559, 0
      %v697 = vsel %vm680, %v561, 0
      %v700 = vsel %vm680, %v563, 0
      %v703 = vsel %vm680, %v565, 0
      %v706 = vsel %vm680, %v567, 0
      %v709 = vsel %vm680, %v569, 0
      %v712 = vsel %vm680, %v571, 0
      %v715 = vsel %vm680, %v573, 0
      %v718 = vsel %vm680, %v575, 0
      %v721 = vsel %vm680, %v577, 0
      %v724 = vsel %vm680, %v579, 0
      %v727 = vsel %vm680, %v581, 0
      %v730 = vsel %vm680, %v583, 0
      %v733 = vsel %vm680, %v585, 0
      %v736 = vsel %vm680, %v587, 0
      %v739 = vsel %vm680, %v589, 0
      %v742 = vsel %vm680, %v591, 0
      %v745 = vsel %vm680, %v593, 0
      %v748 = vsel %vm680, %v595, 0
      %v751 = vsel %vm680, %v597, 0
      %v754 = vsel %vm680, %v599, 0
      %v757 = vsel %vm680, %v601, 0
      %v760 = vsel %vm680, %v603, 0
      %v763 = vsel %vm680, %v605, 0
      %v766 = vsel %vm680, %v607, 0
      %v769 = vsel %vm680, %v609, 0
      %v772 = vsel %vm680, %v611, 0
      %v775 = vsel %vm680, %v613, 0
      %v778 = vsel %vm680, %v615, 0
      %v781 = vsel %vm680, %v617, 0
      %v784 = vsel %vm680, %v619, 0
      %v787 = vsel %vm680, %v621, 0
      %v790 = vsel %vm680, %v623, 0
      %v793 = vsel %vm680, %v625, 0
      %v796 = vsel %vm680, %v627, 0
      %v799 = vsel %vm680, %v629, 0
      %v802 = vsel %vm680, %v631, 0
      %v805 = vsel %vm680, %v633, 0
      %v808 = vsel %vm680, %v635, 0
      %v811 = vsel %vm680, %v637, 0
      %v814 = vsel %vm680, %v639, 0
      %v817 = vsel %vm680, %v641, 0
      %v820 = vsel %vm680, %v643, 0
      %v823 = vsel %vm680, %v645, 0
      %v826 = vsel %vm680, %v647, 0
      %v829 = vsel %vm680, %v649, 0
      %v832 = vsel %vm680, %v651, 0
      %v835 = vsel %vm680, %v653, 0
      %v838 = vsel %vm680, %v655, 0
      %v841 = vsel %vm680, %v657, 0
      %v844 = vsel %vm680, %v659, 0
      %v847 = vsel %vm680, %v661, 0
      %v850 = vsel %vm680, %v663, 0
      %v853 = vsel %vm680, %v665, 0
      %v856 = vsel %vm680, %v667, 0
      %v859 = vsel %vm680, %v669, 0
      %v862 = vsel %vm680, %v671, 0
      %v865 = vsel %vm680, %v673, 0
      %v868 = vsel %vm680, %v675, 0
      %v871 = vsel %vm680, %v677, 0
      %873 = vmatprep.subr.mxu0 0.0
      %v874 = vand.u32 %v678, 4294901760
      %875 = vmatpush1.msra.mxu0 %v874
      %876 = vmatprep.subr.mxu0 0.0
      %v877 = vand.u32 %v679, 4294901760
      %878 = vmatpush1.msra.mxu0 %v877
      %879 = vmatprep.subr.mxu0 0.0
      %880 = vmatpush1.msra.mxu0 0.0
      %881 = vmatprep.subr.mxu0 0.0
      %882 = vmatpush1.msra.mxu0 0.0
      %883 = vmatprep.subr.mxu0 0.0
      %884 = vmatpush1.msra.mxu0 0.0
      %885 = vmatprep.subr.mxu0 0.0
      %886 = vmatpush1.msra.mxu0 0.0
      %887 = vmatprep.subr.mxu0 0.0
      %888 = vmatpush1.msra.mxu0 0.0
      %889 = vmatprep.subr.mxu0 0.0
      %890 = vmatpush1.msra.mxu0 0.0
      %891 = vmatprep.subr.mxu0 0.0
      %892 = vmatpush1.msra.mxu0 0.0
      %893 = vmatprep.subr.mxu0 0.0
      %894 = vmatpush1.msra.mxu0 0.0
      %895 = vmatprep.subr.mxu0 0.0
      %896 = vmatpush1.msra.mxu0 0.0
      %897 = vmatprep.subr.mxu0 0.0
      %898 = vmatpush1.msra.mxu0 0.0
      %899 = vmatprep.subr.mxu0 0.0
      %900 = vmatpush1.msra.mxu0 0.0
      %901 = vmatprep.subr.mxu0 0.0
      %902 = vmatpush1.msra.mxu0 0.0
      %903 = vmatprep.subr.mxu0 0.0
      %904 = vmatpush1.msra.mxu0 0.0
      %905 = vmatprep.subr.mxu0 0.0
      %906 = vmatpush1.msra.mxu0 0.0
      %907 = vmatprep.subr.mxu0 0.0
      %908 = vmatpush1.msra.mxu0 0.0
      %909 = vmatprep.subr.mxu0 0.0
      %910 = vmatpush1.msra.mxu0 0.0
      %911 = vmatprep.subr.mxu0 0.0
      %912 = vmatpush1.msra.mxu0 0.0
      %913 = vmatprep.subr.mxu0 0.0
      %914 = vmatpush1.msra.mxu0 0.0
      %915 = vmatprep.subr.mxu0 0.0
      %916 = vmatpush1.msra.mxu0 0.0
      %917 = vmatprep.subr.mxu0 0.0
      %918 = vmatpush1.msra.mxu0 0.0
      %919 = vmatprep.subr.mxu0 0.0
      %920 = vmatpush1.msra.mxu0 0.0
      %921 = vmatprep.subr.mxu0 0.0
      %922 = vmatpush1.msra.mxu0 0.0
      %923 = vmatprep.subr.mxu0 0.0
      %924 = vmatpush1.msra.mxu0 0.0
      %925 = vmatprep.subr.mxu0 0.0
      %926 = vmatpush1.msra.mxu0 0.0
      %927 = vmatprep.subr.mxu0 0.0
      %928 = vmatpush1.msra.mxu0 0.0
      %929 = vmatprep.subr.mxu0 0.0
      %930 = vmatpush1.msra.mxu0 0.0
      %931 = vmatprep.subr.mxu0 0.0
      %932 = vmatpush1.msra.mxu0 0.0
      %933 = vmatprep.subr.mxu0 0.0
      %934 = vmatpush1.msra.mxu0 0.0
      %935 = vmatprep.subr.mxu0 0.0
      %936 = vmatpush1.msra.mxu0 0.0
      %937 = vmatprep.subr.mxu0 0.0
      %938 = vmatpush1.msra.mxu0 0.0
      %939 = vmatprep.mubr.f32.mxu0 0.0
      %v940 = vand.u32 %v682, 4294901760
      %v941 = vsub.f32 %v682, %v940
      %v942 = vand.u32 %v941, 4294901760
      %v943 = vsub.f32 %v941, %v942
      %v944 = vand.u32 %v943, 4294901760
      %945 = vmatmul.mubr.f32.gmra.mrb[0].mxu0 %v944
      %v946 = vpop.f32.mrb[0].mxu0
      %v947 = vadd.f32 0.0, %v946
      %v948 = vpop.f32.mrb[0].mxu0
      %949 = vmatprep.mubr.f32.mxu0 0.0
      %v950 = vand.u32 %v685, 4294901760
      %v951 = vsub.f32 %v685, %v950
      %v952 = vand.u32 %v951, 4294901760
      %v953 = vsub.f32 %v951, %v952
      %v954 = vand.u32 %v953, 4294901760
      %955 = vmatmul.mubr.f32.gmra.mrb[0].mxu0 %v954
      %v956 = vpop.f32.mrb[0].mxu0
      %v957 = vadd.f32 0.0, %v956
      %v958 = vpop.f32.mrb[0].mxu0
      %959 = vmatprep.mubr.f32.mxu0 0.0
      %v960 = vand.u32 %v688, 4294901760
      %v961 = vsub.f32 %v688, %v960
      %v962 = vand.u32 %v961, 4294901760
      %v963 = vsub.f32 %v961, %v962
      %v964 = vand.u32 %v963, 4294901760
      %965 = vmatmul.mubr.f32.gmra.mrb[0].mxu0 %v964
      %v966 = vpop.f32.mrb[0].mxu0
      %v967 = vadd.f32 0.0, %v966
      %v968 = vpop.f32.mrb[0].mxu0
      %969 = vmatprep.mubr.f32.mxu0 0.0
      %v970 = vand.u32 %v691, 4294901760
      %v971 = vsub.f32 %v691, %v970
      %v972 = vand.u32 %v971, 4294901760
      %v973 = vsub.f32 %v971, %v972
      %v974 = vand.u32 %v973, 4294901760
      %975 = vmatmul.mubr.f32.gmra.mrb[0].mxu0 %v974
      %v976 = vpop.f32.mrb[0].mxu0
      %v977 = vadd.f32 0.0, %v976
      %v978 = vpop.f32.mrb[0].mxu0
      %979 = vmatprep.mubr.f32.mxu0 0.0
      %v980 = vand.u32 %v694, 4294901760
      %v981 = vsub.f32 %v694, %v980
      %v982 = vand.u32 %v981, 4294901760
      %v983 = vsub.f32 %v981, %v982
      %v984 = vand.u32 %v983, 4294901760
      %985 = vmatmul.mubr.f32.gmra.mrb[0].mxu0 %v984
      %v986 = vpop.f32.mrb[0].mxu0
      %v987 = vadd.f32 0.0, %v986
      %v988 = vpop.f32.mrb[0].mxu0
      %989 = vmatprep.mubr.f32.mxu0 0.0
      %v990 = vand.u32 %v697, 4294901760
      %v991 = vsub.f32 %v697, %v990
      %v992 = vand.u32 %v991, 4294901760
      %v993 = vsub.f32 %v991, %v992
      %v994 = vand.u32 %v993, 4294901760
      %995 = vmatmul.mubr.f32.gmra.mrb[0].mxu0 %v994
      %v996 = vpop.f32.mrb[0].mxu0
      %v997 = vadd.f32 0.0, %v996
      %v998 = vpop.f32.mrb[0].mxu0
      %999 = vmatprep.mubr.f32.mxu0 0.0
      %v1000 = vand.u32 %v700, 4294901760
      %v1001 = vsub.f32 %v700, %v1000
      %v1002 = vand.u32 %v1001, 4294901760
      %v1003 = vsub.f32 %v1001, %v1002
      %v1004 = vand.u32 %v1003, 4294901760
      %1005 = vmatmul.mubr.f32.gmra.mrb[0].mxu0 %v1004
      %v1006 = vpop.f32.mrb[0].mxu0
      %v1007 = vadd.f32 0.0, %v1006
      %v1008 = vpop.f32.mrb[0].mxu0
      %1009 = vmatprep.mubr.f32.mxu0 0.0
      %v1010 = vand.u32 %v703, 4294901760
      %v1011 = vsub.f32 %v703, %v1010
      %v1012 = vand.u32 %v1011, 4294901760
      %v1013 = vsub.f32 %v1011, %v1012
      %v1014 = vand.u32 %v1013, 4294901760
      %1015 = vmatmul.mubr.f32.gmra.mrb[0].mxu0 %v1014
      %v1016 = vpop.f32.mrb[0].mxu0
      %v1017 = vadd.f32 0.0, %v1016
      %v1018 = vpop.f32.mrb[0].mxu0
      %1019 = vmatprep.mubr.f32.mxu0 0.0
      %v1020 = vand.u32 %v706, 4294901760
      %v1021 = vsub.f32 %v706, %v1020
      %v1022 = vand.u32 %v1021, 4294901760
      %v1023 = vsub.f32 %v1021, %v1022
      %v1024 = vand.u32 %v1023, 4294901760
      %1025 = vmatmul.mubr.f32.gmra.mrb[0].mxu0 %v1024
      %v1026 = vpop.f32.mrb[0].mxu0
      %v1027 = vadd.f32 0.0, %v1026
      %v1028 = vpop.f32.mrb[0].mxu0
      %1029 = vmatprep.mubr.f32.mxu0 0.0
      %v1030 = vand.u32 %v709, 4294901760
      %v1031 = vsub.f32 %v709, %v1030
      %v1032 = vand.u32 %v1031, 4294901760
      %v1033 = vsub.f32 %v1031, %v1032
      %v1034 = vand.u32 %v1033, 4294901760
      %1035 = vmatmul.mubr.f32.gmra.mrb[0].mxu0 %v1034
      %v1036 = vpop.f32.mrb[0].mxu0
      %v1037 = vadd.f32 0.0, %v1036
      %v1038 = vpop.f32.mrb[0].mxu0
      %1039 = vmatprep.mubr.f32.mxu0 0.0
      %v1040 = vand.u32 %v712, 4294901760
      %v1041 = vsub.f32 %v712, %v1040
      %v1042 = vand.u32 %v1041, 4294901760
      %v1043 = vsub.f32 %v1041, %v1042
      %v1044 = vand.u32 %v1043, 4294901760
      %1045 = vmatmul.mubr.f32.gmra.mrb[0].mxu0 %v1044
      %v1046 = vpop.f32.mrb[0].mxu0
      %v1047 = vadd.f32 0.0, %v1046
      %v1048 = vpop.f32.mrb[0].mxu0
      %1049 = vmatprep.mubr.f32.mxu0 0.0
      %v1050 = vand.u32 %v715, 4294901760
      %v1051 = vsub.f32 %v715, %v1050
      %v1052 = vand.u32 %v1051, 4294901760
      %v1053 = vsub.f32 %v1051, %v1052
      %v1054 = vand.u32 %v1053, 4294901760
      %1055 = vmatmul.mubr.f32.gmra.mrb[0].mxu0 %v1054
      %v1056 = vpop.f32.mrb[0].mxu0
      %v1057 = vadd.f32 0.0, %v1056
      %v1058 = vpop.f32.mrb[0].mxu0
      %1059 = vmatprep.mubr.f32.mxu0 0.0
      %v1060 = vand.u32 %v718, 4294901760
      %v1061 = vsub.f32 %v718, %v1060
      %v1062 = vand.u32 %v1061, 4294901760
      %v1063 = vsub.f32 %v1061, %v1062
      %v1064 = vand.u32 %v1063, 4294901760
      %1065 = vmatmul.mubr.f32.gmra.mrb[0].mxu0 %v1064
      %v1066 = vpop.f32.mrb[0].mxu0
      %v1067 = vadd.f32 0.0, %v1066
      %v1068 = vpop.f32.mrb[0].mxu0
      %1069 = vmatprep.mubr.f32.mxu0 0.0
      %v1070 = vand.u32 %v721, 4294901760
      %v1071 = vsub.f32 %v721, %v1070
      %v1072 = vand.u32 %v1071, 4294901760
      %v1073 = vsub.f32 %v1071, %v1072
      %v1074 = vand.u32 %v1073, 4294901760
      %1075 = vmatmul.mubr.f32.gmra.mrb[0].mxu0 %v1074
      %v1076 = vpop.f32.mrb[0].mxu0
      %v1077 = vadd.f32 0.0, %v1076
      %v1078 = vpop.f32.mrb[0].mxu0
      %1079 = vmatprep.mubr.f32.mxu0 0.0
      %v1080 = vand.u32 %v724, 4294901760
      %v1081 = vsub.f32 %v724, %v1080
      %v1082 = vand.u32 %v1081, 4294901760
      %v1083 = vsub.f32 %v1081, %v1082
      %v1084 = vand.u32 %v1083, 4294901760
      %1085 = vmatmul.mubr.f32.gmra.mrb[0].mxu0 %v1084
      %v1086 = vpop.f32.mrb[0].mxu0
      %v1087 = vadd.f32 0.0, %v1086
      %v1088 = vpop.f32.mrb[0].mxu0
      %1089 = vmatprep.mubr.f32.mxu0 0.0
      %v1090 = vand.u32 %v727, 4294901760
      %v1091 = vsub.f32 %v727, %v1090
      %v1092 = vand.u32 %v1091, 4294901760
      %v1093 = vsub.f32 %v1091, %v1092
      %v1094 = vand.u32 %v1093, 4294901760
      %1095 = vmatmul.mubr.f32.gmra.mrb[0].mxu0 %v1094
      %v1096 = vpop.f32.mrb[0].mxu0
      %v1097 = vadd.f32 0.0, %v1096
      %v1098 = vpop.f32.mrb[0].mxu0
      %1099 = vmatprep.mubr.f32.mxu0 0.0
      %v1100 = vand.u32 %v730, 4294901760
      %v1101 = vsub.f32 %v730, %v1100
      %v1102 = vand.u32 %v1101, 4294901760
      %v1103 = vsub.f32 %v1101, %v1102
      %v1104 = vand.u32 %v1103, 4294901760
      %1105 = vmatmul.mubr.f32.gmra.mrb[0].mxu0 %v1104
      %v1106 = vpop.f32.mrb[0].mxu0
      %v1107 = vadd.f32 0.0, %v1106
      %v1108 = vpop.f32.mrb[0].mxu0
      %1109 = vmatprep.mubr.f32.mxu0 0.0
      %v1110 = vand.u32 %v733, 4294901760
      %v1111 = vsub.f32 %v733, %v1110
      %v1112 = vand.u32 %v1111, 4294901760
      %v1113 = vsub.f32 %v1111, %v1112
      %v1114 = vand.u32 %v1113, 4294901760
      %1115 = vmatmul.mubr.f32.gmra.mrb[0].mxu0 %v1114
      %v1116 = vpop.f32.mrb[0].mxu0
      %v1117 = vadd.f32 0.0, %v1116
      %v1118 = vpop.f32.mrb[0].mxu0
      %1119 = vmatprep.mubr.f32.mxu0 0.0
      %v1120 = vand.u32 %v736, 4294901760
      %v1121 = vsub.f32 %v736, %v1120
      %v1122 = vand.u32 %v1121, 4294901760
      %v1123 = vsub.f32 %v1121, %v1122
      %v1124 = vand.u32 %v1123, 4294901760
      %1125 = vmatmul.mubr.f32.gmra.mrb[0].mxu0 %v1124
      %v1126 = vpop.f32.mrb[0].mxu0
      %v1127 = vadd.f32 0.0, %v1126
      %v1128 = vpop.f32.mrb[0].mxu0
      %1129 = vmatprep.mubr.f32.mxu0 0.0
      %v1130 = vand.u32 %v739, 4294901760
      %v1131 = vsub.f32 %v739, %v1130
      %v1132 = vand.u32 %v1131, 4294901760
      %v1133 = vsub.f32 %v1131, %v1132
      %v1134 = vand.u32 %v1133, 4294901760
      %1135 = vmatmul.mubr.f32.gmra.mrb[0].mxu0 %v1134
      %v1136 = vpop.f32.mrb[0].mxu0
      %v1137 = vadd.f32 0.0, %v1136
      %v1138 = vpop.f32.mrb[0].mxu0
      %1139 = vmatprep.mubr.f32.mxu0 0.0
      %v1140 = vand.u32 %v742, 4294901760
      %v1141 = vsub.f32 %v742, %v1140
      %v1142 = vand.u32 %v1141, 4294901760
      %v1143 = vsub.f32 %v1141, %v1142
      %v1144 = vand.u32 %v1143, 4294901760
      %1145 = vmatmul.mubr.f32.gmra.mrb[0].mxu0 %v1144
      %v1146 = vpop.f32.mrb[0].mxu0
      %v1147 = vadd.f32 0.0, %v1146
      %v1148 = vpop.f32.mrb[0].mxu0
      %1149 = vmatprep.mubr.f32.mxu0 0.0
      %v1150 = vand.u32 %v745, 4294901760
      %v1151 = vsub.f32 %v745, %v1150
      %v1152 = vand.u32 %v1151, 4294901760
      %v1153 = vsub.f32 %v1151, %v1152
      %v1154 = vand.u32 %v1153, 4294901760
      %1155 = vmatmul.mubr.f32.gmra.mrb[0].mxu0 %v1154
      %v1156 = vpop.f32.mrb[0].mxu0
      %v1157 = vadd.f32 0.0, %v1156
      %v1158 = vpop.f32.mrb[0].mxu0
      %1159 = vmatprep.mubr.f32.mxu0 0.0
      %v1160 = vand.u32 %v748, 4294901760
      %v1161 = vsub.f32 %v748, %v1160
      %v1162 = vand.u32 %v1161, 4294901760
      %v1163 = vsub.f32 %v1161, %v1162
      %v1164 = vand.u32 %v1163, 4294901760
      %1165 = vmatmul.mubr.f32.gmra.mrb[0].mxu0 %v1164
      %v1166 = vpop.f32.mrb[0].mxu0
      %v1167 = vadd.f32 0.0, %v1166
      %v1168 = vpop.f32.mrb[0].mxu0
      %1169 = vmatprep.mubr.f32.mxu0 0.0
      %v1170 = vand.u32 %v751, 4294901760
      %v1171 = vsub.f32 %v751, %v1170
      %v1172 = vand.u32 %v1171, 4294901760
      %v1173 = vsub.f32 %v1171, %v1172
      %v1174 = vand.u32 %v1173, 4294901760
      %1175 = vmatmul.mubr.f32.gmra.mrb[0].mxu0 %v1174
      %v1176 = vpop.f32.mrb[0].mxu0
      %v1177 = vadd.f32 0.0, %v1176
      %v1178 = vpop.f32.mrb[0].mxu0
      %1179 = vmatprep.mubr.f32.mxu0 0.0
      %v1180 = vand.u32 %v754, 4294901760
      %v1181 = vsub.f32 %v754, %v1180
      %v1182 = vand.u32 %v1181, 4294901760
      %v1183 = vsub.f32 %v1181, %v1182
      %v1184 = vand.u32 %v1183, 4294901760
      %1185 = vmatmul.mubr.f32.gmra.mrb[0].mxu0 %v1184
      %v1186 = vpop.f32.mrb[0].mxu0
      %v1187 = vadd.f32 0.0, %v1186
      %v1188 = vpop.f32.mrb[0].mxu0
      %1189 = vmatprep.mubr.f32.mxu0 0.0
      %v1190 = vand.u32 %v757, 4294901760
      %v1191 = vsub.f32 %v757, %v1190
      %v1192 = vand.u32 %v1191, 4294901760
      %v1193 = vsub.f32 %v1191, %v1192
      %v1194 = vand.u32 %v1193, 4294901760
      %1195 = vmatmul.mubr.f32.gmra.mrb[0].mxu0 %v1194
      %v1196 = vpop.f32.mrb[0].mxu0
      %v1197 = vadd.f32 0.0, %v1196
      %v1198 = vpop.f32.mrb[0].mxu0
      %1199 = vmatprep.mubr.f32.mxu0 0.0
      %v1200 = vand.u32 %v760, 4294901760
      %v1201 = vsub.f32 %v760, %v1200
      %v1202 = vand.u32 %v1201, 4294901760
      %v1203 = vsub.f32 %v1201, %v1202
      %v1204 = vand.u32 %v1203, 4294901760
      %1205 = vmatmul.mubr.f32.gmra.mrb[0].mxu0 %v1204
      %v1206 = vpop.f32.mrb[0].mxu0
      %v1207 = vadd.f32 0.0, %v1206
      %v1208 = vpop.f32.mrb[0].mxu0
      %1209 = vmatprep.mubr.f32.mxu0 0.0
      %v1210 = vand.u32 %v763, 4294901760
      %v1211 = vsub.f32 %v763, %v1210
      %v1212 = vand.u32 %v1211, 4294901760
      %v1213 = vsub.f32 %v1211, %v1212
      %v1214 = vand.u32 %v1213, 4294901760
      %1215 = vmatmul.mubr.f32.gmra.mrb[0].mxu0 %v1214
      %v1216 = vpop.f32.mrb[0].mxu0
      %v1217 = vadd.f32 0.0, %v1216
      %v1218 = vpop.f32.mrb[0].mxu0
      %1219 = vmatprep.mubr.f32.mxu0 0.0
      %v1220 = vand.u32 %v766, 4294901760
      %v1221 = vsub.f32 %v766, %v1220
      %v1222 = vand.u32 %v1221, 4294901760
      %v1223 = vsub.f32 %v1221, %v1222
      %v1224 = vand.u32 %v1223, 4294901760
      %1225 = vmatmul.mubr.f32.gmra.mrb[0].mxu0 %v1224
      %v1226 = vpop.f32.mrb[0].mxu0
      %v1227 = vadd.f32 0.0, %v1226
      %v1228 = vpop.f32.mrb[0].mxu0
      %1229 = vmatprep.mubr.f32.mxu0 0.0
      %v1230 = vand.u32 %v769, 4294901760
      %v1231 = vsub.f32 %v769, %v1230
      %v1232 = vand.u32 %v1231, 4294901760
      %v1233 = vsub.f32 %v1231, %v1232
      %v1234 = vand.u32 %v1233, 4294901760
      %1235 = vmatmul.mubr.f32.gmra.mrb[0].mxu0 %v1234
      %v1236 = vpop.f32.mrb[0].mxu0
      %v1237 = vadd.f32 0.0, %v1236
      %v1238 = vpop.f32.mrb[0].mxu0
      %1239 = vmatprep.mubr.f32.mxu0 0.0
      %v1240 = vand.u32 %v772, 4294901760
      %v1241 = vsub.f32 %v772, %v1240
      %v1242 = vand.u32 %v1241, 4294901760
      %v1243 = vsub.f32 %v1241, %v1242
      %v1244 = vand.u32 %v1243, 4294901760
      %1245 = vmatmul.mubr.f32.gmra.mrb[0].mxu0 %v1244
      %v1246 = vpop.f32.mrb[0].mxu0
      %v1247 = vadd.f32 0.0, %v1246
      %v1248 = vpop.f32.mrb[0].mxu0
      %1249 = vmatprep.mubr.f32.mxu0 0.0
      %v1250 = vand.u32 %v775, 4294901760
      %v1251 = vsub.f32 %v775, %v1250
      %v1252 = vand.u32 %v1251, 4294901760
      %v1253 = vsub.f32 %v1251, %v1252
      %v1254 = vand.u32 %v1253, 4294901760
      %1255 = vmatmul.mubr.f32.gmra.mrb[0].mxu0 %v1254
      %v1256 = vpop.f32.mrb[0].mxu0
      %v1257 = vadd.f32 0.0, %v1256
      %v1258 = vpop.f32.mrb[0].mxu0
      %1259 = vmatprep.mubr.f32.mxu0 0.0
      %v1260 = vand.u32 %v778, 4294901760
      %v1261 = vsub.f32 %v778, %v1260
      %v1262 = vand.u32 %v1261, 4294901760
      %v1263 = vsub.f32 %v1261, %v1262
      %v1264 = vand.u32 %v1263, 4294901760
      %1265 = vmatmul.mubr.f32.gmra.mrb[0].mxu0 %v1264
      %v1266 = vpop.f32.mrb[0].mxu0
      %v1267 = vadd.f32 0.0, %v1266
      %v1268 = vpop.f32.mrb[0].mxu0
      %1269 = vmatprep.mubr.f32.mxu0 0.0
      %v1270 = vand.u32 %v781, 4294901760
      %v1271 = vsub.f32 %v781, %v1270
      %v1272 = vand.u32 %v1271, 4294901760
      %v1273 = vsub.f32 %v1271, %v1272
      %v1274 = vand.u32 %v1273, 4294901760
      %1275 = vmatmul.mubr.f32.gmra.mrb[0].mxu0 %v1274
      %v1276 = vpop.f32.mrb[0].mxu0
      %v1277 = vadd.f32 0.0, %v1276
      %v1278 = vpop.f32.mrb[0].mxu0
      %1279 = vmatprep.mubr.f32.mxu0 0.0
      %v1280 = vand.u32 %v784, 4294901760
      %v1281 = vsub.f32 %v784, %v1280
      %v1282 = vand.u32 %v1281, 4294901760
      %v1283 = vsub.f32 %v1281, %v1282
      %v1284 = vand.u32 %v1283, 4294901760
      %1285 = vmatmul.mubr.f32.gmra.mrb[0].mxu0 %v1284
      %v1286 = vpop.f32.mrb[0].mxu0
      %v1287 = vadd.f32 0.0, %v1286
      %v1288 = vpop.f32.mrb[0].mxu0
      %1289 = vmatprep.mubr.f32.mxu0 0.0
      %v1290 = vand.u32 %v787, 4294901760
      %v1291 = vsub.f32 %v787, %v1290
      %v1292 = vand.u32 %v1291, 4294901760
      %v1293 = vsub.f32 %v1291, %v1292
      %v1294 = vand.u32 %v1293, 4294901760
      %1295 = vmatmul.mubr.f32.gmra.mrb[0].mxu0 %v1294
      %v1296 = vpop.f32.mrb[0].mxu0
      %v1297 = vadd.f32 0.0, %v1296
      %v1298 = vpop.f32.mrb[0].mxu0
      %1299 = vmatprep.mubr.f32.mxu0 0.0
      %v1300 = vand.u32 %v790, 4294901760
      %v1301 = vsub.f32 %v790, %v1300
      %v1302 = vand.u32 %v1301, 4294901760
      %v1303 = vsub.f32 %v1301, %v1302
      %v1304 = vand.u32 %v1303, 4294901760
      %1305 = vmatmul.mubr.f32.gmra.mrb[0].mxu0 %v1304
      %v1306 = vpop.f32.mrb[0].mxu0
      %v1307 = vadd.f32 0.0, %v1306
      %v1308 = vpop.f32.mrb[0].mxu0
      %1309 = vmatprep.mubr.f32.mxu0 0.0
      %v1310 = vand.u32 %v793, 4294901760
      %v1311 = vsub.f32 %v793, %v1310
      %v1312 = vand.u32 %v1311, 4294901760
      %v1313 = vsub.f32 %v1311, %v1312
      %v1314 = vand.u32 %v1313, 4294901760
      %1315 = vmatmul.mubr.f32.gmra.mrb[0].mxu0 %v1314
      %v1316 = vpop.f32.mrb[0].mxu0
      %v1317 = vadd.f32 0.0, %v1316
      %v1318 = vpop.f32.mrb[0].mxu0
      %1319 = vmatprep.mubr.f32.mxu0 0.0
      %v1320 = vand.u32 %v796, 4294901760
      %v1321 = vsub.f32 %v796, %v1320
      %v1322 = vand.u32 %v1321, 4294901760
      %v1323 = vsub.f32 %v1321, %v1322
      %v1324 = vand.u32 %v1323, 4294901760
      %1325 = vmatmul.mubr.f32.gmra.mrb[0].mxu0 %v1324
      %v1326 = vpop.f32.mrb[0].mxu0
      %v1327 = vadd.f32 0.0, %v1326
      %v1328 = vpop.f32.mrb[0].mxu0
      %1329 = vmatprep.mubr.f32.mxu0 0.0
      %v1330 = vand.u32 %v799, 4294901760
      %v1331 = vsub.f32 %v799, %v1330
      %v1332 = vand.u32 %v1331, 4294901760
      %v1333 = vsub.f32 %v1331, %v1332
      %v1334 = vand.u32 %v1333, 4294901760
      %1335 = vmatmul.mubr.f32.gmra.mrb[0].mxu0 %v1334
      %v1336 = vpop.f32.mrb[0].mxu0
      %v1337 = vadd.f32 0.0, %v1336
      %v1338 = vpop.f32.mrb[0].mxu0
      %1339 = vmatprep.mubr.f32.mxu0 0.0
      %v1340 = vand.u32 %v802, 4294901760
      %v1341 = vsub.f32 %v802, %v1340
      %v1342 = vand.u32 %v1341, 4294901760
      %v1343 = vsub.f32 %v1341, %v1342
      %v1344 = vand.u32 %v1343, 4294901760
      %1345 = vmatmul.mubr.f32.gmra.mrb[0].mxu0 %v1344
      %v1346 = vpop.f32.mrb[0].mxu0
      %v1347 = vadd.f32 0.0, %v1346
      %v1348 = vpop.f32.mrb[0].mxu0
      %1349 = vmatprep.mubr.f32.mxu0 0.0
      %v1350 = vand.u32 %v805, 4294901760
      %v1351 = vsub.f32 %v805, %v1350
      %v1352 = vand.u32 %v1351, 4294901760
      %v1353 = vsub.f32 %v1351, %v1352
      %v1354 = vand.u32 %v1353, 4294901760
      %1355 = vmatmul.mubr.f32.gmra.mrb[0].mxu0 %v1354
      %v1356 = vpop.f32.mrb[0].mxu0
      %v1357 = vadd.f32 0.0, %v1356
      %v1358 = vpop.f32.mrb[0].mxu0
      %1359 = vmatprep.mubr.f32.mxu0 0.0
      %v1360 = vand.u32 %v808, 4294901760
      %v1361 = vsub.f32 %v808, %v1360
      %v1362 = vand.u32 %v1361, 4294901760
      %v1363 = vsub.f32 %v1361, %v1362
      %v1364 = vand.u32 %v1363, 4294901760
      %1365 = vmatmul.mubr.f32.gmra.mrb[0].mxu0 %v1364
      %v1366 = vpop.f32.mrb[0].mxu0
      %v1367 = vadd.f32 0.0, %v1366
      %v1368 = vpop.f32.mrb[0].mxu0
      %1369 = vmatprep.mubr.f32.mxu0 0.0
      %v1370 = vand.u32 %v811, 4294901760
      %v1371 = vsub.f32 %v811, %v1370
      %v1372 = vand.u32 %v1371, 4294901760
      %v1373 = vsub.f32 %v1371, %v1372
      %v1374 = vand.u32 %v1373, 4294901760
      %1375 = vmatmul.mubr.f32.gmra.mrb[0].mxu0 %v1374
      %v1376 = vpop.f32.mrb[0].mxu0
      %v1377 = vadd.f32 0.0, %v1376
      %v1378 = vpop.f32.mrb[0].mxu0
      %1379 = vmatprep.mubr.f32.mxu0 0.0
      %v1380 = vand.u32 %v814, 4294901760
      %v1381 = vsub.f32 %v814, %v1380
      %v1382 = vand.u32 %v1381, 4294901760
      %v1383 = vsub.f32 %v1381, %v1382
      %v1384 = vand.u32 %v1383, 4294901760
      %1385 = vmatmul.mubr.f32.gmra.mrb[0].mxu0 %v1384
      %v1386 = vpop.f32.mrb[0].mxu0
      %v1387 = vadd.f32 0.0, %v1386
      %v1388 = vpop.f32.mrb[0].mxu0
      %1389 = vmatprep.mubr.f32.mxu0 0.0
      %v1390 = vand.u32 %v817, 4294901760
      %v1391 = vsub.f32 %v817, %v1390
      %v1392 = vand.u32 %v1391, 4294901760
      %v1393 = vsub.f32 %v1391, %v1392
      %v1394 = vand.u32 %v1393, 4294901760
      %1395 = vmatmul.mubr.f32.gmra.mrb[0].mxu0 %v1394
      %v1396 = vpop.f32.mrb[0].mxu0
      %v1397 = vadd.f32 0.0, %v1396
      %v1398 = vpop.f32.mrb[0].mxu0
      %1399 = vmatprep.mubr.f32.mxu0 0.0
      %v1400 = vand.u32 %v820, 4294901760
      %v1401 = vsub.f32 %v820, %v1400
      %v1402 = vand.u32 %v1401, 4294901760
      %v1403 = vsub.f32 %v1401, %v1402
      %v1404 = vand.u32 %v1403, 4294901760
      %1405 = vmatmul.mubr.f32.gmra.mrb[0].mxu0 %v1404
      %v1406 = vpop.f32.mrb[0].mxu0
      %v1407 = vadd.f32 0.0, %v1406
      %v1408 = vpop.f32.mrb[0].mxu0
      %1409 = vmatprep.mubr.f32.mxu0 0.0
      %v1410 = vand.u32 %v823, 4294901760
      %v1411 = vsub.f32 %v823, %v1410
      %v1412 = vand.u32 %v1411, 4294901760
      %v1413 = vsub.f32 %v1411, %v1412
      %v1414 = vand.u32 %v1413, 4294901760
      %1415 = vmatmul.mubr.f32.gmra.mrb[0].mxu0 %v1414
      %v1416 = vpop.f32.mrb[0].mxu0
      %v1417 = vadd.f32 0.0, %v1416
      %v1418 = vpop.f32.mrb[0].mxu0
      %1419 = vmatprep.mubr.f32.mxu0 0.0
      %v1420 = vand.u32 %v826, 4294901760
      %v1421 = vsub.f32 %v826, %v1420
      %v1422 = vand.u32 %v1421, 4294901760
      %v1423 = vsub.f32 %v1421, %v1422
      %v1424 = vand.u32 %v1423, 4294901760
      %1425 = vmatmul.mubr.f32.gmra.mrb[0].mxu0 %v1424
      %v1426 = vpop.f32.mrb[0].mxu0
      %v1427 = vadd.f32 0.0, %v1426
      %v1428 = vpop.f32.mrb[0].mxu0
      %1429 = vmatprep.mubr.f32.mxu0 0.0
      %v1430 = vand.u32 %v829, 4294901760
      %v1431 = vsub.f32 %v829, %v1430
      %v1432 = vand.u32 %v1431, 4294901760
      %v1433 = vsub.f32 %v1431, %v1432
      %v1434 = vand.u32 %v1433, 4294901760
      %1435 = vmatmul.mubr.f32.gmra.mrb[0].mxu0 %v1434
      %v1436 = vpop.f32.mrb[0].mxu0
      %v1437 = vadd.f32 0.0, %v1436
      %v1438 = vpop.f32.mrb[0].mxu0
      %1439 = vmatprep.mubr.f32.mxu0 0.0
      %v1440 = vand.u32 %v832, 4294901760
      %v1441 = vsub.f32 %v832, %v1440
      %v1442 = vand.u32 %v1441, 4294901760
      %v1443 = vsub.f32 %v1441, %v1442
      %v1444 = vand.u32 %v1443, 4294901760
      %1445 = vmatmul.mubr.f32.gmra.mrb[0].mxu0 %v1444
      %v1446 = vpop.f32.mrb[0].mxu0
      %v1447 = vadd.f32 0.0, %v1446
      %v1448 = vpop.f32.mrb[0].mxu0
      %1449 = vmatprep.mubr.f32.mxu0 0.0
      %v1450 = vand.u32 %v835, 4294901760
      %v1451 = vsub.f32 %v835, %v1450
      %v1452 = vand.u32 %v1451, 4294901760
      %v1453 = vsub.f32 %v1451, %v1452
      %v1454 = vand.u32 %v1453, 4294901760
      %1455 = vmatmul.mubr.f32.gmra.mrb[0].mxu0 %v1454
      %v1456 = vpop.f32.mrb[0].mxu0
      %v1457 = vadd.f32 0.0, %v1456
      %v1458 = vpop.f32.mrb[0].mxu0
      %1459 = vmatprep.mubr.f32.mxu0 0.0
      %v1460 = vand.u32 %v838, 4294901760
      %v1461 = vsub.f32 %v838, %v1460
      %v1462 = vand.u32 %v1461, 4294901760
      %v1463 = vsub.f32 %v1461, %v1462
      %v1464 = vand.u32 %v1463, 4294901760
      %1465 = vmatmul.mubr.f32.gmra.mrb[0].mxu0 %v1464
      %v1466 = vpop.f32.mrb[0].mxu0
      %v1467 = vadd.f32 0.0, %v1466
      %v1468 = vpop.f32.mrb[0].mxu0
      %1469 = vmatprep.mubr.f32.mxu0 0.0
      %v1470 = vand.u32 %v841, 4294901760
      %v1471 = vsub.f32 %v841, %v1470
      %v1472 = vand.u32 %v1471, 4294901760
      %v1473 = vsub.f32 %v1471, %v1472
      %v1474 = vand.u32 %v1473, 4294901760
      %1475 = vmatmul.mubr.f32.gmra.mrb[0].mxu0 %v1474
      %v1476 = vpop.f32.mrb[0].mxu0
      %v1477 = vadd.f32 0.0, %v1476
      %v1478 = vpop.f32.mrb[0].mxu0
      %1479 = vmatprep.mubr.f32.mxu0 0.0
      %v1480 = vand.u32 %v844, 4294901760
      %v1481 = vsub.f32 %v844, %v1480
      %v1482 = vand.u32 %v1481, 4294901760
      %v1483 = vsub.f32 %v1481, %v1482
      %v1484 = vand.u32 %v1483, 4294901760
      %1485 = vmatmul.mubr.f32.gmra.mrb[0].mxu0 %v1484
      %v1486 = vpop.f32.mrb[0].mxu0
      %v1487 = vadd.f32 0.0, %v1486
      %v1488 = vpop.f32.mrb[0].mxu0
      %1489 = vmatprep.mubr.f32.mxu0 0.0
      %v1490 = vand.u32 %v847, 4294901760
      %v1491 = vsub.f32 %v847, %v1490
      %v1492 = vand.u32 %v1491, 4294901760
      %v1493 = vsub.f32 %v1491, %v1492
      %v1494 = vand.u32 %v1493, 4294901760
      %1495 = vmatmul.mubr.f32.gmra.mrb[0].mxu0 %v1494
      %v1496 = vpop.f32.mrb[0].mxu0
      %v1497 = vadd.f32 0.0, %v1496
      %v1498 = vpop.f32.mrb[0].mxu0
      %1499 = vmatprep.mubr.f32.mxu0 0.0
      %v1500 = vand.u32 %v850, 4294901760
      %v1501 = vsub.f32 %v850, %v1500
      %v1502 = vand.u32 %v1501, 4294901760
      %v1503 = vsub.f32 %v1501, %v1502
      %v1504 = vand.u32 %v1503, 4294901760
      %1505 = vmatmul.mubr.f32.gmra.mrb[0].mxu0 %v1504
      %v1506 = vpop.f32.mrb[0].mxu0
      %v1507 = vadd.f32 0.0, %v1506
      %v1508 = vpop.f32.mrb[0].mxu0
      %1509 = vmatprep.mubr.f32.mxu0 0.0
      %v1510 = vand.u32 %v853, 4294901760
      %v1511 = vsub.f32 %v853, %v1510
      %v1512 = vand.u32 %v1511, 4294901760
      %v1513 = vsub.f32 %v1511, %v1512
      %v1514 = vand.u32 %v1513, 4294901760
      %1515 = vmatmul.mubr.f32.gmra.mrb[0].mxu0 %v1514
      %v1516 = vpop.f32.mrb[0].mxu0
      %v1517 = vadd.f32 0.0, %v1516
      %v1518 = vpop.f32.mrb[0].mxu0
      %1519 = vmatprep.mubr.f32.mxu0 0.0
      %v1520 = vand.u32 %v856, 4294901760
      %v1521 = vsub.f32 %v856, %v1520
      %v1522 = vand.u32 %v1521, 4294901760
      %v1523 = vsub.f32 %v1521, %v1522
      %v1524 = vand.u32 %v1523, 4294901760
      %1525 = vmatmul.mubr.f32.gmra.mrb[0].mxu0 %v1524
      %v1526 = vpop.f32.mrb[0].mxu0
      %v1527 = vadd.f32 0.0, %v1526
      %v1528 = vpop.f32.mrb[0].mxu0
      %1529 = vmatprep.mubr.f32.mxu0 0.0
      %v1530 = vand.u32 %v859, 4294901760
      %v1531 = vsub.f32 %v859, %v1530
      %v1532 = vand.u32 %v1531, 4294901760
      %v1533 = vsub.f32 %v1531, %v1532
      %v1534 = vand.u32 %v1533, 4294901760
      %1535 = vmatmul.mubr.f32.gmra.mrb[0].mxu0 %v1534
      %v1536 = vpop.f32.mrb[0].mxu0
      %v1537 = vadd.f32 0.0, %v1536
      %v1538 = vpop.f32.mrb[0].mxu0
      %1539 = vmatprep.mubr.f32.mxu0 0.0
      %v1540 = vand.u32 %v862, 4294901760
      %v1541 = vsub.f32 %v862, %v1540
      %v1542 = vand.u32 %v1541, 4294901760
      %v1543 = vsub.f32 %v1541, %v1542
      %v1544 = vand.u32 %v1543, 4294901760
      %1545 = vmatmul.mubr.f32.gmra.mrb[0].mxu0 %v1544
      %v1546 = vpop.f32.mrb[0].mxu0
      %v1547 = vadd.f32 0.0, %v1546
      %v1548 = vpop.f32.mrb[0].mxu0
      %1549 = vmatprep.mubr.f32.mxu0 0.0
      %v1550 = vand.u32 %v865, 4294901760
      %v1551 = vsub.f32 %v865, %v1550
      %v1552 = vand.u32 %v1551, 4294901760
      %v1553 = vsub.f32 %v1551, %v1552
      %v1554 = vand.u32 %v1553, 4294901760
      %1555 = vmatmul.mubr.f32.gmra.mrb[0].mxu0 %v1554
      %v1556 = vpop.f32.mrb[0].mxu0
      %v1557 = vadd.f32 0.0, %v1556
      %v1558 = vpop.f32.mrb[0].mxu0
      %1559 = vmatprep.mubr.f32.mxu0 0.0
      %v1560 = vand.u32 %v868, 4294901760
      %v1561 = vsub.f32 %v868, %v1560
      %v1562 = vand.u32 %v1561, 4294901760
      %v1563 = vsub.f32 %v1561, %v1562
      %v1564 = vand.u32 %v1563, 4294901760
      %1565 = vmatmul.mubr.f32.gmra.mrb[0].mxu0 %v1564
      %v1566 = vpop.f32.mrb[0].mxu0
      %v1567 = vadd.f32 0.0, %v1566
      %v1568 = vpop.f32.mrb[0].mxu0
      %1569 = vmatprep.mubr.f32.mxu0 0.0
      %v1570 = vand.u32 %v871, 4294901760
      %v1571 = vsub.f32 %v871, %v1570
      %v1572 = vand.u32 %v1571, 4294901760
      %v1573 = vsub.f32 %v1571, %v1572
      %v1574 = vand.u32 %v1573, 4294901760
      %1575 = vmatmul.mubr.f32.gmra.mrb[0].mxu0 %v1574
      %v1576 = vpop.f32.mrb[0].mxu0
      %v1577 = vadd.f32 0.0, %v1576
      %v1578 = vpop.f32.mrb[0].mxu0
      %1579 = vdwg.mxu0
      %1580 = vmatprep.subr.mxu0 0.0
      %v1581 = vand.u32 %v678, 4294901760
      %v1582 = vsub.f32 %v678, %v1581
      %v1583 = vand.u32 %v1582, 4294901760
      %v1584 = vsub.f32 %v1582, %v1583
      %v1585 = vand.u32 %v1584, 4294901760
      %1586 = vmatpush1.msra.mxu0 %v1585
      %1587 = vmatprep.subr.mxu0 0.0
      %v1588 = vand.u32 %v679, 4294901760
      %v1589 = vsub.f32 %v679, %v1588
      %v1590 = vand.u32 %v1589, 4294901760
      %v1591 = vsub.f32 %v1589, %v1590
      %v1592 = vand.u32 %v1591, 4294901760
      %1593 = vmatpush1.msra.mxu0 %v1592
      %1594 = vmatprep.subr.mxu0 0.0
      %1595 = vmatpush1.msra.mxu0 0.0
      %1596 = vmatprep.subr.mxu0 0.0
      %1597 = vmatpush1.msra.mxu0 0.0
      %1598 = vmatprep.subr.mxu0 0.0
      %1599 = vmatpush1.msra.mxu0 0.0
      %1600 = vmatprep.subr.mxu0 0.0
      %1601 = vmatpush1.msra.mxu0 0.0
      %1602 = vmatprep.subr.mxu0 0.0
      %1603 = vmatpush1.msra.mxu0 0.0
      %1604 = vmatprep.subr.mxu0 0.0
      %1605 = vmatpush1.msra.mxu0 0.0
      %1606 = vmatprep.subr.mxu0 0.0
      %1607 = vmatpush1.msra.mxu0 0.0
      %1608 = vmatprep.subr.mxu0 0.0
      %1609 = vmatpush1.msra.mxu0 0.0
      %1610 = vmatprep.subr.mxu0 0.0
      %1611 = vmatpush1.msra.mxu0 0.0
      %1612 = vmatprep.subr.mxu0 0.0
      %1613 = vmatpush1.msra.mxu0 0.0
      %1614 = vmatprep.subr.mxu0 0.0
      %1615 = vmatpush1.msra.mxu0 0.0
      %1616 = vmatprep.subr.mxu0 0.0
      %1617 = vmatpush1.msra.mxu0 0.0
      %1618 = vmatprep.subr.mxu0 0.0
      %1619 = vmatpush1.msra.mxu0 0.0
      %1620 = vmatprep.subr.mxu0 0.0
      %1621 = vmatpush1.msra.mxu0 0.0
      %1622 = vmatprep.subr.mxu0 0.0
      %1623 = vmatpush1.msra.mxu0 0.0
      %1624 = vmatprep.subr.mxu0 0.0
      %1625 = vmatpush1.msra.mxu0 0.0
      %1626 = vmatprep.subr.mxu0 0.0
      %1627 = vmatpush1.msra.mxu0 0.0
      %1628 = vmatprep.subr.mxu0 0.0
      %1629 = vmatpush1.msra.mxu0 0.0
      %1630 = vmatprep.subr.mxu0 0.0
      %1631 = vmatpush1.msra.mxu0 0.0
      %1632 = vmatprep.subr.mxu0 0.0
      %1633 = vmatpush1.msra.mxu0 0.0
      %1634 = vmatprep.subr.mxu0 0.0
      %1635 = vmatpush1.msra.mxu0 0.0
      %1636 = vmatprep.subr.mxu0 0.0
      %1637 = vmatpush1.msra.mxu0 0.0
      %1638 = vmatprep.subr.mxu0 0.0
      %1639 = vmatpush1.msra.mxu0 0.0
      %1640 = vmatprep.subr.mxu0 0.0
      %1641 = vmatpush1.msra.mxu0 0.0
      %1642 = vmatprep.subr.mxu0 0.0
      %1643 = vmatpush1.msra.mxu0 0.0
      %1644 = vmatprep.subr.mxu0 0.0
      %1645 = vmatpush1.msra.mxu0 0.0
      %1646 = vmatprep.subr.mxu0 0.0
      %1647 = vmatpush1.msra.mxu0 0.0
      %1648 = vmatprep.subr.mxu0 0.0
      %1649 = vmatpush1.msra.mxu0 0.0
      %1650 = vmatprep.subr.mxu0 0.0
      %1651 = vmatpush1.msra.mxu0 0.0
      %1652 = vmatprep.subr.mxu0 0.0
      %1653 = vmatpush1.msra.mxu0 0.0
      %1654 = vmatprep.mubr.f32.mxu0 0.0
      %v1655 = vand.u32 %v682, 4294901760
      %1656 = vmatmul.mubr.f32.gmra.mrb[0].mxu0 %v1655
      %v1657 = vpop.f32.mrb[0].mxu0
      %v1658 = vadd.f32 %v947, %v1657
      %v1659 = vpop.f32.mrb[0].mxu0
      %1660 = vmatprep.mubr.f32.mxu0 0.0
      %v1661 = vand.u32 %v685, 4294901760
      %1662 = vmatmul.mubr.f32.gmra.mrb[0].mxu0 %v1661
      %v1663 = vpop.f32.mrb[0].mxu0
      %v1664 = vadd.f32 %v957, %v1663
      %v1665 = vpop.f32.mrb[0].mxu0
      %1666 = vmatprep.mubr.f32.mxu0 0.0
      %v1667 = vand.u32 %v688, 4294901760
      %1668 = vmatmul.mubr.f32.gmra.mrb[0].mxu0 %v1667
      %v1669 = vpop.f32.mrb[0].mxu0
      %v1670 = vadd.f32 %v967, %v1669
      %v1671 = vpop.f32.mrb[0].mxu0
      %1672 = vmatprep.mubr.f32.mxu0 0.0
      %v1673 = vand.u32 %v691, 4294901760
      %1674 = vmatmul.mubr.f32.gmra.mrb[0].mxu0 %v1673
      %v1675 = vpop.f32.mrb[0].mxu0
      %v1676 = vadd.f32 %v977, %v1675
      %v1677 = vpop.f32.mrb[0].mxu0
      %1678 = vmatprep.mubr.f32.mxu0 0.0
      %v1679 = vand.u32 %v694, 4294901760
      %1680 = vmatmul.mubr.f32.gmra.mrb[0].mxu0 %v1679
      %v1681 = vpop.f32.mrb[0].mxu0
      %v1682 = vadd.f32 %v987, %v1681
      %v1683 = vpop.f32.mrb[0].mxu0
      %1684 = vmatprep.mubr.f32.mxu0 0.0
      %v1685 = vand.u32 %v697, 4294901760
      %1686 = vmatmul.mubr.f32.gmra.mrb[0].mxu0 %v1685
      %v1687 = vpop.f32.mrb[0].mxu0
      %v1688 = vadd.f32 %v997, %v1687
      %v1689 = vpop.f32.mrb[0].mxu0
      %1690 = vmatprep.mubr.f32.mxu0 0.0
      %v1691 = vand.u32 %v700, 4294901760
      %1692 = vmatmul.mubr.f32.gmra.mrb[0].mxu0 %v1691
      %v1693 = vpop.f32.mrb[0].mxu0
      %v1694 = vadd.f32 %v1007, %v1693
      %v1695 = vpop.f32.mrb[0].mxu0
      %1696 = vmatprep.mubr.f32.mxu0 0.0
      %v1697 = vand.u32 %v703, 4294901760
      %1698 = vmatmul.mubr.f32.gmra.mrb[0].mxu0 %v1697
      %v1699 = vpop.f32.mrb[0].mxu0
      %v1700 = vadd.f32 %v1017, %v1699
      %v1701 = vpop.f32.mrb[0].mxu0
      %1702 = vmatprep.mubr.f32.mxu0 0.0
      %v1703 = vand.u32 %v706, 4294901760
      %1704 = vmatmul.mubr.f32.gmra.mrb[0].mxu0 %v1703
      %v1705 = vpop.f32.mrb[0].mxu0
      %v1706 = vadd.f32 %v1027, %v1705
      %v1707 = vpop.f32.mrb[0].mxu0
      %1708 = vmatprep.mubr.f32.mxu0 0.0
      %v1709 = vand.u32 %v709, 4294901760
      %1710 = vmatmul.mubr.f32.gmra.mrb[0].mxu0 %v1709
      %v1711 = vpop.f32.mrb[0].mxu0
      %v1712 = vadd.f32 %v1037, %v1711
      %v1713 = vpop.f32.mrb[0].mxu0
      %1714 = vmatprep.mubr.f32.mxu0 0.0
      %v1715 = vand.u32 %v712, 4294901760
      %1716 = vmatmul.mubr.f32.gmra.mrb[0].mxu0 %v1715
      %v1717 = vpop.f32.mrb[0].mxu0
      %v1718 = vadd.f32 %v1047, %v1717
      %v1719 = vpop.f32.mrb[0].mxu0
      %1720 = vmatprep.mubr.f32.mxu0 0.0
      %v1721 = vand.u32 %v715, 4294901760
      %1722 = vmatmul.mubr.f32.gmra.mrb[0].mxu0 %v1721
      %v1723 = vpop.f32.mrb[0].mxu0
      %v1724 = vadd.f32 %v1057, %v1723
      %v1725 = vpop.f32.mrb[0].mxu0
      %1726 = vmatprep.mubr.f32.mxu0 0.0
      %v1727 = vand.u32 %v718, 4294901760
      %1728 = vmatmul.mubr.f32.gmra.mrb[0].mxu0 %v1727
      %v1729 = vpop.f32.mrb[0].mxu0
      %v1730 = vadd.f32 %v1067, %v1729
      %v1731 = vpop.f32.mrb[0].mxu0
      %1732 = vmatprep.mubr.f32.mxu0 0.0
      %v1733 = vand.u32 %v721, 4294901760
      %1734 = vmatmul.mubr.f32.gmra.mrb[0].mxu0 %v1733
      %v1735 = vpop.f32.mrb[0].mxu0
      %v1736 = vadd.f32 %v1077, %v1735
      %v1737 = vpop.f32.mrb[0].mxu0
      %1738 = vmatprep.mubr.f32.mxu0 0.0
      %v1739 = vand.u32 %v724, 4294901760
      %1740 = vmatmul.mubr.f32.gmra.mrb[0].mxu0 %v1739
      %v1741 = vpop.f32.mrb[0].mxu0
      %v1742 = vadd.f32 %v1087, %v1741
      %v1743 = vpop.f32.mrb[0].mxu0
      %1744 = vmatprep.mubr.f32.mxu0 0.0
      %v1745 = vand.u32 %v727, 4294901760
      %1746 = vmatmul.mubr.f32.gmra.mrb[0].mxu0 %v1745
      %v1747 = vpop.f32.mrb[0].mxu0
      %v1748 = vadd.f32 %v1097, %v1747
      %v1749 = vpop.f32.mrb[0].mxu0
      %1750 = vmatprep.mubr.f32.mxu0 0.0
      %v1751 = vand.u32 %v730, 4294901760
      %1752 = vmatmul.mubr.f32.gmra.mrb[0].mxu0 %v1751
      %v1753 = vpop.f32.mrb[0].mxu0
      %v1754 = vadd.f32 %v1107, %v1753
      %v1755 = vpop.f32.mrb[0].mxu0
      %1756 = vmatprep.mubr.f32.mxu0 0.0
      %v1757 = vand.u32 %v733, 4294901760
      %1758 = vmatmul.mubr.f32.gmra.mrb[0].mxu0 %v1757
      %v1759 = vpop.f32.mrb[0].mxu0
      %v1760 = vadd.f32 %v1117, %v1759
      %v1761 = vpop.f32.mrb[0].mxu0
      %1762 = vmatprep.mubr.f32.mxu0 0.0
      %v1763 = vand.u32 %v736, 4294901760
      %1764 = vmatmul.mubr.f32.gmra.mrb[0].mxu0 %v1763
      %v1765 = vpop.f32.mrb[0].mxu0
      %v1766 = vadd.f32 %v1127, %v1765
      %v1767 = vpop.f32.mrb[0].mxu0
      %1768 = vmatprep.mubr.f32.mxu0 0.0
      %v1769 = vand.u32 %v739, 4294901760
      %1770 = vmatmul.mubr.f32.gmra.mrb[0].mxu0 %v1769
      %v1771 = vpop.f32.mrb[0].mxu0
      %v1772 = vadd.f32 %v1137, %v1771
      %v1773 = vpop.f32.mrb[0].mxu0
      %1774 = vmatprep.mubr.f32.mxu0 0.0
      %v1775 = vand.u32 %v742, 4294901760
      %1776 = vmatmul.mubr.f32.gmra.mrb[0].mxu0 %v1775
      %v1777 = vpop.f32.mrb[0].mxu0
      %v1778 = vadd.f32 %v1147, %v1777
      %v1779 = vpop.f32.mrb[0].mxu0
      %1780 = vmatprep.mubr.f32.mxu0 0.0
      %v1781 = vand.u32 %v745, 4294901760
      %1782 = vmatmul.mubr.f32.gmra.mrb[0].mxu0 %v1781
      %v1783 = vpop.f32.mrb[0].mxu0
      %v1784 = vadd.f32 %v1157, %v1783
      %v1785 = vpop.f32.mrb[0].mxu0
      %1786 = vmatprep.mubr.f32.mxu0 0.0
      %v1787 = vand.u32 %v748, 4294901760
      %1788 = vmatmul.mubr.f32.gmra.mrb[0].mxu0 %v1787
      %v1789 = vpop.f32.mrb[0].mxu0
      %v1790 = vadd.f32 %v1167, %v1789
      %v1791 = vpop.f32.mrb[0].mxu0
      %1792 = vmatprep.mubr.f32.mxu0 0.0
      %v1793 = vand.u32 %v751, 4294901760
      %1794 = vmatmul.mubr.f32.gmra.mrb[0].mxu0 %v1793
      %v1795 = vpop.f32.mrb[0].mxu0
      %v1796 = vadd.f32 %v1177, %v1795
      %v1797 = vpop.f32.mrb[0].mxu0
      %1798 = vmatprep.mubr.f32.mxu0 0.0
      %v1799 = vand.u32 %v754, 4294901760
      %1800 = vmatmul.mubr.f32.gmra.mrb[0].mxu0 %v1799
      %v1801 = vpop.f32.mrb[0].mxu0
      %v1802 = vadd.f32 %v1187, %v1801
      %v1803 = vpop.f32.mrb[0].mxu0
      %1804 = vmatprep.mubr.f32.mxu0 0.0
      %v1805 = vand.u32 %v757, 4294901760
      %1806 = vmatmul.mubr.f32.gmra.mrb[0].mxu0 %v1805
      %v1807 = vpop.f32.mrb[0].mxu0
      %v1808 = vadd.f32 %v1197, %v1807
      %v1809 = vpop.f32.mrb[0].mxu0
      %1810 = vmatprep.mubr.f32.mxu0 0.0
      %v1811 = vand.u32 %v760, 4294901760
      %1812 = vmatmul.mubr.f32.gmra.mrb[0].mxu0 %v1811
      %v1813 = vpop.f32.mrb[0].mxu0
      %v1814 = vadd.f32 %v1207, %v1813
      %v1815 = vpop.f32.mrb[0].mxu0
      %1816 = vmatprep.mubr.f32.mxu0 0.0
      %v1817 = vand.u32 %v763, 4294901760
      %1818 = vmatmul.mubr.f32.gmra.mrb[0].mxu0 %v1817
      %v1819 = vpop.f32.mrb[0].mxu0
      %v1820 = vadd.f32 %v1217, %v1819
      %v1821 = vpop.f32.mrb[0].mxu0
      %1822 = vmatprep.mubr.f32.mxu0 0.0
      %v1823 = vand.u32 %v766, 4294901760
      %1824 = vmatmul.mubr.f32.gmra.mrb[0].mxu0 %v1823
      %v1825 = vpop.f32.mrb[0].mxu0
      %v1826 = vadd.f32 %v1227, %v1825
      %v1827 = vpop.f32.mrb[0].mxu0
      %1828 = vmatprep.mubr.f32.mxu0 0.0
      %v1829 = vand.u32 %v769, 4294901760
      %1830 = vmatmul.mubr.f32.gmra.mrb[0].mxu0 %v1829
      %v1831 = vpop.f32.mrb[0].mxu0
      %v1832 = vadd.f32 %v1237, %v1831
      %v1833 = vpop.f32.mrb[0].mxu0
      %1834 = vmatprep.mubr.f32.mxu0 0.0
      %v1835 = vand.u32 %v772, 4294901760
      %1836 = vmatmul.mubr.f32.gmra.mrb[0].mxu0 %v1835
      %v1837 = vpop.f32.mrb[0].mxu0
      %v1838 = vadd.f32 %v1247, %v1837
      %v1839 = vpop.f32.mrb[0].mxu0
      %1840 = vmatprep.mubr.f32.mxu0 0.0
      %v1841 = vand.u32 %v775, 4294901760
      %1842 = vmatmul.mubr.f32.gmra.mrb[0].mxu0 %v1841
      %v1843 = vpop.f32.mrb[0].mxu0
      %v1844 = vadd.f32 %v1257, %v1843
      %v1845 = vpop.f32.mrb[0].mxu0
      %1846 = vmatprep.mubr.f32.mxu0 0.0
      %v1847 = vand.u32 %v778, 4294901760
      %1848 = vmatmul.mubr.f32.gmra.mrb[0].mxu0 %v1847
      %v1849 = vpop.f32.mrb[0].mxu0
      %v1850 = vadd.f32 %v1267, %v1849
      %v1851 = vpop.f32.mrb[0].mxu0
      %1852 = vmatprep.mubr.f32.mxu0 0.0
      %v1853 = vand.u32 %v781, 4294901760
      %1854 = vmatmul.mubr.f32.gmra.mrb[0].mxu0 %v1853
      %v1855 = vpop.f32.mrb[0].mxu0
      %v1856 = vadd.f32 %v1277, %v1855
      %v1857 = vpop.f32.mrb[0].mxu0
      %1858 = vmatprep.mubr.f32.mxu0 0.0
      %v1859 = vand.u32 %v784, 4294901760
      %1860 = vmatmul.mubr.f32.gmra.mrb[0].mxu0 %v1859
      %v1861 = vpop.f32.mrb[0].mxu0
      %v1862 = vadd.f32 %v1287, %v1861
      %v1863 = vpop.f32.mrb[0].mxu0
      %1864 = vmatprep.mubr.f32.mxu0 0.0
      %v1865 = vand.u32 %v787, 4294901760
      %1866 = vmatmul.mubr.f32.gmra.mrb[0].mxu0 %v1865
      %v1867 = vpop.f32.mrb[0].mxu0
      %v1868 = vadd.f32 %v1297, %v1867
      %v1869 = vpop.f32.mrb[0].mxu0
      %1870 = vmatprep.mubr.f32.mxu0 0.0
      %v1871 = vand.u32 %v790, 4294901760
      %1872 = vmatmul.mubr.f32.gmra.mrb[0].mxu0 %v1871
      %v1873 = vpop.f32.mrb[0].mxu0
      %v1874 = vadd.f32 %v1307, %v1873
      %v1875 = vpop.f32.mrb[0].mxu0
      %1876 = vmatprep.mubr.f32.mxu0 0.0
      %v1877 = vand.u32 %v793, 4294901760
      %1878 = vmatmul.mubr.f32.gmra.mrb[0].mxu0 %v1877
      %v1879 = vpop.f32.mrb[0].mxu0
      %v1880 = vadd.f32 %v1317, %v1879
      %v1881 = vpop.f32.mrb[0].mxu0
      %1882 = vmatprep.mubr.f32.mxu0 0.0
      %v1883 = vand.u32 %v796, 4294901760
      %1884 = vmatmul.mubr.f32.gmra.mrb[0].mxu0 %v1883
      %v1885 = vpop.f32.mrb[0].mxu0
      %v1886 = vadd.f32 %v1327, %v1885
      %v1887 = vpop.f32.mrb[0].mxu0
      %1888 = vmatprep.mubr.f32.mxu0 0.0
      %v1889 = vand.u32 %v799, 4294901760
      %1890 = vmatmul.mubr.f32.gmra.mrb[0].mxu0 %v1889
      %v1891 = vpop.f32.mrb[0].mxu0
      %v1892 = vadd.f32 %v1337, %v1891
      %v1893 = vpop.f32.mrb[0].mxu0
      %1894 = vmatprep.mubr.f32.mxu0 0.0
      %v1895 = vand.u32 %v802, 4294901760
      %1896 = vmatmul.mubr.f32.gmra.mrb[0].mxu0 %v1895
      %v1897 = vpop.f32.mrb[0].mxu0
      %v1898 = vadd.f32 %v1347, %v1897
      %v1899 = vpop.f32.mrb[0].mxu0
      %1900 = vmatprep.mubr.f32.mxu0 0.0
      %v1901 = vand.u32 %v805, 4294901760
      %1902 = vmatmul.mubr.f32.gmra.mrb[0].mxu0 %v1901
      %v1903 = vpop.f32.mrb[0].mxu0
      %v1904 = vadd.f32 %v1357, %v1903
      %v1905 = vpop.f32.mrb[0].mxu0
      %1906 = vmatprep.mubr.f32.mxu0 0.0
      %v1907 = vand.u32 %v808, 4294901760
      %1908 = vmatmul.mubr.f32.gmra.mrb[0].mxu0 %v1907
      %v1909 = vpop.f32.mrb[0].mxu0
      %v1910 = vadd.f32 %v1367, %v1909
      %v1911 = vpop.f32.mrb[0].mxu0
      %1912 = vmatprep.mubr.f32.mxu0 0.0
      %v1913 = vand.u32 %v811, 4294901760
      %1914 = vmatmul.mubr.f32.gmra.mrb[0].mxu0 %v1913
      %v1915 = vpop.f32.mrb[0].mxu0
      %v1916 = vadd.f32 %v1377, %v1915
      %v1917 = vpop.f32.mrb[0].mxu0
      %1918 = vmatprep.mubr.f32.mxu0 0.0
      %v1919 = vand.u32 %v814, 4294901760
      %1920 = vmatmul.mubr.f32.gmra.mrb[0].mxu0 %v1919
      %v1921 = vpop.f32.mrb[0].mxu0
      %v1922 = vadd.f32 %v1387, %v1921
      %v1923 = vpop.f32.mrb[0].mxu0
      %1924 = vmatprep.mubr.f32.mxu0 0.0
      %v1925 = vand.u32 %v817, 4294901760
      %1926 = vmatmul.mubr.f32.gmra.mrb[0].mxu0 %v1925
      %v1927 = vpop.f32.mrb[0].mxu0
      %v1928 = vadd.f32 %v1397, %v1927
      %v1929 = vpop.f32.mrb[0].mxu0
      %1930 = vmatprep.mubr.f32.mxu0 0.0
      %v1931 = vand.u32 %v820, 4294901760
      %1932 = vmatmul.mubr.f32.gmra.mrb[0].mxu0 %v1931
      %v1933 = vpop.f32.mrb[0].mxu0
      %v1934 = vadd.f32 %v1407, %v1933
      %v1935 = vpop.f32.mrb[0].mxu0
      %1936 = vmatprep.mubr.f32.mxu0 0.0
      %v1937 = vand.u32 %v823, 4294901760
      %1938 = vmatmul.mubr.f32.gmra.mrb[0].mxu0 %v1937
      %v1939 = vpop.f32.mrb[0].mxu0
      %v1940 = vadd.f32 %v1417, %v1939
      %v1941 = vpop.f32.mrb[0].mxu0
      %1942 = vmatprep.mubr.f32.mxu0 0.0
      %v1943 = vand.u32 %v826, 4294901760
      %1944 = vmatmul.mubr.f32.gmra.mrb[0].mxu0 %v1943
      %v1945 = vpop.f32.mrb[0].mxu0
      %v1946 = vadd.f32 %v1427, %v1945
      %v1947 = vpop.f32.mrb[0].mxu0
      %1948 = vmatprep.mubr.f32.mxu0 0.0
      %v1949 = vand.u32 %v829, 4294901760
      %1950 = vmatmul.mubr.f32.gmra.mrb[0].mxu0 %v1949
      %v1951 = vpop.f32.mrb[0].mxu0
      %v1952 = vadd.f32 %v1437, %v1951
      %v1953 = vpop.f32.mrb[0].mxu0
      %1954 = vmatprep.mubr.f32.mxu0 0.0
      %v1955 = vand.u32 %v832, 4294901760
      %1956 = vmatmul.mubr.f32.gmra.mrb[0].mxu0 %v1955
      %v1957 = vpop.f32.mrb[0].mxu0
      %v1958 = vadd.f32 %v1447, %v1957
      %v1959 = vpop.f32.mrb[0].mxu0
      %1960 = vmatprep.mubr.f32.mxu0 0.0
      %v1961 = vand.u32 %v835, 4294901760
      %1962 = vmatmul.mubr.f32.gmra.mrb[0].mxu0 %v1961
      %v1963 = vpop.f32.mrb[0].mxu0
      %v1964 = vadd.f32 %v1457, %v1963
      %v1965 = vpop.f32.mrb[0].mxu0
      %1966 = vmatprep.mubr.f32.mxu0 0.0
      %v1967 = vand.u32 %v838, 4294901760
      %1968 = vmatmul.mubr.f32.gmra.mrb[0].mxu0 %v1967
      %v1969 = vpop.f32.mrb[0].mxu0
      %v1970 = vadd.f32 %v1467, %v1969
      %v1971 = vpop.f32.mrb[0].mxu0
      %1972 = vmatprep.mubr.f32.mxu0 0.0
      %v1973 = vand.u32 %v841, 4294901760
      %1974 = vmatmul.mubr.f32.gmra.mrb[0].mxu0 %v1973
      %v1975 = vpop.f32.mrb[0].mxu0
      %v1976 = vadd.f32 %v1477, %v1975
      %v1977 = vpop.f32.mrb[0].mxu0
      %1978 = vmatprep.mubr.f32.mxu0 0.0
      %v1979 = vand.u32 %v844, 4294901760
      %1980 = vmatmul.mubr.f32.gmra.mrb[0].mxu0 %v1979
      %v1981 = vpop.f32.mrb[0].mxu0
      %v1982 = vadd.f32 %v1487, %v1981
      %v1983 = vpop.f32.mrb[0].mxu0
      %1984 = vmatprep.mubr.f32.mxu0 0.0
      %v1985 = vand.u32 %v847, 4294901760
      %1986 = vmatmul.mubr.f32.gmra.mrb[0].mxu0 %v1985
      %v1987 = vpop.f32.mrb[0].mxu0
      %v1988 = vadd.f32 %v1497, %v1987
      %v1989 = vpop.f32.mrb[0].mxu0
      %1990 = vmatprep.mubr.f32.mxu0 0.0
      %v1991 = vand.u32 %v850, 4294901760
      %1992 = vmatmul.mubr.f32.gmra.mrb[0].mxu0 %v1991
      %v1993 = vpop.f32.mrb[0].mxu0
      %v1994 = vadd.f32 %v1507, %v1993
      %v1995 = vpop.f32.mrb[0].mxu0
      %1996 = vmatprep.mubr.f32.mxu0 0.0
      %v1997 = vand.u32 %v853, 4294901760
      %1998 = vmatmul.mubr.f32.gmra.mrb[0].mxu0 %v1997
      %v1999 = vpop.f32.mrb[0].mxu0
      %v2000 = vadd.f32 %v1517, %v1999
      %v2001 = vpop.f32.mrb[0].mxu0
      %2002 = vmatprep.mubr.f32.mxu0 0.0
      %v2003 = vand.u32 %v856, 4294901760
      %2004 = vmatmul.mubr.f32.gmra.mrb[0].mxu0 %v2003
      %v2005 = vpop.f32.mrb[0].mxu0
      %v2006 = vadd.f32 %v1527, %v2005
      %v2007 = vpop.f32.mrb[0].mxu0
      %2008 = vmatprep.mubr.f32.mxu0 0.0
      %v2009 = vand.u32 %v859, 4294901760
      %2010 = vmatmul.mubr.f32.gmra.mrb[0].mxu0 %v2009
      %v2011 = vpop.f32.mrb[0].mxu0
      %v2012 = vadd.f32 %v1537, %v2011
      %v2013 = vpop.f32.mrb[0].mxu0
      %2014 = vmatprep.mubr.f32.mxu0 0.0
      %v2015 = vand.u32 %v862, 4294901760
      %2016 = vmatmul.mubr.f32.gmra.mrb[0].mxu0 %v2015
      %v2017 = vpop.f32.mrb[0].mxu0
      %v2018 = vadd.f32 %v1547, %v2017
      %v2019 = vpop.f32.mrb[0].mxu0
      %2020 = vmatprep.mubr.f32.mxu0 0.0
      %v2021 = vand.u32 %v865, 4294901760
      %2022 = vmatmul.mubr.f32.gmra.mrb[0].mxu0 %v2021
      %v2023 = vpop.f32.mrb[0].mxu0
      %v2024 = vadd.f32 %v1557, %v2023
      %v2025 = vpop.f32.mrb[0].mxu0
      %2026 = vmatprep.mubr.f32.mxu0 0.0
      %v2027 = vand.u32 %v868, 4294901760
      %2028 = vmatmul.mubr.f32.gmra.mrb[0].mxu0 %v2027
      %v2029 = vpop.f32.mrb[0].mxu0
      %v2030 = vadd.f32 %v1567, %v2029
      %v2031 = vpop.f32.mrb[0].mxu0
      %2032 = vmatprep.mubr.f32.mxu0 0.0
      %v2033 = vand.u32 %v871, 4294901760
      %2034 = vmatmul.mubr.f32.gmra.mrb[0].mxu0 %v2033
      %v2035 = vpop.f32.mrb[0].mxu0
      %v2036 = vadd.f32 %v1577, %v2035
      %v2037 = vpop.f32.mrb[0].mxu0
      %2038 = vdwg.mxu0
      %2039 = vmatprep.subr.mxu0 0.0
      %v2040 = vand.u32 %v678, 4294901760
      %v2041 = vsub.f32 %v678, %v2040
      %2042 = vmatpush1.msra.mxu0 %v2041
      %2043 = vmatprep.subr.mxu0 0.0
      %v2044 = vand.u32 %v679, 4294901760
      %v2045 = vsub.f32 %v679, %v2044
      %2046 = vmatpush1.msra.mxu0 %v2045
      %2047 = vmatprep.subr.mxu0 0.0
      %2048 = vmatpush1.msra.mxu0 0.0
      %2049 = vmatprep.subr.mxu0 0.0
      %2050 = vmatpush1.msra.mxu0 0.0
      %2051 = vmatprep.subr.mxu0 0.0
      %2052 = vmatpush1.msra.mxu0 0.0
      %2053 = vmatprep.subr.mxu0 0.0
      %2054 = vmatpush1.msra.mxu0 0.0
      %2055 = vmatprep.subr.mxu0 0.0
      %2056 = vmatpush1.msra.mxu0 0.0
      %2057 = vmatprep.subr.mxu0 0.0
      %2058 = vmatpush1.msra.mxu0 0.0
      %2059 = vmatprep.subr.mxu0 0.0
      %2060 = vmatpush1.msra.mxu0 0.0
      %2061 = vmatprep.subr.mxu0 0.0
      %2062 = vmatpush1.msra.mxu0 0.0
      %2063 = vmatprep.subr.mxu0 0.0
      %2064 = vmatpush1.msra.mxu0 0.0
      %2065 = vmatprep.subr.mxu0 0.0
      %2066 = vmatpush1.msra.mxu0 0.0
      %2067 = vmatprep.subr.mxu0 0.0
      %2068 = vmatpush1.msra.mxu0 0.0
      %2069 = vmatprep.subr.mxu0 0.0
      %2070 = vmatpush1.msra.mxu0 0.0
      %2071 = vmatprep.subr.mxu0 0.0
      %2072 = vmatpush1.msra.mxu0 0.0
      %2073 = vmatprep.subr.mxu0 0.0
      %2074 = vmatpush1.msra.mxu0 0.0
      %2075 = vmatprep.subr.mxu0 0.0
      %2076 = vmatpush1.msra.mxu0 0.0
      %2077 = vmatprep.subr.mxu0 0.0
      %2078 = vmatpush1.msra.mxu0 0.0
      %2079 = vmatprep.subr.mxu0 0.0
      %2080 = vmatpush1.msra.mxu0 0.0
      %2081 = vmatprep.subr.mxu0 0.0
      %2082 = vmatpush1.msra.mxu0 0.0
      %2083 = vmatprep.subr.mxu0 0.0
      %2084 = vmatpush1.msra.mxu0 0.0
      %2085 = vmatprep.subr.mxu0 0.0
      %2086 = vmatpush1.msra.mxu0 0.0
      %2087 = vmatprep.subr.mxu0 0.0
      %2088 = vmatpush1.msra.mxu0 0.0
      %2089 = vmatprep.subr.mxu0 0.0
      %2090 = vmatpush1.msra.mxu0 0.0
      %2091 = vmatprep.subr.mxu0 0.0
      %2092 = vmatpush1.msra.mxu0 0.0
      %2093 = vmatprep.subr.mxu0 0.0
      %2094 = vmatpush1.msra.mxu0 0.0
      %2095 = vmatprep.subr.mxu0 0.0
      %2096 = vmatpush1.msra.mxu0 0.0
      %2097 = vmatprep.subr.mxu0 0.0
      %2098 = vmatpush1.msra.mxu0 0.0
      %2099 = vmatprep.subr.mxu0 0.0
      %2100 = vmatpush1.msra.mxu0 0.0
      %2101 = vmatprep.subr.mxu0 0.0
      %2102 = vmatpush1.msra.mxu0 0.0
      %2103 = vmatprep.subr.mxu0 0.0
      %2104 = vmatpush1.msra.mxu0 0.0
      %2105 = vmatprep.subr.mxu0 0.0
      %2106 = vmatpush1.msra.mxu0 0.0
      %2107 = vmatprep.mubr.f32.mxu0 0.0
      %v2108 = vand.u32 %v682, 4294901760
      %v2109 = vsub.f32 %v682, %v2108
      %2110 = vmatmul.mubr.f32.gmra.mrb[0].mxu0 %v2109
      %v2111 = vpop.f32.mrb[0].mxu0
      %v2112 = vadd.f32 %v1658, %v2111
      %v2113 = vpop.f32.mrb[0].mxu0
      %2114 = vmatprep.mubr.f32.mxu0 0.0
      %v2115 = vand.u32 %v685, 4294901760
      %v2116 = vsub.f32 %v685, %v2115
      %2117 = vmatmul.mubr.f32.gmra.mrb[0].mxu0 %v2116
      %v2118 = vpop.f32.mrb[0].mxu0
      %v2119 = vadd.f32 %v1664, %v2118
      %v2120 = vpop.f32.mrb[0].mxu0
      %2121 = vmatprep.mubr.f32.mxu0 0.0
      %v2122 = vand.u32 %v688, 4294901760
      %v2123 = vsub.f32 %v688, %v2122
      %2124 = vmatmul.mubr.f32.gmra.mrb[0].mxu0 %v2123
      %v2125 = vpop.f32.mrb[0].mxu0
      %v2126 = vadd.f32 %v1670, %v2125
      %v2127 = vpop.f32.mrb[0].mxu0
      %2128 = vmatprep.mubr.f32.mxu0 0.0
      %v2129 = vand.u32 %v691, 4294901760
      %v2130 = vsub.f32 %v691, %v2129
      %2131 = vmatmul.mubr.f32.gmra.mrb[0].mxu0 %v2130
      %v2132 = vpop.f32.mrb[0].mxu0
      %v2133 = vadd.f32 %v1676, %v2132
      %v2134 = vpop.f32.mrb[0].mxu0
      %2135 = vmatprep.mubr.f32.mxu0 0.0
      %v2136 = vand.u32 %v694, 4294901760
      %v2137 = vsub.f32 %v694, %v2136
      %2138 = vmatmul.mubr.f32.gmra.mrb[0].mxu0 %v2137
      %v2139 = vpop.f32.mrb[0].mxu0
      %v2140 = vadd.f32 %v1682, %v2139
      %v2141 = vpop.f32.mrb[0].mxu0
      %2142 = vmatprep.mubr.f32.mxu0 0.0
      %v2143 = vand.u32 %v697, 4294901760
      %v2144 = vsub.f32 %v697, %v2143
      %2145 = vmatmul.mubr.f32.gmra.mrb[0].mxu0 %v2144
      %v2146 = vpop.f32.mrb[0].mxu0
      %v2147 = vadd.f32 %v1688, %v2146
      %v2148 = vpop.f32.mrb[0].mxu0
      %2149 = vmatprep.mubr.f32.mxu0 0.0
      %v2150 = vand.u32 %v700, 4294901760
      %v2151 = vsub.f32 %v700, %v2150
      %2152 = vmatmul.mubr.f32.gmra.mrb[0].mxu0 %v2151
      %v2153 = vpop.f32.mrb[0].mxu0
      %v2154 = vadd.f32 %v1694, %v2153
      %v2155 = vpop.f32.mrb[0].mxu0
      %2156 = vmatprep.mubr.f32.mxu0 0.0
      %v2157 = vand.u32 %v703, 4294901760
      %v2158 = vsub.f32 %v703, %v2157
      %2159 = vmatmul.mubr.f32.gmra.mrb[0].mxu0 %v2158
      %v2160 = vpop.f32.mrb[0].mxu0
      %v2161 = vadd.f32 %v1700, %v2160
      %v2162 = vpop.f32.mrb[0].mxu0
      %2163 = vmatprep.mubr.f32.mxu0 0.0
      %v2164 = vand.u32 %v706, 4294901760
      %v2165 = vsub.f32 %v706, %v2164
      %2166 = vmatmul.mubr.f32.gmra.mrb[0].mxu0 %v2165
      %v2167 = vpop.f32.mrb[0].mxu0
      %v2168 = vadd.f32 %v1706, %v2167
      %v2169 = vpop.f32.mrb[0].mxu0
      %2170 = vmatprep.mubr.f32.mxu0 0.0
      %v2171 = vand.u32 %v709, 4294901760
      %v2172 = vsub.f32 %v709, %v2171
      %2173 = vmatmul.mubr.f32.gmra.mrb[0].mxu0 %v2172
      %v2174 = vpop.f32.mrb[0].mxu0
      %v2175 = vadd.f32 %v1712, %v2174
      %v2176 = vpop.f32.mrb[0].mxu0
      %2177 = vmatprep.mubr.f32.mxu0 0.0
      %v2178 = vand.u32 %v712, 4294901760
      %v2179 = vsub.f32 %v712, %v2178
      %2180 = vmatmul.mubr.f32.gmra.mrb[0].mxu0 %v2179
      %v2181 = vpop.f32.mrb[0].mxu0
      %v2182 = vadd.f32 %v1718, %v2181
      %v2183 = vpop.f32.mrb[0].mxu0
      %2184 = vmatprep.mubr.f32.mxu0 0.0
      %v2185 = vand.u32 %v715, 4294901760
      %v2186 = vsub.f32 %v715, %v2185
      %2187 = vmatmul.mubr.f32.gmra.mrb[0].mxu0 %v2186
      %v2188 = vpop.f32.mrb[0].mxu0
      %v2189 = vadd.f32 %v1724, %v2188
      %v2190 = vpop.f32.mrb[0].mxu0
      %2191 = vmatprep.mubr.f32.mxu0 0.0
      %v2192 = vand.u32 %v718, 4294901760
      %v2193 = vsub.f32 %v718, %v2192
      %2194 = vmatmul.mubr.f32.gmra.mrb[0].mxu0 %v2193
      %v2195 = vpop.f32.mrb[0].mxu0
      %v2196 = vadd.f32 %v1730, %v2195
      %v2197 = vpop.f32.mrb[0].mxu0
      %2198 = vmatprep.mubr.f32.mxu0 0.0
      %v2199 = vand.u32 %v721, 4294901760
      %v2200 = vsub.f32 %v721, %v2199
      %2201 = vmatmul.mubr.f32.gmra.mrb[0].mxu0 %v2200
      %v2202 = vpop.f32.mrb[0].mxu0
      %v2203 = vadd.f32 %v1736, %v2202
      %v2204 = vpop.f32.mrb[0].mxu0
      %2205 = vmatprep.mubr.f32.mxu0 0.0
      %v2206 = vand.u32 %v724, 4294901760
      %v2207 = vsub.f32 %v724, %v2206
      %2208 = vmatmul.mubr.f32.gmra.mrb[0].mxu0 %v2207
      %v2209 = vpop.f32.mrb[0].mxu0
      %v2210 = vadd.f32 %v1742, %v2209
      %v2211 = vpop.f32.mrb[0].mxu0
      %2212 = vmatprep.mubr.f32.mxu0 0.0
      %v2213 = vand.u32 %v727, 4294901760
      %v2214 = vsub.f32 %v727, %v2213
      %2215 = vmatmul.mubr.f32.gmra.mrb[0].mxu0 %v2214
      %v2216 = vpop.f32.mrb[0].mxu0
      %v2217 = vadd.f32 %v1748, %v2216
      %v2218 = vpop.f32.mrb[0].mxu0
      %2219 = vmatprep.mubr.f32.mxu0 0.0
      %v2220 = vand.u32 %v730, 4294901760
      %v2221 = vsub.f32 %v730, %v2220
      %2222 = vmatmul.mubr.f32.gmra.mrb[0].mxu0 %v2221
      %v2223 = vpop.f32.mrb[0].mxu0
      %v2224 = vadd.f32 %v1754, %v2223
      %v2225 = vpop.f32.mrb[0].mxu0
      %2226 = vmatprep.mubr.f32.mxu0 0.0
      %v2227 = vand.u32 %v733, 4294901760
      %v2228 = vsub.f32 %v733, %v2227
      %2229 = vmatmul.mubr.f32.gmra.mrb[0].mxu0 %v2228
      %v2230 = vpop.f32.mrb[0].mxu0
      %v2231 = vadd.f32 %v1760, %v2230
      %v2232 = vpop.f32.mrb[0].mxu0
      %2233 = vmatprep.mubr.f32.mxu0 0.0
      %v2234 = vand.u32 %v736, 4294901760
      %v2235 = vsub.f32 %v736, %v2234
      %2236 = vmatmul.mubr.f32.gmra.mrb[0].mxu0 %v2235
      %v2237 = vpop.f32.mrb[0].mxu0
      %v2238 = vadd.f32 %v1766, %v2237
      %v2239 = vpop.f32.mrb[0].mxu0
      %2240 = vmatprep.mubr.f32.mxu0 0.0
      %v2241 = vand.u32 %v739, 4294901760
      %v2242 = vsub.f32 %v739, %v2241
      %2243 = vmatmul.mubr.f32.gmra.mrb[0].mxu0 %v2242
      %v2244 = vpop.f32.mrb[0].mxu0
      %v2245 = vadd.f32 %v1772, %v2244
      %v2246 = vpop.f32.mrb[0].mxu0
      %2247 = vmatprep.mubr.f32.mxu0 0.0
      %v2248 = vand.u32 %v742, 4294901760
      %v2249 = vsub.f32 %v742, %v2248
      %2250 = vmatmul.mubr.f32.gmra.mrb[0].mxu0 %v2249
      %v2251 = vpop.f32.mrb[0].mxu0
      %v2252 = vadd.f32 %v1778, %v2251
      %v2253 = vpop.f32.mrb[0].mxu0
      %2254 = vmatprep.mubr.f32.mxu0 0.0
      %v2255 = vand.u32 %v745, 4294901760
      %v2256 = vsub.f32 %v745, %v2255
      %2257 = vmatmul.mubr.f32.gmra.mrb[0].mxu0 %v2256
      %v2258 = vpop.f32.mrb[0].mxu0
      %v2259 = vadd.f32 %v1784, %v2258
      %v2260 = vpop.f32.mrb[0].mxu0
      %2261 = vmatprep.mubr.f32.mxu0 0.0
      %v2262 = vand.u32 %v748, 4294901760
      %v2263 = vsub.f32 %v748, %v2262
      %2264 = vmatmul.mubr.f32.gmra.mrb[0].mxu0 %v2263
      %v2265 = vpop.f32.mrb[0].mxu0
      %v2266 = vadd.f32 %v1790, %v2265
      %v2267 = vpop.f32.mrb[0].mxu0
      %2268 = vmatprep.mubr.f32.mxu0 0.0
      %v2269 = vand.u32 %v751, 4294901760
      %v2270 = vsub.f32 %v751, %v2269
      %2271 = vmatmul.mubr.f32.gmra.mrb[0].mxu0 %v2270
      %v2272 = vpop.f32.mrb[0].mxu0
      %v2273 = vadd.f32 %v1796, %v2272
      %v2274 = vpop.f32.mrb[0].mxu0
      %2275 = vmatprep.mubr.f32.mxu0 0.0
      %v2276 = vand.u32 %v754, 4294901760
      %v2277 = vsub.f32 %v754, %v2276
      %2278 = vmatmul.mubr.f32.gmra.mrb[0].mxu0 %v2277
      %v2279 = vpop.f32.mrb[0].mxu0
      %v2280 = vadd.f32 %v1802, %v2279
      %v2281 = vpop.f32.mrb[0].mxu0
      %2282 = vmatprep.mubr.f32.mxu0 0.0
      %v2283 = vand.u32 %v757, 4294901760
      %v2284 = vsub.f32 %v757, %v2283
      %2285 = vmatmul.mubr.f32.gmra.mrb[0].mxu0 %v2284
      %v2286 = vpop.f32.mrb[0].mxu0
      %v2287 = vadd.f32 %v1808, %v2286
      %v2288 = vpop.f32.mrb[0].mxu0
      %2289 = vmatprep.mubr.f32.mxu0 0.0
      %v2290 = vand.u32 %v760, 4294901760
      %v2291 = vsub.f32 %v760, %v2290
      %2292 = vmatmul.mubr.f32.gmra.mrb[0].mxu0 %v2291
      %v2293 = vpop.f32.mrb[0].mxu0
      %v2294 = vadd.f32 %v1814, %v2293
      %v2295 = vpop.f32.mrb[0].mxu0
      %2296 = vmatprep.mubr.f32.mxu0 0.0
      %v2297 = vand.u32 %v763, 4294901760
      %v2298 = vsub.f32 %v763, %v2297
      %2299 = vmatmul.mubr.f32.gmra.mrb[0].mxu0 %v2298
      %v2300 = vpop.f32.mrb[0].mxu0
      %v2301 = vadd.f32 %v1820, %v2300
      %v2302 = vpop.f32.mrb[0].mxu0
      %2303 = vmatprep.mubr.f32.mxu0 0.0
      %v2304 = vand.u32 %v766, 4294901760
      %v2305 = vsub.f32 %v766, %v2304
      %2306 = vmatmul.mubr.f32.gmra.mrb[0].mxu0 %v2305
      %v2307 = vpop.f32.mrb[0].mxu0
      %v2308 = vadd.f32 %v1826, %v2307
      %v2309 = vpop.f32.mrb[0].mxu0
      %2310 = vmatprep.mubr.f32.mxu0 0.0
      %v2311 = vand.u32 %v769, 4294901760
      %v2312 = vsub.f32 %v769, %v2311
      %2313 = vmatmul.mubr.f32.gmra.mrb[0].mxu0 %v2312
      %v2314 = vpop.f32.mrb[0].mxu0
      %v2315 = vadd.f32 %v1832, %v2314
      %v2316 = vpop.f32.mrb[0].mxu0
      %2317 = vmatprep.mubr.f32.mxu0 0.0
      %v2318 = vand.u32 %v772, 4294901760
      %v2319 = vsub.f32 %v772, %v2318
      %2320 = vmatmul.mubr.f32.gmra.mrb[0].mxu0 %v2319
      %v2321 = vpop.f32.mrb[0].mxu0
      %v2322 = vadd.f32 %v1838, %v2321
      %v2323 = vpop.f32.mrb[0].mxu0
      %2324 = vmatprep.mubr.f32.mxu0 0.0
      %v2325 = vand.u32 %v775, 4294901760
      %v2326 = vsub.f32 %v775, %v2325
      %2327 = vmatmul.mubr.f32.gmra.mrb[0].mxu0 %v2326
      %v2328 = vpop.f32.mrb[0].mxu0
      %v2329 = vadd.f32 %v1844, %v2328
      %v2330 = vpop.f32.mrb[0].mxu0
      %2331 = vmatprep.mubr.f32.mxu0 0.0
      %v2332 = vand.u32 %v778, 4294901760
      %v2333 = vsub.f32 %v778, %v2332
      %2334 = vmatmul.mubr.f32.gmra.mrb[0].mxu0 %v2333
      %v2335 = vpop.f32.mrb[0].mxu0
      %v2336 = vadd.f32 %v1850, %v2335
      %v2337 = vpop.f32.mrb[0].mxu0
      %2338 = vmatprep.mubr.f32.mxu0 0.0
      %v2339 = vand.u32 %v781, 4294901760
      %v2340 = vsub.f32 %v781, %v2339
      %2341 = vmatmul.mubr.f32.gmra.mrb[0].mxu0 %v2340
      %v2342 = vpop.f32.mrb[0].mxu0
      %v2343 = vadd.f32 %v1856, %v2342
      %v2344 = vpop.f32.mrb[0].mxu0
      %2345 = vmatprep.mubr.f32.mxu0 0.0
      %v2346 = vand.u32 %v784, 4294901760
      %v2347 = vsub.f32 %v784, %v2346
      %2348 = vmatmul.mubr.f32.gmra.mrb[0].mxu0 %v2347
      %v2349 = vpop.f32.mrb[0].mxu0
      %v2350 = vadd.f32 %v1862, %v2349
      %v2351 = vpop.f32.mrb[0].mxu0
      %2352 = vmatprep.mubr.f32.mxu0 0.0
      %v2353 = vand.u32 %v787, 4294901760
      %v2354 = vsub.f32 %v787, %v2353
      %2355 = vmatmul.mubr.f32.gmra.mrb[0].mxu0 %v2354
      %v2356 = vpop.f32.mrb[0].mxu0
      %v2357 = vadd.f32 %v1868, %v2356
      %v2358 = vpop.f32.mrb[0].mxu0
      %2359 = vmatprep.mubr.f32.mxu0 0.0
      %v2360 = vand.u32 %v790, 4294901760
      %v2361 = vsub.f32 %v790, %v2360
      %2362 = vmatmul.mubr.f32.gmra.mrb[0].mxu0 %v2361
      %v2363 = vpop.f32.mrb[0].mxu0
      %v2364 = vadd.f32 %v1874, %v2363
      %v2365 = vpop.f32.mrb[0].mxu0
      %2366 = vmatprep.mubr.f32.mxu0 0.0
      %v2367 = vand.u32 %v793, 4294901760
      %v2368 = vsub.f32 %v793, %v2367
      %2369 = vmatmul.mubr.f32.gmra.mrb[0].mxu0 %v2368
      %v2370 = vpop.f32.mrb[0].mxu0
      %v2371 = vadd.f32 %v1880, %v2370
      %v2372 = vpop.f32.mrb[0].mxu0
      %2373 = vmatprep.mubr.f32.mxu0 0.0
      %v2374 = vand.u32 %v796, 4294901760
      %v2375 = vsub.f32 %v796, %v2374
      %2376 = vmatmul.mubr.f32.gmra.mrb[0].mxu0 %v2375
      %v2377 = vpop.f32.mrb[0].mxu0
      %v2378 = vadd.f32 %v1886, %v2377
      %v2379 = vpop.f32.mrb[0].mxu0
      %2380 = vmatprep.mubr.f32.mxu0 0.0
      %v2381 = vand.u32 %v799, 4294901760
      %v2382 = vsub.f32 %v799, %v2381
      %2383 = vmatmul.mubr.f32.gmra.mrb[0].mxu0 %v2382
      %v2384 = vpop.f32.mrb[0].mxu0
      %v2385 = vadd.f32 %v1892, %v2384
      %v2386 = vpop.f32.mrb[0].mxu0
      %2387 = vmatprep.mubr.f32.mxu0 0.0
      %v2388 = vand.u32 %v802, 4294901760
      %v2389 = vsub.f32 %v802, %v2388
      %2390 = vmatmul.mubr.f32.gmra.mrb[0].mxu0 %v2389
      %v2391 = vpop.f32.mrb[0].mxu0
      %v2392 = vadd.f32 %v1898, %v2391
      %v2393 = vpop.f32.mrb[0].mxu0
      %2394 = vmatprep.mubr.f32.mxu0 0.0
      %v2395 = vand.u32 %v805, 4294901760
      %v2396 = vsub.f32 %v805, %v2395
      %2397 = vmatmul.mubr.f32.gmra.mrb[0].mxu0 %v2396
      %v2398 = vpop.f32.mrb[0].mxu0
      %v2399 = vadd.f32 %v1904, %v2398
      %v2400 = vpop.f32.mrb[0].mxu0
      %2401 = vmatprep.mubr.f32.mxu0 0.0
      %v2402 = vand.u32 %v808, 4294901760
      %v2403 = vsub.f32 %v808, %v2402
      %2404 = vmatmul.mubr.f32.gmra.mrb[0].mxu0 %v2403
      %v2405 = vpop.f32.mrb[0].mxu0
      %v2406 = vadd.f32 %v1910, %v2405
      %v2407 = vpop.f32.mrb[0].mxu0
      %2408 = vmatprep.mubr.f32.mxu0 0.0
      %v2409 = vand.u32 %v811, 4294901760
      %v2410 = vsub.f32 %v811, %v2409
      %2411 = vmatmul.mubr.f32.gmra.mrb[0].mxu0 %v2410
      %v2412 = vpop.f32.mrb[0].mxu0
      %v2413 = vadd.f32 %v1916, %v2412
      %v2414 = vpop.f32.mrb[0].mxu0
      %2415 = vmatprep.mubr.f32.mxu0 0.0
      %v2416 = vand.u32 %v814, 4294901760
      %v2417 = vsub.f32 %v814, %v2416
      %2418 = vmatmul.mubr.f32.gmra.mrb[0].mxu0 %v2417
      %v2419 = vpop.f32.mrb[0].mxu0
      %v2420 = vadd.f32 %v1922, %v2419
      %v2421 = vpop.f32.mrb[0].mxu0
      %2422 = vmatprep.mubr.f32.mxu0 0.0
      %v2423 = vand.u32 %v817, 4294901760
      %v2424 = vsub.f32 %v817, %v2423
      %2425 = vmatmul.mubr.f32.gmra.mrb[0].mxu0 %v2424
      %v2426 = vpop.f32.mrb[0].mxu0
      %v2427 = vadd.f32 %v1928, %v2426
      %v2428 = vpop.f32.mrb[0].mxu0
      %2429 = vmatprep.mubr.f32.mxu0 0.0
      %v2430 = vand.u32 %v820, 4294901760
      %v2431 = vsub.f32 %v820, %v2430
      %2432 = vmatmul.mubr.f32.gmra.mrb[0].mxu0 %v2431
      %v2433 = vpop.f32.mrb[0].mxu0
      %v2434 = vadd.f32 %v1934, %v2433
      %v2435 = vpop.f32.mrb[0].mxu0
      %2436 = vmatprep.mubr.f32.mxu0 0.0
      %v2437 = vand.u32 %v823, 4294901760
      %v2438 = vsub.f32 %v823, %v2437
      %2439 = vmatmul.mubr.f32.gmra.mrb[0].mxu0 %v2438
      %v2440 = vpop.f32.mrb[0].mxu0
      %v2441 = vadd.f32 %v1940, %v2440
      %v2442 = vpop.f32.mrb[0].mxu0
      %2443 = vmatprep.mubr.f32.mxu0 0.0
      %v2444 = vand.u32 %v826, 4294901760
      %v2445 = vsub.f32 %v826, %v2444
      %2446 = vmatmul.mubr.f32.gmra.mrb[0].mxu0 %v2445
      %v2447 = vpop.f32.mrb[0].mxu0
      %v2448 = vadd.f32 %v1946, %v2447
      %v2449 = vpop.f32.mrb[0].mxu0
      %2450 = vmatprep.mubr.f32.mxu0 0.0
      %v2451 = vand.u32 %v829, 4294901760
      %v2452 = vsub.f32 %v829, %v2451
      %2453 = vmatmul.mubr.f32.gmra.mrb[0].mxu0 %v2452
      %v2454 = vpop.f32.mrb[0].mxu0
      %v2455 = vadd.f32 %v1952, %v2454
      %v2456 = vpop.f32.mrb[0].mxu0
      %2457 = vmatprep.mubr.f32.mxu0 0.0
      %v2458 = vand.u32 %v832, 4294901760
      %v2459 = vsub.f32 %v832, %v2458
      %2460 = vmatmul.mubr.f32.gmra.mrb[0].mxu0 %v2459
      %v2461 = vpop.f32.mrb[0].mxu0
      %v2462 = vadd.f32 %v1958, %v2461
      %v2463 = vpop.f32.mrb[0].mxu0
      %2464 = vmatprep.mubr.f32.mxu0 0.0
      %v2465 = vand.u32 %v835, 4294901760
      %v2466 = vsub.f32 %v835, %v2465
      %2467 = vmatmul.mubr.f32.gmra.mrb[0].mxu0 %v2466
      %v2468 = vpop.f32.mrb[0].mxu0
      %v2469 = vadd.f32 %v1964, %v2468
      %v2470 = vpop.f32.mrb[0].mxu0
      %2471 = vmatprep.mubr.f32.mxu0 0.0
      %v2472 = vand.u32 %v838, 4294901760
      %v2473 = vsub.f32 %v838, %v2472
      %2474 = vmatmul.mubr.f32.gmra.mrb[0].mxu0 %v2473
      %v2475 = vpop.f32.mrb[0].mxu0
      %v2476 = vadd.f32 %v1970, %v2475
      %v2477 = vpop.f32.mrb[0].mxu0
      %2478 = vmatprep.mubr.f32.mxu0 0.0
      %v2479 = vand.u32 %v841, 4294901760
      %v2480 = vsub.f32 %v841, %v2479
      %2481 = vmatmul.mubr.f32.gmra.mrb[0].mxu0 %v2480
      %v2482 = vpop.f32.mrb[0].mxu0
      %v2483 = vadd.f32 %v1976, %v2482
      %v2484 = vpop.f32.mrb[0].mxu0
      %2485 = vmatprep.mubr.f32.mxu0 0.0
      %v2486 = vand.u32 %v844, 4294901760
      %v2487 = vsub.f32 %v844, %v2486
      %2488 = vmatmul.mubr.f32.gmra.mrb[0].mxu0 %v2487
      %v2489 = vpop.f32.mrb[0].mxu0
      %v2490 = vadd.f32 %v1982, %v2489
      %v2491 = vpop.f32.mrb[0].mxu0
      %2492 = vmatprep.mubr.f32.mxu0 0.0
      %v2493 = vand.u32 %v847, 4294901760
      %v2494 = vsub.f32 %v847, %v2493
      %2495 = vmatmul.mubr.f32.gmra.mrb[0].mxu0 %v2494
      %v2496 = vpop.f32.mrb[0].mxu0
      %v2497 = vadd.f32 %v1988, %v2496
      %v2498 = vpop.f32.mrb[0].mxu0
      %2499 = vmatprep.mubr.f32.mxu0 0.0
      %v2500 = vand.u32 %v850, 4294901760
      %v2501 = vsub.f32 %v850, %v2500
      %2502 = vmatmul.mubr.f32.gmra.mrb[0].mxu0 %v2501
      %v2503 = vpop.f32.mrb[0].mxu0
      %v2504 = vadd.f32 %v1994, %v2503
      %v2505 = vpop.f32.mrb[0].mxu0
      %2506 = vmatprep.mubr.f32.mxu0 0.0
      %v2507 = vand.u32 %v853, 4294901760
      %v2508 = vsub.f32 %v853, %v2507
      %2509 = vmatmul.mubr.f32.gmra.mrb[0].mxu0 %v2508
      %v2510 = vpop.f32.mrb[0].mxu0
      %v2511 = vadd.f32 %v2000, %v2510
      %v2512 = vpop.f32.mrb[0].mxu0
      %2513 = vmatprep.mubr.f32.mxu0 0.0
      %v2514 = vand.u32 %v856, 4294901760
      %v2515 = vsub.f32 %v856, %v2514
      %2516 = vmatmul.mubr.f32.gmra.mrb[0].mxu0 %v2515
      %v2517 = vpop.f32.mrb[0].mxu0
      %v2518 = vadd.f32 %v2006, %v2517
      %v2519 = vpop.f32.mrb[0].mxu0
      %2520 = vmatprep.mubr.f32.mxu0 0.0
      %v2521 = vand.u32 %v859, 4294901760
      %v2522 = vsub.f32 %v859, %v2521
      %2523 = vmatmul.mubr.f32.gmra.mrb[0].mxu0 %v2522
      %v2524 = vpop.f32.mrb[0].mxu0
      %v2525 = vadd.f32 %v2012, %v2524
      %v2526 = vpop.f32.mrb[0].mxu0
      %2527 = vmatprep.mubr.f32.mxu0 0.0
      %v2528 = vand.u32 %v862, 4294901760
      %v2529 = vsub.f32 %v862, %v2528
      %2530 = vmatmul.mubr.f32.gmra.mrb[0].mxu0 %v2529
      %v2531 = vpop.f32.mrb[0].mxu0
      %v2532 = vadd.f32 %v2018, %v2531
      %v2533 = vpop.f32.mrb[0].mxu0
      %2534 = vmatprep.mubr.f32.mxu0 0.0
      %v2535 = vand.u32 %v865, 4294901760
      %v2536 = vsub.f32 %v865, %v2535
      %2537 = vmatmul.mubr.f32.gmra.mrb[0].mxu0 %v2536
      %v2538 = vpop.f32.mrb[0].mxu0
      %v2539 = vadd.f32 %v2024, %v2538
      %v2540 = vpop.f32.mrb[0].mxu0
      %2541 = vmatprep.mubr.f32.mxu0 0.0
      %v2542 = vand.u32 %v868, 4294901760
      %v2543 = vsub.f32 %v868, %v2542
      %2544 = vmatmul.mubr.f32.gmra.mrb[0].mxu0 %v2543
      %v2545 = vpop.f32.mrb[0].mxu0
      %v2546 = vadd.f32 %v2030, %v2545
      %v2547 = vpop.f32.mrb[0].mxu0
      %2548 = vmatprep.mubr.f32.mxu0 0.0
      %v2549 = vand.u32 %v871, 4294901760
      %v2550 = vsub.f32 %v871, %v2549
      %2551 = vmatmul.mubr.f32.gmra.mrb[0].mxu0 %v2550
      %v2552 = vpop.f32.mrb[0].mxu0
      %v2553 = vadd.f32 %v2036, %v2552
      %v2554 = vpop.f32.mrb[0].mxu0
      %2555 = vdwg.mxu0
      %2556 = vmatprep.subr.mxu0 0.0
      %v2557 = vand.u32 %v678, 4294901760
      %2558 = vmatpush1.msra.mxu0 %v2557
      %2559 = vmatprep.subr.mxu0 0.0
      %v2560 = vand.u32 %v679, 4294901760
      %2561 = vmatpush1.msra.mxu0 %v2560
      %2562 = vmatprep.subr.mxu0 0.0
      %2563 = vmatpush1.msra.mxu0 0.0
      %2564 = vmatprep.subr.mxu0 0.0
      %2565 = vmatpush1.msra.mxu0 0.0
      %2566 = vmatprep.subr.mxu0 0.0
      %2567 = vmatpush1.msra.mxu0 0.0
      %2568 = vmatprep.subr.mxu0 0.0
      %2569 = vmatpush1.msra.mxu0 0.0
      %2570 = vmatprep.subr.mxu0 0.0
      %2571 = vmatpush1.msra.mxu0 0.0
      %2572 = vmatprep.subr.mxu0 0.0
      %2573 = vmatpush1.msra.mxu0 0.0
      %2574 = vmatprep.subr.mxu0 0.0
      %2575 = vmatpush1.msra.mxu0 0.0
      %2576 = vmatprep.subr.mxu0 0.0
      %2577 = vmatpush1.msra.mxu0 0.0
      %2578 = vmatprep.subr.mxu0 0.0
      %2579 = vmatpush1.msra.mxu0 0.0
      %2580 = vmatprep.subr.mxu0 0.0
      %2581 = vmatpush1.msra.mxu0 0.0
      %2582 = vmatprep.subr.mxu0 0.0
      %2583 = vmatpush1.msra.mxu0 0.0
      %2584 = vmatprep.subr.mxu0 0.0
      %2585 = vmatpush1.msra.mxu0 0.0
      %2586 = vmatprep.subr.mxu0 0.0
      %2587 = vmatpush1.msra.mxu0 0.0
      %2588 = vmatprep.subr.mxu0 0.0
      %2589 = vmatpush1.msra.mxu0 0.0
      %2590 = vmatprep.subr.mxu0 0.0
      %2591 = vmatpush1.msra.mxu0 0.0
      %2592 = vmatprep.subr.mxu0 0.0
      %2593 = vmatpush1.msra.mxu0 0.0
      %2594 = vmatprep.subr.mxu0 0.0
      %2595 = vmatpush1.msra.mxu0 0.0
      %2596 = vmatprep.subr.mxu0 0.0
      %2597 = vmatpush1.msra.mxu0 0.0
      %2598 = vmatprep.subr.mxu0 0.0
      %2599 = vmatpush1.msra.mxu0 0.0
      %2600 = vmatprep.subr.mxu0 0.0
      %2601 = vmatpush1.msra.mxu0 0.0
      %2602 = vmatprep.subr.mxu0 0.0
      %2603 = vmatpush1.msra.mxu0 0.0
      %2604 = vmatprep.subr.mxu0 0.0
      %2605 = vmatpush1.msra.mxu0 0.0
      %2606 = vmatprep.subr.mxu0 0.0
      %2607 = vmatpush1.msra.mxu0 0.0
      %2608 = vmatprep.subr.mxu0 0.0
      %2609 = vmatpush1.msra.mxu0 0.0
      %2610 = vmatprep.subr.mxu0 0.0
      %2611 = vmatpush1.msra.mxu0 0.0
      %2612 = vmatprep.subr.mxu0 0.0
      %2613 = vmatpush1.msra.mxu0 0.0
      %2614 = vmatprep.subr.mxu0 0.0
      %2615 = vmatpush1.msra.mxu0 0.0
      %2616 = vmatprep.subr.mxu0 0.0
      %2617 = vmatpush1.msra.mxu0 0.0
      %2618 = vmatprep.subr.mxu0 0.0
      %2619 = vmatpush1.msra.mxu0 0.0
      %2620 = vmatprep.subr.mxu0 0.0
      %2621 = vmatpush1.msra.mxu0 0.0
      %2622 = vmatprep.mubr.f32.mxu0 0.0
      %v2623 = vand.u32 %v682, 4294901760
      %v2624 = vsub.f32 %v682, %v2623
      %v2625 = vand.u32 %v2624, 4294901760
      %2626 = vmatmul.mubr.f32.gmra.mrb[0].mxu0 %v2625
      %v2627 = vpop.f32.mrb[0].mxu0
      %v2628 = vadd.f32 %v2112, %v2627
      %v2629 = vpop.f32.mrb[0].mxu0
      %2630 = vmatprep.mubr.f32.mxu0 0.0
      %v2631 = vand.u32 %v685, 4294901760
      %v2632 = vsub.f32 %v685, %v2631
      %v2633 = vand.u32 %v2632, 4294901760
      %2634 = vmatmul.mubr.f32.gmra.mrb[0].mxu0 %v2633
      %v2635 = vpop.f32.mrb[0].mxu0
      %v2636 = vadd.f32 %v2119, %v2635
      %v2637 = vpop.f32.mrb[0].mxu0
      %2638 = vmatprep.mubr.f32.mxu0 0.0
      %v2639 = vand.u32 %v688, 4294901760
      %v2640 = vsub.f32 %v688, %v2639
      %v2641 = vand.u32 %v2640, 4294901760
      %2642 = vmatmul.mubr.f32.gmra.mrb[0].mxu0 %v2641
      %v2643 = vpop.f32.mrb[0].mxu0
      %v2644 = vadd.f32 %v2126, %v2643
      %v2645 = vpop.f32.mrb[0].mxu0
      %2646 = vmatprep.mubr.f32.mxu0 0.0
      %v2647 = vand.u32 %v691, 4294901760
      %v2648 = vsub.f32 %v691, %v2647
      %v2649 = vand.u32 %v2648, 4294901760
      %2650 = vmatmul.mubr.f32.gmra.mrb[0].mxu0 %v2649
      %v2651 = vpop.f32.mrb[0].mxu0
      %v2652 = vadd.f32 %v2133, %v2651
      %v2653 = vpop.f32.mrb[0].mxu0
      %2654 = vmatprep.mubr.f32.mxu0 0.0
      %v2655 = vand.u32 %v694, 4294901760
      %v2656 = vsub.f32 %v694, %v2655
      %v2657 = vand.u32 %v2656, 4294901760
      %2658 = vmatmul.mubr.f32.gmra.mrb[0].mxu0 %v2657
      %v2659 = vpop.f32.mrb[0].mxu0
      %v2660 = vadd.f32 %v2140, %v2659
      %v2661 = vpop.f32.mrb[0].mxu0
      %2662 = vmatprep.mubr.f32.mxu0 0.0
      %v2663 = vand.u32 %v697, 4294901760
      %v2664 = vsub.f32 %v697, %v2663
      %v2665 = vand.u32 %v2664, 4294901760
      %2666 = vmatmul.mubr.f32.gmra.mrb[0].mxu0 %v2665
      %v2667 = vpop.f32.mrb[0].mxu0
      %v2668 = vadd.f32 %v2147, %v2667
      %v2669 = vpop.f32.mrb[0].mxu0
      %2670 = vmatprep.mubr.f32.mxu0 0.0
      %v2671 = vand.u32 %v700, 4294901760
      %v2672 = vsub.f32 %v700, %v2671
      %v2673 = vand.u32 %v2672, 4294901760
      %2674 = vmatmul.mubr.f32.gmra.mrb[0].mxu0 %v2673
      %v2675 = vpop.f32.mrb[0].mxu0
      %v2676 = vadd.f32 %v2154, %v2675
      %v2677 = vpop.f32.mrb[0].mxu0
      %2678 = vmatprep.mubr.f32.mxu0 0.0
      %v2679 = vand.u32 %v703, 4294901760
      %v2680 = vsub.f32 %v703, %v2679
      %v2681 = vand.u32 %v2680, 4294901760
      %2682 = vmatmul.mubr.f32.gmra.mrb[0].mxu0 %v2681
      %v2683 = vpop.f32.mrb[0].mxu0
      %v2684 = vadd.f32 %v2161, %v2683
      %v2685 = vpop.f32.mrb[0].mxu0
      %2686 = vmatprep.mubr.f32.mxu0 0.0
      %v2687 = vand.u32 %v706, 4294901760
      %v2688 = vsub.f32 %v706, %v2687
      %v2689 = vand.u32 %v2688, 4294901760
      %2690 = vmatmul.mubr.f32.gmra.mrb[0].mxu0 %v2689
      %v2691 = vpop.f32.mrb[0].mxu0
      %v2692 = vadd.f32 %v2168, %v2691
      %v2693 = vpop.f32.mrb[0].mxu0
      %2694 = vmatprep.mubr.f32.mxu0 0.0
      %v2695 = vand.u32 %v709, 4294901760
      %v2696 = vsub.f32 %v709, %v2695
      %v2697 = vand.u32 %v2696, 4294901760
      %2698 = vmatmul.mubr.f32.gmra.mrb[0].mxu0 %v2697
      %v2699 = vpop.f32.mrb[0].mxu0
      %v2700 = vadd.f32 %v2175, %v2699
      %v2701 = vpop.f32.mrb[0].mxu0
      %2702 = vmatprep.mubr.f32.mxu0 0.0
      %v2703 = vand.u32 %v712, 4294901760
      %v2704 = vsub.f32 %v712, %v2703
      %v2705 = vand.u32 %v2704, 4294901760
      %2706 = vmatmul.mubr.f32.gmra.mrb[0].mxu0 %v2705
      %v2707 = vpop.f32.mrb[0].mxu0
      %v2708 = vadd.f32 %v2182, %v2707
      %v2709 = vpop.f32.mrb[0].mxu0
      %2710 = vmatprep.mubr.f32.mxu0 0.0
      %v2711 = vand.u32 %v715, 4294901760
      %v2712 = vsub.f32 %v715, %v2711
      %v2713 = vand.u32 %v2712, 4294901760
      %2714 = vmatmul.mubr.f32.gmra.mrb[0].mxu0 %v2713
      %v2715 = vpop.f32.mrb[0].mxu0
      %v2716 = vadd.f32 %v2189, %v2715
      %v2717 = vpop.f32.mrb[0].mxu0
      %2718 = vmatprep.mubr.f32.mxu0 0.0
      %v2719 = vand.u32 %v718, 4294901760
      %v2720 = vsub.f32 %v718, %v2719
      %v2721 = vand.u32 %v2720, 4294901760
      %2722 = vmatmul.mubr.f32.gmra.mrb[0].mxu0 %v2721
      %v2723 = vpop.f32.mrb[0].mxu0
      %v2724 = vadd.f32 %v2196, %v2723
      %v2725 = vpop.f32.mrb[0].mxu0
      %2726 = vmatprep.mubr.f32.mxu0 0.0
      %v2727 = vand.u32 %v721, 4294901760
      %v2728 = vsub.f32 %v721, %v2727
      %v2729 = vand.u32 %v2728, 4294901760
      %2730 = vmatmul.mubr.f32.gmra.mrb[0].mxu0 %v2729
      %v2731 = vpop.f32.mrb[0].mxu0
      %v2732 = vadd.f32 %v2203, %v2731
      %v2733 = vpop.f32.mrb[0].mxu0
      %2734 = vmatprep.mubr.f32.mxu0 0.0
      %v2735 = vand.u32 %v724, 4294901760
      %v2736 = vsub.f32 %v724, %v2735
      %v2737 = vand.u32 %v2736, 4294901760
      %2738 = vmatmul.mubr.f32.gmra.mrb[0].mxu0 %v2737
      %v2739 = vpop.f32.mrb[0].mxu0
      %v2740 = vadd.f32 %v2210, %v2739
      %v2741 = vpop.f32.mrb[0].mxu0
      %2742 = vmatprep.mubr.f32.mxu0 0.0
      %v2743 = vand.u32 %v727, 4294901760
      %v2744 = vsub.f32 %v727, %v2743
      %v2745 = vand.u32 %v2744, 4294901760
      %2746 = vmatmul.mubr.f32.gmra.mrb[0].mxu0 %v2745
      %v2747 = vpop.f32.mrb[0].mxu0
      %v2748 = vadd.f32 %v2217, %v2747
      %v2749 = vpop.f32.mrb[0].mxu0
      %2750 = vmatprep.mubr.f32.mxu0 0.0
      %v2751 = vand.u32 %v730, 4294901760
      %v2752 = vsub.f32 %v730, %v2751
      %v2753 = vand.u32 %v2752, 4294901760
      %2754 = vmatmul.mubr.f32.gmra.mrb[0].mxu0 %v2753
      %v2755 = vpop.f32.mrb[0].mxu0
      %v2756 = vadd.f32 %v2224, %v2755
      %v2757 = vpop.f32.mrb[0].mxu0
      %2758 = vmatprep.mubr.f32.mxu0 0.0
      %v2759 = vand.u32 %v733, 4294901760
      %v2760 = vsub.f32 %v733, %v2759
      %v2761 = vand.u32 %v2760, 4294901760
      %2762 = vmatmul.mubr.f32.gmra.mrb[0].mxu0 %v2761
      %v2763 = vpop.f32.mrb[0].mxu0
      %v2764 = vadd.f32 %v2231, %v2763
      %v2765 = vpop.f32.mrb[0].mxu0
      %2766 = vmatprep.mubr.f32.mxu0 0.0
      %v2767 = vand.u32 %v736, 4294901760
      %v2768 = vsub.f32 %v736, %v2767
      %v2769 = vand.u32 %v2768, 4294901760
      %2770 = vmatmul.mubr.f32.gmra.mrb[0].mxu0 %v2769
      %v2771 = vpop.f32.mrb[0].mxu0
      %v2772 = vadd.f32 %v2238, %v2771
      %v2773 = vpop.f32.mrb[0].mxu0
      %2774 = vmatprep.mubr.f32.mxu0 0.0
      %v2775 = vand.u32 %v739, 4294901760
      %v2776 = vsub.f32 %v739, %v2775
      %v2777 = vand.u32 %v2776, 4294901760
      %2778 = vmatmul.mubr.f32.gmra.mrb[0].mxu0 %v2777
      %v2779 = vpop.f32.mrb[0].mxu0
      %v2780 = vadd.f32 %v2245, %v2779
      %v2781 = vpop.f32.mrb[0].mxu0
      %2782 = vmatprep.mubr.f32.mxu0 0.0
      %v2783 = vand.u32 %v742, 4294901760
      %v2784 = vsub.f32 %v742, %v2783
      %v2785 = vand.u32 %v2784, 4294901760
      %2786 = vmatmul.mubr.f32.gmra.mrb[0].mxu0 %v2785
      %v2787 = vpop.f32.mrb[0].mxu0
      %v2788 = vadd.f32 %v2252, %v2787
      %v2789 = vpop.f32.mrb[0].mxu0
      %2790 = vmatprep.mubr.f32.mxu0 0.0
      %v2791 = vand.u32 %v745, 4294901760
      %v2792 = vsub.f32 %v745, %v2791
      %v2793 = vand.u32 %v2792, 4294901760
      %2794 = vmatmul.mubr.f32.gmra.mrb[0].mxu0 %v2793
      %v2795 = vpop.f32.mrb[0].mxu0
      %v2796 = vadd.f32 %v2259, %v2795
      %v2797 = vpop.f32.mrb[0].mxu0
      %2798 = vmatprep.mubr.f32.mxu0 0.0
      %v2799 = vand.u32 %v748, 4294901760
      %v2800 = vsub.f32 %v748, %v2799
      %v2801 = vand.u32 %v2800, 4294901760
      %2802 = vmatmul.mubr.f32.gmra.mrb[0].mxu0 %v2801
      %v2803 = vpop.f32.mrb[0].mxu0
      %v2804 = vadd.f32 %v2266, %v2803
      %v2805 = vpop.f32.mrb[0].mxu0
      %2806 = vmatprep.mubr.f32.mxu0 0.0
      %v2807 = vand.u32 %v751, 4294901760
      %v2808 = vsub.f32 %v751, %v2807
      %v2809 = vand.u32 %v2808, 4294901760
      %2810 = vmatmul.mubr.f32.gmra.mrb[0].mxu0 %v2809
      %v2811 = vpop.f32.mrb[0].mxu0
      %v2812 = vadd.f32 %v2273, %v2811
      %v2813 = vpop.f32.mrb[0].mxu0
      %2814 = vmatprep.mubr.f32.mxu0 0.0
      %v2815 = vand.u32 %v754, 4294901760
      %v2816 = vsub.f32 %v754, %v2815
      %v2817 = vand.u32 %v2816, 4294901760
      %2818 = vmatmul.mubr.f32.gmra.mrb[0].mxu0 %v2817
      %v2819 = vpop.f32.mrb[0].mxu0
      %v2820 = vadd.f32 %v2280, %v2819
      %v2821 = vpop.f32.mrb[0].mxu0
      %2822 = vmatprep.mubr.f32.mxu0 0.0
      %v2823 = vand.u32 %v757, 4294901760
      %v2824 = vsub.f32 %v757, %v2823
      %v2825 = vand.u32 %v2824, 4294901760
      %2826 = vmatmul.mubr.f32.gmra.mrb[0].mxu0 %v2825
      %v2827 = vpop.f32.mrb[0].mxu0
      %v2828 = vadd.f32 %v2287, %v2827
      %v2829 = vpop.f32.mrb[0].mxu0
      %2830 = vmatprep.mubr.f32.mxu0 0.0
      %v2831 = vand.u32 %v760, 4294901760
      %v2832 = vsub.f32 %v760, %v2831
      %v2833 = vand.u32 %v2832, 4294901760
      %2834 = vmatmul.mubr.f32.gmra.mrb[0].mxu0 %v2833
      %v2835 = vpop.f32.mrb[0].mxu0
      %v2836 = vadd.f32 %v2294, %v2835
      %v2837 = vpop.f32.mrb[0].mxu0
      %2838 = vmatprep.mubr.f32.mxu0 0.0
      %v2839 = vand.u32 %v763, 4294901760
      %v2840 = vsub.f32 %v763, %v2839
      %v2841 = vand.u32 %v2840, 4294901760
      %2842 = vmatmul.mubr.f32.gmra.mrb[0].mxu0 %v2841
      %v2843 = vpop.f32.mrb[0].mxu0
      %v2844 = vadd.f32 %v2301, %v2843
      %v2845 = vpop.f32.mrb[0].mxu0
      %2846 = vmatprep.mubr.f32.mxu0 0.0
      %v2847 = vand.u32 %v766, 4294901760
      %v2848 = vsub.f32 %v766, %v2847
      %v2849 = vand.u32 %v2848, 4294901760
      %2850 = vmatmul.mubr.f32.gmra.mrb[0].mxu0 %v2849
      %v2851 = vpop.f32.mrb[0].mxu0
      %v2852 = vadd.f32 %v2308, %v2851
      %v2853 = vpop.f32.mrb[0].mxu0
      %2854 = vmatprep.mubr.f32.mxu0 0.0
      %v2855 = vand.u32 %v769, 4294901760
      %v2856 = vsub.f32 %v769, %v2855
      %v2857 = vand.u32 %v2856, 4294901760
      %2858 = vmatmul.mubr.f32.gmra.mrb[0].mxu0 %v2857
      %v2859 = vpop.f32.mrb[0].mxu0
      %v2860 = vadd.f32 %v2315, %v2859
      %v2861 = vpop.f32.mrb[0].mxu0
      %2862 = vmatprep.mubr.f32.mxu0 0.0
      %v2863 = vand.u32 %v772, 4294901760
      %v2864 = vsub.f32 %v772, %v2863
      %v2865 = vand.u32 %v2864, 4294901760
      %2866 = vmatmul.mubr.f32.gmra.mrb[0].mxu0 %v2865
      %v2867 = vpop.f32.mrb[0].mxu0
      %v2868 = vadd.f32 %v2322, %v2867
      %v2869 = vpop.f32.mrb[0].mxu0
      %2870 = vmatprep.mubr.f32.mxu0 0.0
      %v2871 = vand.u32 %v775, 4294901760
      %v2872 = vsub.f32 %v775, %v2871
      %v2873 = vand.u32 %v2872, 4294901760
      %2874 = vmatmul.mubr.f32.gmra.mrb[0].mxu0 %v2873
      %v2875 = vpop.f32.mrb[0].mxu0
      %v2876 = vadd.f32 %v2329, %v2875
      %v2877 = vpop.f32.mrb[0].mxu0
      %2878 = vmatprep.mubr.f32.mxu0 0.0
      %v2879 = vand.u32 %v778, 4294901760
      %v2880 = vsub.f32 %v778, %v2879
      %v2881 = vand.u32 %v2880, 4294901760
      %2882 = vmatmul.mubr.f32.gmra.mrb[0].mxu0 %v2881
      %v2883 = vpop.f32.mrb[0].mxu0
      %v2884 = vadd.f32 %v2336, %v2883
      %v2885 = vpop.f32.mrb[0].mxu0
      %2886 = vmatprep.mubr.f32.mxu0 0.0
      %v2887 = vand.u32 %v781, 4294901760
      %v2888 = vsub.f32 %v781, %v2887
      %v2889 = vand.u32 %v2888, 4294901760
      %2890 = vmatmul.mubr.f32.gmra.mrb[0].mxu0 %v2889
      %v2891 = vpop.f32.mrb[0].mxu0
      %v2892 = vadd.f32 %v2343, %v2891
      %v2893 = vpop.f32.mrb[0].mxu0
      %2894 = vmatprep.mubr.f32.mxu0 0.0
      %v2895 = vand.u32 %v784, 4294901760
      %v2896 = vsub.f32 %v784, %v2895
      %v2897 = vand.u32 %v2896, 4294901760
      %2898 = vmatmul.mubr.f32.gmra.mrb[0].mxu0 %v2897
      %v2899 = vpop.f32.mrb[0].mxu0
      %v2900 = vadd.f32 %v2350, %v2899
      %v2901 = vpop.f32.mrb[0].mxu0
      %2902 = vmatprep.mubr.f32.mxu0 0.0
      %v2903 = vand.u32 %v787, 4294901760
      %v2904 = vsub.f32 %v787, %v2903
      %v2905 = vand.u32 %v2904, 4294901760
      %2906 = vmatmul.mubr.f32.gmra.mrb[0].mxu0 %v2905
      %v2907 = vpop.f32.mrb[0].mxu0
      %v2908 = vadd.f32 %v2357, %v2907
      %v2909 = vpop.f32.mrb[0].mxu0
      %2910 = vmatprep.mubr.f32.mxu0 0.0
      %v2911 = vand.u32 %v790, 4294901760
      %v2912 = vsub.f32 %v790, %v2911
      %v2913 = vand.u32 %v2912, 4294901760
      %2914 = vmatmul.mubr.f32.gmra.mrb[0].mxu0 %v2913
      %v2915 = vpop.f32.mrb[0].mxu0
      %v2916 = vadd.f32 %v2364, %v2915
      %v2917 = vpop.f32.mrb[0].mxu0
      %2918 = vmatprep.mubr.f32.mxu0 0.0
      %v2919 = vand.u32 %v793, 4294901760
      %v2920 = vsub.f32 %v793, %v2919
      %v2921 = vand.u32 %v2920, 4294901760
      %2922 = vmatmul.mubr.f32.gmra.mrb[0].mxu0 %v2921
      %v2923 = vpop.f32.mrb[0].mxu0
      %v2924 = vadd.f32 %v2371, %v2923
      %v2925 = vpop.f32.mrb[0].mxu0
      %2926 = vmatprep.mubr.f32.mxu0 0.0
      %v2927 = vand.u32 %v796, 4294901760
      %v2928 = vsub.f32 %v796, %v2927
      %v2929 = vand.u32 %v2928, 4294901760
      %2930 = vmatmul.mubr.f32.gmra.mrb[0].mxu0 %v2929
      %v2931 = vpop.f32.mrb[0].mxu0
      %v2932 = vadd.f32 %v2378, %v2931
      %v2933 = vpop.f32.mrb[0].mxu0
      %2934 = vmatprep.mubr.f32.mxu0 0.0
      %v2935 = vand.u32 %v799, 4294901760
      %v2936 = vsub.f32 %v799, %v2935
      %v2937 = vand.u32 %v2936, 4294901760
      %2938 = vmatmul.mubr.f32.gmra.mrb[0].mxu0 %v2937
      %v2939 = vpop.f32.mrb[0].mxu0
      %v2940 = vadd.f32 %v2385, %v2939
      %v2941 = vpop.f32.mrb[0].mxu0
      %2942 = vmatprep.mubr.f32.mxu0 0.0
      %v2943 = vand.u32 %v802, 4294901760
      %v2944 = vsub.f32 %v802, %v2943
      %v2945 = vand.u32 %v2944, 4294901760
      %2946 = vmatmul.mubr.f32.gmra.mrb[0].mxu0 %v2945
      %v2947 = vpop.f32.mrb[0].mxu0
      %v2948 = vadd.f32 %v2392, %v2947
      %v2949 = vpop.f32.mrb[0].mxu0
      %2950 = vmatprep.mubr.f32.mxu0 0.0
      %v2951 = vand.u32 %v805, 4294901760
      %v2952 = vsub.f32 %v805, %v2951
      %v2953 = vand.u32 %v2952, 4294901760
      %2954 = vmatmul.mubr.f32.gmra.mrb[0].mxu0 %v2953
      %v2955 = vpop.f32.mrb[0].mxu0
      %v2956 = vadd.f32 %v2399, %v2955
      %v2957 = vpop.f32.mrb[0].mxu0
      %2958 = vmatprep.mubr.f32.mxu0 0.0
      %v2959 = vand.u32 %v808, 4294901760
      %v2960 = vsub.f32 %v808, %v2959
      %v2961 = vand.u32 %v2960, 4294901760
      %2962 = vmatmul.mubr.f32.gmra.mrb[0].mxu0 %v2961
      %v2963 = vpop.f32.mrb[0].mxu0
      %v2964 = vadd.f32 %v2406, %v2963
      %v2965 = vpop.f32.mrb[0].mxu0
      %2966 = vmatprep.mubr.f32.mxu0 0.0
      %v2967 = vand.u32 %v811, 4294901760
      %v2968 = vsub.f32 %v811, %v2967
      %v2969 = vand.u32 %v2968, 4294901760
      %2970 = vmatmul.mubr.f32.gmra.mrb[0].mxu0 %v2969
      %v2971 = vpop.f32.mrb[0].mxu0
      %v2972 = vadd.f32 %v2413, %v2971
      %v2973 = vpop.f32.mrb[0].mxu0
      %2974 = vmatprep.mubr.f32.mxu0 0.0
      %v2975 = vand.u32 %v814, 4294901760
      %v2976 = vsub.f32 %v814, %v2975
      %v2977 = vand.u32 %v2976, 4294901760
      %2978 = vmatmul.mubr.f32.gmra.mrb[0].mxu0 %v2977
      %v2979 = vpop.f32.mrb[0].mxu0
      %v2980 = vadd.f32 %v2420, %v2979
      %v2981 = vpop.f32.mrb[0].mxu0
      %2982 = vmatprep.mubr.f32.mxu0 0.0
      %v2983 = vand.u32 %v817, 4294901760
      %v2984 = vsub.f32 %v817, %v2983
      %v2985 = vand.u32 %v2984, 4294901760
      %2986 = vmatmul.mubr.f32.gmra.mrb[0].mxu0 %v2985
      %v2987 = vpop.f32.mrb[0].mxu0
      %v2988 = vadd.f32 %v2427, %v2987
      %v2989 = vpop.f32.mrb[0].mxu0
      %2990 = vmatprep.mubr.f32.mxu0 0.0
      %v2991 = vand.u32 %v820, 4294901760
      %v2992 = vsub.f32 %v820, %v2991
      %v2993 = vand.u32 %v2992, 4294901760
      %2994 = vmatmul.mubr.f32.gmra.mrb[0].mxu0 %v2993
      %v2995 = vpop.f32.mrb[0].mxu0
      %v2996 = vadd.f32 %v2434, %v2995
      %v2997 = vpop.f32.mrb[0].mxu0
      %2998 = vmatprep.mubr.f32.mxu0 0.0
      %v2999 = vand.u32 %v823, 4294901760
      %v3000 = vsub.f32 %v823, %v2999
      %v3001 = vand.u32 %v3000, 4294901760
      %3002 = vmatmul.mubr.f32.gmra.mrb[0].mxu0 %v3001
      %v3003 = vpop.f32.mrb[0].mxu0
      %v3004 = vadd.f32 %v2441, %v3003
      %v3005 = vpop.f32.mrb[0].mxu0
      %3006 = vmatprep.mubr.f32.mxu0 0.0
      %v3007 = vand.u32 %v826, 4294901760
      %v3008 = vsub.f32 %v826, %v3007
      %v3009 = vand.u32 %v3008, 4294901760
      %3010 = vmatmul.mubr.f32.gmra.mrb[0].mxu0 %v3009
      %v3011 = vpop.f32.mrb[0].mxu0
      %v3012 = vadd.f32 %v2448, %v3011
      %v3013 = vpop.f32.mrb[0].mxu0
      %3014 = vmatprep.mubr.f32.mxu0 0.0
      %v3015 = vand.u32 %v829, 4294901760
      %v3016 = vsub.f32 %v829, %v3015
      %v3017 = vand.u32 %v3016, 4294901760
      %3018 = vmatmul.mubr.f32.gmra.mrb[0].mxu0 %v3017
      %v3019 = vpop.f32.mrb[0].mxu0
      %v3020 = vadd.f32 %v2455, %v3019
      %v3021 = vpop.f32.mrb[0].mxu0
      %3022 = vmatprep.mubr.f32.mxu0 0.0
      %v3023 = vand.u32 %v832, 4294901760
      %v3024 = vsub.f32 %v832, %v3023
      %v3025 = vand.u32 %v3024, 4294901760
      %3026 = vmatmul.mubr.f32.gmra.mrb[0].mxu0 %v3025
      %v3027 = vpop.f32.mrb[0].mxu0
      %v3028 = vadd.f32 %v2462, %v3027
      %v3029 = vpop.f32.mrb[0].mxu0
      %3030 = vmatprep.mubr.f32.mxu0 0.0
      %v3031 = vand.u32 %v835, 4294901760
      %v3032 = vsub.f32 %v835, %v3031
      %v3033 = vand.u32 %v3032, 4294901760
      %3034 = vmatmul.mubr.f32.gmra.mrb[0].mxu0 %v3033
      %v3035 = vpop.f32.mrb[0].mxu0
      %v3036 = vadd.f32 %v2469, %v3035
      %v3037 = vpop.f32.mrb[0].mxu0
      %3038 = vmatprep.mubr.f32.mxu0 0.0
      %v3039 = vand.u32 %v838, 4294901760
      %v3040 = vsub.f32 %v838, %v3039
      %v3041 = vand.u32 %v3040, 4294901760
      %3042 = vmatmul.mubr.f32.gmra.mrb[0].mxu0 %v3041
      %v3043 = vpop.f32.mrb[0].mxu0
      %v3044 = vadd.f32 %v2476, %v3043
      %v3045 = vpop.f32.mrb[0].mxu0
      %3046 = vmatprep.mubr.f32.mxu0 0.0
      %v3047 = vand.u32 %v841, 4294901760
      %v3048 = vsub.f32 %v841, %v3047
      %v3049 = vand.u32 %v3048, 4294901760
      %3050 = vmatmul.mubr.f32.gmra.mrb[0].mxu0 %v3049
      %v3051 = vpop.f32.mrb[0].mxu0
      %v3052 = vadd.f32 %v2483, %v3051
      %v3053 = vpop.f32.mrb[0].mxu0
      %3054 = vmatprep.mubr.f32.mxu0 0.0
      %v3055 = vand.u32 %v844, 4294901760
      %v3056 = vsub.f32 %v844, %v3055
      %v3057 = vand.u32 %v3056, 4294901760
      %3058 = vmatmul.mubr.f32.gmra.mrb[0].mxu0 %v3057
      %v3059 = vpop.f32.mrb[0].mxu0
      %v3060 = vadd.f32 %v2490, %v3059
      %v3061 = vpop.f32.mrb[0].mxu0
      %3062 = vmatprep.mubr.f32.mxu0 0.0
      %v3063 = vand.u32 %v847, 4294901760
      %v3064 = vsub.f32 %v847, %v3063
      %v3065 = vand.u32 %v3064, 4294901760
      %3066 = vmatmul.mubr.f32.gmra.mrb[0].mxu0 %v3065
      %v3067 = vpop.f32.mrb[0].mxu0
      %v3068 = vadd.f32 %v2497, %v3067
      %v3069 = vpop.f32.mrb[0].mxu0
      %3070 = vmatprep.mubr.f32.mxu0 0.0
      %v3071 = vand.u32 %v850, 4294901760
      %v3072 = vsub.f32 %v850, %v3071
      %v3073 = vand.u32 %v3072, 4294901760
      %3074 = vmatmul.mubr.f32.gmra.mrb[0].mxu0 %v3073
      %v3075 = vpop.f32.mrb[0].mxu0
      %v3076 = vadd.f32 %v2504, %v3075
      %v3077 = vpop.f32.mrb[0].mxu0
      %3078 = vmatprep.mubr.f32.mxu0 0.0
      %v3079 = vand.u32 %v853, 4294901760
      %v3080 = vsub.f32 %v853, %v3079
      %v3081 = vand.u32 %v3080, 4294901760
      %3082 = vmatmul.mubr.f32.gmra.mrb[0].mxu0 %v3081
      %v3083 = vpop.f32.mrb[0].mxu0
      %v3084 = vadd.f32 %v2511, %v3083
      %v3085 = vpop.f32.mrb[0].mxu0
      %3086 = vmatprep.mubr.f32.mxu0 0.0
      %v3087 = vand.u32 %v856, 4294901760
      %v3088 = vsub.f32 %v856, %v3087
      %v3089 = vand.u32 %v3088, 4294901760
      %3090 = vmatmul.mubr.f32.gmra.mrb[0].mxu0 %v3089
      %v3091 = vpop.f32.mrb[0].mxu0
      %v3092 = vadd.f32 %v2518, %v3091
      %v3093 = vpop.f32.mrb[0].mxu0
      %3094 = vmatprep.mubr.f32.mxu0 0.0
      %v3095 = vand.u32 %v859, 4294901760
      %v3096 = vsub.f32 %v859, %v3095
      %v3097 = vand.u32 %v3096, 4294901760
      %3098 = vmatmul.mubr.f32.gmra.mrb[0].mxu0 %v3097
      %v3099 = vpop.f32.mrb[0].mxu0
      %v3100 = vadd.f32 %v2525, %v3099
      %v3101 = vpop.f32.mrb[0].mxu0
      %3102 = vmatprep.mubr.f32.mxu0 0.0
      %v3103 = vand.u32 %v862, 4294901760
      %v3104 = vsub.f32 %v862, %v3103
      %v3105 = vand.u32 %v3104, 4294901760
      %3106 = vmatmul.mubr.f32.gmra.mrb[0].mxu0 %v3105
      %v3107 = vpop.f32.mrb[0].mxu0
      %v3108 = vadd.f32 %v2532, %v3107
      %v3109 = vpop.f32.mrb[0].mxu0
      %3110 = vmatprep.mubr.f32.mxu0 0.0
      %v3111 = vand.u32 %v865, 4294901760
      %v3112 = vsub.f32 %v865, %v3111
      %v3113 = vand.u32 %v3112, 4294901760
      %3114 = vmatmul.mubr.f32.gmra.mrb[0].mxu0 %v3113
      %v3115 = vpop.f32.mrb[0].mxu0
      %v3116 = vadd.f32 %v2539, %v3115
      %v3117 = vpop.f32.mrb[0].mxu0
      %3118 = vmatprep.mubr.f32.mxu0 0.0
      %v3119 = vand.u32 %v868, 4294901760
      %v3120 = vsub.f32 %v868, %v3119
      %v3121 = vand.u32 %v3120, 4294901760
      %3122 = vmatmul.mubr.f32.gmra.mrb[0].mxu0 %v3121
      %v3123 = vpop.f32.mrb[0].mxu0
      %v3124 = vadd.f32 %v2546, %v3123
      %v3125 = vpop.f32.mrb[0].mxu0
      %3126 = vmatprep.mubr.f32.mxu0 0.0
      %v3127 = vand.u32 %v871, 4294901760
      %v3128 = vsub.f32 %v871, %v3127
      %v3129 = vand.u32 %v3128, 4294901760
      %3130 = vmatmul.mubr.f32.gmra.mrb[0].mxu0 %v3129
      %v3131 = vpop.f32.mrb[0].mxu0
      %v3132 = vadd.f32 %v2553, %v3131
      %v3133 = vpop.f32.mrb[0].mxu0
      %3134 = vdwg.mxu0
      %3135 = vmatprep.subr.mxu0 0.0
      %v3136 = vand.u32 %v678, 4294901760
      %v3137 = vsub.f32 %v678, %v3136
      %v3138 = vand.u32 %v3137, 4294901760
      %3139 = vmatpush1.msra.mxu0 %v3138
      %3140 = vmatprep.subr.mxu0 0.0
      %v3141 = vand.u32 %v679, 4294901760
      %v3142 = vsub.f32 %v679, %v3141
      %v3143 = vand.u32 %v3142, 4294901760
      %3144 = vmatpush1.msra.mxu0 %v3143
      %3145 = vmatprep.subr.mxu0 0.0
      %3146 = vmatpush1.msra.mxu0 0.0
      %3147 = vmatprep.subr.mxu0 0.0
      %3148 = vmatpush1.msra.mxu0 0.0
      %3149 = vmatprep.subr.mxu0 0.0
      %3150 = vmatpush1.msra.mxu0 0.0
      %3151 = vmatprep.subr.mxu0 0.0
      %3152 = vmatpush1.msra.mxu0 0.0
      %3153 = vmatprep.subr.mxu0 0.0
      %3154 = vmatpush1.msra.mxu0 0.0
      %3155 = vmatprep.subr.mxu0 0.0
      %3156 = vmatpush1.msra.mxu0 0.0
      %3157 = vmatprep.subr.mxu0 0.0
      %3158 = vmatpush1.msra.mxu0 0.0
      %3159 = vmatprep.subr.mxu0 0.0
      %3160 = vmatpush1.msra.mxu0 0.0
      %3161 = vmatprep.subr.mxu0 0.0
      %3162 = vmatpush1.msra.mxu0 0.0
      %3163 = vmatprep.subr.mxu0 0.0
      %3164 = vmatpush1.msra.mxu0 0.0
      %3165 = vmatprep.subr.mxu0 0.0
      %3166 = vmatpush1.msra.mxu0 0.0
      %3167 = vmatprep.subr.mxu0 0.0
      %3168 = vmatpush1.msra.mxu0 0.0
      %3169 = vmatprep.subr.mxu0 0.0
      %3170 = vmatpush1.msra.mxu0 0.0
      %3171 = vmatprep.subr.mxu0 0.0
      %3172 = vmatpush1.msra.mxu0 0.0
      %3173 = vmatprep.subr.mxu0 0.0
      %3174 = vmatpush1.msra.mxu0 0.0
      %3175 = vmatprep.subr.mxu0 0.0
      %3176 = vmatpush1.msra.mxu0 0.0
      %3177 = vmatprep.subr.mxu0 0.0
      %3178 = vmatpush1.msra.mxu0 0.0
      %3179 = vmatprep.subr.mxu0 0.0
      %3180 = vmatpush1.msra.mxu0 0.0
      %3181 = vmatprep.subr.mxu0 0.0
      %3182 = vmatpush1.msra.mxu0 0.0
      %3183 = vmatprep.subr.mxu0 0.0
      %3184 = vmatpush1.msra.mxu0 0.0
      %3185 = vmatprep.subr.mxu0 0.0
      %3186 = vmatpush1.msra.mxu0 0.0
      %3187 = vmatprep.subr.mxu0 0.0
      %3188 = vmatpush1.msra.mxu0 0.0
      %3189 = vmatprep.subr.mxu0 0.0
      %3190 = vmatpush1.msra.mxu0 0.0
      %3191 = vmatprep.subr.mxu0 0.0
      %3192 = vmatpush1.msra.mxu0 0.0
      %3193 = vmatprep.subr.mxu0 0.0
      %3194 = vmatpush1.msra.mxu0 0.0
      %3195 = vmatprep.subr.mxu0 0.0
      %3196 = vmatpush1.msra.mxu0 0.0
      %3197 = vmatprep.subr.mxu0 0.0
      %3198 = vmatpush1.msra.mxu0 0.0
      %3199 = vmatprep.subr.mxu0 0.0
      %3200 = vmatpush1.msra.mxu0 0.0
      %3201 = vmatprep.subr.mxu0 0.0
      %3202 = vmatpush1.msra.mxu0 0.0
      %3203 = vmatprep.subr.mxu0 0.0
      %3204 = vmatpush1.msra.mxu0 0.0
      %3205 = vmatprep.mubr.f32.mxu0 0.0
      %v3206 = vand.u32 %v682, 4294901760
      %3207 = vmatmul.mubr.f32.gmra.mrb[0].mxu0 %v3206
      %v3208 = vpop.f32.mrb[0].mxu0
      %v3209 = vadd.f32 %v2628, %v3208
      %v3210 = vpop.f32.mrb[0].mxu0
      %3211 = vmatprep.mubr.f32.mxu0 0.0
      %v3212 = vand.u32 %v685, 4294901760
      %3213 = vmatmul.mubr.f32.gmra.mrb[0].mxu0 %v3212
      %v3214 = vpop.f32.mrb[0].mxu0
      %v3215 = vadd.f32 %v2636, %v3214
      %v3216 = vpop.f32.mrb[0].mxu0
      %3217 = vmatprep.mubr.f32.mxu0 0.0
      %v3218 = vand.u32 %v688, 4294901760
      %3219 = vmatmul.mubr.f32.gmra.mrb[0].mxu0 %v3218
      %v3220 = vpop.f32.mrb[0].mxu0
      %v3221 = vadd.f32 %v2644, %v3220
      %v3222 = vpop.f32.mrb[0].mxu0
      %3223 = vmatprep.mubr.f32.mxu0 0.0
      %v3224 = vand.u32 %v691, 4294901760
      %3225 = vmatmul.mubr.f32.gmra.mrb[0].mxu0 %v3224
      %v3226 = vpop.f32.mrb[0].mxu0
      %v3227 = vadd.f32 %v2652, %v3226
      %v3228 = vpop.f32.mrb[0].mxu0
      %3229 = vmatprep.mubr.f32.mxu0 0.0
      %v3230 = vand.u32 %v694, 4294901760
      %3231 = vmatmul.mubr.f32.gmra.mrb[0].mxu0 %v3230
      %v3232 = vpop.f32.mrb[0].mxu0
      %v3233 = vadd.f32 %v2660, %v3232
      %v3234 = vpop.f32.mrb[0].mxu0
      %3235 = vmatprep.mubr.f32.mxu0 0.0
      %v3236 = vand.u32 %v697, 4294901760
      %3237 = vmatmul.mubr.f32.gmra.mrb[0].mxu0 %v3236
      %v3238 = vpop.f32.mrb[0].mxu0
      %v3239 = vadd.f32 %v2668, %v3238
      %v3240 = vpop.f32.mrb[0].mxu0
      %3241 = vmatprep.mubr.f32.mxu0 0.0
      %v3242 = vand.u32 %v700, 4294901760
      %3243 = vmatmul.mubr.f32.gmra.mrb[0].mxu0 %v3242
      %v3244 = vpop.f32.mrb[0].mxu0
      %v3245 = vadd.f32 %v2676, %v3244
      %v3246 = vpop.f32.mrb[0].mxu0
      %3247 = vmatprep.mubr.f32.mxu0 0.0
      %v3248 = vand.u32 %v703, 4294901760
      %3249 = vmatmul.mubr.f32.gmra.mrb[0].mxu0 %v3248
      %v3250 = vpop.f32.mrb[0].mxu0
      %v3251 = vadd.f32 %v2684, %v3250
      %v3252 = vpop.f32.mrb[0].mxu0
      %3253 = vmatprep.mubr.f32.mxu0 0.0
      %v3254 = vand.u32 %v706, 4294901760
      %3255 = vmatmul.mubr.f32.gmra.mrb[0].mxu0 %v3254
      %v3256 = vpop.f32.mrb[0].mxu0
      %v3257 = vadd.f32 %v2692, %v3256
      %v3258 = vpop.f32.mrb[0].mxu0
      %3259 = vmatprep.mubr.f32.mxu0 0.0
      %v3260 = vand.u32 %v709, 4294901760
      %3261 = vmatmul.mubr.f32.gmra.mrb[0].mxu0 %v3260
      %v3262 = vpop.f32.mrb[0].mxu0
      %v3263 = vadd.f32 %v2700, %v3262
      %v3264 = vpop.f32.mrb[0].mxu0
      %3265 = vmatprep.mubr.f32.mxu0 0.0
      %v3266 = vand.u32 %v712, 4294901760
      %3267 = vmatmul.mubr.f32.gmra.mrb[0].mxu0 %v3266
      %v3268 = vpop.f32.mrb[0].mxu0
      %v3269 = vadd.f32 %v2708, %v3268
      %v3270 = vpop.f32.mrb[0].mxu0
      %3271 = vmatprep.mubr.f32.mxu0 0.0
      %v3272 = vand.u32 %v715, 4294901760
      %3273 = vmatmul.mubr.f32.gmra.mrb[0].mxu0 %v3272
      %v3274 = vpop.f32.mrb[0].mxu0
      %v3275 = vadd.f32 %v2716, %v3274
      %v3276 = vpop.f32.mrb[0].mxu0
      %3277 = vmatprep.mubr.f32.mxu0 0.0
      %v3278 = vand.u32 %v718, 4294901760
      %3279 = vmatmul.mubr.f32.gmra.mrb[0].mxu0 %v3278
      %v3280 = vpop.f32.mrb[0].mxu0
      %v3281 = vadd.f32 %v2724, %v3280
      %v3282 = vpop.f32.mrb[0].mxu0
      %3283 = vmatprep.mubr.f32.mxu0 0.0
      %v3284 = vand.u32 %v721, 4294901760
      %3285 = vmatmul.mubr.f32.gmra.mrb[0].mxu0 %v3284
      %v3286 = vpop.f32.mrb[0].mxu0
      %v3287 = vadd.f32 %v2732, %v3286
      %v3288 = vpop.f32.mrb[0].mxu0
      %3289 = vmatprep.mubr.f32.mxu0 0.0
      %v3290 = vand.u32 %v724, 4294901760
      %3291 = vmatmul.mubr.f32.gmra.mrb[0].mxu0 %v3290
      %v3292 = vpop.f32.mrb[0].mxu0
      %v3293 = vadd.f32 %v2740, %v3292
      %v3294 = vpop.f32.mrb[0].mxu0
      %3295 = vmatprep.mubr.f32.mxu0 0.0
      %v3296 = vand.u32 %v727, 4294901760
      %3297 = vmatmul.mubr.f32.gmra.mrb[0].mxu0 %v3296
      %v3298 = vpop.f32.mrb[0].mxu0
      %v3299 = vadd.f32 %v2748, %v3298
      %v3300 = vpop.f32.mrb[0].mxu0
      %3301 = vmatprep.mubr.f32.mxu0 0.0
      %v3302 = vand.u32 %v730, 4294901760
      %3303 = vmatmul.mubr.f32.gmra.mrb[0].mxu0 %v3302
      %v3304 = vpop.f32.mrb[0].mxu0
      %v3305 = vadd.f32 %v2756, %v3304
      %v3306 = vpop.f32.mrb[0].mxu0
      %3307 = vmatprep.mubr.f32.mxu0 0.0
      %v3308 = vand.u32 %v733, 4294901760
      %3309 = vmatmul.mubr.f32.gmra.mrb[0].mxu0 %v3308
      %v3310 = vpop.f32.mrb[0].mxu0
      %v3311 = vadd.f32 %v2764, %v3310
      %v3312 = vpop.f32.mrb[0].mxu0
      %3313 = vmatprep.mubr.f32.mxu0 0.0
      %v3314 = vand.u32 %v736, 4294901760
      %3315 = vmatmul.mubr.f32.gmra.mrb[0].mxu0 %v3314
      %v3316 = vpop.f32.mrb[0].mxu0
      %v3317 = vadd.f32 %v2772, %v3316
      %v3318 = vpop.f32.mrb[0].mxu0
      %3319 = vmatprep.mubr.f32.mxu0 0.0
      %v3320 = vand.u32 %v739, 4294901760
      %3321 = vmatmul.mubr.f32.gmra.mrb[0].mxu0 %v3320
      %v3322 = vpop.f32.mrb[0].mxu0
      %v3323 = vadd.f32 %v2780, %v3322
      %v3324 = vpop.f32.mrb[0].mxu0
      %3325 = vmatprep.mubr.f32.mxu0 0.0
      %v3326 = vand.u32 %v742, 4294901760
      %3327 = vmatmul.mubr.f32.gmra.mrb[0].mxu0 %v3326
      %v3328 = vpop.f32.mrb[0].mxu0
      %v3329 = vadd.f32 %v2788, %v3328
      %v3330 = vpop.f32.mrb[0].mxu0
      %3331 = vmatprep.mubr.f32.mxu0 0.0
      %v3332 = vand.u32 %v745, 4294901760
      %3333 = vmatmul.mubr.f32.gmra.mrb[0].mxu0 %v3332
      %v3334 = vpop.f32.mrb[0].mxu0
      %v3335 = vadd.f32 %v2796, %v3334
      %v3336 = vpop.f32.mrb[0].mxu0
      %3337 = vmatprep.mubr.f32.mxu0 0.0
      %v3338 = vand.u32 %v748, 4294901760
      %3339 = vmatmul.mubr.f32.gmra.mrb[0].mxu0 %v3338
      %v3340 = vpop.f32.mrb[0].mxu0
      %v3341 = vadd.f32 %v2804, %v3340
      %v3342 = vpop.f32.mrb[0].mxu0
      %3343 = vmatprep.mubr.f32.mxu0 0.0
      %v3344 = vand.u32 %v751, 4294901760
      %3345 = vmatmul.mubr.f32.gmra.mrb[0].mxu0 %v3344
      %v3346 = vpop.f32.mrb[0].mxu0
      %v3347 = vadd.f32 %v2812, %v3346
      %v3348 = vpop.f32.mrb[0].mxu0
      %3349 = vmatprep.mubr.f32.mxu0 0.0
      %v3350 = vand.u32 %v754, 4294901760
      %3351 = vmatmul.mubr.f32.gmra.mrb[0].mxu0 %v3350
      %v3352 = vpop.f32.mrb[0].mxu0
      %v3353 = vadd.f32 %v2820, %v3352
      %v3354 = vpop.f32.mrb[0].mxu0
      %3355 = vmatprep.mubr.f32.mxu0 0.0
      %v3356 = vand.u32 %v757, 4294901760
      %3357 = vmatmul.mubr.f32.gmra.mrb[0].mxu0 %v3356
      %v3358 = vpop.f32.mrb[0].mxu0
      %v3359 = vadd.f32 %v2828, %v3358
      %v3360 = vpop.f32.mrb[0].mxu0
      %3361 = vmatprep.mubr.f32.mxu0 0.0
      %v3362 = vand.u32 %v760, 4294901760
      %3363 = vmatmul.mubr.f32.gmra.mrb[0].mxu0 %v3362
      %v3364 = vpop.f32.mrb[0].mxu0
      %v3365 = vadd.f32 %v2836, %v3364
      %v3366 = vpop.f32.mrb[0].mxu0
      %3367 = vmatprep.mubr.f32.mxu0 0.0
      %v3368 = vand.u32 %v763, 4294901760
      %3369 = vmatmul.mubr.f32.gmra.mrb[0].mxu0 %v3368
      %v3370 = vpop.f32.mrb[0].mxu0
      %v3371 = vadd.f32 %v2844, %v3370
      %v3372 = vpop.f32.mrb[0].mxu0
      %3373 = vmatprep.mubr.f32.mxu0 0.0
      %v3374 = vand.u32 %v766, 4294901760
      %3375 = vmatmul.mubr.f32.gmra.mrb[0].mxu0 %v3374
      %v3376 = vpop.f32.mrb[0].mxu0
      %v3377 = vadd.f32 %v2852, %v3376
      %v3378 = vpop.f32.mrb[0].mxu0
      %3379 = vmatprep.mubr.f32.mxu0 0.0
      %v3380 = vand.u32 %v769, 4294901760
      %3381 = vmatmul.mubr.f32.gmra.mrb[0].mxu0 %v3380
      %v3382 = vpop.f32.mrb[0].mxu0
      %v3383 = vadd.f32 %v2860, %v3382
      %v3384 = vpop.f32.mrb[0].mxu0
      %3385 = vmatprep.mubr.f32.mxu0 0.0
      %v3386 = vand.u32 %v772, 4294901760
      %3387 = vmatmul.mubr.f32.gmra.mrb[0].mxu0 %v3386
      %v3388 = vpop.f32.mrb[0].mxu0
      %v3389 = vadd.f32 %v2868, %v3388
      %v3390 = vpop.f32.mrb[0].mxu0
      %3391 = vmatprep.mubr.f32.mxu0 0.0
      %v3392 = vand.u32 %v775, 4294901760
      %3393 = vmatmul.mubr.f32.gmra.mrb[0].mxu0 %v3392
      %v3394 = vpop.f32.mrb[0].mxu0
      %v3395 = vadd.f32 %v2876, %v3394
      %v3396 = vpop.f32.mrb[0].mxu0
      %3397 = vmatprep.mubr.f32.mxu0 0.0
      %v3398 = vand.u32 %v778, 4294901760
      %3399 = vmatmul.mubr.f32.gmra.mrb[0].mxu0 %v3398
      %v3400 = vpop.f32.mrb[0].mxu0
      %v3401 = vadd.f32 %v2884, %v3400
      %v3402 = vpop.f32.mrb[0].mxu0
      %3403 = vmatprep.mubr.f32.mxu0 0.0
      %v3404 = vand.u32 %v781, 4294901760
      %3405 = vmatmul.mubr.f32.gmra.mrb[0].mxu0 %v3404
      %v3406 = vpop.f32.mrb[0].mxu0
      %v3407 = vadd.f32 %v2892, %v3406
      %v3408 = vpop.f32.mrb[0].mxu0
      %3409 = vmatprep.mubr.f32.mxu0 0.0
      %v3410 = vand.u32 %v784, 4294901760
      %3411 = vmatmul.mubr.f32.gmra.mrb[0].mxu0 %v3410
      %v3412 = vpop.f32.mrb[0].mxu0
      %v3413 = vadd.f32 %v2900, %v3412
      %v3414 = vpop.f32.mrb[0].mxu0
      %3415 = vmatprep.mubr.f32.mxu0 0.0
      %v3416 = vand.u32 %v787, 4294901760
      %3417 = vmatmul.mubr.f32.gmra.mrb[0].mxu0 %v3416
      %v3418 = vpop.f32.mrb[0].mxu0
      %v3419 = vadd.f32 %v2908, %v3418
      %v3420 = vpop.f32.mrb[0].mxu0
      %3421 = vmatprep.mubr.f32.mxu0 0.0
      %v3422 = vand.u32 %v790, 4294901760
      %3423 = vmatmul.mubr.f32.gmra.mrb[0].mxu0 %v3422
      %v3424 = vpop.f32.mrb[0].mxu0
      %v3425 = vadd.f32 %v2916, %v3424
      %v3426 = vpop.f32.mrb[0].mxu0
      %3427 = vmatprep.mubr.f32.mxu0 0.0
      %v3428 = vand.u32 %v793, 4294901760
      %3429 = vmatmul.mubr.f32.gmra.mrb[0].mxu0 %v3428
      %v3430 = vpop.f32.mrb[0].mxu0
      %v3431 = vadd.f32 %v2924, %v3430
      %v3432 = vpop.f32.mrb[0].mxu0
      %3433 = vmatprep.mubr.f32.mxu0 0.0
      %v3434 = vand.u32 %v796, 4294901760
      %3435 = vmatmul.mubr.f32.gmra.mrb[0].mxu0 %v3434
      %v3436 = vpop.f32.mrb[0].mxu0
      %v3437 = vadd.f32 %v2932, %v3436
      %v3438 = vpop.f32.mrb[0].mxu0
      %3439 = vmatprep.mubr.f32.mxu0 0.0
      %v3440 = vand.u32 %v799, 4294901760
      %3441 = vmatmul.mubr.f32.gmra.mrb[0].mxu0 %v3440
      %v3442 = vpop.f32.mrb[0].mxu0
      %v3443 = vadd.f32 %v2940, %v3442
      %v3444 = vpop.f32.mrb[0].mxu0
      %3445 = vmatprep.mubr.f32.mxu0 0.0
      %v3446 = vand.u32 %v802, 4294901760
      %3447 = vmatmul.mubr.f32.gmra.mrb[0].mxu0 %v3446
      %v3448 = vpop.f32.mrb[0].mxu0
      %v3449 = vadd.f32 %v2948, %v3448
      %v3450 = vpop.f32.mrb[0].mxu0
      %3451 = vmatprep.mubr.f32.mxu0 0.0
      %v3452 = vand.u32 %v805, 4294901760
      %3453 = vmatmul.mubr.f32.gmra.mrb[0].mxu0 %v3452
      %v3454 = vpop.f32.mrb[0].mxu0
      %v3455 = vadd.f32 %v2956, %v3454
      %v3456 = vpop.f32.mrb[0].mxu0
      %3457 = vmatprep.mubr.f32.mxu0 0.0
      %v3458 = vand.u32 %v808, 4294901760
      %3459 = vmatmul.mubr.f32.gmra.mrb[0].mxu0 %v3458
      %v3460 = vpop.f32.mrb[0].mxu0
      %v3461 = vadd.f32 %v2964, %v3460
      %v3462 = vpop.f32.mrb[0].mxu0
      %3463 = vmatprep.mubr.f32.mxu0 0.0
      %v3464 = vand.u32 %v811, 4294901760
      %3465 = vmatmul.mubr.f32.gmra.mrb[0].mxu0 %v3464
      %v3466 = vpop.f32.mrb[0].mxu0
      %v3467 = vadd.f32 %v2972, %v3466
      %v3468 = vpop.f32.mrb[0].mxu0
      %3469 = vmatprep.mubr.f32.mxu0 0.0
      %v3470 = vand.u32 %v814, 4294901760
      %3471 = vmatmul.mubr.f32.gmra.mrb[0].mxu0 %v3470
      %v3472 = vpop.f32.mrb[0].mxu0
      %v3473 = vadd.f32 %v2980, %v3472
      %v3474 = vpop.f32.mrb[0].mxu0
      %3475 = vmatprep.mubr.f32.mxu0 0.0
      %v3476 = vand.u32 %v817, 4294901760
      %3477 = vmatmul.mubr.f32.gmra.mrb[0].mxu0 %v3476
      %v3478 = vpop.f32.mrb[0].mxu0
      %v3479 = vadd.f32 %v2988, %v3478
      %v3480 = vpop.f32.mrb[0].mxu0
      %3481 = vmatprep.mubr.f32.mxu0 0.0
      %v3482 = vand.u32 %v820, 4294901760
      %3483 = vmatmul.mubr.f32.gmra.mrb[0].mxu0 %v3482
      %v3484 = vpop.f32.mrb[0].mxu0
      %v3485 = vadd.f32 %v2996, %v3484
      %v3486 = vpop.f32.mrb[0].mxu0
      %3487 = vmatprep.mubr.f32.mxu0 0.0
      %v3488 = vand.u32 %v823, 4294901760
      %3489 = vmatmul.mubr.f32.gmra.mrb[0].mxu0 %v3488
      %v3490 = vpop.f32.mrb[0].mxu0
      %v3491 = vadd.f32 %v3004, %v3490
      %v3492 = vpop.f32.mrb[0].mxu0
      %3493 = vmatprep.mubr.f32.mxu0 0.0
      %v3494 = vand.u32 %v826, 4294901760
      %3495 = vmatmul.mubr.f32.gmra.mrb[0].mxu0 %v3494
      %v3496 = vpop.f32.mrb[0].mxu0
      %v3497 = vadd.f32 %v3012, %v3496
      %v3498 = vpop.f32.mrb[0].mxu0
      %3499 = vmatprep.mubr.f32.mxu0 0.0
      %v3500 = vand.u32 %v829, 4294901760
      %3501 = vmatmul.mubr.f32.gmra.mrb[0].mxu0 %v3500
      %v3502 = vpop.f32.mrb[0].mxu0
      %v3503 = vadd.f32 %v3020, %v3502
      %v3504 = vpop.f32.mrb[0].mxu0
      %3505 = vmatprep.mubr.f32.mxu0 0.0
      %v3506 = vand.u32 %v832, 4294901760
      %3507 = vmatmul.mubr.f32.gmra.mrb[0].mxu0 %v3506
      %v3508 = vpop.f32.mrb[0].mxu0
      %v3509 = vadd.f32 %v3028, %v3508
      %v3510 = vpop.f32.mrb[0].mxu0
      %3511 = vmatprep.mubr.f32.mxu0 0.0
      %v3512 = vand.u32 %v835, 4294901760
      %3513 = vmatmul.mubr.f32.gmra.mrb[0].mxu0 %v3512
      %v3514 = vpop.f32.mrb[0].mxu0
      %v3515 = vadd.f32 %v3036, %v3514
      %v3516 = vpop.f32.mrb[0].mxu0
      %3517 = vmatprep.mubr.f32.mxu0 0.0
      %v3518 = vand.u32 %v838, 4294901760
      %3519 = vmatmul.mubr.f32.gmra.mrb[0].mxu0 %v3518
      %v3520 = vpop.f32.mrb[0].mxu0
      %v3521 = vadd.f32 %v3044, %v3520
      %v3522 = vpop.f32.mrb[0].mxu0
      %3523 = vmatprep.mubr.f32.mxu0 0.0
      %v3524 = vand.u32 %v841, 4294901760
      %3525 = vmatmul.mubr.f32.gmra.mrb[0].mxu0 %v3524
      %v3526 = vpop.f32.mrb[0].mxu0
      %v3527 = vadd.f32 %v3052, %v3526
      %v3528 = vpop.f32.mrb[0].mxu0
      %3529 = vmatprep.mubr.f32.mxu0 0.0
      %v3530 = vand.u32 %v844, 4294901760
      %3531 = vmatmul.mubr.f32.gmra.mrb[0].mxu0 %v3530
      %v3532 = vpop.f32.mrb[0].mxu0
      %v3533 = vadd.f32 %v3060, %v3532
      %v3534 = vpop.f32.mrb[0].mxu0
      %3535 = vmatprep.mubr.f32.mxu0 0.0
      %v3536 = vand.u32 %v847, 4294901760
      %3537 = vmatmul.mubr.f32.gmra.mrb[0].mxu0 %v3536
      %v3538 = vpop.f32.mrb[0].mxu0
      %v3539 = vadd.f32 %v3068, %v3538
      %v3540 = vpop.f32.mrb[0].mxu0
      %3541 = vmatprep.mubr.f32.mxu0 0.0
      %v3542 = vand.u32 %v850, 4294901760
      %3543 = vmatmul.mubr.f32.gmra.mrb[0].mxu0 %v3542
      %v3544 = vpop.f32.mrb[0].mxu0
      %v3545 = vadd.f32 %v3076, %v3544
      %v3546 = vpop.f32.mrb[0].mxu0
      %3547 = vmatprep.mubr.f32.mxu0 0.0
      %v3548 = vand.u32 %v853, 4294901760
      %3549 = vmatmul.mubr.f32.gmra.mrb[0].mxu0 %v3548
      %v3550 = vpop.f32.mrb[0].mxu0
      %v3551 = vadd.f32 %v3084, %v3550
      %v3552 = vpop.f32.mrb[0].mxu0
      %3553 = vmatprep.mubr.f32.mxu0 0.0
      %v3554 = vand.u32 %v856, 4294901760
      %3555 = vmatmul.mubr.f32.gmra.mrb[0].mxu0 %v3554
      %v3556 = vpop.f32.mrb[0].mxu0
      %v3557 = vadd.f32 %v3092, %v3556
      %v3558 = vpop.f32.mrb[0].mxu0
      %3559 = vmatprep.mubr.f32.mxu0 0.0
      %v3560 = vand.u32 %v859, 4294901760
      %3561 = vmatmul.mubr.f32.gmra.mrb[0].mxu0 %v3560
      %v3562 = vpop.f32.mrb[0].mxu0
      %v3563 = vadd.f32 %v3100, %v3562
      %v3564 = vpop.f32.mrb[0].mxu0
      %3565 = vmatprep.mubr.f32.mxu0 0.0
      %v3566 = vand.u32 %v862, 4294901760
      %3567 = vmatmul.mubr.f32.gmra.mrb[0].mxu0 %v3566
      %v3568 = vpop.f32.mrb[0].mxu0
      %v3569 = vadd.f32 %v3108, %v3568
      %v3570 = vpop.f32.mrb[0].mxu0
      %3571 = vmatprep.mubr.f32.mxu0 0.0
      %v3572 = vand.u32 %v865, 4294901760
      %3573 = vmatmul.mubr.f32.gmra.mrb[0].mxu0 %v3572
      %v3574 = vpop.f32.mrb[0].mxu0
      %v3575 = vadd.f32 %v3116, %v3574
      %v3576 = vpop.f32.mrb[0].mxu0
      %3577 = vmatprep.mubr.f32.mxu0 0.0
      %v3578 = vand.u32 %v868, 4294901760
      %3579 = vmatmul.mubr.f32.gmra.mrb[0].mxu0 %v3578
      %v3580 = vpop.f32.mrb[0].mxu0
      %v3581 = vadd.f32 %v3124, %v3580
      %v3582 = vpop.f32.mrb[0].mxu0
      %3583 = vmatprep.mubr.f32.mxu0 0.0
      %v3584 = vand.u32 %v871, 4294901760
      %3585 = vmatmul.mubr.f32.gmra.mrb[0].mxu0 %v3584
      %v3586 = vpop.f32.mrb[0].mxu0
      %v3587 = vadd.f32 %v3132, %v3586
      %v3588 = vpop.f32.mrb[0].mxu0
      %3589 = vdwg.mxu0
      %3590 = vmatprep.subr.mxu0 0.0
      %v3591 = vand.u32 %v678, 4294901760
      %3592 = vmatpush1.msra.mxu0 %v3591
      %3593 = vmatprep.subr.mxu0 0.0
      %v3594 = vand.u32 %v679, 4294901760
      %3595 = vmatpush1.msra.mxu0 %v3594
      %3596 = vmatprep.subr.mxu0 0.0
      %3597 = vmatpush1.msra.mxu0 0.0
      %3598 = vmatprep.subr.mxu0 0.0
      %3599 = vmatpush1.msra.mxu0 0.0
      %3600 = vmatprep.subr.mxu0 0.0
      %3601 = vmatpush1.msra.mxu0 0.0
      %3602 = vmatprep.subr.mxu0 0.0
      %3603 = vmatpush1.msra.mxu0 0.0
      %3604 = vmatprep.subr.mxu0 0.0
      %3605 = vmatpush1.msra.mxu0 0.0
      %3606 = vmatprep.subr.mxu0 0.0
      %3607 = vmatpush1.msra.mxu0 0.0
      %3608 = vmatprep.subr.mxu0 0.0
      %3609 = vmatpush1.msra.mxu0 0.0
      %3610 = vmatprep.subr.mxu0 0.0
      %3611 = vmatpush1.msra.mxu0 0.0
      %3612 = vmatprep.subr.mxu0 0.0
      %3613 = vmatpush1.msra.mxu0 0.0
      %3614 = vmatprep.subr.mxu0 0.0
      %3615 = vmatpush1.msra.mxu0 0.0
      %3616 = vmatprep.subr.mxu0 0.0
      %3617 = vmatpush1.msra.mxu0 0.0
      %3618 = vmatprep.subr.mxu0 0.0
      %3619 = vmatpush1.msra.mxu0 0.0
      %3620 = vmatprep.subr.mxu0 0.0
      %3621 = vmatpush1.msra.mxu0 0.0
      %3622 = vmatprep.subr.mxu0 0.0
      %3623 = vmatpush1.msra.mxu0 0.0
      %3624 = vmatprep.subr.mxu0 0.0
      %3625 = vmatpush1.msra.mxu0 0.0
      %3626 = vmatprep.subr.mxu0 0.0
      %3627 = vmatpush1.msra.mxu0 0.0
      %3628 = vmatprep.subr.mxu0 0.0
      %3629 = vmatpush1.msra.mxu0 0.0
      %3630 = vmatprep.subr.mxu0 0.0
      %3631 = vmatpush1.msra.mxu0 0.0
      %3632 = vmatprep.subr.mxu0 0.0
      %3633 = vmatpush1.msra.mxu0 0.0
      %3634 = vmatprep.subr.mxu0 0.0
      %3635 = vmatpush1.msra.mxu0 0.0
      %3636 = vmatprep.subr.mxu0 0.0
      %3637 = vmatpush1.msra.mxu0 0.0
      %3638 = vmatprep.subr.mxu0 0.0
      %3639 = vmatpush1.msra.mxu0 0.0
      %3640 = vmatprep.subr.mxu0 0.0
      %3641 = vmatpush1.msra.mxu0 0.0
      %3642 = vmatprep.subr.mxu0 0.0
      %3643 = vmatpush1.msra.mxu0 0.0
      %3644 = vmatprep.subr.mxu0 0.0
      %3645 = vmatpush1.msra.mxu0 0.0
      %3646 = vmatprep.subr.mxu0 0.0
      %3647 = vmatpush1.msra.mxu0 0.0
      %3648 = vmatprep.subr.mxu0 0.0
      %3649 = vmatpush1.msra.mxu0 0.0
      %3650 = vmatprep.subr.mxu0 0.0
      %3651 = vmatpush1.msra.mxu0 0.0
      %3652 = vmatprep.subr.mxu0 0.0
      %3653 = vmatpush1.msra.mxu0 0.0
      %3654 = vmatprep.subr.mxu0 0.0
      %3655 = vmatpush1.msra.mxu0 0.0
      %3656 = vmatprep.mubr.f32.mxu0 0.0
      %v3657 = vand.u32 %v682, 4294901760
      %3658 = vmatmul.mubr.f32.gmra.mrb[0].mxu0 %v3657
      %v3659 = vpop.f32.mrb[0].mxu0
      %v3660 = vadd.f32 %v3209, %v3659
      %v3661 = vpop.f32.mrb[0].mxu0
      %3662 = vmatprep.mubr.f32.mxu0 0.0
      %v3663 = vand.u32 %v685, 4294901760
      %3664 = vmatmul.mubr.f32.gmra.mrb[0].mxu0 %v3663
      %v3665 = vpop.f32.mrb[0].mxu0
      %v3666 = vadd.f32 %v3215, %v3665
      %v3667 = vpop.f32.mrb[0].mxu0
      %3668 = vmatprep.mubr.f32.mxu0 0.0
      %v3669 = vand.u32 %v688, 4294901760
      %3670 = vmatmul.mubr.f32.gmra.mrb[0].mxu0 %v3669
      %v3671 = vpop.f32.mrb[0].mxu0
      %v3672 = vadd.f32 %v3221, %v3671
      %v3673 = vpop.f32.mrb[0].mxu0
      %3674 = vmatprep.mubr.f32.mxu0 0.0
      %v3675 = vand.u32 %v691, 4294901760
      %3676 = vmatmul.mubr.f32.gmra.mrb[0].mxu0 %v3675
      %v3677 = vpop.f32.mrb[0].mxu0
      %v3678 = vadd.f32 %v3227, %v3677
      %v3679 = vpop.f32.mrb[0].mxu0
      %3680 = vmatprep.mubr.f32.mxu0 0.0
      %v3681 = vand.u32 %v694, 4294901760
      %3682 = vmatmul.mubr.f32.gmra.mrb[0].mxu0 %v3681
      %v3683 = vpop.f32.mrb[0].mxu0
      %v3684 = vadd.f32 %v3233, %v3683
      %v3685 = vpop.f32.mrb[0].mxu0
      %3686 = vmatprep.mubr.f32.mxu0 0.0
      %v3687 = vand.u32 %v697, 4294901760
      %3688 = vmatmul.mubr.f32.gmra.mrb[0].mxu0 %v3687
      %v3689 = vpop.f32.mrb[0].mxu0
      %v3690 = vadd.f32 %v3239, %v3689
      %v3691 = vpop.f32.mrb[0].mxu0
      %3692 = vmatprep.mubr.f32.mxu0 0.0
      %v3693 = vand.u32 %v700, 4294901760
      %3694 = vmatmul.mubr.f32.gmra.mrb[0].mxu0 %v3693
      %v3695 = vpop.f32.mrb[0].mxu0
      %v3696 = vadd.f32 %v3245, %v3695
      %v3697 = vpop.f32.mrb[0].mxu0
      %3698 = vmatprep.mubr.f32.mxu0 0.0
      %v3699 = vand.u32 %v703, 4294901760
      %3700 = vmatmul.mubr.f32.gmra.mrb[0].mxu0 %v3699
      %v3701 = vpop.f32.mrb[0].mxu0
      %v3702 = vadd.f32 %v3251, %v3701
      %v3703 = vpop.f32.mrb[0].mxu0
      %3704 = vmatprep.mubr.f32.mxu0 0.0
      %v3705 = vand.u32 %v706, 4294901760
      %3706 = vmatmul.mubr.f32.gmra.mrb[0].mxu0 %v3705
      %v3707 = vpop.f32.mrb[0].mxu0
      %v3708 = vadd.f32 %v3257, %v3707
      %v3709 = vpop.f32.mrb[0].mxu0
      %3710 = vmatprep.mubr.f32.mxu0 0.0
      %v3711 = vand.u32 %v709, 4294901760
      %3712 = vmatmul.mubr.f32.gmra.mrb[0].mxu0 %v3711
      %v3713 = vpop.f32.mrb[0].mxu0
      %v3714 = vadd.f32 %v3263, %v3713
      %v3715 = vpop.f32.mrb[0].mxu0
      %3716 = vmatprep.mubr.f32.mxu0 0.0
      %v3717 = vand.u32 %v712, 4294901760
      %3718 = vmatmul.mubr.f32.gmra.mrb[0].mxu0 %v3717
      %v3719 = vpop.f32.mrb[0].mxu0
      %v3720 = vadd.f32 %v3269, %v3719
      %v3721 = vpop.f32.mrb[0].mxu0
      %3722 = vmatprep.mubr.f32.mxu0 0.0
      %v3723 = vand.u32 %v715, 4294901760
      %3724 = vmatmul.mubr.f32.gmra.mrb[0].mxu0 %v3723
      %v3725 = vpop.f32.mrb[0].mxu0
      %v3726 = vadd.f32 %v3275, %v3725
      %v3727 = vpop.f32.mrb[0].mxu0
      %3728 = vmatprep.mubr.f32.mxu0 0.0
      %v3729 = vand.u32 %v718, 4294901760
      %3730 = vmatmul.mubr.f32.gmra.mrb[0].mxu0 %v3729
      %v3731 = vpop.f32.mrb[0].mxu0
      %v3732 = vadd.f32 %v3281, %v3731
      %v3733 = vpop.f32.mrb[0].mxu0
      %3734 = vmatprep.mubr.f32.mxu0 0.0
      %v3735 = vand.u32 %v721, 4294901760
      %3736 = vmatmul.mubr.f32.gmra.mrb[0].mxu0 %v3735
      %v3737 = vpop.f32.mrb[0].mxu0
      %v3738 = vadd.f32 %v3287, %v3737
      %v3739 = vpop.f32.mrb[0].mxu0
      %3740 = vmatprep.mubr.f32.mxu0 0.0
      %v3741 = vand.u32 %v724, 4294901760
      %3742 = vmatmul.mubr.f32.gmra.mrb[0].mxu0 %v3741
      %v3743 = vpop.f32.mrb[0].mxu0
      %v3744 = vadd.f32 %v3293, %v3743
      %v3745 = vpop.f32.mrb[0].mxu0
      %3746 = vmatprep.mubr.f32.mxu0 0.0
      %v3747 = vand.u32 %v727, 4294901760
      %3748 = vmatmul.mubr.f32.gmra.mrb[0].mxu0 %v3747
      %v3749 = vpop.f32.mrb[0].mxu0
      %v3750 = vadd.f32 %v3299, %v3749
      %v3751 = vpop.f32.mrb[0].mxu0
      %3752 = vmatprep.mubr.f32.mxu0 0.0
      %v3753 = vand.u32 %v730, 4294901760
      %3754 = vmatmul.mubr.f32.gmra.mrb[0].mxu0 %v3753
      %v3755 = vpop.f32.mrb[0].mxu0
      %v3756 = vadd.f32 %v3305, %v3755
      %v3757 = vpop.f32.mrb[0].mxu0
      %3758 = vmatprep.mubr.f32.mxu0 0.0
      %v3759 = vand.u32 %v733, 4294901760
      %3760 = vmatmul.mubr.f32.gmra.mrb[0].mxu0 %v3759
      %v3761 = vpop.f32.mrb[0].mxu0
      %v3762 = vadd.f32 %v3311, %v3761
      %v3763 = vpop.f32.mrb[0].mxu0
      %3764 = vmatprep.mubr.f32.mxu0 0.0
      %v3765 = vand.u32 %v736, 4294901760
      %3766 = vmatmul.mubr.f32.gmra.mrb[0].mxu0 %v3765
      %v3767 = vpop.f32.mrb[0].mxu0
      %v3768 = vadd.f32 %v3317, %v3767
      %v3769 = vpop.f32.mrb[0].mxu0
      %3770 = vmatprep.mubr.f32.mxu0 0.0
      %v3771 = vand.u32 %v739, 4294901760
      %3772 = vmatmul.mubr.f32.gmra.mrb[0].mxu0 %v3771
      %v3773 = vpop.f32.mrb[0].mxu0
      %v3774 = vadd.f32 %v3323, %v3773
      %v3775 = vpop.f32.mrb[0].mxu0
      %3776 = vmatprep.mubr.f32.mxu0 0.0
      %v3777 = vand.u32 %v742, 4294901760
      %3778 = vmatmul.mubr.f32.gmra.mrb[0].mxu0 %v3777
      %v3779 = vpop.f32.mrb[0].mxu0
      %v3780 = vadd.f32 %v3329, %v3779
      %v3781 = vpop.f32.mrb[0].mxu0
      %3782 = vmatprep.mubr.f32.mxu0 0.0
      %v3783 = vand.u32 %v745, 4294901760
      %3784 = vmatmul.mubr.f32.gmra.mrb[0].mxu0 %v3783
      %v3785 = vpop.f32.mrb[0].mxu0
      %v3786 = vadd.f32 %v3335, %v3785
      %v3787 = vpop.f32.mrb[0].mxu0
      %3788 = vmatprep.mubr.f32.mxu0 0.0
      %v3789 = vand.u32 %v748, 4294901760
      %3790 = vmatmul.mubr.f32.gmra.mrb[0].mxu0 %v3789
      %v3791 = vpop.f32.mrb[0].mxu0
      %v3792 = vadd.f32 %v3341, %v3791
      %v3793 = vpop.f32.mrb[0].mxu0
      %3794 = vmatprep.mubr.f32.mxu0 0.0
      %v3795 = vand.u32 %v751, 4294901760
      %3796 = vmatmul.mubr.f32.gmra.mrb[0].mxu0 %v3795
      %v3797 = vpop.f32.mrb[0].mxu0
      %v3798 = vadd.f32 %v3347, %v3797
      %v3799 = vpop.f32.mrb[0].mxu0
      %3800 = vmatprep.mubr.f32.mxu0 0.0
      %v3801 = vand.u32 %v754, 4294901760
      %3802 = vmatmul.mubr.f32.gmra.mrb[0].mxu0 %v3801
      %v3803 = vpop.f32.mrb[0].mxu0
      %v3804 = vadd.f32 %v3353, %v3803
      %v3805 = vpop.f32.mrb[0].mxu0
      %3806 = vmatprep.mubr.f32.mxu0 0.0
      %v3807 = vand.u32 %v757, 4294901760
      %3808 = vmatmul.mubr.f32.gmra.mrb[0].mxu0 %v3807
      %v3809 = vpop.f32.mrb[0].mxu0
      %v3810 = vadd.f32 %v3359, %v3809
      %v3811 = vpop.f32.mrb[0].mxu0
      %3812 = vmatprep.mubr.f32.mxu0 0.0
      %v3813 = vand.u32 %v760, 4294901760
      %3814 = vmatmul.mubr.f32.gmra.mrb[0].mxu0 %v3813
      %v3815 = vpop.f32.mrb[0].mxu0
      %v3816 = vadd.f32 %v3365, %v3815
      %v3817 = vpop.f32.mrb[0].mxu0
      %3818 = vmatprep.mubr.f32.mxu0 0.0
      %v3819 = vand.u32 %v763, 4294901760
      %3820 = vmatmul.mubr.f32.gmra.mrb[0].mxu0 %v3819
      %v3821 = vpop.f32.mrb[0].mxu0
      %v3822 = vadd.f32 %v3371, %v3821
      %v3823 = vpop.f32.mrb[0].mxu0
      %3824 = vmatprep.mubr.f32.mxu0 0.0
      %v3825 = vand.u32 %v766, 4294901760
      %3826 = vmatmul.mubr.f32.gmra.mrb[0].mxu0 %v3825
      %v3827 = vpop.f32.mrb[0].mxu0
      %v3828 = vadd.f32 %v3377, %v3827
      %v3829 = vpop.f32.mrb[0].mxu0
      %3830 = vmatprep.mubr.f32.mxu0 0.0
      %v3831 = vand.u32 %v769, 4294901760
      %3832 = vmatmul.mubr.f32.gmra.mrb[0].mxu0 %v3831
      %v3833 = vpop.f32.mrb[0].mxu0
      %v3834 = vadd.f32 %v3383, %v3833
      %v3835 = vpop.f32.mrb[0].mxu0
      %3836 = vmatprep.mubr.f32.mxu0 0.0
      %v3837 = vand.u32 %v772, 4294901760
      %3838 = vmatmul.mubr.f32.gmra.mrb[0].mxu0 %v3837
      %v3839 = vpop.f32.mrb[0].mxu0
      %v3840 = vadd.f32 %v3389, %v3839
      %v3841 = vpop.f32.mrb[0].mxu0
      %3842 = vmatprep.mubr.f32.mxu0 0.0
      %v3843 = vand.u32 %v775, 4294901760
      %3844 = vmatmul.mubr.f32.gmra.mrb[0].mxu0 %v3843
      %v3845 = vpop.f32.mrb[0].mxu0
      %v3846 = vadd.f32 %v3395, %v3845
      %v3847 = vpop.f32.mrb[0].mxu0
      %3848 = vmatprep.mubr.f32.mxu0 0.0
      %v3849 = vand.u32 %v778, 4294901760
      %3850 = vmatmul.mubr.f32.gmra.mrb[0].mxu0 %v3849
      %v3851 = vpop.f32.mrb[0].mxu0
      %v3852 = vadd.f32 %v3401, %v3851
      %v3853 = vpop.f32.mrb[0].mxu0
      %3854 = vmatprep.mubr.f32.mxu0 0.0
      %v3855 = vand.u32 %v781, 4294901760
      %3856 = vmatmul.mubr.f32.gmra.mrb[0].mxu0 %v3855
      %v3857 = vpop.f32.mrb[0].mxu0
      %v3858 = vadd.f32 %v3407, %v3857
      %v3859 = vpop.f32.mrb[0].mxu0
      %3860 = vmatprep.mubr.f32.mxu0 0.0
      %v3861 = vand.u32 %v784, 4294901760
      %3862 = vmatmul.mubr.f32.gmra.mrb[0].mxu0 %v3861
      %v3863 = vpop.f32.mrb[0].mxu0
      %v3864 = vadd.f32 %v3413, %v3863
      %v3865 = vpop.f32.mrb[0].mxu0
      %3866 = vmatprep.mubr.f32.mxu0 0.0
      %v3867 = vand.u32 %v787, 4294901760
      %3868 = vmatmul.mubr.f32.gmra.mrb[0].mxu0 %v3867
      %v3869 = vpop.f32.mrb[0].mxu0
      %v3870 = vadd.f32 %v3419, %v3869
      %v3871 = vpop.f32.mrb[0].mxu0
      %3872 = vmatprep.mubr.f32.mxu0 0.0
      %v3873 = vand.u32 %v790, 4294901760
      %3874 = vmatmul.mubr.f32.gmra.mrb[0].mxu0 %v3873
      %v3875 = vpop.f32.mrb[0].mxu0
      %v3876 = vadd.f32 %v3425, %v3875
      %v3877 = vpop.f32.mrb[0].mxu0
      %3878 = vmatprep.mubr.f32.mxu0 0.0
      %v3879 = vand.u32 %v793, 4294901760
      %3880 = vmatmul.mubr.f32.gmra.mrb[0].mxu0 %v3879
      %v3881 = vpop.f32.mrb[0].mxu0
      %v3882 = vadd.f32 %v3431, %v3881
      %v3883 = vpop.f32.mrb[0].mxu0
      %3884 = vmatprep.mubr.f32.mxu0 0.0
      %v3885 = vand.u32 %v796, 4294901760
      %3886 = vmatmul.mubr.f32.gmra.mrb[0].mxu0 %v3885
      %v3887 = vpop.f32.mrb[0].mxu0
      %v3888 = vadd.f32 %v3437, %v3887
      %v3889 = vpop.f32.mrb[0].mxu0
      %3890 = vmatprep.mubr.f32.mxu0 0.0
      %v3891 = vand.u32 %v799, 4294901760
      %3892 = vmatmul.mubr.f32.gmra.mrb[0].mxu0 %v3891
      %v3893 = vpop.f32.mrb[0].mxu0
      %v3894 = vadd.f32 %v3443, %v3893
      %v3895 = vpop.f32.mrb[0].mxu0
      %3896 = vmatprep.mubr.f32.mxu0 0.0
      %v3897 = vand.u32 %v802, 4294901760
      %3898 = vmatmul.mubr.f32.gmra.mrb[0].mxu0 %v3897
      %v3899 = vpop.f32.mrb[0].mxu0
      %v3900 = vadd.f32 %v3449, %v3899
      %v3901 = vpop.f32.mrb[0].mxu0
      %3902 = vmatprep.mubr.f32.mxu0 0.0
      %v3903 = vand.u32 %v805, 4294901760
      %3904 = vmatmul.mubr.f32.gmra.mrb[0].mxu0 %v3903
      %v3905 = vpop.f32.mrb[0].mxu0
      %v3906 = vadd.f32 %v3455, %v3905
      %v3907 = vpop.f32.mrb[0].mxu0
      %3908 = vmatprep.mubr.f32.mxu0 0.0
      %v3909 = vand.u32 %v808, 4294901760
      %3910 = vmatmul.mubr.f32.gmra.mrb[0].mxu0 %v3909
      %v3911 = vpop.f32.mrb[0].mxu0
      %v3912 = vadd.f32 %v3461, %v3911
      %v3913 = vpop.f32.mrb[0].mxu0
      %3914 = vmatprep.mubr.f32.mxu0 0.0
      %v3915 = vand.u32 %v811, 4294901760
      %3916 = vmatmul.mubr.f32.gmra.mrb[0].mxu0 %v3915
      %v3917 = vpop.f32.mrb[0].mxu0
      %v3918 = vadd.f32 %v3467, %v3917
      %v3919 = vpop.f32.mrb[0].mxu0
      %3920 = vmatprep.mubr.f32.mxu0 0.0
      %v3921 = vand.u32 %v814, 4294901760
      %3922 = vmatmul.mubr.f32.gmra.mrb[0].mxu0 %v3921
      %v3923 = vpop.f32.mrb[0].mxu0
      %v3924 = vadd.f32 %v3473, %v3923
      %v3925 = vpop.f32.mrb[0].mxu0
      %3926 = vmatprep.mubr.f32.mxu0 0.0
      %v3927 = vand.u32 %v817, 4294901760
      %3928 = vmatmul.mubr.f32.gmra.mrb[0].mxu0 %v3927
      %v3929 = vpop.f32.mrb[0].mxu0
      %v3930 = vadd.f32 %v3479, %v3929
      %v3931 = vpop.f32.mrb[0].mxu0
      %3932 = vmatprep.mubr.f32.mxu0 0.0
      %v3933 = vand.u32 %v820, 4294901760
      %3934 = vmatmul.mubr.f32.gmra.mrb[0].mxu0 %v3933
      %v3935 = vpop.f32.mrb[0].mxu0
      %v3936 = vadd.f32 %v3485, %v3935
      %v3937 = vpop.f32.mrb[0].mxu0
      %3938 = vmatprep.mubr.f32.mxu0 0.0
      %v3939 = vand.u32 %v823, 4294901760
      %3940 = vmatmul.mubr.f32.gmra.mrb[0].mxu0 %v3939
      %v3941 = vpop.f32.mrb[0].mxu0
      %v3942 = vadd.f32 %v3491, %v3941
      %v3943 = vpop.f32.mrb[0].mxu0
      %3944 = vmatprep.mubr.f32.mxu0 0.0
      %v3945 = vand.u32 %v826, 4294901760
      %3946 = vmatmul.mubr.f32.gmra.mrb[0].mxu0 %v3945
      %v3947 = vpop.f32.mrb[0].mxu0
      %v3948 = vadd.f32 %v3497, %v3947
      %v3949 = vpop.f32.mrb[0].mxu0
      %3950 = vmatprep.mubr.f32.mxu0 0.0
      %v3951 = vand.u32 %v829, 4294901760
      %3952 = vmatmul.mubr.f32.gmra.mrb[0].mxu0 %v3951
      %v3953 = vpop.f32.mrb[0].mxu0
      %v3954 = vadd.f32 %v3503, %v3953
      %v3955 = vpop.f32.mrb[0].mxu0
      %3956 = vmatprep.mubr.f32.mxu0 0.0
      %v3957 = vand.u32 %v832, 4294901760
      %3958 = vmatmul.mubr.f32.gmra.mrb[0].mxu0 %v3957
      %v3959 = vpop.f32.mrb[0].mxu0
      %v3960 = vadd.f32 %v3509, %v3959
      %v3961 = vpop.f32.mrb[0].mxu0
      %3962 = vmatprep.mubr.f32.mxu0 0.0
      %v3963 = vand.u32 %v835, 4294901760
      %3964 = vmatmul.mubr.f32.gmra.mrb[0].mxu0 %v3963
      %v3965 = vpop.f32.mrb[0].mxu0
      %v3966 = vadd.f32 %v3515, %v3965
      %v3967 = vpop.f32.mrb[0].mxu0
      %3968 = vmatprep.mubr.f32.mxu0 0.0
      %v3969 = vand.u32 %v838, 4294901760
      %3970 = vmatmul.mubr.f32.gmra.mrb[0].mxu0 %v3969
      %v3971 = vpop.f32.mrb[0].mxu0
      %v3972 = vadd.f32 %v3521, %v3971
      %v3973 = vpop.f32.mrb[0].mxu0
      %3974 = vmatprep.mubr.f32.mxu0 0.0
      %v3975 = vand.u32 %v841, 4294901760
      %3976 = vmatmul.mubr.f32.gmra.mrb[0].mxu0 %v3975
      %v3977 = vpop.f32.mrb[0].mxu0
      %v3978 = vadd.f32 %v3527, %v3977
      %v3979 = vpop.f32.mrb[0].mxu0
      %3980 = vmatprep.mubr.f32.mxu0 0.0
      %v3981 = vand.u32 %v844, 4294901760
      %3982 = vmatmul.mubr.f32.gmra.mrb[0].mxu0 %v3981
      %v3983 = vpop.f32.mrb[0].mxu0
      %v3984 = vadd.f32 %v3533, %v3983
      %v3985 = vpop.f32.mrb[0].mxu0
      %3986 = vmatprep.mubr.f32.mxu0 0.0
      %v3987 = vand.u32 %v847, 4294901760
      %3988 = vmatmul.mubr.f32.gmra.mrb[0].mxu0 %v3987
      %v3989 = vpop.f32.mrb[0].mxu0
      %v3990 = vadd.f32 %v3539, %v3989
      %v3991 = vpop.f32.mrb[0].mxu0
      %3992 = vmatprep.mubr.f32.mxu0 0.0
      %v3993 = vand.u32 %v850, 4294901760
      %3994 = vmatmul.mubr.f32.gmra.mrb[0].mxu0 %v3993
      %v3995 = vpop.f32.mrb[0].mxu0
      %v3996 = vadd.f32 %v3545, %v3995
      %v3997 = vpop.f32.mrb[0].mxu0
      %3998 = vmatprep.mubr.f32.mxu0 0.0
      %v3999 = vand.u32 %v853, 4294901760
      %4000 = vmatmul.mubr.f32.gmra.mrb[0].mxu0 %v3999
      %v4001 = vpop.f32.mrb[0].mxu0
      %v4002 = vadd.f32 %v3551, %v4001
      %v4003 = vpop.f32.mrb[0].mxu0
      %4004 = vmatprep.mubr.f32.mxu0 0.0
      %v4005 = vand.u32 %v856, 4294901760
      %4006 = vmatmul.mubr.f32.gmra.mrb[0].mxu0 %v4005
      %v4007 = vpop.f32.mrb[0].mxu0
      %v4008 = vadd.f32 %v3557, %v4007
      %v4009 = vpop.f32.mrb[0].mxu0
      %4010 = vmatprep.mubr.f32.mxu0 0.0
      %v4011 = vand.u32 %v859, 4294901760
      %4012 = vmatmul.mubr.f32.gmra.mrb[0].mxu0 %v4011
      %v4013 = vpop.f32.mrb[0].mxu0
      %v4014 = vadd.f32 %v3563, %v4013
      %v4015 = vpop.f32.mrb[0].mxu0
      %4016 = vmatprep.mubr.f32.mxu0 0.0
      %v4017 = vand.u32 %v862, 4294901760
      %4018 = vmatmul.mubr.f32.gmra.mrb[0].mxu0 %v4017
      %v4019 = vpop.f32.mrb[0].mxu0
      %v4020 = vadd.f32 %v3569, %v4019
      %v4021 = vpop.f32.mrb[0].mxu0
      %4022 = vmatprep.mubr.f32.mxu0 0.0
      %v4023 = vand.u32 %v865, 4294901760
      %4024 = vmatmul.mubr.f32.gmra.mrb[0].mxu0 %v4023
      %v4025 = vpop.f32.mrb[0].mxu0
      %v4026 = vadd.f32 %v3575, %v4025
      %v4027 = vpop.f32.mrb[0].mxu0
      %4028 = vmatprep.mubr.f32.mxu0 0.0
      %v4029 = vand.u32 %v868, 4294901760
      %4030 = vmatmul.mubr.f32.gmra.mrb[0].mxu0 %v4029
      %v4031 = vpop.f32.mrb[0].mxu0
      %v4032 = vadd.f32 %v3581, %v4031
      %v4033 = vpop.f32.mrb[0].mxu0
      %4034 = vmatprep.mubr.f32.mxu0 0.0
      %v4035 = vand.u32 %v871, 4294901760
      %4036 = vmatmul.mubr.f32.gmra.mrb[0].mxu0 %v4035
      %v4037 = vpop.f32.mrb[0].mxu0
      %v4038 = vadd.f32 %v3587, %v4037
      %v4039 = vpop.f32.mrb[0].mxu0
      %4040 = vdwg.mxu0
      %v4041 = vmul.f32 %v3660, 1.442695
      %v4042 = vpow.pop %v4041
      %v4043 = vmul.f32 %v3666, 1.442695
      %v4044 = vpow.pop %v4043
      %v4045 = vmul.f32 %v3672, 1.442695
      %v4046 = vpow.pop %v4045
      %v4047 = vmul.f32 %v3678, 1.442695
      %v4048 = vpow.pop %v4047
      %v4049 = vmul.f32 %v3684, 1.442695
      %v4050 = vpow.pop %v4049
      %v4051 = vmul.f32 %v3690, 1.442695
      %v4052 = vpow.pop %v4051
      %v4053 = vmul.f32 %v3696, 1.442695
      %v4054 = vpow.pop %v4053
      %v4055 = vmul.f32 %v3702, 1.442695
      %v4056 = vpow.pop %v4055
      %v4057 = vmul.f32 %v3708, 1.442695
      %v4058 = vpow.pop %v4057
      %v4059 = vmul.f32 %v3714, 1.442695
      %v4060 = vpow.pop %v4059
      %v4061 = vmul.f32 %v3720, 1.442695
      %v4062 = vpow.pop %v4061
      %v4063 = vmul.f32 %v3726, 1.442695
      %v4064 = vpow.pop %v4063
      %v4065 = vmul.f32 %v3732, 1.442695
      %v4066 = vpow.pop %v4065
      %v4067 = vmul.f32 %v3738, 1.442695
      %v4068 = vpow.pop %v4067
      %v4069 = vmul.f32 %v3744, 1.442695
      %v4070 = vpow.pop %v4069
      %v4071 = vmul.f32 %v3750, 1.442695
      %v4072 = vpow.pop %v4071
      %v4073 = vmul.f32 %v3756, 1.442695
      %v4074 = vpow.pop %v4073
      %v4075 = vmul.f32 %v3762, 1.442695
      %v4076 = vpow.pop %v4075
      %v4077 = vmul.f32 %v3768, 1.442695
      %v4078 = vpow.pop %v4077
      %v4079 = vmul.f32 %v3774, 1.442695
      %v4080 = vpow.pop %v4079
      %v4081 = vmul.f32 %v3780, 1.442695
      %v4082 = vpow.pop %v4081
      %v4083 = vmul.f32 %v3786, 1.442695
      %v4084 = vpow.pop %v4083
      %v4085 = vmul.f32 %v3792, 1.442695
      %v4086 = vpow.pop %v4085
      %v4087 = vmul.f32 %v3798, 1.442695
      %v4088 = vpow.pop %v4087
      %v4089 = vmul.f32 %v3804, 1.442695
      %v4090 = vpow.pop %v4089
      %v4091 = vmul.f32 %v3810, 1.442695
      %v4092 = vpow.pop %v4091
      %v4093 = vmul.f32 %v3816, 1.442695
      %v4094 = vpow.pop %v4093
      %v4095 = vmul.f32 %v3822, 1.442695
      %v4096 = vpow.pop %v4095
      %v4097 = vmul.f32 %v3828, 1.442695
      %v4098 = vpow.pop %v4097
      %v4099 = vmul.f32 %v3834, 1.442695
      %v4100 = vpow.pop %v4099
      %v4101 = vmul.f32 %v3840, 1.442695
      %v4102 = vpow.pop %v4101
      %v4103 = vmul.f32 %v3846, 1.442695
      %v4104 = vpow.pop %v4103
      %v4105 = vmul.f32 %v3852, 1.442695
      %v4106 = vpow.pop %v4105
      %v4107 = vmul.f32 %v3858, 1.442695
      %v4108 = vpow.pop %v4107
      %v4109 = vmul.f32 %v3864, 1.442695
      %v4110 = vpow.pop %v4109
      %v4111 = vmul.f32 %v3870, 1.442695
      %v4112 = vpow.pop %v4111
      %v4113 = vmul.f32 %v3876, 1.442695
      %v4114 = vpow.pop %v4113
      %v4115 = vmul.f32 %v3882, 1.442695
      %v4116 = vpow.pop %v4115
      %v4117 = vmul.f32 %v3888, 1.442695
      %v4118 = vpow.pop %v4117
      %v4119 = vmul.f32 %v3894, 1.442695
      %v4120 = vpow.pop %v4119
      %v4121 = vmul.f32 %v3900, 1.442695
      %v4122 = vpow.pop %v4121
      %v4123 = vmul.f32 %v3906, 1.442695
      %v4124 = vpow.pop %v4123
      %v4125 = vmul.f32 %v3912, 1.442695
      %v4126 = vpow.pop %v4125
      %v4127 = vmul.f32 %v3918, 1.442695
      %v4128 = vpow.pop %v4127
      %v4129 = vmul.f32 %v3924, 1.442695
      %v4130 = vpow.pop %v4129
      %v4131 = vmul.f32 %v3930, 1.442695
      %v4132 = vpow.pop %v4131
      %v4133 = vmul.f32 %v3936, 1.442695
      %v4134 = vpow.pop %v4133
      %v4135 = vmul.f32 %v3942, 1.442695
      %v4136 = vpow.pop %v4135
      %v4137 = vmul.f32 %v3948, 1.442695
      %v4138 = vpow.pop %v4137
      %v4139 = vmul.f32 %v3954, 1.442695
      %v4140 = vpow.pop %v4139
      %v4141 = vmul.f32 %v3960, 1.442695
      %v4142 = vpow.pop %v4141
      %v4143 = vmul.f32 %v3966, 1.442695
      %v4144 = vpow.pop %v4143
      %v4145 = vmul.f32 %v3972, 1.442695
      %v4146 = vpow.pop %v4145
      %v4147 = vmul.f32 %v3978, 1.442695
      %v4148 = vpow.pop %v4147
      %v4149 = vmul.f32 %v3984, 1.442695
      %v4150 = vpow.pop %v4149
      %v4151 = vmul.f32 %v3990, 1.442695
      %v4152 = vpow.pop %v4151
      %v4153 = vmul.f32 %v3996, 1.442695
      %v4154 = vpow.pop %v4153
      %v4155 = vmul.f32 %v4002, 1.442695
      %v4156 = vpow.pop %v4155
      %v4157 = vmul.f32 %v4008, 1.442695
      %v4158 = vpow.pop %v4157
      %v4159 = vmul.f32 %v4014, 1.442695
      %v4160 = vpow.pop %v4159
      %v4161 = vmul.f32 %v4020, 1.442695
      %v4162 = vpow.pop %v4161
      %v4163 = vmul.f32 %v4026, 1.442695
      %v4164 = vpow.pop %v4163
      %v4165 = vmul.f32 %v4032, 1.442695
      %v4166 = vpow.pop %v4165
      %v4167 = vmul.f32 %v4038, 1.442695
      %v4168 = vpow.pop %v4167
      %v4169 = vmul.f32 %v358, %v4042
      %v4170 = vmul.f32 %v359, %v4044
      %v4171 = vmul.f32 %v360, %v4046
      %v4172 = vmul.f32 %v361, %v4048
      %v4173 = vmul.f32 %v362, %v4050
      %v4174 = vmul.f32 %v363, %v4052
      %v4175 = vmul.f32 %v364, %v4054
      %v4176 = vmul.f32 %v365, %v4056
      %v4177 = vmul.f32 %v366, %v4058
      %v4178 = vmul.f32 %v367, %v4060
      %v4179 = vmul.f32 %v368, %v4062
      %v4180 = vmul.f32 %v369, %v4064
      %v4181 = vmul.f32 %v370, %v4066
      %v4182 = vmul.f32 %v371, %v4068
      %v4183 = vmul.f32 %v372, %v4070
      %v4184 = vmul.f32 %v373, %v4072
      %v4185 = vmul.f32 %v374, %v4074
      %v4186 = vmul.f32 %v375, %v4076
      %v4187 = vmul.f32 %v376, %v4078
      %v4188 = vmul.f32 %v377, %v4080
      %v4189 = vmul.f32 %v378, %v4082
      %v4190 = vmul.f32 %v379, %v4084
      %v4191 = vmul.f32 %v380, %v4086
      %v4192 = vmul.f32 %v381, %v4088
      %v4193 = vmul.f32 %v382, %v4090
      %v4194 = vmul.f32 %v383, %v4092
      %v4195 = vmul.f32 %v384, %v4094
      %v4196 = vmul.f32 %v385, %v4096
      %v4197 = vmul.f32 %v386, %v4098
      %v4198 = vmul.f32 %v387, %v4100
      %v4199 = vmul.f32 %v388, %v4102
      %v4200 = vmul.f32 %v389, %v4104
      %v4201 = vmul.f32 %v390, %v4106
      %v4202 = vmul.f32 %v391, %v4108
      %v4203 = vmul.f32 %v392, %v4110
      %v4204 = vmul.f32 %v393, %v4112
      %v4205 = vmul.f32 %v394, %v4114
      %v4206 = vmul.f32 %v395, %v4116
      %v4207 = vmul.f32 %v396, %v4118
      %v4208 = vmul.f32 %v397, %v4120
      %v4209 = vmul.f32 %v398, %v4122
      %v4210 = vmul.f32 %v399, %v4124
      %v4211 = vmul.f32 %v400, %v4126
      %v4212 = vmul.f32 %v401, %v4128
      %v4213 = vmul.f32 %v402, %v4130
      %v4214 = vmul.f32 %v403, %v4132
      %v4215 = vmul.f32 %v404, %v4134
      %v4216 = vmul.f32 %v405, %v4136
      %v4217 = vmul.f32 %v406, %v4138
      %v4218 = vmul.f32 %v407, %v4140
      %v4219 = vmul.f32 %v408, %v4142
      %v4220 = vmul.f32 %v409, %v4144
      %v4221 = vmul.f32 %v410, %v4146
      %v4222 = vmul.f32 %v411, %v4148
      %v4223 = vmul.f32 %v412, %v4150
      %v4224 = vmul.f32 %v413, %v4152
      %v4225 = vmul.f32 %v414, %v4154
      %v4226 = vmul.f32 %v415, %v4156
      %v4227 = vmul.f32 %v416, %v4158
      %v4228 = vmul.f32 %v417, %v4160
      %v4229 = vmul.f32 %v418, %v4162
      %v4230 = vmul.f32 %v419, %v4164
      %v4231 = vmul.f32 %v420, %v4166
      %v4232 = vmul.f32 %v421, %v4168
      %v4233 = vld [vmem:[%s1] sm:$0xff]
      %v4234 = vld [vmem:[%s1 + $0x8] sm:$0xff]
      %v4236 = vsel %vm680, %v4169, 0
      %v4239 = vsel %vm680, %v4170, 0
      %v4242 = vsel %vm680, %v4171, 0
      %v4245 = vsel %vm680, %v4172, 0
      %v4248 = vsel %vm680, %v4173, 0
      %v4251 = vsel %vm680, %v4174, 0
      %v4254 = vsel %vm680, %v4175, 0
      %v4257 = vsel %vm680, %v4176, 0
      %v4260 = vsel %vm680, %v4177, 0
      %v4263 = vsel %vm680, %v4178, 0
      %v4266 = vsel %vm680, %v4179, 0
      %v4269 = vsel %vm680, %v4180, 0
      %v4272 = vsel %vm680, %v4181, 0
      %v4275 = vsel %vm680, %v4182, 0
      %v4278 = vsel %vm680, %v4183, 0
      %v4281 = vsel %vm680, %v4184, 0
      %v4284 = vsel %vm680, %v4185, 0
      %v4287 = vsel %vm680, %v4186, 0
      %v4290 = vsel %vm680, %v4187, 0
      %v4293 = vsel %vm680, %v4188, 0
      %v4296 = vsel %vm680, %v4189, 0
      %v4299 = vsel %vm680, %v4190, 0
      %v4302 = vsel %vm680, %v4191, 0
      %v4305 = vsel %vm680, %v4192, 0
      %v4308 = vsel %vm680, %v4193, 0
      %v4311 = vsel %vm680, %v4194, 0
      %v4314 = vsel %vm680, %v4195, 0
      %v4317 = vsel %vm680, %v4196, 0
      %v4320 = vsel %vm680, %v4197, 0
      %v4323 = vsel %vm680, %v4198, 0
      %v4326 = vsel %vm680, %v4199, 0
      %v4329 = vsel %vm680, %v4200, 0
      %v4332 = vsel %vm680, %v4201, 0
      %v4335 = vsel %vm680, %v4202, 0
      %v4338 = vsel %vm680, %v4203, 0
      %v4341 = vsel %vm680, %v4204, 0
      %v4344 = vsel %vm680, %v4205, 0
      %v4347 = vsel %vm680, %v4206, 0
      %v4350 = vsel %vm680, %v4207, 0
      %v4353 = vsel %vm680, %v4208, 0
      %v4356 = vsel %vm680, %v4209, 0
      %v4359 = vsel %vm680, %v4210, 0
      %v4362 = vsel %vm680, %v4211, 0
      %v4365 = vsel %vm680, %v4212, 0
      %v4368 = vsel %vm680, %v4213, 0
      %v4371 = vsel %vm680, %v4214, 0
      %v4374 = vsel %vm680, %v4215, 0
      %v4377 = vsel %vm680, %v4216, 0
      %v4380 = vsel %vm680, %v4217, 0
      %v4383 = vsel %vm680, %v4218, 0
      %v4386 = vsel %vm680, %v4219, 0
      %v4389 = vsel %vm680, %v4220, 0
      %v4392 = vsel %vm680, %v4221, 0
      %v4395 = vsel %vm680, %v4222, 0
      %v4398 = vsel %vm680, %v4223, 0
      %v4401 = vsel %vm680, %v4224, 0
      %v4404 = vsel %vm680, %v4225, 0
      %v4407 = vsel %vm680, %v4226, 0
      %v4410 = vsel %vm680, %v4227, 0
      %v4413 = vsel %vm680, %v4228, 0
      %v4416 = vsel %vm680, %v4229, 0
      %v4419 = vsel %vm680, %v4230, 0
      %v4422 = vsel %vm680, %v4231, 0
      %v4425 = vsel %vm680, %v4232, 0
      %4427 = vmatprep.subr.mxu0 0.0
      %v4428 = vand.u32 %v4233, 4294901760
      %4429 = vmatpush1.msra.mxu0 %v4428
      %4430 = vmatprep.subr.mxu0 0.0
      %v4431 = vand.u32 %v4234, 4294901760
      %4432 = vmatpush1.msra.mxu0 %v4431
      %4433 = vmatprep.subr.mxu0 0.0
      %4434 = vmatpush1.msra.mxu0 0.0
      %4435 = vmatprep.subr.mxu0 0.0
      %4436 = vmatpush1.msra.mxu0 0.0
      %4437 = vmatprep.subr.mxu0 0.0
      %4438 = vmatpush1.msra.mxu0 0.0
      %4439 = vmatprep.subr.mxu0 0.0
      %4440 = vmatpush1.msra.mxu0 0.0
      %4441 = vmatprep.subr.mxu0 0.0
      %4442 = vmatpush1.msra.mxu0 0.0
      %4443 = vmatprep.subr.mxu0 0.0
      %4444 = vmatpush1.msra.mxu0 0.0
      %4445 = vmatprep.subr.mxu0 0.0
      %4446 = vmatpush1.msra.mxu0 0.0
      %4447 = vmatprep.subr.mxu0 0.0
      %4448 = vmatpush1.msra.mxu0 0.0
      %4449 = vmatprep.subr.mxu0 0.0
      %4450 = vmatpush1.msra.mxu0 0.0
      %4451 = vmatprep.subr.mxu0 0.0
      %4452 = vmatpush1.msra.mxu0 0.0
      %4453 = vmatprep.subr.mxu0 0.0
      %4454 = vmatpush1.msra.mxu0 0.0
      %4455 = vmatprep.subr.mxu0 0.0
      %4456 = vmatpush1.msra.mxu0 0.0
      %4457 = vmatprep.subr.mxu0 0.0
      %4458 = vmatpush1.msra.mxu0 0.0
      %4459 = vmatprep.subr.mxu0 0.0
      %4460 = vmatpush1.msra.mxu0 0.0
      %4461 = vmatprep.subr.mxu0 0.0
      %4462 = vmatpush1.msra.mxu0 0.0
      %4463 = vmatprep.subr.mxu0 0.0
      %4464 = vmatpush1.msra.mxu0 0.0
      %4465 = vmatprep.subr.mxu0 0.0
      %4466 = vmatpush1.msra.mxu0 0.0
      %4467 = vmatprep.subr.mxu0 0.0
      %4468 = vmatpush1.msra.mxu0 0.0
      %4469 = vmatprep.subr.mxu0 0.0
      %4470 = vmatpush1.msra.mxu0 0.0
      %4471 = vmatprep.subr.mxu0 0.0
      %4472 = vmatpush1.msra.mxu0 0.0
      %4473 = vmatprep.subr.mxu0 0.0
      %4474 = vmatpush1.msra.mxu0 0.0
      %4475 = vmatprep.subr.mxu0 0.0
      %4476 = vmatpush1.msra.mxu0 0.0
      %4477 = vmatprep.subr.mxu0 0.0
      %4478 = vmatpush1.msra.mxu0 0.0
      %4479 = vmatprep.subr.mxu0 0.0
      %4480 = vmatpush1.msra.mxu0 0.0
      %4481 = vmatprep.subr.mxu0 0.0
      %4482 = vmatpush1.msra.mxu0 0.0
      %4483 = vmatprep.subr.mxu0 0.0
      %4484 = vmatpush1.msra.mxu0 0.0
      %4485 = vmatprep.subr.mxu0 0.0
      %4486 = vmatpush1.msra.mxu0 0.0
      %4487 = vmatprep.subr.mxu0 0.0
      %4488 = vmatpush1.msra.mxu0 0.0
      %4489 = vmatprep.subr.mxu0 0.0
      %4490 = vmatpush1.msra.mxu0 0.0
      %4491 = vmatprep.subr.mxu0 0.0
      %4492 = vmatpush1.msra.mxu0 0.0
      %4493 = vmatprep.mubr.f32.mxu0 0.0
      %v4494 = vand.u32 %v4236, 4294901760
      %v4495 = vsub.f32 %v4236, %v4494
      %v4496 = vand.u32 %v4495, 4294901760
      %v4497 = vsub.f32 %v4495, %v4496
      %v4498 = vand.u32 %v4497, 4294901760
      %4499 = vmatmul.mubr.f32.gmra.mrb[0].mxu0 %v4498
      %v4500 = vpop.f32.mrb[0].mxu0
      %v4501 = vadd.f32 0.0, %v4500
      %v4502 = vpop.f32.mrb[0].mxu0
      %4503 = vmatprep.mubr.f32.mxu0 0.0
      %v4504 = vand.u32 %v4239, 4294901760
      %v4505 = vsub.f32 %v4239, %v4504
      %v4506 = vand.u32 %v4505, 4294901760
      %v4507 = vsub.f32 %v4505, %v4506
      %v4508 = vand.u32 %v4507, 4294901760
      %4509 = vmatmul.mubr.f32.gmra.mrb[0].mxu0 %v4508
      %v4510 = vpop.f32.mrb[0].mxu0
      %v4511 = vadd.f32 0.0, %v4510
      %v4512 = vpop.f32.mrb[0].mxu0
      %4513 = vmatprep.mubr.f32.mxu0 0.0
      %v4514 = vand.u32 %v4242, 4294901760
      %v4515 = vsub.f32 %v4242, %v4514
      %v4516 = vand.u32 %v4515, 4294901760
      %v4517 = vsub.f32 %v4515, %v4516
      %v4518 = vand.u32 %v4517, 4294901760
      %4519 = vmatmul.mubr.f32.gmra.mrb[0].mxu0 %v4518
      %v4520 = vpop.f32.mrb[0].mxu0
      %v4521 = vadd.f32 0.0, %v4520
      %v4522 = vpop.f32.mrb[0].mxu0
      %4523 = vmatprep.mubr.f32.mxu0 0.0
      %v4524 = vand.u32 %v4245, 4294901760
      %v4525 = vsub.f32 %v4245, %v4524
      %v4526 = vand.u32 %v4525, 4294901760
      %v4527 = vsub.f32 %v4525, %v4526
      %v4528 = vand.u32 %v4527, 4294901760
      %4529 = vmatmul.mubr.f32.gmra.mrb[0].mxu0 %v4528
      %v4530 = vpop.f32.mrb[0].mxu0
      %v4531 = vadd.f32 0.0, %v4530
      %v4532 = vpop.f32.mrb[0].mxu0
      %4533 = vmatprep.mubr.f32.mxu0 0.0
      %v4534 = vand.u32 %v4248, 4294901760
      %v4535 = vsub.f32 %v4248, %v4534
      %v4536 = vand.u32 %v4535, 4294901760
      %v4537 = vsub.f32 %v4535, %v4536
      %v4538 = vand.u32 %v4537, 4294901760
      %4539 = vmatmul.mubr.f32.gmra.mrb[0].mxu0 %v4538
      %v4540 = vpop.f32.mrb[0].mxu0
      %v4541 = vadd.f32 0.0, %v4540
      %v4542 = vpop.f32.mrb[0].mxu0
      %4543 = vmatprep.mubr.f32.mxu0 0.0
      %v4544 = vand.u32 %v4251, 4294901760
      %v4545 = vsub.f32 %v4251, %v4544
      %v4546 = vand.u32 %v4545, 4294901760
      %v4547 = vsub.f32 %v4545, %v4546
      %v4548 = vand.u32 %v4547, 4294901760
      %4549 = vmatmul.mubr.f32.gmra.mrb[0].mxu0 %v4548
      %v4550 = vpop.f32.mrb[0].mxu0
      %v4551 = vadd.f32 0.0, %v4550
      %v4552 = vpop.f32.mrb[0].mxu0
      %4553 = vmatprep.mubr.f32.mxu0 0.0
      %v4554 = vand.u32 %v4254, 4294901760
      %v4555 = vsub.f32 %v4254, %v4554
      %v4556 = vand.u32 %v4555, 4294901760
      %v4557 = vsub.f32 %v4555, %v4556
      %v4558 = vand.u32 %v4557, 4294901760
      %4559 = vmatmul.mubr.f32.gmra.mrb[0].mxu0 %v4558
      %v4560 = vpop.f32.mrb[0].mxu0
      %v4561 = vadd.f32 0.0, %v4560
      %v4562 = vpop.f32.mrb[0].mxu0
      %4563 = vmatprep.mubr.f32.mxu0 0.0
      %v4564 = vand.u32 %v4257, 4294901760
      %v4565 = vsub.f32 %v4257, %v4564
      %v4566 = vand.u32 %v4565, 4294901760
      %v4567 = vsub.f32 %v4565, %v4566
      %v4568 = vand.u32 %v4567, 4294901760
      %4569 = vmatmul.mubr.f32.gmra.mrb[0].mxu0 %v4568
      %v4570 = vpop.f32.mrb[0].mxu0
      %v4571 = vadd.f32 0.0, %v4570
      %v4572 = vpop.f32.mrb[0].mxu0
      %4573 = vmatprep.mubr.f32.mxu0 0.0
      %v4574 = vand.u32 %v4260, 4294901760
      %v4575 = vsub.f32 %v4260, %v4574
      %v4576 = vand.u32 %v4575, 4294901760
      %v4577 = vsub.f32 %v4575, %v4576
      %v4578 = vand.u32 %v4577, 4294901760
      %4579 = vmatmul.mubr.f32.gmra.mrb[0].mxu0 %v4578
      %v4580 = vpop.f32.mrb[0].mxu0
      %v4581 = vadd.f32 0.0, %v4580
      %v4582 = vpop.f32.mrb[0].mxu0
      %4583 = vmatprep.mubr.f32.mxu0 0.0
      %v4584 = vand.u32 %v4263, 4294901760
      %v4585 = vsub.f32 %v4263, %v4584
      %v4586 = vand.u32 %v4585, 4294901760
      %v4587 = vsub.f32 %v4585, %v4586
      %v4588 = vand.u32 %v4587, 4294901760
      %4589 = vmatmul.mubr.f32.gmra.mrb[0].mxu0 %v4588
      %v4590 = vpop.f32.mrb[0].mxu0
      %v4591 = vadd.f32 0.0, %v4590
      %v4592 = vpop.f32.mrb[0].mxu0
      %4593 = vmatprep.mubr.f32.mxu0 0.0
      %v4594 = vand.u32 %v4266, 4294901760
      %v4595 = vsub.f32 %v4266, %v4594
      %v4596 = vand.u32 %v4595, 4294901760
      %v4597 = vsub.f32 %v4595, %v4596
      %v4598 = vand.u32 %v4597, 4294901760
      %4599 = vmatmul.mubr.f32.gmra.mrb[0].mxu0 %v4598
      %v4600 = vpop.f32.mrb[0].mxu0
      %v4601 = vadd.f32 0.0, %v4600
      %v4602 = vpop.f32.mrb[0].mxu0
      %4603 = vmatprep.mubr.f32.mxu0 0.0
      %v4604 = vand.u32 %v4269, 4294901760
      %v4605 = vsub.f32 %v4269, %v4604
      %v4606 = vand.u32 %v4605, 4294901760
      %v4607 = vsub.f32 %v4605, %v4606
      %v4608 = vand.u32 %v4607, 4294901760
      %4609 = vmatmul.mubr.f32.gmra.mrb[0].mxu0 %v4608
      %v4610 = vpop.f32.mrb[0].mxu0
      %v4611 = vadd.f32 0.0, %v4610
      %v4612 = vpop.f32.mrb[0].mxu0
      %4613 = vmatprep.mubr.f32.mxu0 0.0
      %v4614 = vand.u32 %v4272, 4294901760
      %v4615 = vsub.f32 %v4272, %v4614
      %v4616 = vand.u32 %v4615, 4294901760
      %v4617 = vsub.f32 %v4615, %v4616
      %v4618 = vand.u32 %v4617, 4294901760
      %4619 = vmatmul.mubr.f32.gmra.mrb[0].mxu0 %v4618
      %v4620 = vpop.f32.mrb[0].mxu0
      %v4621 = vadd.f32 0.0, %v4620
      %v4622 = vpop.f32.mrb[0].mxu0
      %4623 = vmatprep.mubr.f32.mxu0 0.0
      %v4624 = vand.u32 %v4275, 4294901760
      %v4625 = vsub.f32 %v4275, %v4624
      %v4626 = vand.u32 %v4625, 4294901760
      %v4627 = vsub.f32 %v4625, %v4626
      %v4628 = vand.u32 %v4627, 4294901760
      %4629 = vmatmul.mubr.f32.gmra.mrb[0].mxu0 %v4628
      %v4630 = vpop.f32.mrb[0].mxu0
      %v4631 = vadd.f32 0.0, %v4630
      %v4632 = vpop.f32.mrb[0].mxu0
      %4633 = vmatprep.mubr.f32.mxu0 0.0
      %v4634 = vand.u32 %v4278, 4294901760
      %v4635 = vsub.f32 %v4278, %v4634
      %v4636 = vand.u32 %v4635, 4294901760
      %v4637 = vsub.f32 %v4635, %v4636
      %v4638 = vand.u32 %v4637, 4294901760
      %4639 = vmatmul.mubr.f32.gmra.mrb[0].mxu0 %v4638
      %v4640 = vpop.f32.mrb[0].mxu0
      %v4641 = vadd.f32 0.0, %v4640
      %v4642 = vpop.f32.mrb[0].mxu0
      %4643 = vmatprep.mubr.f32.mxu0 0.0
      %v4644 = vand.u32 %v4281, 4294901760
      %v4645 = vsub.f32 %v4281, %v4644
      %v4646 = vand.u32 %v4645, 4294901760
      %v4647 = vsub.f32 %v4645, %v4646
      %v4648 = vand.u32 %v4647, 4294901760
      %4649 = vmatmul.mubr.f32.gmra.mrb[0].mxu0 %v4648
      %v4650 = vpop.f32.mrb[0].mxu0
      %v4651 = vadd.f32 0.0, %v4650
      %v4652 = vpop.f32.mrb[0].mxu0
      %4653 = vmatprep.mubr.f32.mxu0 0.0
      %v4654 = vand.u32 %v4284, 4294901760
      %v4655 = vsub.f32 %v4284, %v4654
      %v4656 = vand.u32 %v4655, 4294901760
      %v4657 = vsub.f32 %v4655, %v4656
      %v4658 = vand.u32 %v4657, 4294901760
      %4659 = vmatmul.mubr.f32.gmra.mrb[0].mxu0 %v4658
      %v4660 = vpop.f32.mrb[0].mxu0
      %v4661 = vadd.f32 0.0, %v4660
      %v4662 = vpop.f32.mrb[0].mxu0
      %4663 = vmatprep.mubr.f32.mxu0 0.0
      %v4664 = vand.u32 %v4287, 4294901760
      %v4665 = vsub.f32 %v4287, %v4664
      %v4666 = vand.u32 %v4665, 4294901760
      %v4667 = vsub.f32 %v4665, %v4666
      %v4668 = vand.u32 %v4667, 4294901760
      %4669 = vmatmul.mubr.f32.gmra.mrb[0].mxu0 %v4668
      %v4670 = vpop.f32.mrb[0].mxu0
      %v4671 = vadd.f32 0.0, %v4670
      %v4672 = vpop.f32.mrb[0].mxu0
      %4673 = vmatprep.mubr.f32.mxu0 0.0
      %v4674 = vand.u32 %v4290, 4294901760
      %v4675 = vsub.f32 %v4290, %v4674
      %v4676 = vand.u32 %v4675, 4294901760
      %v4677 = vsub.f32 %v4675, %v4676
      %v4678 = vand.u32 %v4677, 4294901760
      %4679 = vmatmul.mubr.f32.gmra.mrb[0].mxu0 %v4678
      %v4680 = vpop.f32.mrb[0].mxu0
      %v4681 = vadd.f32 0.0, %v4680
      %v4682 = vpop.f32.mrb[0].mxu0
      %4683 = vmatprep.mubr.f32.mxu0 0.0
      %v4684 = vand.u32 %v4293, 4294901760
      %v4685 = vsub.f32 %v4293, %v4684
      %v4686 = vand.u32 %v4685, 4294901760
      %v4687 = vsub.f32 %v4685, %v4686
      %v4688 = vand.u32 %v4687, 4294901760
      %4689 = vmatmul.mubr.f32.gmra.mrb[0].mxu0 %v4688
      %v4690 = vpop.f32.mrb[0].mxu0
      %v4691 = vadd.f32 0.0, %v4690
      %v4692 = vpop.f32.mrb[0].mxu0
      %4693 = vmatprep.mubr.f32.mxu0 0.0
      %v4694 = vand.u32 %v4296, 4294901760
      %v4695 = vsub.f32 %v4296, %v4694
      %v4696 = vand.u32 %v4695, 4294901760
      %v4697 = vsub.f32 %v4695, %v4696
      %v4698 = vand.u32 %v4697, 4294901760
      %4699 = vmatmul.mubr.f32.gmra.mrb[0].mxu0 %v4698
      %v4700 = vpop.f32.mrb[0].mxu0
      %v4701 = vadd.f32 0.0, %v4700
      %v4702 = vpop.f32.mrb[0].mxu0
      %4703 = vmatprep.mubr.f32.mxu0 0.0
      %v4704 = vand.u32 %v4299, 4294901760
      %v4705 = vsub.f32 %v4299, %v4704
      %v4706 = vand.u32 %v4705, 4294901760
      %v4707 = vsub.f32 %v4705, %v4706
      %v4708 = vand.u32 %v4707, 4294901760
      %4709 = vmatmul.mubr.f32.gmra.mrb[0].mxu0 %v4708
      %v4710 = vpop.f32.mrb[0].mxu0
      %v4711 = vadd.f32 0.0, %v4710
      %v4712 = vpop.f32.mrb[0].mxu0
      %4713 = vmatprep.mubr.f32.mxu0 0.0
      %v4714 = vand.u32 %v4302, 4294901760
      %v4715 = vsub.f32 %v4302, %v4714
      %v4716 = vand.u32 %v4715, 4294901760
      %v4717 = vsub.f32 %v4715, %v4716
      %v4718 = vand.u32 %v4717, 4294901760
      %4719 = vmatmul.mubr.f32.gmra.mrb[0].mxu0 %v4718
      %v4720 = vpop.f32.mrb[0].mxu0
      %v4721 = vadd.f32 0.0, %v4720
      %v4722 = vpop.f32.mrb[0].mxu0
      %4723 = vmatprep.mubr.f32.mxu0 0.0
      %v4724 = vand.u32 %v4305, 4294901760
      %v4725 = vsub.f32 %v4305, %v4724
      %v4726 = vand.u32 %v4725, 4294901760
      %v4727 = vsub.f32 %v4725, %v4726
      %v4728 = vand.u32 %v4727, 4294901760
      %4729 = vmatmul.mubr.f32.gmra.mrb[0].mxu0 %v4728
      %v4730 = vpop.f32.mrb[0].mxu0
      %v4731 = vadd.f32 0.0, %v4730
      %v4732 = vpop.f32.mrb[0].mxu0
      %4733 = vmatprep.mubr.f32.mxu0 0.0
      %v4734 = vand.u32 %v4308, 4294901760
      %v4735 = vsub.f32 %v4308, %v4734
      %v4736 = vand.u32 %v4735, 4294901760
      %v4737 = vsub.f32 %v4735, %v4736
      %v4738 = vand.u32 %v4737, 4294901760
      %4739 = vmatmul.mubr.f32.gmra.mrb[0].mxu0 %v4738
      %v4740 = vpop.f32.mrb[0].mxu0
      %v4741 = vadd.f32 0.0, %v4740
      %v4742 = vpop.f32.mrb[0].mxu0
      %4743 = vmatprep.mubr.f32.mxu0 0.0
      %v4744 = vand.u32 %v4311, 4294901760
      %v4745 = vsub.f32 %v4311, %v4744
      %v4746 = vand.u32 %v4745, 4294901760
      %v4747 = vsub.f32 %v4745, %v4746
      %v4748 = vand.u32 %v4747, 4294901760
      %4749 = vmatmul.mubr.f32.gmra.mrb[0].mxu0 %v4748
      %v4750 = vpop.f32.mrb[0].mxu0
      %v4751 = vadd.f32 0.0, %v4750
      %v4752 = vpop.f32.mrb[0].mxu0
      %4753 = vmatprep.mubr.f32.mxu0 0.0
      %v4754 = vand.u32 %v4314, 4294901760
      %v4755 = vsub.f32 %v4314, %v4754
      %v4756 = vand.u32 %v4755, 4294901760
      %v4757 = vsub.f32 %v4755, %v4756
      %v4758 = vand.u32 %v4757, 4294901760
      %4759 = vmatmul.mubr.f32.gmra.mrb[0].mxu0 %v4758
      %v4760 = vpop.f32.mrb[0].mxu0
      %v4761 = vadd.f32 0.0, %v4760
      %v4762 = vpop.f32.mrb[0].mxu0
      %4763 = vmatprep.mubr.f32.mxu0 0.0
      %v4764 = vand.u32 %v4317, 4294901760
      %v4765 = vsub.f32 %v4317, %v4764
      %v4766 = vand.u32 %v4765, 4294901760
      %v4767 = vsub.f32 %v4765, %v4766
      %v4768 = vand.u32 %v4767, 4294901760
      %4769 = vmatmul.mubr.f32.gmra.mrb[0].mxu0 %v4768
      %v4770 = vpop.f32.mrb[0].mxu0
      %v4771 = vadd.f32 0.0, %v4770
      %v4772 = vpop.f32.mrb[0].mxu0
      %4773 = vmatprep.mubr.f32.mxu0 0.0
      %v4774 = vand.u32 %v4320, 4294901760
      %v4775 = vsub.f32 %v4320, %v4774
      %v4776 = vand.u32 %v4775, 4294901760
      %v4777 = vsub.f32 %v4775, %v4776
      %v4778 = vand.u32 %v4777, 4294901760
      %4779 = vmatmul.mubr.f32.gmra.mrb[0].mxu0 %v4778
      %v4780 = vpop.f32.mrb[0].mxu0
      %v4781 = vadd.f32 0.0, %v4780
      %v4782 = vpop.f32.mrb[0].mxu0
      %4783 = vmatprep.mubr.f32.mxu0 0.0
      %v4784 = vand.u32 %v4323, 4294901760
      %v4785 = vsub.f32 %v4323, %v4784
      %v4786 = vand.u32 %v4785, 4294901760
      %v4787 = vsub.f32 %v4785, %v4786
      %v4788 = vand.u32 %v4787, 4294901760
      %4789 = vmatmul.mubr.f32.gmra.mrb[0].mxu0 %v4788
      %v4790 = vpop.f32.mrb[0].mxu0
      %v4791 = vadd.f32 0.0, %v4790
      %v4792 = vpop.f32.mrb[0].mxu0
      %4793 = vmatprep.mubr.f32.mxu0 0.0
      %v4794 = vand.u32 %v4326, 4294901760
      %v4795 = vsub.f32 %v4326, %v4794
      %v4796 = vand.u32 %v4795, 4294901760
      %v4797 = vsub.f32 %v4795, %v4796
      %v4798 = vand.u32 %v4797, 4294901760
      %4799 = vmatmul.mubr.f32.gmra.mrb[0].mxu0 %v4798
      %v4800 = vpop.f32.mrb[0].mxu0
      %v4801 = vadd.f32 0.0, %v4800
      %v4802 = vpop.f32.mrb[0].mxu0
      %4803 = vmatprep.mubr.f32.mxu0 0.0
      %v4804 = vand.u32 %v4329, 4294901760
      %v4805 = vsub.f32 %v4329, %v4804
      %v4806 = vand.u32 %v4805, 4294901760
      %v4807 = vsub.f32 %v4805, %v4806
      %v4808 = vand.u32 %v4807, 4294901760
      %4809 = vmatmul.mubr.f32.gmra.mrb[0].mxu0 %v4808
      %v4810 = vpop.f32.mrb[0].mxu0
      %v4811 = vadd.f32 0.0, %v4810
      %v4812 = vpop.f32.mrb[0].mxu0
      %4813 = vmatprep.mubr.f32.mxu0 0.0
      %v4814 = vand.u32 %v4332, 4294901760
      %v4815 = vsub.f32 %v4332, %v4814
      %v4816 = vand.u32 %v4815, 4294901760
      %v4817 = vsub.f32 %v4815, %v4816
      %v4818 = vand.u32 %v4817, 4294901760
      %4819 = vmatmul.mubr.f32.gmra.mrb[0].mxu0 %v4818
      %v4820 = vpop.f32.mrb[0].mxu0
      %v4821 = vadd.f32 0.0, %v4820
      %v4822 = vpop.f32.mrb[0].mxu0
      %4823 = vmatprep.mubr.f32.mxu0 0.0
      %v4824 = vand.u32 %v4335, 4294901760
      %v4825 = vsub.f32 %v4335, %v4824
      %v4826 = vand.u32 %v4825, 4294901760
      %v4827 = vsub.f32 %v4825, %v4826
      %v4828 = vand.u32 %v4827, 4294901760
      %4829 = vmatmul.mubr.f32.gmra.mrb[0].mxu0 %v4828
      %v4830 = vpop.f32.mrb[0].mxu0
      %v4831 = vadd.f32 0.0, %v4830
      %v4832 = vpop.f32.mrb[0].mxu0
      %4833 = vmatprep.mubr.f32.mxu0 0.0
      %v4834 = vand.u32 %v4338, 4294901760
      %v4835 = vsub.f32 %v4338, %v4834
      %v4836 = vand.u32 %v4835, 4294901760
      %v4837 = vsub.f32 %v4835, %v4836
      %v4838 = vand.u32 %v4837, 4294901760
      %4839 = vmatmul.mubr.f32.gmra.mrb[0].mxu0 %v4838
      %v4840 = vpop.f32.mrb[0].mxu0
      %v4841 = vadd.f32 0.0, %v4840
      %v4842 = vpop.f32.mrb[0].mxu0
      %4843 = vmatprep.mubr.f32.mxu0 0.0
      %v4844 = vand.u32 %v4341, 4294901760
      %v4845 = vsub.f32 %v4341, %v4844
      %v4846 = vand.u32 %v4845, 4294901760
      %v4847 = vsub.f32 %v4845, %v4846
      %v4848 = vand.u32 %v4847, 4294901760
      %4849 = vmatmul.mubr.f32.gmra.mrb[0].mxu0 %v4848
      %v4850 = vpop.f32.mrb[0].mxu0
      %v4851 = vadd.f32 0.0, %v4850
      %v4852 = vpop.f32.mrb[0].mxu0
      %4853 = vmatprep.mubr.f32.mxu0 0.0
      %v4854 = vand.u32 %v4344, 4294901760
      %v4855 = vsub.f32 %v4344, %v4854
      %v4856 = vand.u32 %v4855, 4294901760
      %v4857 = vsub.f32 %v4855, %v4856
      %v4858 = vand.u32 %v4857, 4294901760
      %4859 = vmatmul.mubr.f32.gmra.mrb[0].mxu0 %v4858
      %v4860 = vpop.f32.mrb[0].mxu0
      %v4861 = vadd.f32 0.0, %v4860
      %v4862 = vpop.f32.mrb[0].mxu0
      %4863 = vmatprep.mubr.f32.mxu0 0.0
      %v4864 = vand.u32 %v4347, 4294901760
      %v4865 = vsub.f32 %v4347, %v4864
      %v4866 = vand.u32 %v4865, 4294901760
      %v4867 = vsub.f32 %v4865, %v4866
      %v4868 = vand.u32 %v4867, 4294901760
      %4869 = vmatmul.mubr.f32.gmra.mrb[0].mxu0 %v4868
      %v4870 = vpop.f32.mrb[0].mxu0
      %v4871 = vadd.f32 0.0, %v4870
      %v4872 = vpop.f32.mrb[0].mxu0
      %4873 = vmatprep.mubr.f32.mxu0 0.0
      %v4874 = vand.u32 %v4350, 4294901760
      %v4875 = vsub.f32 %v4350, %v4874
      %v4876 = vand.u32 %v4875, 4294901760
      %v4877 = vsub.f32 %v4875, %v4876
      %v4878 = vand.u32 %v4877, 4294901760
      %4879 = vmatmul.mubr.f32.gmra.mrb[0].mxu0 %v4878
      %v4880 = vpop.f32.mrb[0].mxu0
      %v4881 = vadd.f32 0.0, %v4880
      %v4882 = vpop.f32.mrb[0].mxu0
      %4883 = vmatprep.mubr.f32.mxu0 0.0
      %v4884 = vand.u32 %v4353, 4294901760
      %v4885 = vsub.f32 %v4353, %v4884
      %v4886 = vand.u32 %v4885, 4294901760
      %v4887 = vsub.f32 %v4885, %v4886
      %v4888 = vand.u32 %v4887, 4294901760
      %4889 = vmatmul.mubr.f32.gmra.mrb[0].mxu0 %v4888
      %v4890 = vpop.f32.mrb[0].mxu0
      %v4891 = vadd.f32 0.0, %v4890
      %v4892 = vpop.f32.mrb[0].mxu0
      %4893 = vmatprep.mubr.f32.mxu0 0.0
      %v4894 = vand.u32 %v4356, 4294901760
      %v4895 = vsub.f32 %v4356, %v4894
      %v4896 = vand.u32 %v4895, 4294901760
      %v4897 = vsub.f32 %v4895, %v4896
      %v4898 = vand.u32 %v4897, 4294901760
      %4899 = vmatmul.mubr.f32.gmra.mrb[0].mxu0 %v4898
      %v4900 = vpop.f32.mrb[0].mxu0
      %v4901 = vadd.f32 0.0, %v4900
      %v4902 = vpop.f32.mrb[0].mxu0
      %4903 = vmatprep.mubr.f32.mxu0 0.0
      %v4904 = vand.u32 %v4359, 4294901760
      %v4905 = vsub.f32 %v4359, %v4904
      %v4906 = vand.u32 %v4905, 4294901760
      %v4907 = vsub.f32 %v4905, %v4906
      %v4908 = vand.u32 %v4907, 4294901760
      %4909 = vmatmul.mubr.f32.gmra.mrb[0].mxu0 %v4908
      %v4910 = vpop.f32.mrb[0].mxu0
      %v4911 = vadd.f32 0.0, %v4910
      %v4912 = vpop.f32.mrb[0].mxu0
      %4913 = vmatprep.mubr.f32.mxu0 0.0
      %v4914 = vand.u32 %v4362, 4294901760
      %v4915 = vsub.f32 %v4362, %v4914
      %v4916 = vand.u32 %v4915, 4294901760
      %v4917 = vsub.f32 %v4915, %v4916
      %v4918 = vand.u32 %v4917, 4294901760
      %4919 = vmatmul.mubr.f32.gmra.mrb[0].mxu0 %v4918
      %v4920 = vpop.f32.mrb[0].mxu0
      %v4921 = vadd.f32 0.0, %v4920
      %v4922 = vpop.f32.mrb[0].mxu0
      %4923 = vmatprep.mubr.f32.mxu0 0.0
      %v4924 = vand.u32 %v4365, 4294901760
      %v4925 = vsub.f32 %v4365, %v4924
      %v4926 = vand.u32 %v4925, 4294901760
      %v4927 = vsub.f32 %v4925, %v4926
      %v4928 = vand.u32 %v4927, 4294901760
      %4929 = vmatmul.mubr.f32.gmra.mrb[0].mxu0 %v4928
      %v4930 = vpop.f32.mrb[0].mxu0
      %v4931 = vadd.f32 0.0, %v4930
      %v4932 = vpop.f32.mrb[0].mxu0
      %4933 = vmatprep.mubr.f32.mxu0 0.0
      %v4934 = vand.u32 %v4368, 4294901760
      %v4935 = vsub.f32 %v4368, %v4934
      %v4936 = vand.u32 %v4935, 4294901760
      %v4937 = vsub.f32 %v4935, %v4936
      %v4938 = vand.u32 %v4937, 4294901760
      %4939 = vmatmul.mubr.f32.gmra.mrb[0].mxu0 %v4938
      %v4940 = vpop.f32.mrb[0].mxu0
      %v4941 = vadd.f32 0.0, %v4940
      %v4942 = vpop.f32.mrb[0].mxu0
      %4943 = vmatprep.mubr.f32.mxu0 0.0
      %v4944 = vand.u32 %v4371, 4294901760
      %v4945 = vsub.f32 %v4371, %v4944
      %v4946 = vand.u32 %v4945, 4294901760
      %v4947 = vsub.f32 %v4945, %v4946
      %v4948 = vand.u32 %v4947, 4294901760
      %4949 = vmatmul.mubr.f32.gmra.mrb[0].mxu0 %v4948
      %v4950 = vpop.f32.mrb[0].mxu0
      %v4951 = vadd.f32 0.0, %v4950
      %v4952 = vpop.f32.mrb[0].mxu0
      %4953 = vmatprep.mubr.f32.mxu0 0.0
      %v4954 = vand.u32 %v4374, 4294901760
      %v4955 = vsub.f32 %v4374, %v4954
      %v4956 = vand.u32 %v4955, 4294901760
      %v4957 = vsub.f32 %v4955, %v4956
      %v4958 = vand.u32 %v4957, 4294901760
      %4959 = vmatmul.mubr.f32.gmra.mrb[0].mxu0 %v4958
      %v4960 = vpop.f32.mrb[0].mxu0
      %v4961 = vadd.f32 0.0, %v4960
      %v4962 = vpop.f32.mrb[0].mxu0
      %4963 = vmatprep.mubr.f32.mxu0 0.0
      %v4964 = vand.u32 %v4377, 4294901760
      %v4965 = vsub.f32 %v4377, %v4964
      %v4966 = vand.u32 %v4965, 4294901760
      %v4967 = vsub.f32 %v4965, %v4966
      %v4968 = vand.u32 %v4967, 4294901760
      %4969 = vmatmul.mubr.f32.gmra.mrb[0].mxu0 %v4968
      %v4970 = vpop.f32.mrb[0].mxu0
      %v4971 = vadd.f32 0.0, %v4970
      %v4972 = vpop.f32.mrb[0].mxu0
      %4973 = vmatprep.mubr.f32.mxu0 0.0
      %v4974 = vand.u32 %v4380, 4294901760
      %v4975 = vsub.f32 %v4380, %v4974
      %v4976 = vand.u32 %v4975, 4294901760
      %v4977 = vsub.f32 %v4975, %v4976
      %v4978 = vand.u32 %v4977, 4294901760
      %4979 = vmatmul.mubr.f32.gmra.mrb[0].mxu0 %v4978
      %v4980 = vpop.f32.mrb[0].mxu0
      %v4981 = vadd.f32 0.0, %v4980
      %v4982 = vpop.f32.mrb[0].mxu0
      %4983 = vmatprep.mubr.f32.mxu0 0.0
      %v4984 = vand.u32 %v4383, 4294901760
      %v4985 = vsub.f32 %v4383, %v4984
      %v4986 = vand.u32 %v4985, 4294901760
      %v4987 = vsub.f32 %v4985, %v4986
      %v4988 = vand.u32 %v4987, 4294901760
      %4989 = vmatmul.mubr.f32.gmra.mrb[0].mxu0 %v4988
      %v4990 = vpop.f32.mrb[0].mxu0
      %v4991 = vadd.f32 0.0, %v4990
      %v4992 = vpop.f32.mrb[0].mxu0
      %4993 = vmatprep.mubr.f32.mxu0 0.0
      %v4994 = vand.u32 %v4386, 4294901760
      %v4995 = vsub.f32 %v4386, %v4994
      %v4996 = vand.u32 %v4995, 4294901760
      %v4997 = vsub.f32 %v4995, %v4996
      %v4998 = vand.u32 %v4997, 4294901760
      %4999 = vmatmul.mubr.f32.gmra.mrb[0].mxu0 %v4998
      %v5000 = vpop.f32.mrb[0].mxu0
      %v5001 = vadd.f32 0.0, %v5000
      %v5002 = vpop.f32.mrb[0].mxu0
      %5003 = vmatprep.mubr.f32.mxu0 0.0
      %v5004 = vand.u32 %v4389, 4294901760
      %v5005 = vsub.f32 %v4389, %v5004
      %v5006 = vand.u32 %v5005, 4294901760
      %v5007 = vsub.f32 %v5005, %v5006
      %v5008 = vand.u32 %v5007, 4294901760
      %5009 = vmatmul.mubr.f32.gmra.mrb[0].mxu0 %v5008
      %v5010 = vpop.f32.mrb[0].mxu0
      %v5011 = vadd.f32 0.0, %v5010
      %v5012 = vpop.f32.mrb[0].mxu0
      %5013 = vmatprep.mubr.f32.mxu0 0.0
      %v5014 = vand.u32 %v4392, 4294901760
      %v5015 = vsub.f32 %v4392, %v5014
      %v5016 = vand.u32 %v5015, 4294901760
      %v5017 = vsub.f32 %v5015, %v5016
      %v5018 = vand.u32 %v5017, 4294901760
      %5019 = vmatmul.mubr.f32.gmra.mrb[0].mxu0 %v5018
      %v5020 = vpop.f32.mrb[0].mxu0
      %v5021 = vadd.f32 0.0, %v5020
      %v5022 = vpop.f32.mrb[0].mxu0
      %5023 = vmatprep.mubr.f32.mxu0 0.0
      %v5024 = vand.u32 %v4395, 4294901760
      %v5025 = vsub.f32 %v4395, %v5024
      %v5026 = vand.u32 %v5025, 4294901760
      %v5027 = vsub.f32 %v5025, %v5026
      %v5028 = vand.u32 %v5027, 4294901760
      %5029 = vmatmul.mubr.f32.gmra.mrb[0].mxu0 %v5028
      %v5030 = vpop.f32.mrb[0].mxu0
      %v5031 = vadd.f32 0.0, %v5030
      %v5032 = vpop.f32.mrb[0].mxu0
      %5033 = vmatprep.mubr.f32.mxu0 0.0
      %v5034 = vand.u32 %v4398, 4294901760
      %v5035 = vsub.f32 %v4398, %v5034
      %v5036 = vand.u32 %v5035, 4294901760
      %v5037 = vsub.f32 %v5035, %v5036
      %v5038 = vand.u32 %v5037, 4294901760
      %5039 = vmatmul.mubr.f32.gmra.mrb[0].mxu0 %v5038
      %v5040 = vpop.f32.mrb[0].mxu0
      %v5041 = vadd.f32 0.0, %v5040
      %v5042 = vpop.f32.mrb[0].mxu0
      %5043 = vmatprep.mubr.f32.mxu0 0.0
      %v5044 = vand.u32 %v4401, 4294901760
      %v5045 = vsub.f32 %v4401, %v5044
      %v5046 = vand.u32 %v5045, 4294901760
      %v5047 = vsub.f32 %v5045, %v5046
      %v5048 = vand.u32 %v5047, 4294901760
      %5049 = vmatmul.mubr.f32.gmra.mrb[0].mxu0 %v5048
      %v5050 = vpop.f32.mrb[0].mxu0
      %v5051 = vadd.f32 0.0, %v5050
      %v5052 = vpop.f32.mrb[0].mxu0
      %5053 = vmatprep.mubr.f32.mxu0 0.0
      %v5054 = vand.u32 %v4404, 4294901760
      %v5055 = vsub.f32 %v4404, %v5054
      %v5056 = vand.u32 %v5055, 4294901760
      %v5057 = vsub.f32 %v5055, %v5056
      %v5058 = vand.u32 %v5057, 4294901760
      %5059 = vmatmul.mubr.f32.gmra.mrb[0].mxu0 %v5058
      %v5060 = vpop.f32.mrb[0].mxu0
      %v5061 = vadd.f32 0.0, %v5060
      %v5062 = vpop.f32.mrb[0].mxu0
      %5063 = vmatprep.mubr.f32.mxu0 0.0
      %v5064 = vand.u32 %v4407, 4294901760
      %v5065 = vsub.f32 %v4407, %v5064
      %v5066 = vand.u32 %v5065, 4294901760
      %v5067 = vsub.f32 %v5065, %v5066
      %v5068 = vand.u32 %v5067, 4294901760
      %5069 = vmatmul.mubr.f32.gmra.mrb[0].mxu0 %v5068
      %v5070 = vpop.f32.mrb[0].mxu0
      %v5071 = vadd.f32 0.0, %v5070
      %v5072 = vpop.f32.mrb[0].mxu0
      %5073 = vmatprep.mubr.f32.mxu0 0.0
      %v5074 = vand.u32 %v4410, 4294901760
      %v5075 = vsub.f32 %v4410, %v5074
      %v5076 = vand.u32 %v5075, 4294901760
      %v5077 = vsub.f32 %v5075, %v5076
      %v5078 = vand.u32 %v5077, 4294901760
      %5079 = vmatmul.mubr.f32.gmra.mrb[0].mxu0 %v5078
      %v5080 = vpop.f32.mrb[0].mxu0
      %v5081 = vadd.f32 0.0, %v5080
      %v5082 = vpop.f32.mrb[0].mxu0
      %5083 = vmatprep.mubr.f32.mxu0 0.0
      %v5084 = vand.u32 %v4413, 4294901760
      %v5085 = vsub.f32 %v4413, %v5084
      %v5086 = vand.u32 %v5085, 4294901760
      %v5087 = vsub.f32 %v5085, %v5086
      %v5088 = vand.u32 %v5087, 4294901760
      %5089 = vmatmul.mubr.f32.gmra.mrb[0].mxu0 %v5088
      %v5090 = vpop.f32.mrb[0].mxu0
      %v5091 = vadd.f32 0.0, %v5090
      %v5092 = vpop.f32.mrb[0].mxu0
      %5093 = vmatprep.mubr.f32.mxu0 0.0
      %v5094 = vand.u32 %v4416, 4294901760
      %v5095 = vsub.f32 %v4416, %v5094
      %v5096 = vand.u32 %v5095, 4294901760
      %v5097 = vsub.f32 %v5095, %v5096
      %v5098 = vand.u32 %v5097, 4294901760
      %5099 = vmatmul.mubr.f32.gmra.mrb[0].mxu0 %v5098
      %v5100 = vpop.f32.mrb[0].mxu0
      %v5101 = vadd.f32 0.0, %v5100
      %v5102 = vpop.f32.mrb[0].mxu0
      %5103 = vmatprep.mubr.f32.mxu0 0.0
      %v5104 = vand.u32 %v4419, 4294901760
      %v5105 = vsub.f32 %v4419, %v5104
      %v5106 = vand.u32 %v5105, 4294901760
      %v5107 = vsub.f32 %v5105, %v5106
      %v5108 = vand.u32 %v5107, 4294901760
      %5109 = vmatmul.mubr.f32.gmra.mrb[0].mxu0 %v5108
      %v5110 = vpop.f32.mrb[0].mxu0
      %v5111 = vadd.f32 0.0, %v5110
      %v5112 = vpop.f32.mrb[0].mxu0
      %5113 = vmatprep.mubr.f32.mxu0 0.0
      %v5114 = vand.u32 %v4422, 4294901760
      %v5115 = vsub.f32 %v4422, %v5114
      %v5116 = vand.u32 %v5115, 4294901760
      %v5117 = vsub.f32 %v5115, %v5116
      %v5118 = vand.u32 %v5117, 4294901760
      %5119 = vmatmul.mubr.f32.gmra.mrb[0].mxu0 %v5118
      %v5120 = vpop.f32.mrb[0].mxu0
      %v5121 = vadd.f32 0.0, %v5120
      %v5122 = vpop.f32.mrb[0].mxu0
      %5123 = vmatprep.mubr.f32.mxu0 0.0
      %v5124 = vand.u32 %v4425, 4294901760
      %v5125 = vsub.f32 %v4425, %v5124
      %v5126 = vand.u32 %v5125, 4294901760
      %v5127 = vsub.f32 %v5125, %v5126
      %v5128 = vand.u32 %v5127, 4294901760
      %5129 = vmatmul.mubr.f32.gmra.mrb[0].mxu0 %v5128
      %v5130 = vpop.f32.mrb[0].mxu0
      %v5131 = vadd.f32 0.0, %v5130
      %v5132 = vpop.f32.mrb[0].mxu0
      %5133 = vdwg.mxu0
      %5134 = vmatprep.subr.mxu0 0.0
      %v5135 = vand.u32 %v4233, 4294901760
      %v5136 = vsub.f32 %v4233, %v5135
      %v5137 = vand.u32 %v5136, 4294901760
      %v5138 = vsub.f32 %v5136, %v5137
      %v5139 = vand.u32 %v5138, 4294901760
      %5140 = vmatpush1.msra.mxu0 %v5139
      %5141 = vmatprep.subr.mxu0 0.0
      %v5142 = vand.u32 %v4234, 4294901760
      %v5143 = vsub.f32 %v4234, %v5142
      %v5144 = vand.u32 %v5143, 4294901760
      %v5145 = vsub.f32 %v5143, %v5144
      %v5146 = vand.u32 %v5145, 4294901760
      %5147 = vmatpush1.msra.mxu0 %v5146
      %5148 = vmatprep.subr.mxu0 0.0
      %5149 = vmatpush1.msra.mxu0 0.0
      %5150 = vmatprep.subr.mxu0 0.0
      %5151 = vmatpush1.msra.mxu0 0.0
      %5152 = vmatprep.subr.mxu0 0.0
      %5153 = vmatpush1.msra.mxu0 0.0
      %5154 = vmatprep.subr.mxu0 0.0
      %5155 = vmatpush1.msra.mxu0 0.0
      %5156 = vmatprep.subr.mxu0 0.0
      %5157 = vmatpush1.msra.mxu0 0.0
      %5158 = vmatprep.subr.mxu0 0.0
      %5159 = vmatpush1.msra.mxu0 0.0
      %5160 = vmatprep.subr.mxu0 0.0
      %5161 = vmatpush1.msra.mxu0 0.0
      %5162 = vmatprep.subr.mxu0 0.0
      %5163 = vmatpush1.msra.mxu0 0.0
      %5164 = vmatprep.subr.mxu0 0.0
      %5165 = vmatpush1.msra.mxu0 0.0
      %5166 = vmatprep.subr.mxu0 0.0
      %5167 = vmatpush1.msra.mxu0 0.0
      %5168 = vmatprep.subr.mxu0 0.0
      %5169 = vmatpush1.msra.mxu0 0.0
      %5170 = vmatprep.subr.mxu0 0.0
      %5171 = vmatpush1.msra.mxu0 0.0
      %5172 = vmatprep.subr.mxu0 0.0
      %5173 = vmatpush1.msra.mxu0 0.0
      %5174 = vmatprep.subr.mxu0 0.0
      %5175 = vmatpush1.msra.mxu0 0.0
      %5176 = vmatprep.subr.mxu0 0.0
      %5177 = vmatpush1.msra.mxu0 0.0
      %5178 = vmatprep.subr.mxu0 0.0
      %5179 = vmatpush1.msra.mxu0 0.0
      %5180 = vmatprep.subr.mxu0 0.0
      %5181 = vmatpush1.msra.mxu0 0.0
      %5182 = vmatprep.subr.mxu0 0.0
      %5183 = vmatpush1.msra.mxu0 0.0
      %5184 = vmatprep.subr.mxu0 0.0
      %5185 = vmatpush1.msra.mxu0 0.0
      %5186 = vmatprep.subr.mxu0 0.0
      %5187 = vmatpush1.msra.mxu0 0.0
      %5188 = vmatprep.subr.mxu0 0.0
      %5189 = vmatpush1.msra.mxu0 0.0
      %5190 = vmatprep.subr.mxu0 0.0
      %5191 = vmatpush1.msra.mxu0 0.0
      %5192 = vmatprep.subr.mxu0 0.0
      %5193 = vmatpush1.msra.mxu0 0.0
      %5194 = vmatprep.subr.mxu0 0.0
      %5195 = vmatpush1.msra.mxu0 0.0
      %5196 = vmatprep.subr.mxu0 0.0
      %5197 = vmatpush1.msra.mxu0 0.0
      %5198 = vmatprep.subr.mxu0 0.0
      %5199 = vmatpush1.msra.mxu0 0.0
      %5200 = vmatprep.subr.mxu0 0.0
      %5201 = vmatpush1.msra.mxu0 0.0
      %5202 = vmatprep.subr.mxu0 0.0
      %5203 = vmatpush1.msra.mxu0 0.0
      %5204 = vmatprep.subr.mxu0 0.0
      %5205 = vmatpush1.msra.mxu0 0.0
      %5206 = vmatprep.subr.mxu0 0.0
      %5207 = vmatpush1.msra.mxu0 0.0
      %5208 = vmatprep.mubr.f32.mxu0 0.0
      %v5209 = vand.u32 %v4236, 4294901760
      %5210 = vmatmul.mubr.f32.gmra.mrb[0].mxu0 %v5209
      %v5211 = vpop.f32.mrb[0].mxu0
      %v5212 = vadd.f32 %v4501, %v5211
      %v5213 = vpop.f32.mrb[0].mxu0
      %5214 = vmatprep.mubr.f32.mxu0 0.0
      %v5215 = vand.u32 %v4239, 4294901760
      %5216 = vmatmul.mubr.f32.gmra.mrb[0].mxu0 %v5215
      %v5217 = vpop.f32.mrb[0].mxu0
      %v5218 = vadd.f32 %v4511, %v5217
      %v5219 = vpop.f32.mrb[0].mxu0
      %5220 = vmatprep.mubr.f32.mxu0 0.0
      %v5221 = vand.u32 %v4242, 4294901760
      %5222 = vmatmul.mubr.f32.gmra.mrb[0].mxu0 %v5221
      %v5223 = vpop.f32.mrb[0].mxu0
      %v5224 = vadd.f32 %v4521, %v5223
      %v5225 = vpop.f32.mrb[0].mxu0
      %5226 = vmatprep.mubr.f32.mxu0 0.0
      %v5227 = vand.u32 %v4245, 4294901760
      %5228 = vmatmul.mubr.f32.gmra.mrb[0].mxu0 %v5227
      %v5229 = vpop.f32.mrb[0].mxu0
      %v5230 = vadd.f32 %v4531, %v5229
      %v5231 = vpop.f32.mrb[0].mxu0
      %5232 = vmatprep.mubr.f32.mxu0 0.0
      %v5233 = vand.u32 %v4248, 4294901760
      %5234 = vmatmul.mubr.f32.gmra.mrb[0].mxu0 %v5233
      %v5235 = vpop.f32.mrb[0].mxu0
      %v5236 = vadd.f32 %v4541, %v5235
      %v5237 = vpop.f32.mrb[0].mxu0
      %5238 = vmatprep.mubr.f32.mxu0 0.0
      %v5239 = vand.u32 %v4251, 4294901760
      %5240 = vmatmul.mubr.f32.gmra.mrb[0].mxu0 %v5239
      %v5241 = vpop.f32.mrb[0].mxu0
      %v5242 = vadd.f32 %v4551, %v5241
      %v5243 = vpop.f32.mrb[0].mxu0
      %5244 = vmatprep.mubr.f32.mxu0 0.0
      %v5245 = vand.u32 %v4254, 4294901760
      %5246 = vmatmul.mubr.f32.gmra.mrb[0].mxu0 %v5245
      %v5247 = vpop.f32.mrb[0].mxu0
      %v5248 = vadd.f32 %v4561, %v5247
      %v5249 = vpop.f32.mrb[0].mxu0
      %5250 = vmatprep.mubr.f32.mxu0 0.0
      %v5251 = vand.u32 %v4257, 4294901760
      %5252 = vmatmul.mubr.f32.gmra.mrb[0].mxu0 %v5251
      %v5253 = vpop.f32.mrb[0].mxu0
      %v5254 = vadd.f32 %v4571, %v5253
      %v5255 = vpop.f32.mrb[0].mxu0
      %5256 = vmatprep.mubr.f32.mxu0 0.0
      %v5257 = vand.u32 %v4260, 4294901760
      %5258 = vmatmul.mubr.f32.gmra.mrb[0].mxu0 %v5257
      %v5259 = vpop.f32.mrb[0].mxu0
      %v5260 = vadd.f32 %v4581, %v5259
      %v5261 = vpop.f32.mrb[0].mxu0
      %5262 = vmatprep.mubr.f32.mxu0 0.0
      %v5263 = vand.u32 %v4263, 4294901760
      %5264 = vmatmul.mubr.f32.gmra.mrb[0].mxu0 %v5263
      %v5265 = vpop.f32.mrb[0].mxu0
      %v5266 = vadd.f32 %v4591, %v5265
      %v5267 = vpop.f32.mrb[0].mxu0
      %5268 = vmatprep.mubr.f32.mxu0 0.0
      %v5269 = vand.u32 %v4266, 4294901760
      %5270 = vmatmul.mubr.f32.gmra.mrb[0].mxu0 %v5269
      %v5271 = vpop.f32.mrb[0].mxu0
      %v5272 = vadd.f32 %v4601, %v5271
      %v5273 = vpop.f32.mrb[0].mxu0
      %5274 = vmatprep.mubr.f32.mxu0 0.0
      %v5275 = vand.u32 %v4269, 4294901760
      %5276 = vmatmul.mubr.f32.gmra.mrb[0].mxu0 %v5275
      %v5277 = vpop.f32.mrb[0].mxu0
      %v5278 = vadd.f32 %v4611, %v5277
      %v5279 = vpop.f32.mrb[0].mxu0
      %5280 = vmatprep.mubr.f32.mxu0 0.0
      %v5281 = vand.u32 %v4272, 4294901760
      %5282 = vmatmul.mubr.f32.gmra.mrb[0].mxu0 %v5281
      %v5283 = vpop.f32.mrb[0].mxu0
      %v5284 = vadd.f32 %v4621, %v5283
      %v5285 = vpop.f32.mrb[0].mxu0
      %5286 = vmatprep.mubr.f32.mxu0 0.0
      %v5287 = vand.u32 %v4275, 4294901760
      %5288 = vmatmul.mubr.f32.gmra.mrb[0].mxu0 %v5287
      %v5289 = vpop.f32.mrb[0].mxu0
      %v5290 = vadd.f32 %v4631, %v5289
      %v5291 = vpop.f32.mrb[0].mxu0
      %5292 = vmatprep.mubr.f32.mxu0 0.0
      %v5293 = vand.u32 %v4278, 4294901760
      %5294 = vmatmul.mubr.f32.gmra.mrb[0].mxu0 %v5293
      %v5295 = vpop.f32.mrb[0].mxu0
      %v5296 = vadd.f32 %v4641, %v5295
      %v5297 = vpop.f32.mrb[0].mxu0
      %5298 = vmatprep.mubr.f32.mxu0 0.0
      %v5299 = vand.u32 %v4281, 4294901760
      %5300 = vmatmul.mubr.f32.gmra.mrb[0].mxu0 %v5299
      %v5301 = vpop.f32.mrb[0].mxu0
      %v5302 = vadd.f32 %v4651, %v5301
      %v5303 = vpop.f32.mrb[0].mxu0
      %5304 = vmatprep.mubr.f32.mxu0 0.0
      %v5305 = vand.u32 %v4284, 4294901760
      %5306 = vmatmul.mubr.f32.gmra.mrb[0].mxu0 %v5305
      %v5307 = vpop.f32.mrb[0].mxu0
      %v5308 = vadd.f32 %v4661, %v5307
      %v5309 = vpop.f32.mrb[0].mxu0
      %5310 = vmatprep.mubr.f32.mxu0 0.0
      %v5311 = vand.u32 %v4287, 4294901760
      %5312 = vmatmul.mubr.f32.gmra.mrb[0].mxu0 %v5311
      %v5313 = vpop.f32.mrb[0].mxu0
      %v5314 = vadd.f32 %v4671, %v5313
      %v5315 = vpop.f32.mrb[0].mxu0
      %5316 = vmatprep.mubr.f32.mxu0 0.0
      %v5317 = vand.u32 %v4290, 4294901760
      %5318 = vmatmul.mubr.f32.gmra.mrb[0].mxu0 %v5317
      %v5319 = vpop.f32.mrb[0].mxu0
      %v5320 = vadd.f32 %v4681, %v5319
      %v5321 = vpop.f32.mrb[0].mxu0
      %5322 = vmatprep.mubr.f32.mxu0 0.0
      %v5323 = vand.u32 %v4293, 4294901760
      %5324 = vmatmul.mubr.f32.gmra.mrb[0].mxu0 %v5323
      %v5325 = vpop.f32.mrb[0].mxu0
      %v5326 = vadd.f32 %v4691, %v5325
      %v5327 = vpop.f32.mrb[0].mxu0
      %5328 = vmatprep.mubr.f32.mxu0 0.0
      %v5329 = vand.u32 %v4296, 4294901760
      %5330 = vmatmul.mubr.f32.gmra.mrb[0].mxu0 %v5329
      %v5331 = vpop.f32.mrb[0].mxu0
      %v5332 = vadd.f32 %v4701, %v5331
      %v5333 = vpop.f32.mrb[0].mxu0
      %5334 = vmatprep.mubr.f32.mxu0 0.0
      %v5335 = vand.u32 %v4299, 4294901760
      %5336 = vmatmul.mubr.f32.gmra.mrb[0].mxu0 %v5335
      %v5337 = vpop.f32.mrb[0].mxu0
      %v5338 = vadd.f32 %v4711, %v5337
      %v5339 = vpop.f32.mrb[0].mxu0
      %5340 = vmatprep.mubr.f32.mxu0 0.0
      %v5341 = vand.u32 %v4302, 4294901760
      %5342 = vmatmul.mubr.f32.gmra.mrb[0].mxu0 %v5341
      %v5343 = vpop.f32.mrb[0].mxu0
      %v5344 = vadd.f32 %v4721, %v5343
      %v5345 = vpop.f32.mrb[0].mxu0
      %5346 = vmatprep.mubr.f32.mxu0 0.0
      %v5347 = vand.u32 %v4305, 4294901760
      %5348 = vmatmul.mubr.f32.gmra.mrb[0].mxu0 %v5347
      %v5349 = vpop.f32.mrb[0].mxu0
      %v5350 = vadd.f32 %v4731, %v5349
      %v5351 = vpop.f32.mrb[0].mxu0
      %5352 = vmatprep.mubr.f32.mxu0 0.0
      %v5353 = vand.u32 %v4308, 4294901760
      %5354 = vmatmul.mubr.f32.gmra.mrb[0].mxu0 %v5353
      %v5355 = vpop.f32.mrb[0].mxu0
      %v5356 = vadd.f32 %v4741, %v5355
      %v5357 = vpop.f32.mrb[0].mxu0
      %5358 = vmatprep.mubr.f32.mxu0 0.0
      %v5359 = vand.u32 %v4311, 4294901760
      %5360 = vmatmul.mubr.f32.gmra.mrb[0].mxu0 %v5359
      %v5361 = vpop.f32.mrb[0].mxu0
      %v5362 = vadd.f32 %v4751, %v5361
      %v5363 = vpop.f32.mrb[0].mxu0
      %5364 = vmatprep.mubr.f32.mxu0 0.0
      %v5365 = vand.u32 %v4314, 4294901760
      %5366 = vmatmul.mubr.f32.gmra.mrb[0].mxu0 %v5365
      %v5367 = vpop.f32.mrb[0].mxu0
      %v5368 = vadd.f32 %v4761, %v5367
      %v5369 = vpop.f32.mrb[0].mxu0
      %5370 = vmatprep.mubr.f32.mxu0 0.0
      %v5371 = vand.u32 %v4317, 4294901760
      %5372 = vmatmul.mubr.f32.gmra.mrb[0].mxu0 %v5371
      %v5373 = vpop.f32.mrb[0].mxu0
      %v5374 = vadd.f32 %v4771, %v5373
      %v5375 = vpop.f32.mrb[0].mxu0
      %5376 = vmatprep.mubr.f32.mxu0 0.0
      %v5377 = vand.u32 %v4320, 4294901760
      %5378 = vmatmul.mubr.f32.gmra.mrb[0].mxu0 %v5377
      %v5379 = vpop.f32.mrb[0].mxu0
      %v5380 = vadd.f32 %v4781, %v5379
      %v5381 = vpop.f32.mrb[0].mxu0
      %5382 = vmatprep.mubr.f32.mxu0 0.0
      %v5383 = vand.u32 %v4323, 4294901760
      %5384 = vmatmul.mubr.f32.gmra.mrb[0].mxu0 %v5383
      %v5385 = vpop.f32.mrb[0].mxu0
      %v5386 = vadd.f32 %v4791, %v5385
      %v5387 = vpop.f32.mrb[0].mxu0
      %5388 = vmatprep.mubr.f32.mxu0 0.0
      %v5389 = vand.u32 %v4326, 4294901760
      %5390 = vmatmul.mubr.f32.gmra.mrb[0].mxu0 %v5389
      %v5391 = vpop.f32.mrb[0].mxu0
      %v5392 = vadd.f32 %v4801, %v5391
      %v5393 = vpop.f32.mrb[0].mxu0
      %5394 = vmatprep.mubr.f32.mxu0 0.0
      %v5395 = vand.u32 %v4329, 4294901760
      %5396 = vmatmul.mubr.f32.gmra.mrb[0].mxu0 %v5395
      %v5397 = vpop.f32.mrb[0].mxu0
      %v5398 = vadd.f32 %v4811, %v5397
      %v5399 = vpop.f32.mrb[0].mxu0
      %5400 = vmatprep.mubr.f32.mxu0 0.0
      %v5401 = vand.u32 %v4332, 4294901760
      %5402 = vmatmul.mubr.f32.gmra.mrb[0].mxu0 %v5401
      %v5403 = vpop.f32.mrb[0].mxu0
      %v5404 = vadd.f32 %v4821, %v5403
      %v5405 = vpop.f32.mrb[0].mxu0
      %5406 = vmatprep.mubr.f32.mxu0 0.0
      %v5407 = vand.u32 %v4335, 4294901760
      %5408 = vmatmul.mubr.f32.gmra.mrb[0].mxu0 %v5407
      %v5409 = vpop.f32.mrb[0].mxu0
      %v5410 = vadd.f32 %v4831, %v5409
      %v5411 = vpop.f32.mrb[0].mxu0
      %5412 = vmatprep.mubr.f32.mxu0 0.0
      %v5413 = vand.u32 %v4338, 4294901760
      %5414 = vmatmul.mubr.f32.gmra.mrb[0].mxu0 %v5413
      %v5415 = vpop.f32.mrb[0].mxu0
      %v5416 = vadd.f32 %v4841, %v5415
      %v5417 = vpop.f32.mrb[0].mxu0
      %5418 = vmatprep.mubr.f32.mxu0 0.0
      %v5419 = vand.u32 %v4341, 4294901760
      %5420 = vmatmul.mubr.f32.gmra.mrb[0].mxu0 %v5419
      %v5421 = vpop.f32.mrb[0].mxu0
      %v5422 = vadd.f32 %v4851, %v5421
      %v5423 = vpop.f32.mrb[0].mxu0
      %5424 = vmatprep.mubr.f32.mxu0 0.0
      %v5425 = vand.u32 %v4344, 4294901760
      %5426 = vmatmul.mubr.f32.gmra.mrb[0].mxu0 %v5425
      %v5427 = vpop.f32.mrb[0].mxu0
      %v5428 = vadd.f32 %v4861, %v5427
      %v5429 = vpop.f32.mrb[0].mxu0
      %5430 = vmatprep.mubr.f32.mxu0 0.0
      %v5431 = vand.u32 %v4347, 4294901760
      %5432 = vmatmul.mubr.f32.gmra.mrb[0].mxu0 %v5431
      %v5433 = vpop.f32.mrb[0].mxu0
      %v5434 = vadd.f32 %v4871, %v5433
      %v5435 = vpop.f32.mrb[0].mxu0
      %5436 = vmatprep.mubr.f32.mxu0 0.0
      %v5437 = vand.u32 %v4350, 4294901760
      %5438 = vmatmul.mubr.f32.gmra.mrb[0].mxu0 %v5437
      %v5439 = vpop.f32.mrb[0].mxu0
      %v5440 = vadd.f32 %v4881, %v5439
      %v5441 = vpop.f32.mrb[0].mxu0
      %5442 = vmatprep.mubr.f32.mxu0 0.0
      %v5443 = vand.u32 %v4353, 4294901760
      %5444 = vmatmul.mubr.f32.gmra.mrb[0].mxu0 %v5443
      %v5445 = vpop.f32.mrb[0].mxu0
      %v5446 = vadd.f32 %v4891, %v5445
      %v5447 = vpop.f32.mrb[0].mxu0
      %5448 = vmatprep.mubr.f32.mxu0 0.0
      %v5449 = vand.u32 %v4356, 4294901760
      %5450 = vmatmul.mubr.f32.gmra.mrb[0].mxu0 %v5449
      %v5451 = vpop.f32.mrb[0].mxu0
      %v5452 = vadd.f32 %v4901, %v5451
      %v5453 = vpop.f32.mrb[0].mxu0
      %5454 = vmatprep.mubr.f32.mxu0 0.0
      %v5455 = vand.u32 %v4359, 4294901760
      %5456 = vmatmul.mubr.f32.gmra.mrb[0].mxu0 %v5455
      %v5457 = vpop.f32.mrb[0].mxu0
      %v5458 = vadd.f32 %v4911, %v5457
      %v5459 = vpop.f32.mrb[0].mxu0
      %5460 = vmatprep.mubr.f32.mxu0 0.0
      %v5461 = vand.u32 %v4362, 4294901760
      %5462 = vmatmul.mubr.f32.gmra.mrb[0].mxu0 %v5461
      %v5463 = vpop.f32.mrb[0].mxu0
      %v5464 = vadd.f32 %v4921, %v5463
      %v5465 = vpop.f32.mrb[0].mxu0
      %5466 = vmatprep.mubr.f32.mxu0 0.0
      %v5467 = vand.u32 %v4365, 4294901760
      %5468 = vmatmul.mubr.f32.gmra.mrb[0].mxu0 %v5467
      %v5469 = vpop.f32.mrb[0].mxu0
      %v5470 = vadd.f32 %v4931, %v5469
      %v5471 = vpop.f32.mrb[0].mxu0
      %5472 = vmatprep.mubr.f32.mxu0 0.0
      %v5473 = vand.u32 %v4368, 4294901760
      %5474 = vmatmul.mubr.f32.gmra.mrb[0].mxu0 %v5473
      %v5475 = vpop.f32.mrb[0].mxu0
      %v5476 = vadd.f32 %v4941, %v5475
      %v5477 = vpop.f32.mrb[0].mxu0
      %5478 = vmatprep.mubr.f32.mxu0 0.0
      %v5479 = vand.u32 %v4371, 4294901760
      %5480 = vmatmul.mubr.f32.gmra.mrb[0].mxu0 %v5479
      %v5481 = vpop.f32.mrb[0].mxu0
      %v5482 = vadd.f32 %v4951, %v5481
      %v5483 = vpop.f32.mrb[0].mxu0
      %5484 = vmatprep.mubr.f32.mxu0 0.0
      %v5485 = vand.u32 %v4374, 4294901760
      %5486 = vmatmul.mubr.f32.gmra.mrb[0].mxu0 %v5485
      %v5487 = vpop.f32.mrb[0].mxu0
      %v5488 = vadd.f32 %v4961, %v5487
      %v5489 = vpop.f32.mrb[0].mxu0
      %5490 = vmatprep.mubr.f32.mxu0 0.0
      %v5491 = vand.u32 %v4377, 4294901760
      %5492 = vmatmul.mubr.f32.gmra.mrb[0].mxu0 %v5491
      %v5493 = vpop.f32.mrb[0].mxu0
      %v5494 = vadd.f32 %v4971, %v5493
      %v5495 = vpop.f32.mrb[0].mxu0
      %5496 = vmatprep.mubr.f32.mxu0 0.0
      %v5497 = vand.u32 %v4380, 4294901760
      %5498 = vmatmul.mubr.f32.gmra.mrb[0].mxu0 %v5497
      %v5499 = vpop.f32.mrb[0].mxu0
      %v5500 = vadd.f32 %v4981, %v5499
      %v5501 = vpop.f32.mrb[0].mxu0
      %5502 = vmatprep.mubr.f32.mxu0 0.0
      %v5503 = vand.u32 %v4383, 4294901760
      %5504 = vmatmul.mubr.f32.gmra.mrb[0].mxu0 %v5503
      %v5505 = vpop.f32.mrb[0].mxu0
      %v5506 = vadd.f32 %v4991, %v5505
      %v5507 = vpop.f32.mrb[0].mxu0
      %5508 = vmatprep.mubr.f32.mxu0 0.0
      %v5509 = vand.u32 %v4386, 4294901760
      %5510 = vmatmul.mubr.f32.gmra.mrb[0].mxu0 %v5509
      %v5511 = vpop.f32.mrb[0].mxu0
      %v5512 = vadd.f32 %v5001, %v5511
      %v5513 = vpop.f32.mrb[0].mxu0
      %5514 = vmatprep.mubr.f32.mxu0 0.0
      %v5515 = vand.u32 %v4389, 4294901760
      %5516 = vmatmul.mubr.f32.gmra.mrb[0].mxu0 %v5515
      %v5517 = vpop.f32.mrb[0].mxu0
      %v5518 = vadd.f32 %v5011, %v5517
      %v5519 = vpop.f32.mrb[0].mxu0
      %5520 = vmatprep.mubr.f32.mxu0 0.0
      %v5521 = vand.u32 %v4392, 4294901760
      %5522 = vmatmul.mubr.f32.gmra.mrb[0].mxu0 %v5521
      %v5523 = vpop.f32.mrb[0].mxu0
      %v5524 = vadd.f32 %v5021, %v5523
      %v5525 = vpop.f32.mrb[0].mxu0
      %5526 = vmatprep.mubr.f32.mxu0 0.0
      %v5527 = vand.u32 %v4395, 4294901760
      %5528 = vmatmul.mubr.f32.gmra.mrb[0].mxu0 %v5527
      %v5529 = vpop.f32.mrb[0].mxu0
      %v5530 = vadd.f32 %v5031, %v5529
      %v5531 = vpop.f32.mrb[0].mxu0
      %5532 = vmatprep.mubr.f32.mxu0 0.0
      %v5533 = vand.u32 %v4398, 4294901760
      %5534 = vmatmul.mubr.f32.gmra.mrb[0].mxu0 %v5533
      %v5535 = vpop.f32.mrb[0].mxu0
      %v5536 = vadd.f32 %v5041, %v5535
      %v5537 = vpop.f32.mrb[0].mxu0
      %5538 = vmatprep.mubr.f32.mxu0 0.0
      %v5539 = vand.u32 %v4401, 4294901760
      %5540 = vmatmul.mubr.f32.gmra.mrb[0].mxu0 %v5539
      %v5541 = vpop.f32.mrb[0].mxu0
      %v5542 = vadd.f32 %v5051, %v5541
      %v5543 = vpop.f32.mrb[0].mxu0
      %5544 = vmatprep.mubr.f32.mxu0 0.0
      %v5545 = vand.u32 %v4404, 4294901760
      %5546 = vmatmul.mubr.f32.gmra.mrb[0].mxu0 %v5545
      %v5547 = vpop.f32.mrb[0].mxu0
      %v5548 = vadd.f32 %v5061, %v5547
      %v5549 = vpop.f32.mrb[0].mxu0
      %5550 = vmatprep.mubr.f32.mxu0 0.0
      %v5551 = vand.u32 %v4407, 4294901760
      %5552 = vmatmul.mubr.f32.gmra.mrb[0].mxu0 %v5551
      %v5553 = vpop.f32.mrb[0].mxu0
      %v5554 = vadd.f32 %v5071, %v5553
      %v5555 = vpop.f32.mrb[0].mxu0
      %5556 = vmatprep.mubr.f32.mxu0 0.0
      %v5557 = vand.u32 %v4410, 4294901760
      %5558 = vmatmul.mubr.f32.gmra.mrb[0].mxu0 %v5557
      %v5559 = vpop.f32.mrb[0].mxu0
      %v5560 = vadd.f32 %v5081, %v5559
      %v5561 = vpop.f32.mrb[0].mxu0
      %5562 = vmatprep.mubr.f32.mxu0 0.0
      %v5563 = vand.u32 %v4413, 4294901760
      %5564 = vmatmul.mubr.f32.gmra.mrb[0].mxu0 %v5563
      %v5565 = vpop.f32.mrb[0].mxu0
      %v5566 = vadd.f32 %v5091, %v5565
      %v5567 = vpop.f32.mrb[0].mxu0
      %5568 = vmatprep.mubr.f32.mxu0 0.0
      %v5569 = vand.u32 %v4416, 4294901760
      %5570 = vmatmul.mubr.f32.gmra.mrb[0].mxu0 %v5569
      %v5571 = vpop.f32.mrb[0].mxu0
      %v5572 = vadd.f32 %v5101, %v5571
      %v5573 = vpop.f32.mrb[0].mxu0
      %5574 = vmatprep.mubr.f32.mxu0 0.0
      %v5575 = vand.u32 %v4419, 4294901760
      %5576 = vmatmul.mubr.f32.gmra.mrb[0].mxu0 %v5575
      %v5577 = vpop.f32.mrb[0].mxu0
      %v5578 = vadd.f32 %v5111, %v5577
      %v5579 = vpop.f32.mrb[0].mxu0
      %5580 = vmatprep.mubr.f32.mxu0 0.0
      %v5581 = vand.u32 %v4422, 4294901760
      %5582 = vmatmul.mubr.f32.gmra.mrb[0].mxu0 %v5581
      %v5583 = vpop.f32.mrb[0].mxu0
      %v5584 = vadd.f32 %v5121, %v5583
      %v5585 = vpop.f32.mrb[0].mxu0
      %5586 = vmatprep.mubr.f32.mxu0 0.0
      %v5587 = vand.u32 %v4425, 4294901760
      %5588 = vmatmul.mubr.f32.gmra.mrb[0].mxu0 %v5587
      %v5589 = vpop.f32.mrb[0].mxu0
      %v5590 = vadd.f32 %v5131, %v5589
      %v5591 = vpop.f32.mrb[0].mxu0
      %5592 = vdwg.mxu0
      %5593 = vmatprep.subr.mxu0 0.0
      %v5594 = vand.u32 %v4233, 4294901760
      %v5595 = vsub.f32 %v4233, %v5594
      %5596 = vmatpush1.msra.mxu0 %v5595
      %5597 = vmatprep.subr.mxu0 0.0
      %v5598 = vand.u32 %v4234, 4294901760
      %v5599 = vsub.f32 %v4234, %v5598
      %5600 = vmatpush1.msra.mxu0 %v5599
      %5601 = vmatprep.subr.mxu0 0.0
      %5602 = vmatpush1.msra.mxu0 0.0
      %5603 = vmatprep.subr.mxu0 0.0
      %5604 = vmatpush1.msra.mxu0 0.0
      %5605 = vmatprep.subr.mxu0 0.0
      %5606 = vmatpush1.msra.mxu0 0.0
      %5607 = vmatprep.subr.mxu0 0.0
      %5608 = vmatpush1.msra.mxu0 0.0
      %5609 = vmatprep.subr.mxu0 0.0
      %5610 = vmatpush1.msra.mxu0 0.0
      %5611 = vmatprep.subr.mxu0 0.0
      %5612 = vmatpush1.msra.mxu0 0.0
      %5613 = vmatprep.subr.mxu0 0.0
      %5614 = vmatpush1.msra.mxu0 0.0
      %5615 = vmatprep.subr.mxu0 0.0
      %5616 = vmatpush1.msra.mxu0 0.0
      %5617 = vmatprep.subr.mxu0 0.0
      %5618 = vmatpush1.msra.mxu0 0.0
      %5619 = vmatprep.subr.mxu0 0.0
      %5620 = vmatpush1.msra.mxu0 0.0
      %5621 = vmatprep.subr.mxu0 0.0
      %5622 = vmatpush1.msra.mxu0 0.0
      %5623 = vmatprep.subr.mxu0 0.0
      %5624 = vmatpush1.msra.mxu0 0.0
      %5625 = vmatprep.subr.mxu0 0.0
      %5626 = vmatpush1.msra.mxu0 0.0
      %5627 = vmatprep.subr.mxu0 0.0
      %5628 = vmatpush1.msra.mxu0 0.0
      %5629 = vmatprep.subr.mxu0 0.0
      %5630 = vmatpush1.msra.mxu0 0.0
      %5631 = vmatprep.subr.mxu0 0.0
      %5632 = vmatpush1.msra.mxu0 0.0
      %5633 = vmatprep.subr.mxu0 0.0
      %5634 = vmatpush1.msra.mxu0 0.0
      %5635 = vmatprep.subr.mxu0 0.0
      %5636 = vmatpush1.msra.mxu0 0.0
      %5637 = vmatprep.subr.mxu0 0.0
      %5638 = vmatpush1.msra.mxu0 0.0
      %5639 = vmatprep.subr.mxu0 0.0
      %5640 = vmatpush1.msra.mxu0 0.0
      %5641 = vmatprep.subr.mxu0 0.0
      %5642 = vmatpush1.msra.mxu0 0.0
      %5643 = vmatprep.subr.mxu0 0.0
      %5644 = vmatpush1.msra.mxu0 0.0
      %5645 = vmatprep.subr.mxu0 0.0
      %5646 = vmatpush1.msra.mxu0 0.0
      %5647 = vmatprep.subr.mxu0 0.0
      %5648 = vmatpush1.msra.mxu0 0.0
      %5649 = vmatprep.subr.mxu0 0.0
      %5650 = vmatpush1.msra.mxu0 0.0
      %5651 = vmatprep.subr.mxu0 0.0
      %5652 = vmatpush1.msra.mxu0 0.0
      %5653 = vmatprep.subr.mxu0 0.0
      %5654 = vmatpush1.msra.mxu0 0.0
      %5655 = vmatprep.subr.mxu0 0.0
      %5656 = vmatpush1.msra.mxu0 0.0
      %5657 = vmatprep.subr.mxu0 0.0
      %5658 = vmatpush1.msra.mxu0 0.0
      %5659 = vmatprep.subr.mxu0 0.0
      %5660 = vmatpush1.msra.mxu0 0.0
      %5661 = vmatprep.mubr.f32.mxu0 0.0
      %v5662 = vand.u32 %v4236, 4294901760
      %v5663 = vsub.f32 %v4236, %v5662
      %5664 = vmatmul.mubr.f32.gmra.mrb[0].mxu0 %v5663
      %v5665 = vpop.f32.mrb[0].mxu0
      %v5666 = vadd.f32 %v5212, %v5665
      %v5667 = vpop.f32.mrb[0].mxu0
      %5668 = vmatprep.mubr.f32.mxu0 0.0
      %v5669 = vand.u32 %v4239, 4294901760
      %v5670 = vsub.f32 %v4239, %v5669
      %5671 = vmatmul.mubr.f32.gmra.mrb[0].mxu0 %v5670
      %v5672 = vpop.f32.mrb[0].mxu0
      %v5673 = vadd.f32 %v5218, %v5672
      %v5674 = vpop.f32.mrb[0].mxu0
      %5675 = vmatprep.mubr.f32.mxu0 0.0
      %v5676 = vand.u32 %v4242, 4294901760
      %v5677 = vsub.f32 %v4242, %v5676
      %5678 = vmatmul.mubr.f32.gmra.mrb[0].mxu0 %v5677
      %v5679 = vpop.f32.mrb[0].mxu0
      %v5680 = vadd.f32 %v5224, %v5679
      %v5681 = vpop.f32.mrb[0].mxu0
      %5682 = vmatprep.mubr.f32.mxu0 0.0
      %v5683 = vand.u32 %v4245, 4294901760
      %v5684 = vsub.f32 %v4245, %v5683
      %5685 = vmatmul.mubr.f32.gmra.mrb[0].mxu0 %v5684
      %v5686 = vpop.f32.mrb[0].mxu0
      %v5687 = vadd.f32 %v5230, %v5686
      %v5688 = vpop.f32.mrb[0].mxu0
      %5689 = vmatprep.mubr.f32.mxu0 0.0
      %v5690 = vand.u32 %v4248, 4294901760
      %v5691 = vsub.f32 %v4248, %v5690
      %5692 = vmatmul.mubr.f32.gmra.mrb[0].mxu0 %v5691
      %v5693 = vpop.f32.mrb[0].mxu0
      %v5694 = vadd.f32 %v5236, %v5693
      %v5695 = vpop.f32.mrb[0].mxu0
      %5696 = vmatprep.mubr.f32.mxu0 0.0
      %v5697 = vand.u32 %v4251, 4294901760
      %v5698 = vsub.f32 %v4251, %v5697
      %5699 = vmatmul.mubr.f32.gmra.mrb[0].mxu0 %v5698
      %v5700 = vpop.f32.mrb[0].mxu0
      %v5701 = vadd.f32 %v5242, %v5700
      %v5702 = vpop.f32.mrb[0].mxu0
      %5703 = vmatprep.mubr.f32.mxu0 0.0
      %v5704 = vand.u32 %v4254, 4294901760
      %v5705 = vsub.f32 %v4254, %v5704
      %5706 = vmatmul.mubr.f32.gmra.mrb[0].mxu0 %v5705
      %v5707 = vpop.f32.mrb[0].mxu0
      %v5708 = vadd.f32 %v5248, %v5707
      %v5709 = vpop.f32.mrb[0].mxu0
      %5710 = vmatprep.mubr.f32.mxu0 0.0
      %v5711 = vand.u32 %v4257, 4294901760
      %v5712 = vsub.f32 %v4257, %v5711
      %5713 = vmatmul.mubr.f32.gmra.mrb[0].mxu0 %v5712
      %v5714 = vpop.f32.mrb[0].mxu0
      %v5715 = vadd.f32 %v5254, %v5714
      %v5716 = vpop.f32.mrb[0].mxu0
      %5717 = vmatprep.mubr.f32.mxu0 0.0
      %v5718 = vand.u32 %v4260, 4294901760
      %v5719 = vsub.f32 %v4260, %v5718
      %5720 = vmatmul.mubr.f32.gmra.mrb[0].mxu0 %v5719
      %v5721 = vpop.f32.mrb[0].mxu0
      %v5722 = vadd.f32 %v5260, %v5721
      %v5723 = vpop.f32.mrb[0].mxu0
      %5724 = vmatprep.mubr.f32.mxu0 0.0
      %v5725 = vand.u32 %v4263, 4294901760
      %v5726 = vsub.f32 %v4263, %v5725
      %5727 = vmatmul.mubr.f32.gmra.mrb[0].mxu0 %v5726
      %v5728 = vpop.f32.mrb[0].mxu0
      %v5729 = vadd.f32 %v5266, %v5728
      %v5730 = vpop.f32.mrb[0].mxu0
      %5731 = vmatprep.mubr.f32.mxu0 0.0
      %v5732 = vand.u32 %v4266, 4294901760
      %v5733 = vsub.f32 %v4266, %v5732
      %5734 = vmatmul.mubr.f32.gmra.mrb[0].mxu0 %v5733
      %v5735 = vpop.f32.mrb[0].mxu0
      %v5736 = vadd.f32 %v5272, %v5735
      %v5737 = vpop.f32.mrb[0].mxu0
      %5738 = vmatprep.mubr.f32.mxu0 0.0
      %v5739 = vand.u32 %v4269, 4294901760
      %v5740 = vsub.f32 %v4269, %v5739
      %5741 = vmatmul.mubr.f32.gmra.mrb[0].mxu0 %v5740
      %v5742 = vpop.f32.mrb[0].mxu0
      %v5743 = vadd.f32 %v5278, %v5742
      %v5744 = vpop.f32.mrb[0].mxu0
      %5745 = vmatprep.mubr.f32.mxu0 0.0
      %v5746 = vand.u32 %v4272, 4294901760
      %v5747 = vsub.f32 %v4272, %v5746
      %5748 = vmatmul.mubr.f32.gmra.mrb[0].mxu0 %v5747
      %v5749 = vpop.f32.mrb[0].mxu0
      %v5750 = vadd.f32 %v5284, %v5749
      %v5751 = vpop.f32.mrb[0].mxu0
      %5752 = vmatprep.mubr.f32.mxu0 0.0
      %v5753 = vand.u32 %v4275, 4294901760
      %v5754 = vsub.f32 %v4275, %v5753
      %5755 = vmatmul.mubr.f32.gmra.mrb[0].mxu0 %v5754
      %v5756 = vpop.f32.mrb[0].mxu0
      %v5757 = vadd.f32 %v5290, %v5756
      %v5758 = vpop.f32.mrb[0].mxu0
      %5759 = vmatprep.mubr.f32.mxu0 0.0
      %v5760 = vand.u32 %v4278, 4294901760
      %v5761 = vsub.f32 %v4278, %v5760
      %5762 = vmatmul.mubr.f32.gmra.mrb[0].mxu0 %v5761
      %v5763 = vpop.f32.mrb[0].mxu0
      %v5764 = vadd.f32 %v5296, %v5763
      %v5765 = vpop.f32.mrb[0].mxu0
      %5766 = vmatprep.mubr.f32.mxu0 0.0
      %v5767 = vand.u32 %v4281, 4294901760
      %v5768 = vsub.f32 %v4281, %v5767
      %5769 = vmatmul.mubr.f32.gmra.mrb[0].mxu0 %v5768
      %v5770 = vpop.f32.mrb[0].mxu0
      %v5771 = vadd.f32 %v5302, %v5770
      %v5772 = vpop.f32.mrb[0].mxu0
      %5773 = vmatprep.mubr.f32.mxu0 0.0
      %v5774 = vand.u32 %v4284, 4294901760
      %v5775 = vsub.f32 %v4284, %v5774
      %5776 = vmatmul.mubr.f32.gmra.mrb[0].mxu0 %v5775
      %v5777 = vpop.f32.mrb[0].mxu0
      %v5778 = vadd.f32 %v5308, %v5777
      %v5779 = vpop.f32.mrb[0].mxu0
      %5780 = vmatprep.mubr.f32.mxu0 0.0
      %v5781 = vand.u32 %v4287, 4294901760
      %v5782 = vsub.f32 %v4287, %v5781
      %5783 = vmatmul.mubr.f32.gmra.mrb[0].mxu0 %v5782
      %v5784 = vpop.f32.mrb[0].mxu0
      %v5785 = vadd.f32 %v5314, %v5784
      %v5786 = vpop.f32.mrb[0].mxu0
      %5787 = vmatprep.mubr.f32.mxu0 0.0
      %v5788 = vand.u32 %v4290, 4294901760
      %v5789 = vsub.f32 %v4290, %v5788
      %5790 = vmatmul.mubr.f32.gmra.mrb[0].mxu0 %v5789
      %v5791 = vpop.f32.mrb[0].mxu0
      %v5792 = vadd.f32 %v5320, %v5791
      %v5793 = vpop.f32.mrb[0].mxu0
      %5794 = vmatprep.mubr.f32.mxu0 0.0
      %v5795 = vand.u32 %v4293, 4294901760
      %v5796 = vsub.f32 %v4293, %v5795
      %5797 = vmatmul.mubr.f32.gmra.mrb[0].mxu0 %v5796
      %v5798 = vpop.f32.mrb[0].mxu0
      %v5799 = vadd.f32 %v5326, %v5798
      %v5800 = vpop.f32.mrb[0].mxu0
      %5801 = vmatprep.mubr.f32.mxu0 0.0
      %v5802 = vand.u32 %v4296, 4294901760
      %v5803 = vsub.f32 %v4296, %v5802
      %5804 = vmatmul.mubr.f32.gmra.mrb[0].mxu0 %v5803
      %v5805 = vpop.f32.mrb[0].mxu0
      %v5806 = vadd.f32 %v5332, %v5805
      %v5807 = vpop.f32.mrb[0].mxu0
      %5808 = vmatprep.mubr.f32.mxu0 0.0
      %v5809 = vand.u32 %v4299, 4294901760
      %v5810 = vsub.f32 %v4299, %v5809
      %5811 = vmatmul.mubr.f32.gmra.mrb[0].mxu0 %v5810
      %v5812 = vpop.f32.mrb[0].mxu0
      %v5813 = vadd.f32 %v5338, %v5812
      %v5814 = vpop.f32.mrb[0].mxu0
      %5815 = vmatprep.mubr.f32.mxu0 0.0
      %v5816 = vand.u32 %v4302, 4294901760
      %v5817 = vsub.f32 %v4302, %v5816
      %5818 = vmatmul.mubr.f32.gmra.mrb[0].mxu0 %v5817
      %v5819 = vpop.f32.mrb[0].mxu0
      %v5820 = vadd.f32 %v5344, %v5819
      %v5821 = vpop.f32.mrb[0].mxu0
      %5822 = vmatprep.mubr.f32.mxu0 0.0
      %v5823 = vand.u32 %v4305, 4294901760
      %v5824 = vsub.f32 %v4305, %v5823
      %5825 = vmatmul.mubr.f32.gmra.mrb[0].mxu0 %v5824
      %v5826 = vpop.f32.mrb[0].mxu0
      %v5827 = vadd.f32 %v5350, %v5826
      %v5828 = vpop.f32.mrb[0].mxu0
      %5829 = vmatprep.mubr.f32.mxu0 0.0
      %v5830 = vand.u32 %v4308, 4294901760
      %v5831 = vsub.f32 %v4308, %v5830
      %5832 = vmatmul.mubr.f32.gmra.mrb[0].mxu0 %v5831
      %v5833 = vpop.f32.mrb[0].mxu0
      %v5834 = vadd.f32 %v5356, %v5833
      %v5835 = vpop.f32.mrb[0].mxu0
      %5836 = vmatprep.mubr.f32.mxu0 0.0
      %v5837 = vand.u32 %v4311, 4294901760
      %v5838 = vsub.f32 %v4311, %v5837
      %5839 = vmatmul.mubr.f32.gmra.mrb[0].mxu0 %v5838
      %v5840 = vpop.f32.mrb[0].mxu0
      %v5841 = vadd.f32 %v5362, %v5840
      %v5842 = vpop.f32.mrb[0].mxu0
      %5843 = vmatprep.mubr.f32.mxu0 0.0
      %v5844 = vand.u32 %v4314, 4294901760
      %v5845 = vsub.f32 %v4314, %v5844
      %5846 = vmatmul.mubr.f32.gmra.mrb[0].mxu0 %v5845
      %v5847 = vpop.f32.mrb[0].mxu0
      %v5848 = vadd.f32 %v5368, %v5847
      %v5849 = vpop.f32.mrb[0].mxu0
      %5850 = vmatprep.mubr.f32.mxu0 0.0
      %v5851 = vand.u32 %v4317, 4294901760
      %v5852 = vsub.f32 %v4317, %v5851
      %5853 = vmatmul.mubr.f32.gmra.mrb[0].mxu0 %v5852
      %v5854 = vpop.f32.mrb[0].mxu0
      %v5855 = vadd.f32 %v5374, %v5854
      %v5856 = vpop.f32.mrb[0].mxu0
      %5857 = vmatprep.mubr.f32.mxu0 0.0
      %v5858 = vand.u32 %v4320, 4294901760
      %v5859 = vsub.f32 %v4320, %v5858
      %5860 = vmatmul.mubr.f32.gmra.mrb[0].mxu0 %v5859
      %v5861 = vpop.f32.mrb[0].mxu0
      %v5862 = vadd.f32 %v5380, %v5861
      %v5863 = vpop.f32.mrb[0].mxu0
      %5864 = vmatprep.mubr.f32.mxu0 0.0
      %v5865 = vand.u32 %v4323, 4294901760
      %v5866 = vsub.f32 %v4323, %v5865
      %5867 = vmatmul.mubr.f32.gmra.mrb[0].mxu0 %v5866
      %v5868 = vpop.f32.mrb[0].mxu0
      %v5869 = vadd.f32 %v5386, %v5868
      %v5870 = vpop.f32.mrb[0].mxu0
      %5871 = vmatprep.mubr.f32.mxu0 0.0
      %v5872 = vand.u32 %v4326, 4294901760
      %v5873 = vsub.f32 %v4326, %v5872
      %5874 = vmatmul.mubr.f32.gmra.mrb[0].mxu0 %v5873
      %v5875 = vpop.f32.mrb[0].mxu0
      %v5876 = vadd.f32 %v5392, %v5875
      %v5877 = vpop.f32.mrb[0].mxu0
      %5878 = vmatprep.mubr.f32.mxu0 0.0
      %v5879 = vand.u32 %v4329, 4294901760
      %v5880 = vsub.f32 %v4329, %v5879
      %5881 = vmatmul.mubr.f32.gmra.mrb[0].mxu0 %v5880
      %v5882 = vpop.f32.mrb[0].mxu0
      %v5883 = vadd.f32 %v5398, %v5882
      %v5884 = vpop.f32.mrb[0].mxu0
      %5885 = vmatprep.mubr.f32.mxu0 0.0
      %v5886 = vand.u32 %v4332, 4294901760
      %v5887 = vsub.f32 %v4332, %v5886
      %5888 = vmatmul.mubr.f32.gmra.mrb[0].mxu0 %v5887
      %v5889 = vpop.f32.mrb[0].mxu0
      %v5890 = vadd.f32 %v5404, %v5889
      %v5891 = vpop.f32.mrb[0].mxu0
      %5892 = vmatprep.mubr.f32.mxu0 0.0
      %v5893 = vand.u32 %v4335, 4294901760
      %v5894 = vsub.f32 %v4335, %v5893
      %5895 = vmatmul.mubr.f32.gmra.mrb[0].mxu0 %v5894
      %v5896 = vpop.f32.mrb[0].mxu0
      %v5897 = vadd.f32 %v5410, %v5896
      %v5898 = vpop.f32.mrb[0].mxu0
      %5899 = vmatprep.mubr.f32.mxu0 0.0
      %v5900 = vand.u32 %v4338, 4294901760
      %v5901 = vsub.f32 %v4338, %v5900
      %5902 = vmatmul.mubr.f32.gmra.mrb[0].mxu0 %v5901
      %v5903 = vpop.f32.mrb[0].mxu0
      %v5904 = vadd.f32 %v5416, %v5903
      %v5905 = vpop.f32.mrb[0].mxu0
      %5906 = vmatprep.mubr.f32.mxu0 0.0
      %v5907 = vand.u32 %v4341, 4294901760
      %v5908 = vsub.f32 %v4341, %v5907
      %5909 = vmatmul.mubr.f32.gmra.mrb[0].mxu0 %v5908
      %v5910 = vpop.f32.mrb[0].mxu0
      %v5911 = vadd.f32 %v5422, %v5910
      %v5912 = vpop.f32.mrb[0].mxu0
      %5913 = vmatprep.mubr.f32.mxu0 0.0
      %v5914 = vand.u32 %v4344, 4294901760
      %v5915 = vsub.f32 %v4344, %v5914
      %5916 = vmatmul.mubr.f32.gmra.mrb[0].mxu0 %v5915
      %v5917 = vpop.f32.mrb[0].mxu0
      %v5918 = vadd.f32 %v5428, %v5917
      %v5919 = vpop.f32.mrb[0].mxu0
      %5920 = vmatprep.mubr.f32.mxu0 0.0
      %v5921 = vand.u32 %v4347, 4294901760
      %v5922 = vsub.f32 %v4347, %v5921
      %5923 = vmatmul.mubr.f32.gmra.mrb[0].mxu0 %v5922
      %v5924 = vpop.f32.mrb[0].mxu0
      %v5925 = vadd.f32 %v5434, %v5924
      %v5926 = vpop.f32.mrb[0].mxu0
      %5927 = vmatprep.mubr.f32.mxu0 0.0
      %v5928 = vand.u32 %v4350, 4294901760
      %v5929 = vsub.f32 %v4350, %v5928
      %5930 = vmatmul.mubr.f32.gmra.mrb[0].mxu0 %v5929
      %v5931 = vpop.f32.mrb[0].mxu0
      %v5932 = vadd.f32 %v5440, %v5931
      %v5933 = vpop.f32.mrb[0].mxu0
      %5934 = vmatprep.mubr.f32.mxu0 0.0
      %v5935 = vand.u32 %v4353, 4294901760
      %v5936 = vsub.f32 %v4353, %v5935
      %5937 = vmatmul.mubr.f32.gmra.mrb[0].mxu0 %v5936
      %v5938 = vpop.f32.mrb[0].mxu0
      %v5939 = vadd.f32 %v5446, %v5938
      %v5940 = vpop.f32.mrb[0].mxu0
      %5941 = vmatprep.mubr.f32.mxu0 0.0
      %v5942 = vand.u32 %v4356, 4294901760
      %v5943 = vsub.f32 %v4356, %v5942
      %5944 = vmatmul.mubr.f32.gmra.mrb[0].mxu0 %v5943
      %v5945 = vpop.f32.mrb[0].mxu0
      %v5946 = vadd.f32 %v5452, %v5945
      %v5947 = vpop.f32.mrb[0].mxu0
      %5948 = vmatprep.mubr.f32.mxu0 0.0
      %v5949 = vand.u32 %v4359, 4294901760
      %v5950 = vsub.f32 %v4359, %v5949
      %5951 = vmatmul.mubr.f32.gmra.mrb[0].mxu0 %v5950
      %v5952 = vpop.f32.mrb[0].mxu0
      %v5953 = vadd.f32 %v5458, %v5952
      %v5954 = vpop.f32.mrb[0].mxu0
      %5955 = vmatprep.mubr.f32.mxu0 0.0
      %v5956 = vand.u32 %v4362, 4294901760
      %v5957 = vsub.f32 %v4362, %v5956
      %5958 = vmatmul.mubr.f32.gmra.mrb[0].mxu0 %v5957
      %v5959 = vpop.f32.mrb[0].mxu0
      %v5960 = vadd.f32 %v5464, %v5959
      %v5961 = vpop.f32.mrb[0].mxu0
      %5962 = vmatprep.mubr.f32.mxu0 0.0
      %v5963 = vand.u32 %v4365, 4294901760
      %v5964 = vsub.f32 %v4365, %v5963
      %5965 = vmatmul.mubr.f32.gmra.mrb[0].mxu0 %v5964
      %v5966 = vpop.f32.mrb[0].mxu0
      %v5967 = vadd.f32 %v5470, %v5966
      %v5968 = vpop.f32.mrb[0].mxu0
      %5969 = vmatprep.mubr.f32.mxu0 0.0
      %v5970 = vand.u32 %v4368, 4294901760
      %v5971 = vsub.f32 %v4368, %v5970
      %5972 = vmatmul.mubr.f32.gmra.mrb[0].mxu0 %v5971
      %v5973 = vpop.f32.mrb[0].mxu0
      %v5974 = vadd.f32 %v5476, %v5973
      %v5975 = vpop.f32.mrb[0].mxu0
      %5976 = vmatprep.mubr.f32.mxu0 0.0
      %v5977 = vand.u32 %v4371, 4294901760
      %v5978 = vsub.f32 %v4371, %v5977
      %5979 = vmatmul.mubr.f32.gmra.mrb[0].mxu0 %v5978
      %v5980 = vpop.f32.mrb[0].mxu0
      %v5981 = vadd.f32 %v5482, %v5980
      %v5982 = vpop.f32.mrb[0].mxu0
      %5983 = vmatprep.mubr.f32.mxu0 0.0
      %v5984 = vand.u32 %v4374, 4294901760
      %v5985 = vsub.f32 %v4374, %v5984
      %5986 = vmatmul.mubr.f32.gmra.mrb[0].mxu0 %v5985
      %v5987 = vpop.f32.mrb[0].mxu0
      %v5988 = vadd.f32 %v5488, %v5987
      %v5989 = vpop.f32.mrb[0].mxu0
      %5990 = vmatprep.mubr.f32.mxu0 0.0
      %v5991 = vand.u32 %v4377, 4294901760
      %v5992 = vsub.f32 %v4377, %v5991
      %5993 = vmatmul.mubr.f32.gmra.mrb[0].mxu0 %v5992
      %v5994 = vpop.f32.mrb[0].mxu0
      %v5995 = vadd.f32 %v5494, %v5994
      %v5996 = vpop.f32.mrb[0].mxu0
      %5997 = vmatprep.mubr.f32.mxu0 0.0
      %v5998 = vand.u32 %v4380, 4294901760
      %v5999 = vsub.f32 %v4380, %v5998
      %6000 = vmatmul.mubr.f32.gmra.mrb[0].mxu0 %v5999
      %v6001 = vpop.f32.mrb[0].mxu0
      %v6002 = vadd.f32 %v5500, %v6001
      %v6003 = vpop.f32.mrb[0].mxu0
      %6004 = vmatprep.mubr.f32.mxu0 0.0
      %v6005 = vand.u32 %v4383, 4294901760
      %v6006 = vsub.f32 %v4383, %v6005
      %6007 = vmatmul.mubr.f32.gmra.mrb[0].mxu0 %v6006
      %v6008 = vpop.f32.mrb[0].mxu0
      %v6009 = vadd.f32 %v5506, %v6008
      %v6010 = vpop.f32.mrb[0].mxu0
      %6011 = vmatprep.mubr.f32.mxu0 0.0
      %v6012 = vand.u32 %v4386, 4294901760
      %v6013 = vsub.f32 %v4386, %v6012
      %6014 = vmatmul.mubr.f32.gmra.mrb[0].mxu0 %v6013
      %v6015 = vpop.f32.mrb[0].mxu0
      %v6016 = vadd.f32 %v5512, %v6015
      %v6017 = vpop.f32.mrb[0].mxu0
      %6018 = vmatprep.mubr.f32.mxu0 0.0
      %v6019 = vand.u32 %v4389, 4294901760
      %v6020 = vsub.f32 %v4389, %v6019
      %6021 = vmatmul.mubr.f32.gmra.mrb[0].mxu0 %v6020
      %v6022 = vpop.f32.mrb[0].mxu0
      %v6023 = vadd.f32 %v5518, %v6022
      %v6024 = vpop.f32.mrb[0].mxu0
      %6025 = vmatprep.mubr.f32.mxu0 0.0
      %v6026 = vand.u32 %v4392, 4294901760
      %v6027 = vsub.f32 %v4392, %v6026
      %6028 = vmatmul.mubr.f32.gmra.mrb[0].mxu0 %v6027
      %v6029 = vpop.f32.mrb[0].mxu0
      %v6030 = vadd.f32 %v5524, %v6029
      %v6031 = vpop.f32.mrb[0].mxu0
      %6032 = vmatprep.mubr.f32.mxu0 0.0
      %v6033 = vand.u32 %v4395, 4294901760
      %v6034 = vsub.f32 %v4395, %v6033
      %6035 = vmatmul.mubr.f32.gmra.mrb[0].mxu0 %v6034
      %v6036 = vpop.f32.mrb[0].mxu0
      %v6037 = vadd.f32 %v5530, %v6036
      %v6038 = vpop.f32.mrb[0].mxu0
      %6039 = vmatprep.mubr.f32.mxu0 0.0
      %v6040 = vand.u32 %v4398, 4294901760
      %v6041 = vsub.f32 %v4398, %v6040
      %6042 = vmatmul.mubr.f32.gmra.mrb[0].mxu0 %v6041
      %v6043 = vpop.f32.mrb[0].mxu0
      %v6044 = vadd.f32 %v5536, %v6043
      %v6045 = vpop.f32.mrb[0].mxu0
      %6046 = vmatprep.mubr.f32.mxu0 0.0
      %v6047 = vand.u32 %v4401, 4294901760
      %v6048 = vsub.f32 %v4401, %v6047
      %6049 = vmatmul.mubr.f32.gmra.mrb[0].mxu0 %v6048
      %v6050 = vpop.f32.mrb[0].mxu0
      %v6051 = vadd.f32 %v5542, %v6050
      %v6052 = vpop.f32.mrb[0].mxu0
      %6053 = vmatprep.mubr.f32.mxu0 0.0
      %v6054 = vand.u32 %v4404, 4294901760
      %v6055 = vsub.f32 %v4404, %v6054
      %6056 = vmatmul.mubr.f32.gmra.mrb[0].mxu0 %v6055
      %v6057 = vpop.f32.mrb[0].mxu0
      %v6058 = vadd.f32 %v5548, %v6057
      %v6059 = vpop.f32.mrb[0].mxu0
      %6060 = vmatprep.mubr.f32.mxu0 0.0
      %v6061 = vand.u32 %v4407, 4294901760
      %v6062 = vsub.f32 %v4407, %v6061
      %6063 = vmatmul.mubr.f32.gmra.mrb[0].mxu0 %v6062
      %v6064 = vpop.f32.mrb[0].mxu0
      %v6065 = vadd.f32 %v5554, %v6064
      %v6066 = vpop.f32.mrb[0].mxu0
      %6067 = vmatprep.mubr.f32.mxu0 0.0
      %v6068 = vand.u32 %v4410, 4294901760
      %v6069 = vsub.f32 %v4410, %v6068
      %6070 = vmatmul.mubr.f32.gmra.mrb[0].mxu0 %v6069
      %v6071 = vpop.f32.mrb[0].mxu0
      %v6072 = vadd.f32 %v5560, %v6071
      %v6073 = vpop.f32.mrb[0].mxu0
      %6074 = vmatprep.mubr.f32.mxu0 0.0
      %v6075 = vand.u32 %v4413, 4294901760
      %v6076 = vsub.f32 %v4413, %v6075
      %6077 = vmatmul.mubr.f32.gmra.mrb[0].mxu0 %v6076
      %v6078 = vpop.f32.mrb[0].mxu0
      %v6079 = vadd.f32 %v5566, %v6078
      %v6080 = vpop.f32.mrb[0].mxu0
      %6081 = vmatprep.mubr.f32.mxu0 0.0
      %v6082 = vand.u32 %v4416, 4294901760
      %v6083 = vsub.f32 %v4416, %v6082
      %6084 = vmatmul.mubr.f32.gmra.mrb[0].mxu0 %v6083
      %v6085 = vpop.f32.mrb[0].mxu0
      %v6086 = vadd.f32 %v5572, %v6085
      %v6087 = vpop.f32.mrb[0].mxu0
      %6088 = vmatprep.mubr.f32.mxu0 0.0
      %v6089 = vand.u32 %v4419, 4294901760
      %v6090 = vsub.f32 %v4419, %v6089
      %6091 = vmatmul.mubr.f32.gmra.mrb[0].mxu0 %v6090
      %v6092 = vpop.f32.mrb[0].mxu0
      %v6093 = vadd.f32 %v5578, %v6092
      %v6094 = vpop.f32.mrb[0].mxu0
      %6095 = vmatprep.mubr.f32.mxu0 0.0
      %v6096 = vand.u32 %v4422, 4294901760
      %v6097 = vsub.f32 %v4422, %v6096
      %6098 = vmatmul.mubr.f32.gmra.mrb[0].mxu0 %v6097
      %v6099 = vpop.f32.mrb[0].mxu0
      %v6100 = vadd.f32 %v5584, %v6099
      %v6101 = vpop.f32.mrb[0].mxu0
      %6102 = vmatprep.mubr.f32.mxu0 0.0
      %v6103 = vand.u32 %v4425, 4294901760
      %v6104 = vsub.f32 %v4425, %v6103
      %6105 = vmatmul.mubr.f32.gmra.mrb[0].mxu0 %v6104
      %v6106 = vpop.f32.mrb[0].mxu0
      %v6107 = vadd.f32 %v5590, %v6106
      %v6108 = vpop.f32.mrb[0].mxu0
      %6109 = vdwg.mxu0
      %6110 = vmatprep.subr.mxu0 0.0
      %v6111 = vand.u32 %v4233, 4294901760
      %6112 = vmatpush1.msra.mxu0 %v6111
      %6113 = vmatprep.subr.mxu0 0.0
      %v6114 = vand.u32 %v4234, 4294901760
      %6115 = vmatpush1.msra.mxu0 %v6114
      %6116 = vmatprep.subr.mxu0 0.0
      %6117 = vmatpush1.msra.mxu0 0.0
      %6118 = vmatprep.subr.mxu0 0.0
      %6119 = vmatpush1.msra.mxu0 0.0
      %6120 = vmatprep.subr.mxu0 0.0
      %6121 = vmatpush1.msra.mxu0 0.0
      %6122 = vmatprep.subr.mxu0 0.0
      %6123 = vmatpush1.msra.mxu0 0.0
      %6124 = vmatprep.subr.mxu0 0.0
      %6125 = vmatpush1.msra.mxu0 0.0
      %6126 = vmatprep.subr.mxu0 0.0
      %6127 = vmatpush1.msra.mxu0 0.0
      %6128 = vmatprep.subr.mxu0 0.0
      %6129 = vmatpush1.msra.mxu0 0.0
      %6130 = vmatprep.subr.mxu0 0.0
      %6131 = vmatpush1.msra.mxu0 0.0
      %6132 = vmatprep.subr.mxu0 0.0
      %6133 = vmatpush1.msra.mxu0 0.0
      %6134 = vmatprep.subr.mxu0 0.0
      %6135 = vmatpush1.msra.mxu0 0.0
      %6136 = vmatprep.subr.mxu0 0.0
      %6137 = vmatpush1.msra.mxu0 0.0
      %6138 = vmatprep.subr.mxu0 0.0
      %6139 = vmatpush1.msra.mxu0 0.0
      %6140 = vmatprep.subr.mxu0 0.0
      %6141 = vmatpush1.msra.mxu0 0.0
      %6142 = vmatprep.subr.mxu0 0.0
      %6143 = vmatpush1.msra.mxu0 0.0
      %6144 = vmatprep.subr.mxu0 0.0
      %6145 = vmatpush1.msra.mxu0 0.0
      %6146 = vmatprep.subr.mxu0 0.0
      %6147 = vmatpush1.msra.mxu0 0.0
      %6148 = vmatprep.subr.mxu0 0.0
      %6149 = vmatpush1.msra.mxu0 0.0
      %6150 = vmatprep.subr.mxu0 0.0
      %6151 = vmatpush1.msra.mxu0 0.0
      %6152 = vmatprep.subr.mxu0 0.0
      %6153 = vmatpush1.msra.mxu0 0.0
      %6154 = vmatprep.subr.mxu0 0.0
      %6155 = vmatpush1.msra.mxu0 0.0
      %6156 = vmatprep.subr.mxu0 0.0
      %6157 = vmatpush1.msra.mxu0 0.0
      %6158 = vmatprep.subr.mxu0 0.0
      %6159 = vmatpush1.msra.mxu0 0.0
      %6160 = vmatprep.subr.mxu0 0.0
      %6161 = vmatpush1.msra.mxu0 0.0
      %6162 = vmatprep.subr.mxu0 0.0
      %6163 = vmatpush1.msra.mxu0 0.0
      %6164 = vmatprep.subr.mxu0 0.0
      %6165 = vmatpush1.msra.mxu0 0.0
      %6166 = vmatprep.subr.mxu0 0.0
      %6167 = vmatpush1.msra.mxu0 0.0
      %6168 = vmatprep.subr.mxu0 0.0
      %6169 = vmatpush1.msra.mxu0 0.0
      %6170 = vmatprep.subr.mxu0 0.0
      %6171 = vmatpush1.msra.mxu0 0.0
      %6172 = vmatprep.subr.mxu0 0.0
      %6173 = vmatpush1.msra.mxu0 0.0
      %6174 = vmatprep.subr.mxu0 0.0
      %6175 = vmatpush1.msra.mxu0 0.0
      %6176 = vmatprep.mubr.f32.mxu0 0.0
      %v6177 = vand.u32 %v4236, 4294901760
      %v6178 = vsub.f32 %v4236, %v6177
      %v6179 = vand.u32 %v6178, 4294901760
      %6180 = vmatmul.mubr.f32.gmra.mrb[0].mxu0 %v6179
      %v6181 = vpop.f32.mrb[0].mxu0
      %v6182 = vadd.f32 %v5666, %v6181
      %v6183 = vpop.f32.mrb[0].mxu0
      %6184 = vmatprep.mubr.f32.mxu0 0.0
      %v6185 = vand.u32 %v4239, 4294901760
      %v6186 = vsub.f32 %v4239, %v6185
      %v6187 = vand.u32 %v6186, 4294901760
      %6188 = vmatmul.mubr.f32.gmra.mrb[0].mxu0 %v6187
      %v6189 = vpop.f32.mrb[0].mxu0
      %v6190 = vadd.f32 %v5673, %v6189
      %v6191 = vpop.f32.mrb[0].mxu0
      %6192 = vmatprep.mubr.f32.mxu0 0.0
      %v6193 = vand.u32 %v4242, 4294901760
      %v6194 = vsub.f32 %v4242, %v6193
      %v6195 = vand.u32 %v6194, 4294901760
      %6196 = vmatmul.mubr.f32.gmra.mrb[0].mxu0 %v6195
      %v6197 = vpop.f32.mrb[0].mxu0
      %v6198 = vadd.f32 %v5680, %v6197
      %v6199 = vpop.f32.mrb[0].mxu0
      %6200 = vmatprep.mubr.f32.mxu0 0.0
      %v6201 = vand.u32 %v4245, 4294901760
      %v6202 = vsub.f32 %v4245, %v6201
      %v6203 = vand.u32 %v6202, 4294901760
      %6204 = vmatmul.mubr.f32.gmra.mrb[0].mxu0 %v6203
      %v6205 = vpop.f32.mrb[0].mxu0
      %v6206 = vadd.f32 %v5687, %v6205
      %v6207 = vpop.f32.mrb[0].mxu0
      %6208 = vmatprep.mubr.f32.mxu0 0.0
      %v6209 = vand.u32 %v4248, 4294901760
      %v6210 = vsub.f32 %v4248, %v6209
      %v6211 = vand.u32 %v6210, 4294901760
      %6212 = vmatmul.mubr.f32.gmra.mrb[0].mxu0 %v6211
      %v6213 = vpop.f32.mrb[0].mxu0
      %v6214 = vadd.f32 %v5694, %v6213
      %v6215 = vpop.f32.mrb[0].mxu0
      %6216 = vmatprep.mubr.f32.mxu0 0.0
      %v6217 = vand.u32 %v4251, 4294901760
      %v6218 = vsub.f32 %v4251, %v6217
      %v6219 = vand.u32 %v6218, 4294901760
      %6220 = vmatmul.mubr.f32.gmra.mrb[0].mxu0 %v6219
      %v6221 = vpop.f32.mrb[0].mxu0
      %v6222 = vadd.f32 %v5701, %v6221
      %v6223 = vpop.f32.mrb[0].mxu0
      %6224 = vmatprep.mubr.f32.mxu0 0.0
      %v6225 = vand.u32 %v4254, 4294901760
      %v6226 = vsub.f32 %v4254, %v6225
      %v6227 = vand.u32 %v6226, 4294901760
      %6228 = vmatmul.mubr.f32.gmra.mrb[0].mxu0 %v6227
      %v6229 = vpop.f32.mrb[0].mxu0
      %v6230 = vadd.f32 %v5708, %v6229
      %v6231 = vpop.f32.mrb[0].mxu0
      %6232 = vmatprep.mubr.f32.mxu0 0.0
      %v6233 = vand.u32 %v4257, 4294901760
      %v6234 = vsub.f32 %v4257, %v6233
      %v6235 = vand.u32 %v6234, 4294901760
      %6236 = vmatmul.mubr.f32.gmra.mrb[0].mxu0 %v6235
      %v6237 = vpop.f32.mrb[0].mxu0
      %v6238 = vadd.f32 %v5715, %v6237
      %v6239 = vpop.f32.mrb[0].mxu0
      %6240 = vmatprep.mubr.f32.mxu0 0.0
      %v6241 = vand.u32 %v4260, 4294901760
      %v6242 = vsub.f32 %v4260, %v6241
      %v6243 = vand.u32 %v6242, 4294901760
      %6244 = vmatmul.mubr.f32.gmra.mrb[0].mxu0 %v6243
      %v6245 = vpop.f32.mrb[0].mxu0
      %v6246 = vadd.f32 %v5722, %v6245
      %v6247 = vpop.f32.mrb[0].mxu0
      %6248 = vmatprep.mubr.f32.mxu0 0.0
      %v6249 = vand.u32 %v4263, 4294901760
      %v6250 = vsub.f32 %v4263, %v6249
      %v6251 = vand.u32 %v6250, 4294901760
      %6252 = vmatmul.mubr.f32.gmra.mrb[0].mxu0 %v6251
      %v6253 = vpop.f32.mrb[0].mxu0
      %v6254 = vadd.f32 %v5729, %v6253
      %v6255 = vpop.f32.mrb[0].mxu0
      %6256 = vmatprep.mubr.f32.mxu0 0.0
      %v6257 = vand.u32 %v4266, 4294901760
      %v6258 = vsub.f32 %v4266, %v6257
      %v6259 = vand.u32 %v6258, 4294901760
      %6260 = vmatmul.mubr.f32.gmra.mrb[0].mxu0 %v6259
      %v6261 = vpop.f32.mrb[0].mxu0
      %v6262 = vadd.f32 %v5736, %v6261
      %v6263 = vpop.f32.mrb[0].mxu0
      %6264 = vmatprep.mubr.f32.mxu0 0.0
      %v6265 = vand.u32 %v4269, 4294901760
      %v6266 = vsub.f32 %v4269, %v6265
      %v6267 = vand.u32 %v6266, 4294901760
      %6268 = vmatmul.mubr.f32.gmra.mrb[0].mxu0 %v6267
      %v6269 = vpop.f32.mrb[0].mxu0
      %v6270 = vadd.f32 %v5743, %v6269
      %v6271 = vpop.f32.mrb[0].mxu0
      %6272 = vmatprep.mubr.f32.mxu0 0.0
      %v6273 = vand.u32 %v4272, 4294901760
      %v6274 = vsub.f32 %v4272, %v6273
      %v6275 = vand.u32 %v6274, 4294901760
      %6276 = vmatmul.mubr.f32.gmra.mrb[0].mxu0 %v6275
      %v6277 = vpop.f32.mrb[0].mxu0
      %v6278 = vadd.f32 %v5750, %v6277
      %v6279 = vpop.f32.mrb[0].mxu0
      %6280 = vmatprep.mubr.f32.mxu0 0.0
      %v6281 = vand.u32 %v4275, 4294901760
      %v6282 = vsub.f32 %v4275, %v6281
      %v6283 = vand.u32 %v6282, 4294901760
      %6284 = vmatmul.mubr.f32.gmra.mrb[0].mxu0 %v6283
      %v6285 = vpop.f32.mrb[0].mxu0
      %v6286 = vadd.f32 %v5757, %v6285
      %v6287 = vpop.f32.mrb[0].mxu0
      %6288 = vmatprep.mubr.f32.mxu0 0.0
      %v6289 = vand.u32 %v4278, 4294901760
      %v6290 = vsub.f32 %v4278, %v6289
      %v6291 = vand.u32 %v6290, 4294901760
      %6292 = vmatmul.mubr.f32.gmra.mrb[0].mxu0 %v6291
      %v6293 = vpop.f32.mrb[0].mxu0
      %v6294 = vadd.f32 %v5764, %v6293
      %v6295 = vpop.f32.mrb[0].mxu0
      %6296 = vmatprep.mubr.f32.mxu0 0.0
      %v6297 = vand.u32 %v4281, 4294901760
      %v6298 = vsub.f32 %v4281, %v6297
      %v6299 = vand.u32 %v6298, 4294901760
      %6300 = vmatmul.mubr.f32.gmra.mrb[0].mxu0 %v6299
      %v6301 = vpop.f32.mrb[0].mxu0
      %v6302 = vadd.f32 %v5771, %v6301
      %v6303 = vpop.f32.mrb[0].mxu0
      %6304 = vmatprep.mubr.f32.mxu0 0.0
      %v6305 = vand.u32 %v4284, 4294901760
      %v6306 = vsub.f32 %v4284, %v6305
      %v6307 = vand.u32 %v6306, 4294901760
      %6308 = vmatmul.mubr.f32.gmra.mrb[0].mxu0 %v6307
      %v6309 = vpop.f32.mrb[0].mxu0
      %v6310 = vadd.f32 %v5778, %v6309
      %v6311 = vpop.f32.mrb[0].mxu0
      %6312 = vmatprep.mubr.f32.mxu0 0.0
      %v6313 = vand.u32 %v4287, 4294901760
      %v6314 = vsub.f32 %v4287, %v6313
      %v6315 = vand.u32 %v6314, 4294901760
      %6316 = vmatmul.mubr.f32.gmra.mrb[0].mxu0 %v6315
      %v6317 = vpop.f32.mrb[0].mxu0
      %v6318 = vadd.f32 %v5785, %v6317
      %v6319 = vpop.f32.mrb[0].mxu0
      %6320 = vmatprep.mubr.f32.mxu0 0.0
      %v6321 = vand.u32 %v4290, 4294901760
      %v6322 = vsub.f32 %v4290, %v6321
      %v6323 = vand.u32 %v6322, 4294901760
      %6324 = vmatmul.mubr.f32.gmra.mrb[0].mxu0 %v6323
      %v6325 = vpop.f32.mrb[0].mxu0
      %v6326 = vadd.f32 %v5792, %v6325
      %v6327 = vpop.f32.mrb[0].mxu0
      %6328 = vmatprep.mubr.f32.mxu0 0.0
      %v6329 = vand.u32 %v4293, 4294901760
      %v6330 = vsub.f32 %v4293, %v6329
      %v6331 = vand.u32 %v6330, 4294901760
      %6332 = vmatmul.mubr.f32.gmra.mrb[0].mxu0 %v6331
      %v6333 = vpop.f32.mrb[0].mxu0
      %v6334 = vadd.f32 %v5799, %v6333
      %v6335 = vpop.f32.mrb[0].mxu0
      %6336 = vmatprep.mubr.f32.mxu0 0.0
      %v6337 = vand.u32 %v4296, 4294901760
      %v6338 = vsub.f32 %v4296, %v6337
      %v6339 = vand.u32 %v6338, 4294901760
      %6340 = vmatmul.mubr.f32.gmra.mrb[0].mxu0 %v6339
      %v6341 = vpop.f32.mrb[0].mxu0
      %v6342 = vadd.f32 %v5806, %v6341
      %v6343 = vpop.f32.mrb[0].mxu0
      %6344 = vmatprep.mubr.f32.mxu0 0.0
      %v6345 = vand.u32 %v4299, 4294901760
      %v6346 = vsub.f32 %v4299, %v6345
      %v6347 = vand.u32 %v6346, 4294901760
      %6348 = vmatmul.mubr.f32.gmra.mrb[0].mxu0 %v6347
      %v6349 = vpop.f32.mrb[0].mxu0
      %v6350 = vadd.f32 %v5813, %v6349
      %v6351 = vpop.f32.mrb[0].mxu0
      %6352 = vmatprep.mubr.f32.mxu0 0.0
      %v6353 = vand.u32 %v4302, 4294901760
      %v6354 = vsub.f32 %v4302, %v6353
      %v6355 = vand.u32 %v6354, 4294901760
      %6356 = vmatmul.mubr.f32.gmra.mrb[0].mxu0 %v6355
      %v6357 = vpop.f32.mrb[0].mxu0
      %v6358 = vadd.f32 %v5820, %v6357
      %v6359 = vpop.f32.mrb[0].mxu0
      %6360 = vmatprep.mubr.f32.mxu0 0.0
      %v6361 = vand.u32 %v4305, 4294901760
      %v6362 = vsub.f32 %v4305, %v6361
      %v6363 = vand.u32 %v6362, 4294901760
      %6364 = vmatmul.mubr.f32.gmra.mrb[0].mxu0 %v6363
      %v6365 = vpop.f32.mrb[0].mxu0
      %v6366 = vadd.f32 %v5827, %v6365
      %v6367 = vpop.f32.mrb[0].mxu0
      %6368 = vmatprep.mubr.f32.mxu0 0.0
      %v6369 = vand.u32 %v4308, 4294901760
      %v6370 = vsub.f32 %v4308, %v6369
      %v6371 = vand.u32 %v6370, 4294901760
      %6372 = vmatmul.mubr.f32.gmra.mrb[0].mxu0 %v6371
      %v6373 = vpop.f32.mrb[0].mxu0
      %v6374 = vadd.f32 %v5834, %v6373
      %v6375 = vpop.f32.mrb[0].mxu0
      %6376 = vmatprep.mubr.f32.mxu0 0.0
      %v6377 = vand.u32 %v4311, 4294901760
      %v6378 = vsub.f32 %v4311, %v6377
      %v6379 = vand.u32 %v6378, 4294901760
      %6380 = vmatmul.mubr.f32.gmra.mrb[0].mxu0 %v6379
      %v6381 = vpop.f32.mrb[0].mxu0
      %v6382 = vadd.f32 %v5841, %v6381
      %v6383 = vpop.f32.mrb[0].mxu0
      %6384 = vmatprep.mubr.f32.mxu0 0.0
      %v6385 = vand.u32 %v4314, 4294901760
      %v6386 = vsub.f32 %v4314, %v6385
      %v6387 = vand.u32 %v6386, 4294901760
      %6388 = vmatmul.mubr.f32.gmra.mrb[0].mxu0 %v6387
      %v6389 = vpop.f32.mrb[0].mxu0
      %v6390 = vadd.f32 %v5848, %v6389
      %v6391 = vpop.f32.mrb[0].mxu0
      %6392 = vmatprep.mubr.f32.mxu0 0.0
      %v6393 = vand.u32 %v4317, 4294901760
      %v6394 = vsub.f32 %v4317, %v6393
      %v6395 = vand.u32 %v6394, 4294901760
      %6396 = vmatmul.mubr.f32.gmra.mrb[0].mxu0 %v6395
      %v6397 = vpop.f32.mrb[0].mxu0
      %v6398 = vadd.f32 %v5855, %v6397
      %v6399 = vpop.f32.mrb[0].mxu0
      %6400 = vmatprep.mubr.f32.mxu0 0.0
      %v6401 = vand.u32 %v4320, 4294901760
      %v6402 = vsub.f32 %v4320, %v6401
      %v6403 = vand.u32 %v6402, 4294901760
      %6404 = vmatmul.mubr.f32.gmra.mrb[0].mxu0 %v6403
      %v6405 = vpop.f32.mrb[0].mxu0
      %v6406 = vadd.f32 %v5862, %v6405
      %v6407 = vpop.f32.mrb[0].mxu0
      %6408 = vmatprep.mubr.f32.mxu0 0.0
      %v6409 = vand.u32 %v4323, 4294901760
      %v6410 = vsub.f32 %v4323, %v6409
      %v6411 = vand.u32 %v6410, 4294901760
      %6412 = vmatmul.mubr.f32.gmra.mrb[0].mxu0 %v6411
      %v6413 = vpop.f32.mrb[0].mxu0
      %v6414 = vadd.f32 %v5869, %v6413
      %v6415 = vpop.f32.mrb[0].mxu0
      %6416 = vmatprep.mubr.f32.mxu0 0.0
      %v6417 = vand.u32 %v4326, 4294901760
      %v6418 = vsub.f32 %v4326, %v6417
      %v6419 = vand.u32 %v6418, 4294901760
      %6420 = vmatmul.mubr.f32.gmra.mrb[0].mxu0 %v6419
      %v6421 = vpop.f32.mrb[0].mxu0
      %v6422 = vadd.f32 %v5876, %v6421
      %v6423 = vpop.f32.mrb[0].mxu0
      %6424 = vmatprep.mubr.f32.mxu0 0.0
      %v6425 = vand.u32 %v4329, 4294901760
      %v6426 = vsub.f32 %v4329, %v6425
      %v6427 = vand.u32 %v6426, 4294901760
      %6428 = vmatmul.mubr.f32.gmra.mrb[0].mxu0 %v6427
      %v6429 = vpop.f32.mrb[0].mxu0
      %v6430 = vadd.f32 %v5883, %v6429
      %v6431 = vpop.f32.mrb[0].mxu0
      %6432 = vmatprep.mubr.f32.mxu0 0.0
      %v6433 = vand.u32 %v4332, 4294901760
      %v6434 = vsub.f32 %v4332, %v6433
      %v6435 = vand.u32 %v6434, 4294901760
      %6436 = vmatmul.mubr.f32.gmra.mrb[0].mxu0 %v6435
      %v6437 = vpop.f32.mrb[0].mxu0
      %v6438 = vadd.f32 %v5890, %v6437
      %v6439 = vpop.f32.mrb[0].mxu0
      %6440 = vmatprep.mubr.f32.mxu0 0.0
      %v6441 = vand.u32 %v4335, 4294901760
      %v6442 = vsub.f32 %v4335, %v6441
      %v6443 = vand.u32 %v6442, 4294901760
      %6444 = vmatmul.mubr.f32.gmra.mrb[0].mxu0 %v6443
      %v6445 = vpop.f32.mrb[0].mxu0
      %v6446 = vadd.f32 %v5897, %v6445
      %v6447 = vpop.f32.mrb[0].mxu0
      %6448 = vmatprep.mubr.f32.mxu0 0.0
      %v6449 = vand.u32 %v4338, 4294901760
      %v6450 = vsub.f32 %v4338, %v6449
      %v6451 = vand.u32 %v6450, 4294901760
      %6452 = vmatmul.mubr.f32.gmra.mrb[0].mxu0 %v6451
      %v6453 = vpop.f32.mrb[0].mxu0
      %v6454 = vadd.f32 %v5904, %v6453
      %v6455 = vpop.f32.mrb[0].mxu0
      %6456 = vmatprep.mubr.f32.mxu0 0.0
      %v6457 = vand.u32 %v4341, 4294901760
      %v6458 = vsub.f32 %v4341, %v6457
      %v6459 = vand.u32 %v6458, 4294901760
      %6460 = vmatmul.mubr.f32.gmra.mrb[0].mxu0 %v6459
      %v6461 = vpop.f32.mrb[0].mxu0
      %v6462 = vadd.f32 %v5911, %v6461
      %v6463 = vpop.f32.mrb[0].mxu0
      %6464 = vmatprep.mubr.f32.mxu0 0.0
      %v6465 = vand.u32 %v4344, 4294901760
      %v6466 = vsub.f32 %v4344, %v6465
      %v6467 = vand.u32 %v6466, 4294901760
      %6468 = vmatmul.mubr.f32.gmra.mrb[0].mxu0 %v6467
      %v6469 = vpop.f32.mrb[0].mxu0
      %v6470 = vadd.f32 %v5918, %v6469
      %v6471 = vpop.f32.mrb[0].mxu0
      %6472 = vmatprep.mubr.f32.mxu0 0.0
      %v6473 = vand.u32 %v4347, 4294901760
      %v6474 = vsub.f32 %v4347, %v6473
      %v6475 = vand.u32 %v6474, 4294901760
      %6476 = vmatmul.mubr.f32.gmra.mrb[0].mxu0 %v6475
      %v6477 = vpop.f32.mrb[0].mxu0
      %v6478 = vadd.f32 %v5925, %v6477
      %v6479 = vpop.f32.mrb[0].mxu0
      %6480 = vmatprep.mubr.f32.mxu0 0.0
      %v6481 = vand.u32 %v4350, 4294901760
      %v6482 = vsub.f32 %v4350, %v6481
      %v6483 = vand.u32 %v6482, 4294901760
      %6484 = vmatmul.mubr.f32.gmra.mrb[0].mxu0 %v6483
      %v6485 = vpop.f32.mrb[0].mxu0
      %v6486 = vadd.f32 %v5932, %v6485
      %v6487 = vpop.f32.mrb[0].mxu0
      %6488 = vmatprep.mubr.f32.mxu0 0.0
      %v6489 = vand.u32 %v4353, 4294901760
      %v6490 = vsub.f32 %v4353, %v6489
      %v6491 = vand.u32 %v6490, 4294901760
      %6492 = vmatmul.mubr.f32.gmra.mrb[0].mxu0 %v6491
      %v6493 = vpop.f32.mrb[0].mxu0
      %v6494 = vadd.f32 %v5939, %v6493
      %v6495 = vpop.f32.mrb[0].mxu0
      %6496 = vmatprep.mubr.f32.mxu0 0.0
      %v6497 = vand.u32 %v4356, 4294901760
      %v6498 = vsub.f32 %v4356, %v6497
      %v6499 = vand.u32 %v6498, 4294901760
      %6500 = vmatmul.mubr.f32.gmra.mrb[0].mxu0 %v6499
      %v6501 = vpop.f32.mrb[0].mxu0
      %v6502 = vadd.f32 %v5946, %v6501
      %v6503 = vpop.f32.mrb[0].mxu0
      %6504 = vmatprep.mubr.f32.mxu0 0.0
      %v6505 = vand.u32 %v4359, 4294901760
      %v6506 = vsub.f32 %v4359, %v6505
      %v6507 = vand.u32 %v6506, 4294901760
      %6508 = vmatmul.mubr.f32.gmra.mrb[0].mxu0 %v6507
      %v6509 = vpop.f32.mrb[0].mxu0
      %v6510 = vadd.f32 %v5953, %v6509
      %v6511 = vpop.f32.mrb[0].mxu0
      %6512 = vmatprep.mubr.f32.mxu0 0.0
      %v6513 = vand.u32 %v4362, 4294901760
      %v6514 = vsub.f32 %v4362, %v6513
      %v6515 = vand.u32 %v6514, 4294901760
      %6516 = vmatmul.mubr.f32.gmra.mrb[0].mxu0 %v6515
      %v6517 = vpop.f32.mrb[0].mxu0
      %v6518 = vadd.f32 %v5960, %v6517
      %v6519 = vpop.f32.mrb[0].mxu0
      %6520 = vmatprep.mubr.f32.mxu0 0.0
      %v6521 = vand.u32 %v4365, 4294901760
      %v6522 = vsub.f32 %v4365, %v6521
      %v6523 = vand.u32 %v6522, 4294901760
      %6524 = vmatmul.mubr.f32.gmra.mrb[0].mxu0 %v6523
      %v6525 = vpop.f32.mrb[0].mxu0
      %v6526 = vadd.f32 %v5967, %v6525
      %v6527 = vpop.f32.mrb[0].mxu0
      %6528 = vmatprep.mubr.f32.mxu0 0.0
      %v6529 = vand.u32 %v4368, 4294901760
      %v6530 = vsub.f32 %v4368, %v6529
      %v6531 = vand.u32 %v6530, 4294901760
      %6532 = vmatmul.mubr.f32.gmra.mrb[0].mxu0 %v6531
      %v6533 = vpop.f32.mrb[0].mxu0
      %v6534 = vadd.f32 %v5974, %v6533
      %v6535 = vpop.f32.mrb[0].mxu0
      %6536 = vmatprep.mubr.f32.mxu0 0.0
      %v6537 = vand.u32 %v4371, 4294901760
      %v6538 = vsub.f32 %v4371, %v6537
      %v6539 = vand.u32 %v6538, 4294901760
      %6540 = vmatmul.mubr.f32.gmra.mrb[0].mxu0 %v6539
      %v6541 = vpop.f32.mrb[0].mxu0
      %v6542 = vadd.f32 %v5981, %v6541
      %v6543 = vpop.f32.mrb[0].mxu0
      %6544 = vmatprep.mubr.f32.mxu0 0.0
      %v6545 = vand.u32 %v4374, 4294901760
      %v6546 = vsub.f32 %v4374, %v6545
      %v6547 = vand.u32 %v6546, 4294901760
      %6548 = vmatmul.mubr.f32.gmra.mrb[0].mxu0 %v6547
      %v6549 = vpop.f32.mrb[0].mxu0
      %v6550 = vadd.f32 %v5988, %v6549
      %v6551 = vpop.f32.mrb[0].mxu0
      %6552 = vmatprep.mubr.f32.mxu0 0.0
      %v6553 = vand.u32 %v4377, 4294901760
      %v6554 = vsub.f32 %v4377, %v6553
      %v6555 = vand.u32 %v6554, 4294901760
      %6556 = vmatmul.mubr.f32.gmra.mrb[0].mxu0 %v6555
      %v6557 = vpop.f32.mrb[0].mxu0
      %v6558 = vadd.f32 %v5995, %v6557
      %v6559 = vpop.f32.mrb[0].mxu0
      %6560 = vmatprep.mubr.f32.mxu0 0.0
      %v6561 = vand.u32 %v4380, 4294901760
      %v6562 = vsub.f32 %v4380, %v6561
      %v6563 = vand.u32 %v6562, 4294901760
      %6564 = vmatmul.mubr.f32.gmra.mrb[0].mxu0 %v6563
      %v6565 = vpop.f32.mrb[0].mxu0
      %v6566 = vadd.f32 %v6002, %v6565
      %v6567 = vpop.f32.mrb[0].mxu0
      %6568 = vmatprep.mubr.f32.mxu0 0.0
      %v6569 = vand.u32 %v4383, 4294901760
      %v6570 = vsub.f32 %v4383, %v6569
      %v6571 = vand.u32 %v6570, 4294901760
      %6572 = vmatmul.mubr.f32.gmra.mrb[0].mxu0 %v6571
      %v6573 = vpop.f32.mrb[0].mxu0
      %v6574 = vadd.f32 %v6009, %v6573
      %v6575 = vpop.f32.mrb[0].mxu0
      %6576 = vmatprep.mubr.f32.mxu0 0.0
      %v6577 = vand.u32 %v4386, 4294901760
      %v6578 = vsub.f32 %v4386, %v6577
      %v6579 = vand.u32 %v6578, 4294901760
      %6580 = vmatmul.mubr.f32.gmra.mrb[0].mxu0 %v6579
      %v6581 = vpop.f32.mrb[0].mxu0
      %v6582 = vadd.f32 %v6016, %v6581
      %v6583 = vpop.f32.mrb[0].mxu0
      %6584 = vmatprep.mubr.f32.mxu0 0.0
      %v6585 = vand.u32 %v4389, 4294901760
      %v6586 = vsub.f32 %v4389, %v6585
      %v6587 = vand.u32 %v6586, 4294901760
      %6588 = vmatmul.mubr.f32.gmra.mrb[0].mxu0 %v6587
      %v6589 = vpop.f32.mrb[0].mxu0
      %v6590 = vadd.f32 %v6023, %v6589
      %v6591 = vpop.f32.mrb[0].mxu0
      %6592 = vmatprep.mubr.f32.mxu0 0.0
      %v6593 = vand.u32 %v4392, 4294901760
      %v6594 = vsub.f32 %v4392, %v6593
      %v6595 = vand.u32 %v6594, 4294901760
      %6596 = vmatmul.mubr.f32.gmra.mrb[0].mxu0 %v6595
      %v6597 = vpop.f32.mrb[0].mxu0
      %v6598 = vadd.f32 %v6030, %v6597
      %v6599 = vpop.f32.mrb[0].mxu0
      %6600 = vmatprep.mubr.f32.mxu0 0.0
      %v6601 = vand.u32 %v4395, 4294901760
      %v6602 = vsub.f32 %v4395, %v6601
      %v6603 = vand.u32 %v6602, 4294901760
      %6604 = vmatmul.mubr.f32.gmra.mrb[0].mxu0 %v6603
      %v6605 = vpop.f32.mrb[0].mxu0
      %v6606 = vadd.f32 %v6037, %v6605
      %v6607 = vpop.f32.mrb[0].mxu0
      %6608 = vmatprep.mubr.f32.mxu0 0.0
      %v6609 = vand.u32 %v4398, 4294901760
      %v6610 = vsub.f32 %v4398, %v6609
      %v6611 = vand.u32 %v6610, 4294901760
      %6612 = vmatmul.mubr.f32.gmra.mrb[0].mxu0 %v6611
      %v6613 = vpop.f32.mrb[0].mxu0
      %v6614 = vadd.f32 %v6044, %v6613
      %v6615 = vpop.f32.mrb[0].mxu0
      %6616 = vmatprep.mubr.f32.mxu0 0.0
      %v6617 = vand.u32 %v4401, 4294901760
      %v6618 = vsub.f32 %v4401, %v6617
      %v6619 = vand.u32 %v6618, 4294901760
      %6620 = vmatmul.mubr.f32.gmra.mrb[0].mxu0 %v6619
      %v6621 = vpop.f32.mrb[0].mxu0
      %v6622 = vadd.f32 %v6051, %v6621
      %v6623 = vpop.f32.mrb[0].mxu0
      %6624 = vmatprep.mubr.f32.mxu0 0.0
      %v6625 = vand.u32 %v4404, 4294901760
      %v6626 = vsub.f32 %v4404, %v6625
      %v6627 = vand.u32 %v6626, 4294901760
      %6628 = vmatmul.mubr.f32.gmra.mrb[0].mxu0 %v6627
      %v6629 = vpop.f32.mrb[0].mxu0
      %v6630 = vadd.f32 %v6058, %v6629
      %v6631 = vpop.f32.mrb[0].mxu0
      %6632 = vmatprep.mubr.f32.mxu0 0.0
      %v6633 = vand.u32 %v4407, 4294901760
      %v6634 = vsub.f32 %v4407, %v6633
      %v6635 = vand.u32 %v6634, 4294901760
      %6636 = vmatmul.mubr.f32.gmra.mrb[0].mxu0 %v6635
      %v6637 = vpop.f32.mrb[0].mxu0
      %v6638 = vadd.f32 %v6065, %v6637
      %v6639 = vpop.f32.mrb[0].mxu0
      %6640 = vmatprep.mubr.f32.mxu0 0.0
      %v6641 = vand.u32 %v4410, 4294901760
      %v6642 = vsub.f32 %v4410, %v6641
      %v6643 = vand.u32 %v6642, 4294901760
      %6644 = vmatmul.mubr.f32.gmra.mrb[0].mxu0 %v6643
      %v6645 = vpop.f32.mrb[0].mxu0
      %v6646 = vadd.f32 %v6072, %v6645
      %v6647 = vpop.f32.mrb[0].mxu0
      %6648 = vmatprep.mubr.f32.mxu0 0.0
      %v6649 = vand.u32 %v4413, 4294901760
      %v6650 = vsub.f32 %v4413, %v6649
      %v6651 = vand.u32 %v6650, 4294901760
      %6652 = vmatmul.mubr.f32.gmra.mrb[0].mxu0 %v6651
      %v6653 = vpop.f32.mrb[0].mxu0
      %v6654 = vadd.f32 %v6079, %v6653
      %v6655 = vpop.f32.mrb[0].mxu0
      %6656 = vmatprep.mubr.f32.mxu0 0.0
      %v6657 = vand.u32 %v4416, 4294901760
      %v6658 = vsub.f32 %v4416, %v6657
      %v6659 = vand.u32 %v6658, 4294901760
      %6660 = vmatmul.mubr.f32.gmra.mrb[0].mxu0 %v6659
      %v6661 = vpop.f32.mrb[0].mxu0
      %v6662 = vadd.f32 %v6086, %v6661
      %v6663 = vpop.f32.mrb[0].mxu0
      %6664 = vmatprep.mubr.f32.mxu0 0.0
      %v6665 = vand.u32 %v4419, 4294901760
      %v6666 = vsub.f32 %v4419, %v6665
      %v6667 = vand.u32 %v6666, 4294901760
      %6668 = vmatmul.mubr.f32.gmra.mrb[0].mxu0 %v6667
      %v6669 = vpop.f32.mrb[0].mxu0
      %v6670 = vadd.f32 %v6093, %v6669
      %v6671 = vpop.f32.mrb[0].mxu0
      %6672 = vmatprep.mubr.f32.mxu0 0.0
      %v6673 = vand.u32 %v4422, 4294901760
      %v6674 = vsub.f32 %v4422, %v6673
      %v6675 = vand.u32 %v6674, 4294901760
      %6676 = vmatmul.mubr.f32.gmra.mrb[0].mxu0 %v6675
      %v6677 = vpop.f32.mrb[0].mxu0
      %v6678 = vadd.f32 %v6100, %v6677
      %v6679 = vpop.f32.mrb[0].mxu0
      %6680 = vmatprep.mubr.f32.mxu0 0.0
      %v6681 = vand.u32 %v4425, 4294901760
      %v6682 = vsub.f32 %v4425, %v6681
      %v6683 = vand.u32 %v6682, 4294901760
      %6684 = vmatmul.mubr.f32.gmra.mrb[0].mxu0 %v6683
      %v6685 = vpop.f32.mrb[0].mxu0
      %v6686 = vadd.f32 %v6107, %v6685
      %v6687 = vpop.f32.mrb[0].mxu0
      %6688 = vdwg.mxu0
      %6689 = vmatprep.subr.mxu0 0.0
      %v6690 = vand.u32 %v4233, 4294901760
      %v6691 = vsub.f32 %v4233, %v6690
      %v6692 = vand.u32 %v6691, 4294901760
      %6693 = vmatpush1.msra.mxu0 %v6692
      %6694 = vmatprep.subr.mxu0 0.0
      %v6695 = vand.u32 %v4234, 4294901760
      %v6696 = vsub.f32 %v4234, %v6695
      %v6697 = vand.u32 %v6696, 4294901760
      %6698 = vmatpush1.msra.mxu0 %v6697
      %6699 = vmatprep.subr.mxu0 0.0
      %6700 = vmatpush1.msra.mxu0 0.0
      %6701 = vmatprep.subr.mxu0 0.0
      %6702 = vmatpush1.msra.mxu0 0.0
      %6703 = vmatprep.subr.mxu0 0.0
      %6704 = vmatpush1.msra.mxu0 0.0
      %6705 = vmatprep.subr.mxu0 0.0
      %6706 = vmatpush1.msra.mxu0 0.0
      %6707 = vmatprep.subr.mxu0 0.0
      %6708 = vmatpush1.msra.mxu0 0.0
      %6709 = vmatprep.subr.mxu0 0.0
      %6710 = vmatpush1.msra.mxu0 0.0
      %6711 = vmatprep.subr.mxu0 0.0
      %6712 = vmatpush1.msra.mxu0 0.0
      %6713 = vmatprep.subr.mxu0 0.0
      %6714 = vmatpush1.msra.mxu0 0.0
      %6715 = vmatprep.subr.mxu0 0.0
      %6716 = vmatpush1.msra.mxu0 0.0
      %6717 = vmatprep.subr.mxu0 0.0
      %6718 = vmatpush1.msra.mxu0 0.0
      %6719 = vmatprep.subr.mxu0 0.0
      %6720 = vmatpush1.msra.mxu0 0.0
      %6721 = vmatprep.subr.mxu0 0.0
      %6722 = vmatpush1.msra.mxu0 0.0
      %6723 = vmatprep.subr.mxu0 0.0
      %6724 = vmatpush1.msra.mxu0 0.0
      %6725 = vmatprep.subr.mxu0 0.0
      %6726 = vmatpush1.msra.mxu0 0.0
      %6727 = vmatprep.subr.mxu0 0.0
      %6728 = vmatpush1.msra.mxu0 0.0
      %6729 = vmatprep.subr.mxu0 0.0
      %6730 = vmatpush1.msra.mxu0 0.0
      %6731 = vmatprep.subr.mxu0 0.0
      %6732 = vmatpush1.msra.mxu0 0.0
      %6733 = vmatprep.subr.mxu0 0.0
      %6734 = vmatpush1.msra.mxu0 0.0
      %6735 = vmatprep.subr.mxu0 0.0
      %6736 = vmatpush1.msra.mxu0 0.0
      %6737 = vmatprep.subr.mxu0 0.0
      %6738 = vmatpush1.msra.mxu0 0.0
      %6739 = vmatprep.subr.mxu0 0.0
      %6740 = vmatpush1.msra.mxu0 0.0
      %6741 = vmatprep.subr.mxu0 0.0
      %6742 = vmatpush1.msra.mxu0 0.0
      %6743 = vmatprep.subr.mxu0 0.0
      %6744 = vmatpush1.msra.mxu0 0.0
      %6745 = vmatprep.subr.mxu0 0.0
      %6746 = vmatpush1.msra.mxu0 0.0
      %6747 = vmatprep.subr.mxu0 0.0
      %6748 = vmatpush1.msra.mxu0 0.0
      %6749 = vmatprep.subr.mxu0 0.0
      %6750 = vmatpush1.msra.mxu0 0.0
      %6751 = vmatprep.subr.mxu0 0.0
      %6752 = vmatpush1.msra.mxu0 0.0
      %6753 = vmatprep.subr.mxu0 0.0
      %6754 = vmatpush1.msra.mxu0 0.0
      %6755 = vmatprep.subr.mxu0 0.0
      %6756 = vmatpush1.msra.mxu0 0.0
      %6757 = vmatprep.subr.mxu0 0.0
      %6758 = vmatpush1.msra.mxu0 0.0
      %6759 = vmatprep.mubr.f32.mxu0 0.0
      %v6760 = vand.u32 %v4236, 4294901760
      %6761 = vmatmul.mubr.f32.gmra.mrb[0].mxu0 %v6760
      %v6762 = vpop.f32.mrb[0].mxu0
      %v6763 = vadd.f32 %v6182, %v6762
      %v6764 = vpop.f32.mrb[0].mxu0
      %6765 = vmatprep.mubr.f32.mxu0 0.0
      %v6766 = vand.u32 %v4239, 4294901760
      %6767 = vmatmul.mubr.f32.gmra.mrb[0].mxu0 %v6766
      %v6768 = vpop.f32.mrb[0].mxu0
      %v6769 = vadd.f32 %v6190, %v6768
      %v6770 = vpop.f32.mrb[0].mxu0
      %6771 = vmatprep.mubr.f32.mxu0 0.0
      %v6772 = vand.u32 %v4242, 4294901760
      %6773 = vmatmul.mubr.f32.gmra.mrb[0].mxu0 %v6772
      %v6774 = vpop.f32.mrb[0].mxu0
      %v6775 = vadd.f32 %v6198, %v6774
      %v6776 = vpop.f32.mrb[0].mxu0
      %6777 = vmatprep.mubr.f32.mxu0 0.0
      %v6778 = vand.u32 %v4245, 4294901760
      %6779 = vmatmul.mubr.f32.gmra.mrb[0].mxu0 %v6778
      %v6780 = vpop.f32.mrb[0].mxu0
      %v6781 = vadd.f32 %v6206, %v6780
      %v6782 = vpop.f32.mrb[0].mxu0
      %6783 = vmatprep.mubr.f32.mxu0 0.0
      %v6784 = vand.u32 %v4248, 4294901760
      %6785 = vmatmul.mubr.f32.gmra.mrb[0].mxu0 %v6784
      %v6786 = vpop.f32.mrb[0].mxu0
      %v6787 = vadd.f32 %v6214, %v6786
      %v6788 = vpop.f32.mrb[0].mxu0
      %6789 = vmatprep.mubr.f32.mxu0 0.0
      %v6790 = vand.u32 %v4251, 4294901760
      %6791 = vmatmul.mubr.f32.gmra.mrb[0].mxu0 %v6790
      %v6792 = vpop.f32.mrb[0].mxu0
      %v6793 = vadd.f32 %v6222, %v6792
      %v6794 = vpop.f32.mrb[0].mxu0
      %6795 = vmatprep.mubr.f32.mxu0 0.0
      %v6796 = vand.u32 %v4254, 4294901760
      %6797 = vmatmul.mubr.f32.gmra.mrb[0].mxu0 %v6796
      %v6798 = vpop.f32.mrb[0].mxu0
      %v6799 = vadd.f32 %v6230, %v6798
      %v6800 = vpop.f32.mrb[0].mxu0
      %6801 = vmatprep.mubr.f32.mxu0 0.0
      %v6802 = vand.u32 %v4257, 4294901760
      %6803 = vmatmul.mubr.f32.gmra.mrb[0].mxu0 %v6802
      %v6804 = vpop.f32.mrb[0].mxu0
      %v6805 = vadd.f32 %v6238, %v6804
      %v6806 = vpop.f32.mrb[0].mxu0
      %6807 = vmatprep.mubr.f32.mxu0 0.0
      %v6808 = vand.u32 %v4260, 4294901760
      %6809 = vmatmul.mubr.f32.gmra.mrb[0].mxu0 %v6808
      %v6810 = vpop.f32.mrb[0].mxu0
      %v6811 = vadd.f32 %v6246, %v6810
      %v6812 = vpop.f32.mrb[0].mxu0
      %6813 = vmatprep.mubr.f32.mxu0 0.0
      %v6814 = vand.u32 %v4263, 4294901760
      %6815 = vmatmul.mubr.f32.gmra.mrb[0].mxu0 %v6814
      %v6816 = vpop.f32.mrb[0].mxu0
      %v6817 = vadd.f32 %v6254, %v6816
      %v6818 = vpop.f32.mrb[0].mxu0
      %6819 = vmatprep.mubr.f32.mxu0 0.0
      %v6820 = vand.u32 %v4266, 4294901760
      %6821 = vmatmul.mubr.f32.gmra.mrb[0].mxu0 %v6820
      %v6822 = vpop.f32.mrb[0].mxu0
      %v6823 = vadd.f32 %v6262, %v6822
      %v6824 = vpop.f32.mrb[0].mxu0
      %6825 = vmatprep.mubr.f32.mxu0 0.0
      %v6826 = vand.u32 %v4269, 4294901760
      %6827 = vmatmul.mubr.f32.gmra.mrb[0].mxu0 %v6826
      %v6828 = vpop.f32.mrb[0].mxu0
      %v6829 = vadd.f32 %v6270, %v6828
      %v6830 = vpop.f32.mrb[0].mxu0
      %6831 = vmatprep.mubr.f32.mxu0 0.0
      %v6832 = vand.u32 %v4272, 4294901760
      %6833 = vmatmul.mubr.f32.gmra.mrb[0].mxu0 %v6832
      %v6834 = vpop.f32.mrb[0].mxu0
      %v6835 = vadd.f32 %v6278, %v6834
      %v6836 = vpop.f32.mrb[0].mxu0
      %6837 = vmatprep.mubr.f32.mxu0 0.0
      %v6838 = vand.u32 %v4275, 4294901760
      %6839 = vmatmul.mubr.f32.gmra.mrb[0].mxu0 %v6838
      %v6840 = vpop.f32.mrb[0].mxu0
      %v6841 = vadd.f32 %v6286, %v6840
      %v6842 = vpop.f32.mrb[0].mxu0
      %6843 = vmatprep.mubr.f32.mxu0 0.0
      %v6844 = vand.u32 %v4278, 4294901760
      %6845 = vmatmul.mubr.f32.gmra.mrb[0].mxu0 %v6844
      %v6846 = vpop.f32.mrb[0].mxu0
      %v6847 = vadd.f32 %v6294, %v6846
      %v6848 = vpop.f32.mrb[0].mxu0
      %6849 = vmatprep.mubr.f32.mxu0 0.0
      %v6850 = vand.u32 %v4281, 4294901760
      %6851 = vmatmul.mubr.f32.gmra.mrb[0].mxu0 %v6850
      %v6852 = vpop.f32.mrb[0].mxu0
      %v6853 = vadd.f32 %v6302, %v6852
      %v6854 = vpop.f32.mrb[0].mxu0
      %6855 = vmatprep.mubr.f32.mxu0 0.0
      %v6856 = vand.u32 %v4284, 4294901760
      %6857 = vmatmul.mubr.f32.gmra.mrb[0].mxu0 %v6856
      %v6858 = vpop.f32.mrb[0].mxu0
      %v6859 = vadd.f32 %v6310, %v6858
      %v6860 = vpop.f32.mrb[0].mxu0
      %6861 = vmatprep.mubr.f32.mxu0 0.0
      %v6862 = vand.u32 %v4287, 4294901760
      %6863 = vmatmul.mubr.f32.gmra.mrb[0].mxu0 %v6862
      %v6864 = vpop.f32.mrb[0].mxu0
      %v6865 = vadd.f32 %v6318, %v6864
      %v6866 = vpop.f32.mrb[0].mxu0
      %6867 = vmatprep.mubr.f32.mxu0 0.0
      %v6868 = vand.u32 %v4290, 4294901760
      %6869 = vmatmul.mubr.f32.gmra.mrb[0].mxu0 %v6868
      %v6870 = vpop.f32.mrb[0].mxu0
      %v6871 = vadd.f32 %v6326, %v6870
      %v6872 = vpop.f32.mrb[0].mxu0
      %6873 = vmatprep.mubr.f32.mxu0 0.0
      %v6874 = vand.u32 %v4293, 4294901760
      %6875 = vmatmul.mubr.f32.gmra.mrb[0].mxu0 %v6874
      %v6876 = vpop.f32.mrb[0].mxu0
      %v6877 = vadd.f32 %v6334, %v6876
      %v6878 = vpop.f32.mrb[0].mxu0
      %6879 = vmatprep.mubr.f32.mxu0 0.0
      %v6880 = vand.u32 %v4296, 4294901760
      %6881 = vmatmul.mubr.f32.gmra.mrb[0].mxu0 %v6880
      %v6882 = vpop.f32.mrb[0].mxu0
      %v6883 = vadd.f32 %v6342, %v6882
      %v6884 = vpop.f32.mrb[0].mxu0
      %6885 = vmatprep.mubr.f32.mxu0 0.0
      %v6886 = vand.u32 %v4299, 4294901760
      %6887 = vmatmul.mubr.f32.gmra.mrb[0].mxu0 %v6886
      %v6888 = vpop.f32.mrb[0].mxu0
      %v6889 = vadd.f32 %v6350, %v6888
      %v6890 = vpop.f32.mrb[0].mxu0
      %6891 = vmatprep.mubr.f32.mxu0 0.0
      %v6892 = vand.u32 %v4302, 4294901760
      %6893 = vmatmul.mubr.f32.gmra.mrb[0].mxu0 %v6892
      %v6894 = vpop.f32.mrb[0].mxu0
      %v6895 = vadd.f32 %v6358, %v6894
      %v6896 = vpop.f32.mrb[0].mxu0
      %6897 = vmatprep.mubr.f32.mxu0 0.0
      %v6898 = vand.u32 %v4305, 4294901760
      %6899 = vmatmul.mubr.f32.gmra.mrb[0].mxu0 %v6898
      %v6900 = vpop.f32.mrb[0].mxu0
      %v6901 = vadd.f32 %v6366, %v6900
      %v6902 = vpop.f32.mrb[0].mxu0
      %6903 = vmatprep.mubr.f32.mxu0 0.0
      %v6904 = vand.u32 %v4308, 4294901760
      %6905 = vmatmul.mubr.f32.gmra.mrb[0].mxu0 %v6904
      %v6906 = vpop.f32.mrb[0].mxu0
      %v6907 = vadd.f32 %v6374, %v6906
      %v6908 = vpop.f32.mrb[0].mxu0
      %6909 = vmatprep.mubr.f32.mxu0 0.0
      %v6910 = vand.u32 %v4311, 4294901760
      %6911 = vmatmul.mubr.f32.gmra.mrb[0].mxu0 %v6910
      %v6912 = vpop.f32.mrb[0].mxu0
      %v6913 = vadd.f32 %v6382, %v6912
      %v6914 = vpop.f32.mrb[0].mxu0
      %6915 = vmatprep.mubr.f32.mxu0 0.0
      %v6916 = vand.u32 %v4314, 4294901760
      %6917 = vmatmul.mubr.f32.gmra.mrb[0].mxu0 %v6916
      %v6918 = vpop.f32.mrb[0].mxu0
      %v6919 = vadd.f32 %v6390, %v6918
      %v6920 = vpop.f32.mrb[0].mxu0
      %6921 = vmatprep.mubr.f32.mxu0 0.0
      %v6922 = vand.u32 %v4317, 4294901760
      %6923 = vmatmul.mubr.f32.gmra.mrb[0].mxu0 %v6922
      %v6924 = vpop.f32.mrb[0].mxu0
      %v6925 = vadd.f32 %v6398, %v6924
      %v6926 = vpop.f32.mrb[0].mxu0
      %6927 = vmatprep.mubr.f32.mxu0 0.0
      %v6928 = vand.u32 %v4320, 4294901760
      %6929 = vmatmul.mubr.f32.gmra.mrb[0].mxu0 %v6928
      %v6930 = vpop.f32.mrb[0].mxu0
      %v6931 = vadd.f32 %v6406, %v6930
      %v6932 = vpop.f32.mrb[0].mxu0
      %6933 = vmatprep.mubr.f32.mxu0 0.0
      %v6934 = vand.u32 %v4323, 4294901760
      %6935 = vmatmul.mubr.f32.gmra.mrb[0].mxu0 %v6934
      %v6936 = vpop.f32.mrb[0].mxu0
      %v6937 = vadd.f32 %v6414, %v6936
      %v6938 = vpop.f32.mrb[0].mxu0
      %6939 = vmatprep.mubr.f32.mxu0 0.0
      %v6940 = vand.u32 %v4326, 4294901760
      %6941 = vmatmul.mubr.f32.gmra.mrb[0].mxu0 %v6940
      %v6942 = vpop.f32.mrb[0].mxu0
      %v6943 = vadd.f32 %v6422, %v6942
      %v6944 = vpop.f32.mrb[0].mxu0
      %6945 = vmatprep.mubr.f32.mxu0 0.0
      %v6946 = vand.u32 %v4329, 4294901760
      %6947 = vmatmul.mubr.f32.gmra.mrb[0].mxu0 %v6946
      %v6948 = vpop.f32.mrb[0].mxu0
      %v6949 = vadd.f32 %v6430, %v6948
      %v6950 = vpop.f32.mrb[0].mxu0
      %6951 = vmatprep.mubr.f32.mxu0 0.0
      %v6952 = vand.u32 %v4332, 4294901760
      %6953 = vmatmul.mubr.f32.gmra.mrb[0].mxu0 %v6952
      %v6954 = vpop.f32.mrb[0].mxu0
      %v6955 = vadd.f32 %v6438, %v6954
      %v6956 = vpop.f32.mrb[0].mxu0
      %6957 = vmatprep.mubr.f32.mxu0 0.0
      %v6958 = vand.u32 %v4335, 4294901760
      %6959 = vmatmul.mubr.f32.gmra.mrb[0].mxu0 %v6958
      %v6960 = vpop.f32.mrb[0].mxu0
      %v6961 = vadd.f32 %v6446, %v6960
      %v6962 = vpop.f32.mrb[0].mxu0
      %6963 = vmatprep.mubr.f32.mxu0 0.0
      %v6964 = vand.u32 %v4338, 4294901760
      %6965 = vmatmul.mubr.f32.gmra.mrb[0].mxu0 %v6964
      %v6966 = vpop.f32.mrb[0].mxu0
      %v6967 = vadd.f32 %v6454, %v6966
      %v6968 = vpop.f32.mrb[0].mxu0
      %6969 = vmatprep.mubr.f32.mxu0 0.0
      %v6970 = vand.u32 %v4341, 4294901760
      %6971 = vmatmul.mubr.f32.gmra.mrb[0].mxu0 %v6970
      %v6972 = vpop.f32.mrb[0].mxu0
      %v6973 = vadd.f32 %v6462, %v6972
      %v6974 = vpop.f32.mrb[0].mxu0
      %6975 = vmatprep.mubr.f32.mxu0 0.0
      %v6976 = vand.u32 %v4344, 4294901760
      %6977 = vmatmul.mubr.f32.gmra.mrb[0].mxu0 %v6976
      %v6978 = vpop.f32.mrb[0].mxu0
      %v6979 = vadd.f32 %v6470, %v6978
      %v6980 = vpop.f32.mrb[0].mxu0
      %6981 = vmatprep.mubr.f32.mxu0 0.0
      %v6982 = vand.u32 %v4347, 4294901760
      %6983 = vmatmul.mubr.f32.gmra.mrb[0].mxu0 %v6982
      %v6984 = vpop.f32.mrb[0].mxu0
      %v6985 = vadd.f32 %v6478, %v6984
      %v6986 = vpop.f32.mrb[0].mxu0
      %6987 = vmatprep.mubr.f32.mxu0 0.0
      %v6988 = vand.u32 %v4350, 4294901760
      %6989 = vmatmul.mubr.f32.gmra.mrb[0].mxu0 %v6988
      %v6990 = vpop.f32.mrb[0].mxu0
      %v6991 = vadd.f32 %v6486, %v6990
      %v6992 = vpop.f32.mrb[0].mxu0
      %6993 = vmatprep.mubr.f32.mxu0 0.0
      %v6994 = vand.u32 %v4353, 4294901760
      %6995 = vmatmul.mubr.f32.gmra.mrb[0].mxu0 %v6994
      %v6996 = vpop.f32.mrb[0].mxu0
      %v6997 = vadd.f32 %v6494, %v6996
      %v6998 = vpop.f32.mrb[0].mxu0
      %6999 = vmatprep.mubr.f32.mxu0 0.0
      %v7000 = vand.u32 %v4356, 4294901760
      %7001 = vmatmul.mubr.f32.gmra.mrb[0].mxu0 %v7000
      %v7002 = vpop.f32.mrb[0].mxu0
      %v7003 = vadd.f32 %v6502, %v7002
      %v7004 = vpop.f32.mrb[0].mxu0
      %7005 = vmatprep.mubr.f32.mxu0 0.0
      %v7006 = vand.u32 %v4359, 4294901760
      %7007 = vmatmul.mubr.f32.gmra.mrb[0].mxu0 %v7006
      %v7008 = vpop.f32.mrb[0].mxu0
      %v7009 = vadd.f32 %v6510, %v7008
      %v7010 = vpop.f32.mrb[0].mxu0
      %7011 = vmatprep.mubr.f32.mxu0 0.0
      %v7012 = vand.u32 %v4362, 4294901760
      %7013 = vmatmul.mubr.f32.gmra.mrb[0].mxu0 %v7012
      %v7014 = vpop.f32.mrb[0].mxu0
      %v7015 = vadd.f32 %v6518, %v7014
      %v7016 = vpop.f32.mrb[0].mxu0
      %7017 = vmatprep.mubr.f32.mxu0 0.0
      %v7018 = vand.u32 %v4365, 4294901760
      %7019 = vmatmul.mubr.f32.gmra.mrb[0].mxu0 %v7018
      %v7020 = vpop.f32.mrb[0].mxu0
      %v7021 = vadd.f32 %v6526, %v7020
      %v7022 = vpop.f32.mrb[0].mxu0
      %7023 = vmatprep.mubr.f32.mxu0 0.0
      %v7024 = vand.u32 %v4368, 4294901760
      %7025 = vmatmul.mubr.f32.gmra.mrb[0].mxu0 %v7024
      %v7026 = vpop.f32.mrb[0].mxu0
      %v7027 = vadd.f32 %v6534, %v7026
      %v7028 = vpop.f32.mrb[0].mxu0
      %7029 = vmatprep.mubr.f32.mxu0 0.0
      %v7030 = vand.u32 %v4371, 4294901760
      %7031 = vmatmul.mubr.f32.gmra.mrb[0].mxu0 %v7030
      %v7032 = vpop.f32.mrb[0].mxu0
      %v7033 = vadd.f32 %v6542, %v7032
      %v7034 = vpop.f32.mrb[0].mxu0
      %7035 = vmatprep.mubr.f32.mxu0 0.0
      %v7036 = vand.u32 %v4374, 4294901760
      %7037 = vmatmul.mubr.f32.gmra.mrb[0].mxu0 %v7036
      %v7038 = vpop.f32.mrb[0].mxu0
      %v7039 = vadd.f32 %v6550, %v7038
      %v7040 = vpop.f32.mrb[0].mxu0
      %7041 = vmatprep.mubr.f32.mxu0 0.0
      %v7042 = vand.u32 %v4377, 4294901760
      %7043 = vmatmul.mubr.f32.gmra.mrb[0].mxu0 %v7042
      %v7044 = vpop.f32.mrb[0].mxu0
      %v7045 = vadd.f32 %v6558, %v7044
      %v7046 = vpop.f32.mrb[0].mxu0
      %7047 = vmatprep.mubr.f32.mxu0 0.0
      %v7048 = vand.u32 %v4380, 4294901760
      %7049 = vmatmul.mubr.f32.gmra.mrb[0].mxu0 %v7048
      %v7050 = vpop.f32.mrb[0].mxu0
      %v7051 = vadd.f32 %v6566, %v7050
      %v7052 = vpop.f32.mrb[0].mxu0
      %7053 = vmatprep.mubr.f32.mxu0 0.0
      %v7054 = vand.u32 %v4383, 4294901760
      %7055 = vmatmul.mubr.f32.gmra.mrb[0].mxu0 %v7054
      %v7056 = vpop.f32.mrb[0].mxu0
      %v7057 = vadd.f32 %v6574, %v7056
      %v7058 = vpop.f32.mrb[0].mxu0
      %7059 = vmatprep.mubr.f32.mxu0 0.0
      %v7060 = vand.u32 %v4386, 4294901760
      %7061 = vmatmul.mubr.f32.gmra.mrb[0].mxu0 %v7060
      %v7062 = vpop.f32.mrb[0].mxu0
      %v7063 = vadd.f32 %v6582, %v7062
      %v7064 = vpop.f32.mrb[0].mxu0
      %7065 = vmatprep.mubr.f32.mxu0 0.0
      %v7066 = vand.u32 %v4389, 4294901760
      %7067 = vmatmul.mubr.f32.gmra.mrb[0].mxu0 %v7066
      %v7068 = vpop.f32.mrb[0].mxu0
      %v7069 = vadd.f32 %v6590, %v7068
      %v7070 = vpop.f32.mrb[0].mxu0
      %7071 = vmatprep.mubr.f32.mxu0 0.0
      %v7072 = vand.u32 %v4392, 4294901760
      %7073 = vmatmul.mubr.f32.gmra.mrb[0].mxu0 %v7072
      %v7074 = vpop.f32.mrb[0].mxu0
      %v7075 = vadd.f32 %v6598, %v7074
      %v7076 = vpop.f32.mrb[0].mxu0
      %7077 = vmatprep.mubr.f32.mxu0 0.0
      %v7078 = vand.u32 %v4395, 4294901760
      %7079 = vmatmul.mubr.f32.gmra.mrb[0].mxu0 %v7078
      %v7080 = vpop.f32.mrb[0].mxu0
      %v7081 = vadd.f32 %v6606, %v7080
      %v7082 = vpop.f32.mrb[0].mxu0
      %7083 = vmatprep.mubr.f32.mxu0 0.0
      %v7084 = vand.u32 %v4398, 4294901760
      %7085 = vmatmul.mubr.f32.gmra.mrb[0].mxu0 %v7084
      %v7086 = vpop.f32.mrb[0].mxu0
      %v7087 = vadd.f32 %v6614, %v7086
      %v7088 = vpop.f32.mrb[0].mxu0
      %7089 = vmatprep.mubr.f32.mxu0 0.0
      %v7090 = vand.u32 %v4401, 4294901760
      %7091 = vmatmul.mubr.f32.gmra.mrb[0].mxu0 %v7090
      %v7092 = vpop.f32.mrb[0].mxu0
      %v7093 = vadd.f32 %v6622, %v7092
      %v7094 = vpop.f32.mrb[0].mxu0
      %7095 = vmatprep.mubr.f32.mxu0 0.0
      %v7096 = vand.u32 %v4404, 4294901760
      %7097 = vmatmul.mubr.f32.gmra.mrb[0].mxu0 %v7096
      %v7098 = vpop.f32.mrb[0].mxu0
      %v7099 = vadd.f32 %v6630, %v7098
      %v7100 = vpop.f32.mrb[0].mxu0
      %7101 = vmatprep.mubr.f32.mxu0 0.0
      %v7102 = vand.u32 %v4407, 4294901760
      %7103 = vmatmul.mubr.f32.gmra.mrb[0].mxu0 %v7102
      %v7104 = vpop.f32.mrb[0].mxu0
      %v7105 = vadd.f32 %v6638, %v7104
      %v7106 = vpop.f32.mrb[0].mxu0
      %7107 = vmatprep.mubr.f32.mxu0 0.0
      %v7108 = vand.u32 %v4410, 4294901760
      %7109 = vmatmul.mubr.f32.gmra.mrb[0].mxu0 %v7108
      %v7110 = vpop.f32.mrb[0].mxu0
      %v7111 = vadd.f32 %v6646, %v7110
      %v7112 = vpop.f32.mrb[0].mxu0
      %7113 = vmatprep.mubr.f32.mxu0 0.0
      %v7114 = vand.u32 %v4413, 4294901760
      %7115 = vmatmul.mubr.f32.gmra.mrb[0].mxu0 %v7114
      %v7116 = vpop.f32.mrb[0].mxu0
      %v7117 = vadd.f32 %v6654, %v7116
      %v7118 = vpop.f32.mrb[0].mxu0
      %7119 = vmatprep.mubr.f32.mxu0 0.0
      %v7120 = vand.u32 %v4416, 4294901760
      %7121 = vmatmul.mubr.f32.gmra.mrb[0].mxu0 %v7120
      %v7122 = vpop.f32.mrb[0].mxu0
      %v7123 = vadd.f32 %v6662, %v7122
      %v7124 = vpop.f32.mrb[0].mxu0
      %7125 = vmatprep.mubr.f32.mxu0 0.0
      %v7126 = vand.u32 %v4419, 4294901760
      %7127 = vmatmul.mubr.f32.gmra.mrb[0].mxu0 %v7126
      %v7128 = vpop.f32.mrb[0].mxu0
      %v7129 = vadd.f32 %v6670, %v7128
      %v7130 = vpop.f32.mrb[0].mxu0
      %7131 = vmatprep.mubr.f32.mxu0 0.0
      %v7132 = vand.u32 %v4422, 4294901760
      %7133 = vmatmul.mubr.f32.gmra.mrb[0].mxu0 %v7132
      %v7134 = vpop.f32.mrb[0].mxu0
      %v7135 = vadd.f32 %v6678, %v7134
      %v7136 = vpop.f32.mrb[0].mxu0
      %7137 = vmatprep.mubr.f32.mxu0 0.0
      %v7138 = vand.u32 %v4425, 4294901760
      %7139 = vmatmul.mubr.f32.gmra.mrb[0].mxu0 %v7138
      %v7140 = vpop.f32.mrb[0].mxu0
      %v7141 = vadd.f32 %v6686, %v7140
      %v7142 = vpop.f32.mrb[0].mxu0
      %7143 = vdwg.mxu0
      %7144 = vmatprep.subr.mxu0 0.0
      %v7145 = vand.u32 %v4233, 4294901760
      %7146 = vmatpush1.msra.mxu0 %v7145
      %7147 = vmatprep.subr.mxu0 0.0
      %v7148 = vand.u32 %v4234, 4294901760
      %7149 = vmatpush1.msra.mxu0 %v7148
      %7150 = vmatprep.subr.mxu0 0.0
      %7151 = vmatpush1.msra.mxu0 0.0
      %7152 = vmatprep.subr.mxu0 0.0
      %7153 = vmatpush1.msra.mxu0 0.0
      %7154 = vmatprep.subr.mxu0 0.0
      %7155 = vmatpush1.msra.mxu0 0.0
      %7156 = vmatprep.subr.mxu0 0.0
      %7157 = vmatpush1.msra.mxu0 0.0
      %7158 = vmatprep.subr.mxu0 0.0
      %7159 = vmatpush1.msra.mxu0 0.0
      %7160 = vmatprep.subr.mxu0 0.0
      %7161 = vmatpush1.msra.mxu0 0.0
      %7162 = vmatprep.subr.mxu0 0.0
      %7163 = vmatpush1.msra.mxu0 0.0
      %7164 = vmatprep.subr.mxu0 0.0
      %7165 = vmatpush1.msra.mxu0 0.0
      %7166 = vmatprep.subr.mxu0 0.0
      %7167 = vmatpush1.msra.mxu0 0.0
      %7168 = vmatprep.subr.mxu0 0.0
      %7169 = vmatpush1.msra.mxu0 0.0
      %7170 = vmatprep.subr.mxu0 0.0
      %7171 = vmatpush1.msra.mxu0 0.0
      %7172 = vmatprep.subr.mxu0 0.0
      %7173 = vmatpush1.msra.mxu0 0.0
      %7174 = vmatprep.subr.mxu0 0.0
      %7175 = vmatpush1.msra.mxu0 0.0
      %7176 = vmatprep.subr.mxu0 0.0
      %7177 = vmatpush1.msra.mxu0 0.0
      %7178 = vmatprep.subr.mxu0 0.0
      %7179 = vmatpush1.msra.mxu0 0.0
      %7180 = vmatprep.subr.mxu0 0.0
      %7181 = vmatpush1.msra.mxu0 0.0
      %7182 = vmatprep.subr.mxu0 0.0
      %7183 = vmatpush1.msra.mxu0 0.0
      %7184 = vmatprep.subr.mxu0 0.0
      %7185 = vmatpush1.msra.mxu0 0.0
      %7186 = vmatprep.subr.mxu0 0.0
      %7187 = vmatpush1.msra.mxu0 0.0
      %7188 = vmatprep.subr.mxu0 0.0
      %7189 = vmatpush1.msra.mxu0 0.0
      %7190 = vmatprep.subr.mxu0 0.0
      %7191 = vmatpush1.msra.mxu0 0.0
      %7192 = vmatprep.subr.mxu0 0.0
      %7193 = vmatpush1.msra.mxu0 0.0
      %7194 = vmatprep.subr.mxu0 0.0
      %7195 = vmatpush1.msra.mxu0 0.0
      %7196 = vmatprep.subr.mxu0 0.0
      %7197 = vmatpush1.msra.mxu0 0.0
      %7198 = vmatprep.subr.mxu0 0.0
      %7199 = vmatpush1.msra.mxu0 0.0
      %7200 = vmatprep.subr.mxu0 0.0
      %7201 = vmatpush1.msra.mxu0 0.0
      %7202 = vmatprep.subr.mxu0 0.0
      %7203 = vmatpush1.msra.mxu0 0.0
      %7204 = vmatprep.subr.mxu0 0.0
      %7205 = vmatpush1.msra.mxu0 0.0
      %7206 = vmatprep.subr.mxu0 0.0
      %7207 = vmatpush1.msra.mxu0 0.0
      %7208 = vmatprep.subr.mxu0 0.0
      %7209 = vmatpush1.msra.mxu0 0.0
      %7210 = vmatprep.mubr.f32.mxu0 0.0
      %v7211 = vand.u32 %v4236, 4294901760
      %7212 = vmatmul.mubr.f32.gmra.mrb[0].mxu0 %v7211
      %v7213 = vpop.f32.mrb[0].mxu0
      %v7214 = vadd.f32 %v6763, %v7213
      %v7215 = vpop.f32.mrb[0].mxu0
      %7216 = vmatprep.mubr.f32.mxu0 0.0
      %v7217 = vand.u32 %v4239, 4294901760
      %7218 = vmatmul.mubr.f32.gmra.mrb[0].mxu0 %v7217
      %v7219 = vpop.f32.mrb[0].mxu0
      %v7220 = vadd.f32 %v6769, %v7219
      %v7221 = vpop.f32.mrb[0].mxu0
      %7222 = vmatprep.mubr.f32.mxu0 0.0
      %v7223 = vand.u32 %v4242, 4294901760
      %7224 = vmatmul.mubr.f32.gmra.mrb[0].mxu0 %v7223
      %v7225 = vpop.f32.mrb[0].mxu0
      %v7226 = vadd.f32 %v6775, %v7225
      %v7227 = vpop.f32.mrb[0].mxu0
      %7228 = vmatprep.mubr.f32.mxu0 0.0
      %v7229 = vand.u32 %v4245, 4294901760
      %7230 = vmatmul.mubr.f32.gmra.mrb[0].mxu0 %v7229
      %v7231 = vpop.f32.mrb[0].mxu0
      %v7232 = vadd.f32 %v6781, %v7231
      %v7233 = vpop.f32.mrb[0].mxu0
      %7234 = vmatprep.mubr.f32.mxu0 0.0
      %v7235 = vand.u32 %v4248, 4294901760
      %7236 = vmatmul.mubr.f32.gmra.mrb[0].mxu0 %v7235
      %v7237 = vpop.f32.mrb[0].mxu0
      %v7238 = vadd.f32 %v6787, %v7237
      %v7239 = vpop.f32.mrb[0].mxu0
      %7240 = vmatprep.mubr.f32.mxu0 0.0
      %v7241 = vand.u32 %v4251, 4294901760
      %7242 = vmatmul.mubr.f32.gmra.mrb[0].mxu0 %v7241
      %v7243 = vpop.f32.mrb[0].mxu0
      %v7244 = vadd.f32 %v6793, %v7243
      %v7245 = vpop.f32.mrb[0].mxu0
      %7246 = vmatprep.mubr.f32.mxu0 0.0
      %v7247 = vand.u32 %v4254, 4294901760
      %7248 = vmatmul.mubr.f32.gmra.mrb[0].mxu0 %v7247
      %v7249 = vpop.f32.mrb[0].mxu0
      %v7250 = vadd.f32 %v6799, %v7249
      %v7251 = vpop.f32.mrb[0].mxu0
      %7252 = vmatprep.mubr.f32.mxu0 0.0
      %v7253 = vand.u32 %v4257, 4294901760
      %7254 = vmatmul.mubr.f32.gmra.mrb[0].mxu0 %v7253
      %v7255 = vpop.f32.mrb[0].mxu0
      %v7256 = vadd.f32 %v6805, %v7255
      %v7257 = vpop.f32.mrb[0].mxu0
      %7258 = vmatprep.mubr.f32.mxu0 0.0
      %v7259 = vand.u32 %v4260, 4294901760
      %7260 = vmatmul.mubr.f32.gmra.mrb[0].mxu0 %v7259
      %v7261 = vpop.f32.mrb[0].mxu0
      %v7262 = vadd.f32 %v6811, %v7261
      %v7263 = vpop.f32.mrb[0].mxu0
      %7264 = vmatprep.mubr.f32.mxu0 0.0
      %v7265 = vand.u32 %v4263, 4294901760
      %7266 = vmatmul.mubr.f32.gmra.mrb[0].mxu0 %v7265
      %v7267 = vpop.f32.mrb[0].mxu0
      %v7268 = vadd.f32 %v6817, %v7267
      %v7269 = vpop.f32.mrb[0].mxu0
      %7270 = vmatprep.mubr.f32.mxu0 0.0
      %v7271 = vand.u32 %v4266, 4294901760
      %7272 = vmatmul.mubr.f32.gmra.mrb[0].mxu0 %v7271
      %v7273 = vpop.f32.mrb[0].mxu0
      %v7274 = vadd.f32 %v6823, %v7273
      %v7275 = vpop.f32.mrb[0].mxu0
      %7276 = vmatprep.mubr.f32.mxu0 0.0
      %v7277 = vand.u32 %v4269, 4294901760
      %7278 = vmatmul.mubr.f32.gmra.mrb[0].mxu0 %v7277
      %v7279 = vpop.f32.mrb[0].mxu0
      %v7280 = vadd.f32 %v6829, %v7279
      %v7281 = vpop.f32.mrb[0].mxu0
      %7282 = vmatprep.mubr.f32.mxu0 0.0
      %v7283 = vand.u32 %v4272, 4294901760
      %7284 = vmatmul.mubr.f32.gmra.mrb[0].mxu0 %v7283
      %v7285 = vpop.f32.mrb[0].mxu0
      %v7286 = vadd.f32 %v6835, %v7285
      %v7287 = vpop.f32.mrb[0].mxu0
      %7288 = vmatprep.mubr.f32.mxu0 0.0
      %v7289 = vand.u32 %v4275, 4294901760
      %7290 = vmatmul.mubr.f32.gmra.mrb[0].mxu0 %v7289
      %v7291 = vpop.f32.mrb[0].mxu0
      %v7292 = vadd.f32 %v6841, %v7291
      %v7293 = vpop.f32.mrb[0].mxu0
      %7294 = vmatprep.mubr.f32.mxu0 0.0
      %v7295 = vand.u32 %v4278, 4294901760
      %7296 = vmatmul.mubr.f32.gmra.mrb[0].mxu0 %v7295
      %v7297 = vpop.f32.mrb[0].mxu0
      %v7298 = vadd.f32 %v6847, %v7297
      %v7299 = vpop.f32.mrb[0].mxu0
      %7300 = vmatprep.mubr.f32.mxu0 0.0
      %v7301 = vand.u32 %v4281, 4294901760
      %7302 = vmatmul.mubr.f32.gmra.mrb[0].mxu0 %v7301
      %v7303 = vpop.f32.mrb[0].mxu0
      %v7304 = vadd.f32 %v6853, %v7303
      %v7305 = vpop.f32.mrb[0].mxu0
      %7306 = vmatprep.mubr.f32.mxu0 0.0
      %v7307 = vand.u32 %v4284, 4294901760
      %7308 = vmatmul.mubr.f32.gmra.mrb[0].mxu0 %v7307
      %v7309 = vpop.f32.mrb[0].mxu0
      %v7310 = vadd.f32 %v6859, %v7309
      %v7311 = vpop.f32.mrb[0].mxu0
      %7312 = vmatprep.mubr.f32.mxu0 0.0
      %v7313 = vand.u32 %v4287, 4294901760
      %7314 = vmatmul.mubr.f32.gmra.mrb[0].mxu0 %v7313
      %v7315 = vpop.f32.mrb[0].mxu0
      %v7316 = vadd.f32 %v6865, %v7315
      %v7317 = vpop.f32.mrb[0].mxu0
      %7318 = vmatprep.mubr.f32.mxu0 0.0
      %v7319 = vand.u32 %v4290, 4294901760
      %7320 = vmatmul.mubr.f32.gmra.mrb[0].mxu0 %v7319
      %v7321 = vpop.f32.mrb[0].mxu0
      %v7322 = vadd.f32 %v6871, %v7321
      %v7323 = vpop.f32.mrb[0].mxu0
      %7324 = vmatprep.mubr.f32.mxu0 0.0
      %v7325 = vand.u32 %v4293, 4294901760
      %7326 = vmatmul.mubr.f32.gmra.mrb[0].mxu0 %v7325
      %v7327 = vpop.f32.mrb[0].mxu0
      %v7328 = vadd.f32 %v6877, %v7327
      %v7329 = vpop.f32.mrb[0].mxu0
      %7330 = vmatprep.mubr.f32.mxu0 0.0
      %v7331 = vand.u32 %v4296, 4294901760
      %7332 = vmatmul.mubr.f32.gmra.mrb[0].mxu0 %v7331
      %v7333 = vpop.f32.mrb[0].mxu0
      %v7334 = vadd.f32 %v6883, %v7333
      %v7335 = vpop.f32.mrb[0].mxu0
      %7336 = vmatprep.mubr.f32.mxu0 0.0
      %v7337 = vand.u32 %v4299, 4294901760
      %7338 = vmatmul.mubr.f32.gmra.mrb[0].mxu0 %v7337
      %v7339 = vpop.f32.mrb[0].mxu0
      %v7340 = vadd.f32 %v6889, %v7339
      %v7341 = vpop.f32.mrb[0].mxu0
      %7342 = vmatprep.mubr.f32.mxu0 0.0
      %v7343 = vand.u32 %v4302, 4294901760
      %7344 = vmatmul.mubr.f32.gmra.mrb[0].mxu0 %v7343
      %v7345 = vpop.f32.mrb[0].mxu0
      %v7346 = vadd.f32 %v6895, %v7345
      %v7347 = vpop.f32.mrb[0].mxu0
      %7348 = vmatprep.mubr.f32.mxu0 0.0
      %v7349 = vand.u32 %v4305, 4294901760
      %7350 = vmatmul.mubr.f32.gmra.mrb[0].mxu0 %v7349
      %v7351 = vpop.f32.mrb[0].mxu0
      %v7352 = vadd.f32 %v6901, %v7351
      %v7353 = vpop.f32.mrb[0].mxu0
      %7354 = vmatprep.mubr.f32.mxu0 0.0
      %v7355 = vand.u32 %v4308, 4294901760
      %7356 = vmatmul.mubr.f32.gmra.mrb[0].mxu0 %v7355
      %v7357 = vpop.f32.mrb[0].mxu0
      %v7358 = vadd.f32 %v6907, %v7357
      %v7359 = vpop.f32.mrb[0].mxu0
      %7360 = vmatprep.mubr.f32.mxu0 0.0
      %v7361 = vand.u32 %v4311, 4294901760
      %7362 = vmatmul.mubr.f32.gmra.mrb[0].mxu0 %v7361
      %v7363 = vpop.f32.mrb[0].mxu0
      %v7364 = vadd.f32 %v6913, %v7363
      %v7365 = vpop.f32.mrb[0].mxu0
      %7366 = vmatprep.mubr.f32.mxu0 0.0
      %v7367 = vand.u32 %v4314, 4294901760
      %7368 = vmatmul.mubr.f32.gmra.mrb[0].mxu0 %v7367
      %v7369 = vpop.f32.mrb[0].mxu0
      %v7370 = vadd.f32 %v6919, %v7369
      %v7371 = vpop.f32.mrb[0].mxu0
      %7372 = vmatprep.mubr.f32.mxu0 0.0
      %v7373 = vand.u32 %v4317, 4294901760
      %7374 = vmatmul.mubr.f32.gmra.mrb[0].mxu0 %v7373
      %v7375 = vpop.f32.mrb[0].mxu0
      %v7376 = vadd.f32 %v6925, %v7375
      %v7377 = vpop.f32.mrb[0].mxu0
      %7378 = vmatprep.mubr.f32.mxu0 0.0
      %v7379 = vand.u32 %v4320, 4294901760
      %7380 = vmatmul.mubr.f32.gmra.mrb[0].mxu0 %v7379
      %v7381 = vpop.f32.mrb[0].mxu0
      %v7382 = vadd.f32 %v6931, %v7381
      %v7383 = vpop.f32.mrb[0].mxu0
      %7384 = vmatprep.mubr.f32.mxu0 0.0
      %v7385 = vand.u32 %v4323, 4294901760
      %7386 = vmatmul.mubr.f32.gmra.mrb[0].mxu0 %v7385
      %v7387 = vpop.f32.mrb[0].mxu0
      %v7388 = vadd.f32 %v6937, %v7387
      %v7389 = vpop.f32.mrb[0].mxu0
      %7390 = vmatprep.mubr.f32.mxu0 0.0
      %v7391 = vand.u32 %v4326, 4294901760
      %7392 = vmatmul.mubr.f32.gmra.mrb[0].mxu0 %v7391
      %v7393 = vpop.f32.mrb[0].mxu0
      %v7394 = vadd.f32 %v6943, %v7393
      %v7395 = vpop.f32.mrb[0].mxu0
      %7396 = vmatprep.mubr.f32.mxu0 0.0
      %v7397 = vand.u32 %v4329, 4294901760
      %7398 = vmatmul.mubr.f32.gmra.mrb[0].mxu0 %v7397
      %v7399 = vpop.f32.mrb[0].mxu0
      %v7400 = vadd.f32 %v6949, %v7399
      %v7401 = vpop.f32.mrb[0].mxu0
      %7402 = vmatprep.mubr.f32.mxu0 0.0
      %v7403 = vand.u32 %v4332, 4294901760
      %7404 = vmatmul.mubr.f32.gmra.mrb[0].mxu0 %v7403
      %v7405 = vpop.f32.mrb[0].mxu0
      %v7406 = vadd.f32 %v6955, %v7405
      %v7407 = vpop.f32.mrb[0].mxu0
      %7408 = vmatprep.mubr.f32.mxu0 0.0
      %v7409 = vand.u32 %v4335, 4294901760
      %7410 = vmatmul.mubr.f32.gmra.mrb[0].mxu0 %v7409
      %v7411 = vpop.f32.mrb[0].mxu0
      %v7412 = vadd.f32 %v6961, %v7411
      %v7413 = vpop.f32.mrb[0].mxu0
      %7414 = vmatprep.mubr.f32.mxu0 0.0
      %v7415 = vand.u32 %v4338, 4294901760
      %7416 = vmatmul.mubr.f32.gmra.mrb[0].mxu0 %v7415
      %v7417 = vpop.f32.mrb[0].mxu0
      %v7418 = vadd.f32 %v6967, %v7417
      %v7419 = vpop.f32.mrb[0].mxu0
      %7420 = vmatprep.mubr.f32.mxu0 0.0
      %v7421 = vand.u32 %v4341, 4294901760
      %7422 = vmatmul.mubr.f32.gmra.mrb[0].mxu0 %v7421
      %v7423 = vpop.f32.mrb[0].mxu0
      %v7424 = vadd.f32 %v6973, %v7423
      %v7425 = vpop.f32.mrb[0].mxu0
      %7426 = vmatprep.mubr.f32.mxu0 0.0
      %v7427 = vand.u32 %v4344, 4294901760
      %7428 = vmatmul.mubr.f32.gmra.mrb[0].mxu0 %v7427
      %v7429 = vpop.f32.mrb[0].mxu0
      %v7430 = vadd.f32 %v6979, %v7429
      %v7431 = vpop.f32.mrb[0].mxu0
      %7432 = vmatprep.mubr.f32.mxu0 0.0
      %v7433 = vand.u32 %v4347, 4294901760
      %7434 = vmatmul.mubr.f32.gmra.mrb[0].mxu0 %v7433
      %v7435 = vpop.f32.mrb[0].mxu0
      %v7436 = vadd.f32 %v6985, %v7435
      %v7437 = vpop.f32.mrb[0].mxu0
      %7438 = vmatprep.mubr.f32.mxu0 0.0
      %v7439 = vand.u32 %v4350, 4294901760
      %7440 = vmatmul.mubr.f32.gmra.mrb[0].mxu0 %v7439
      %v7441 = vpop.f32.mrb[0].mxu0
      %v7442 = vadd.f32 %v6991, %v7441
      %v7443 = vpop.f32.mrb[0].mxu0
      %7444 = vmatprep.mubr.f32.mxu0 0.0
      %v7445 = vand.u32 %v4353, 4294901760
      %7446 = vmatmul.mubr.f32.gmra.mrb[0].mxu0 %v7445
      %v7447 = vpop.f32.mrb[0].mxu0
      %v7448 = vadd.f32 %v6997, %v7447
      %v7449 = vpop.f32.mrb[0].mxu0
      %7450 = vmatprep.mubr.f32.mxu0 0.0
      %v7451 = vand.u32 %v4356, 4294901760
      %7452 = vmatmul.mubr.f32.gmra.mrb[0].mxu0 %v7451
      %v7453 = vpop.f32.mrb[0].mxu0
      %v7454 = vadd.f32 %v7003, %v7453
      %v7455 = vpop.f32.mrb[0].mxu0
      %7456 = vmatprep.mubr.f32.mxu0 0.0
      %v7457 = vand.u32 %v4359, 4294901760
      %7458 = vmatmul.mubr.f32.gmra.mrb[0].mxu0 %v7457
      %v7459 = vpop.f32.mrb[0].mxu0
      %v7460 = vadd.f32 %v7009, %v7459
      %v7461 = vpop.f32.mrb[0].mxu0
      %7462 = vmatprep.mubr.f32.mxu0 0.0
      %v7463 = vand.u32 %v4362, 4294901760
      %7464 = vmatmul.mubr.f32.gmra.mrb[0].mxu0 %v7463
      %v7465 = vpop.f32.mrb[0].mxu0
      %v7466 = vadd.f32 %v7015, %v7465
      %v7467 = vpop.f32.mrb[0].mxu0
      %7468 = vmatprep.mubr.f32.mxu0 0.0
      %v7469 = vand.u32 %v4365, 4294901760
      %7470 = vmatmul.mubr.f32.gmra.mrb[0].mxu0 %v7469
      %v7471 = vpop.f32.mrb[0].mxu0
      %v7472 = vadd.f32 %v7021, %v7471
      %v7473 = vpop.f32.mrb[0].mxu0
      %7474 = vmatprep.mubr.f32.mxu0 0.0
      %v7475 = vand.u32 %v4368, 4294901760
      %7476 = vmatmul.mubr.f32.gmra.mrb[0].mxu0 %v7475
      %v7477 = vpop.f32.mrb[0].mxu0
      %v7478 = vadd.f32 %v7027, %v7477
      %v7479 = vpop.f32.mrb[0].mxu0
      %7480 = vmatprep.mubr.f32.mxu0 0.0
      %v7481 = vand.u32 %v4371, 4294901760
      %7482 = vmatmul.mubr.f32.gmra.mrb[0].mxu0 %v7481
      %v7483 = vpop.f32.mrb[0].mxu0
      %v7484 = vadd.f32 %v7033, %v7483
      %v7485 = vpop.f32.mrb[0].mxu0
      %7486 = vmatprep.mubr.f32.mxu0 0.0
      %v7487 = vand.u32 %v4374, 4294901760
      %7488 = vmatmul.mubr.f32.gmra.mrb[0].mxu0 %v7487
      %v7489 = vpop.f32.mrb[0].mxu0
      %v7490 = vadd.f32 %v7039, %v7489
      %v7491 = vpop.f32.mrb[0].mxu0
      %7492 = vmatprep.mubr.f32.mxu0 0.0
      %v7493 = vand.u32 %v4377, 4294901760
      %7494 = vmatmul.mubr.f32.gmra.mrb[0].mxu0 %v7493
      %v7495 = vpop.f32.mrb[0].mxu0
      %v7496 = vadd.f32 %v7045, %v7495
      %v7497 = vpop.f32.mrb[0].mxu0
      %7498 = vmatprep.mubr.f32.mxu0 0.0
      %v7499 = vand.u32 %v4380, 4294901760
      %7500 = vmatmul.mubr.f32.gmra.mrb[0].mxu0 %v7499
      %v7501 = vpop.f32.mrb[0].mxu0
      %v7502 = vadd.f32 %v7051, %v7501
      %v7503 = vpop.f32.mrb[0].mxu0
      %7504 = vmatprep.mubr.f32.mxu0 0.0
      %v7505 = vand.u32 %v4383, 4294901760
      %7506 = vmatmul.mubr.f32.gmra.mrb[0].mxu0 %v7505
      %v7507 = vpop.f32.mrb[0].mxu0
      %v7508 = vadd.f32 %v7057, %v7507
      %v7509 = vpop.f32.mrb[0].mxu0
      %7510 = vmatprep.mubr.f32.mxu0 0.0
      %v7511 = vand.u32 %v4386, 4294901760
      %7512 = vmatmul.mubr.f32.gmra.mrb[0].mxu0 %v7511
      %v7513 = vpop.f32.mrb[0].mxu0
      %v7514 = vadd.f32 %v7063, %v7513
      %v7515 = vpop.f32.mrb[0].mxu0
      %7516 = vmatprep.mubr.f32.mxu0 0.0
      %v7517 = vand.u32 %v4389, 4294901760
      %7518 = vmatmul.mubr.f32.gmra.mrb[0].mxu0 %v7517
      %v7519 = vpop.f32.mrb[0].mxu0
      %v7520 = vadd.f32 %v7069, %v7519
      %v7521 = vpop.f32.mrb[0].mxu0
      %7522 = vmatprep.mubr.f32.mxu0 0.0
      %v7523 = vand.u32 %v4392, 4294901760
      %7524 = vmatmul.mubr.f32.gmra.mrb[0].mxu0 %v7523
      %v7525 = vpop.f32.mrb[0].mxu0
      %v7526 = vadd.f32 %v7075, %v7525
      %v7527 = vpop.f32.mrb[0].mxu0
      %7528 = vmatprep.mubr.f32.mxu0 0.0
      %v7529 = vand.u32 %v4395, 4294901760
      %7530 = vmatmul.mubr.f32.gmra.mrb[0].mxu0 %v7529
      %v7531 = vpop.f32.mrb[0].mxu0
      %v7532 = vadd.f32 %v7081, %v7531
      %v7533 = vpop.f32.mrb[0].mxu0
      %7534 = vmatprep.mubr.f32.mxu0 0.0
      %v7535 = vand.u32 %v4398, 4294901760
      %7536 = vmatmul.mubr.f32.gmra.mrb[0].mxu0 %v7535
      %v7537 = vpop.f32.mrb[0].mxu0
      %v7538 = vadd.f32 %v7087, %v7537
      %v7539 = vpop.f32.mrb[0].mxu0
      %7540 = vmatprep.mubr.f32.mxu0 0.0
      %v7541 = vand.u32 %v4401, 4294901760
      %7542 = vmatmul.mubr.f32.gmra.mrb[0].mxu0 %v7541
      %v7543 = vpop.f32.mrb[0].mxu0
      %v7544 = vadd.f32 %v7093, %v7543
      %v7545 = vpop.f32.mrb[0].mxu0
      %7546 = vmatprep.mubr.f32.mxu0 0.0
      %v7547 = vand.u32 %v4404, 4294901760
      %7548 = vmatmul.mubr.f32.gmra.mrb[0].mxu0 %v7547
      %v7549 = vpop.f32.mrb[0].mxu0
      %v7550 = vadd.f32 %v7099, %v7549
      %v7551 = vpop.f32.mrb[0].mxu0
      %7552 = vmatprep.mubr.f32.mxu0 0.0
      %v7553 = vand.u32 %v4407, 4294901760
      %7554 = vmatmul.mubr.f32.gmra.mrb[0].mxu0 %v7553
      %v7555 = vpop.f32.mrb[0].mxu0
      %v7556 = vadd.f32 %v7105, %v7555
      %v7557 = vpop.f32.mrb[0].mxu0
      %7558 = vmatprep.mubr.f32.mxu0 0.0
      %v7559 = vand.u32 %v4410, 4294901760
      %7560 = vmatmul.mubr.f32.gmra.mrb[0].mxu0 %v7559
      %v7561 = vpop.f32.mrb[0].mxu0
      %v7562 = vadd.f32 %v7111, %v7561
      %v7563 = vpop.f32.mrb[0].mxu0
      %7564 = vmatprep.mubr.f32.mxu0 0.0
      %v7565 = vand.u32 %v4413, 4294901760
      %7566 = vmatmul.mubr.f32.gmra.mrb[0].mxu0 %v7565
      %v7567 = vpop.f32.mrb[0].mxu0
      %v7568 = vadd.f32 %v7117, %v7567
      %v7569 = vpop.f32.mrb[0].mxu0
      %7570 = vmatprep.mubr.f32.mxu0 0.0
      %v7571 = vand.u32 %v4416, 4294901760
      %7572 = vmatmul.mubr.f32.gmra.mrb[0].mxu0 %v7571
      %v7573 = vpop.f32.mrb[0].mxu0
      %v7574 = vadd.f32 %v7123, %v7573
      %v7575 = vpop.f32.mrb[0].mxu0
      %7576 = vmatprep.mubr.f32.mxu0 0.0
      %v7577 = vand.u32 %v4419, 4294901760
      %7578 = vmatmul.mubr.f32.gmra.mrb[0].mxu0 %v7577
      %v7579 = vpop.f32.mrb[0].mxu0
      %v7580 = vadd.f32 %v7129, %v7579
      %v7581 = vpop.f32.mrb[0].mxu0
      %7582 = vmatprep.mubr.f32.mxu0 0.0
      %v7583 = vand.u32 %v4422, 4294901760
      %7584 = vmatmul.mubr.f32.gmra.mrb[0].mxu0 %v7583
      %v7585 = vpop.f32.mrb[0].mxu0
      %v7586 = vadd.f32 %v7135, %v7585
      %v7587 = vpop.f32.mrb[0].mxu0
      %7588 = vmatprep.mubr.f32.mxu0 0.0
      %v7589 = vand.u32 %v4425, 4294901760
      %7590 = vmatmul.mubr.f32.gmra.mrb[0].mxu0 %v7589
      %v7591 = vpop.f32.mrb[0].mxu0
      %v7592 = vadd.f32 %v7141, %v7591
      %v7593 = vpop.f32.mrb[0].mxu0
      %7594 = vdwg.mxu0
      %v7595 = vmul.f32 %v7214, %v422
      %v7596 = vmul.f32 %v7220, %v423
      %v7597 = vmul.f32 %v7226, %v424
      %v7598 = vmul.f32 %v7232, %v425
      %v7599 = vmul.f32 %v7238, %v426
      %v7600 = vmul.f32 %v7244, %v427
      %v7601 = vmul.f32 %v7250, %v428
      %v7602 = vmul.f32 %v7256, %v429
      %v7603 = vmul.f32 %v7262, %v430
      %v7604 = vmul.f32 %v7268, %v431
      %v7605 = vmul.f32 %v7274, %v432
      %v7606 = vmul.f32 %v7280, %v433
      %v7607 = vmul.f32 %v7286, %v434
      %v7608 = vmul.f32 %v7292, %v435
      %v7609 = vmul.f32 %v7298, %v436
      %v7610 = vmul.f32 %v7304, %v437
      %v7611 = vmul.f32 %v7310, %v438
      %v7612 = vmul.f32 %v7316, %v439
      %v7613 = vmul.f32 %v7322, %v440
      %v7614 = vmul.f32 %v7328, %v441
      %v7615 = vmul.f32 %v7334, %v442
      %v7616 = vmul.f32 %v7340, %v443
      %v7617 = vmul.f32 %v7346, %v444
      %v7618 = vmul.f32 %v7352, %v445
      %v7619 = vmul.f32 %v7358, %v446
      %v7620 = vmul.f32 %v7364, %v447
      %v7621 = vmul.f32 %v7370, %v448
      %v7622 = vmul.f32 %v7376, %v449
      %v7623 = vmul.f32 %v7382, %v450
      %v7624 = vmul.f32 %v7388, %v451
      %v7625 = vmul.f32 %v7394, %v452
      %v7626 = vmul.f32 %v7400, %v453
      %v7627 = vmul.f32 %v7406, %v454
      %v7628 = vmul.f32 %v7412, %v455
      %v7629 = vmul.f32 %v7418, %v456
      %v7630 = vmul.f32 %v7424, %v457
      %v7631 = vmul.f32 %v7430, %v458
      %v7632 = vmul.f32 %v7436, %v459
      %v7633 = vmul.f32 %v7442, %v460
      %v7634 = vmul.f32 %v7448, %v461
      %v7635 = vmul.f32 %v7454, %v462
      %v7636 = vmul.f32 %v7460, %v463
      %v7637 = vmul.f32 %v7466, %v464
      %v7638 = vmul.f32 %v7472, %v465
      %v7639 = vmul.f32 %v7478, %v466
      %v7640 = vmul.f32 %v7484, %v467
      %v7641 = vmul.f32 %v7490, %v468
      %v7642 = vmul.f32 %v7496, %v469
      %v7643 = vmul.f32 %v7502, %v470
      %v7644 = vmul.f32 %v7508, %v471
      %v7645 = vmul.f32 %v7514, %v472
      %v7646 = vmul.f32 %v7520, %v473
      %v7647 = vmul.f32 %v7526, %v474
      %v7648 = vmul.f32 %v7532, %v475
      %v7649 = vmul.f32 %v7538, %v476
      %v7650 = vmul.f32 %v7544, %v477
      %v7651 = vmul.f32 %v7550, %v478
      %v7652 = vmul.f32 %v7556, %v479
      %v7653 = vmul.f32 %v7562, %v480
      %v7654 = vmul.f32 %v7568, %v481
      %v7655 = vmul.f32 %v7574, %v482
      %v7656 = vmul.f32 %v7580, %v483
      %v7657 = vmul.f32 %v7586, %v484
      %v7658 = vmul.f32 %v7592, %v485
      %v7659 = vld [vmem:[%s2] sm:$0xff]
      %v7660 = vld [vmem:[%s2 + $0x8] sm:$0xff]
      %v7661 = vld [vmem:[%s2 + $0x10] sm:$0xff]
      %v7662 = vld [vmem:[%s2 + $0x18] sm:$0xff]
      %v7663 = vld [vmem:[%s2 + $0x20] sm:$0xff]
      %v7664 = vld [vmem:[%s2 + $0x28] sm:$0xff]
      %vm7665 = vcmask 392192
      %v7667 = vsel %vm7665, %v7595, 0
      %v7670 = vsel %vm7665, %v7596, 0
      %v7673 = vsel %vm7665, %v7597, 0
      %v7676 = vsel %vm7665, %v7598, 0
      %v7679 = vsel %vm7665, %v7599, 0
      %v7682 = vsel %vm7665, %v7600, 0
      %v7685 = vsel %vm7665, %v7601, 0
      %v7688 = vsel %vm7665, %v7602, 0
      %v7691 = vsel %vm7665, %v7603, 0
      %v7694 = vsel %vm7665, %v7604, 0
      %v7697 = vsel %vm7665, %v7605, 0
      %v7700 = vsel %vm7665, %v7606, 0
      %v7703 = vsel %vm7665, %v7607, 0
      %v7706 = vsel %vm7665, %v7608, 0
      %v7709 = vsel %vm7665, %v7609, 0
      %v7712 = vsel %vm7665, %v7610, 0
      %v7715 = vsel %vm7665, %v7611, 0
      %v7718 = vsel %vm7665, %v7612, 0
      %v7721 = vsel %vm7665, %v7613, 0
      %v7724 = vsel %vm7665, %v7614, 0
      %v7727 = vsel %vm7665, %v7615, 0
      %v7730 = vsel %vm7665, %v7616, 0
      %v7733 = vsel %vm7665, %v7617, 0
      %v7736 = vsel %vm7665, %v7618, 0
      %v7739 = vsel %vm7665, %v7619, 0
      %v7742 = vsel %vm7665, %v7620, 0
      %v7745 = vsel %vm7665, %v7621, 0
      %v7748 = vsel %vm7665, %v7622, 0
      %v7751 = vsel %vm7665, %v7623, 0
      %v7754 = vsel %vm7665, %v7624, 0
      %v7757 = vsel %vm7665, %v7625, 0
      %v7760 = vsel %vm7665, %v7626, 0
      %v7763 = vsel %vm7665, %v7627, 0
      %v7766 = vsel %vm7665, %v7628, 0
      %v7769 = vsel %vm7665, %v7629, 0
      %v7772 = vsel %vm7665, %v7630, 0
      %v7775 = vsel %vm7665, %v7631, 0
      %v7778 = vsel %vm7665, %v7632, 0
      %v7781 = vsel %vm7665, %v7633, 0
      %v7784 = vsel %vm7665, %v7634, 0
      %v7787 = vsel %vm7665, %v7635, 0
      %v7790 = vsel %vm7665, %v7636, 0
      %v7793 = vsel %vm7665, %v7637, 0
      %v7796 = vsel %vm7665, %v7638, 0
      %v7799 = vsel %vm7665, %v7639, 0
      %v7802 = vsel %vm7665, %v7640, 0
      %v7805 = vsel %vm7665, %v7641, 0
      %v7808 = vsel %vm7665, %v7642, 0
      %v7811 = vsel %vm7665, %v7643, 0
      %v7814 = vsel %vm7665, %v7644, 0
      %v7817 = vsel %vm7665, %v7645, 0
      %v7820 = vsel %vm7665, %v7646, 0
      %v7823 = vsel %vm7665, %v7647, 0
      %v7826 = vsel %vm7665, %v7648, 0
      %v7829 = vsel %vm7665, %v7649, 0
      %v7832 = vsel %vm7665, %v7650, 0
      %v7835 = vsel %vm7665, %v7651, 0
      %v7838 = vsel %vm7665, %v7652, 0
      %v7841 = vsel %vm7665, %v7653, 0
      %v7844 = vsel %vm7665, %v7654, 0
      %v7847 = vsel %vm7665, %v7655, 0
      %v7850 = vsel %vm7665, %v7656, 0
      %v7853 = vsel %vm7665, %v7657, 0
      %v7856 = vsel %vm7665, %v7658, 0
      %7858 = vmatprep.subr.mxu0 0.0
      %v7859 = vand.u32 %v7659, 4294901760
      %7860 = vmatpush1.msra.mxu0 %v7859
      %7861 = vmatprep.subr.mxu0 0.0
      %v7862 = vand.u32 %v7660, 4294901760
      %7863 = vmatpush1.msra.mxu0 %v7862
      %7864 = vmatprep.subr.mxu0 0.0
      %v7865 = vand.u32 %v7661, 4294901760
      %7866 = vmatpush1.msra.mxu0 %v7865
      %7867 = vmatprep.subr.mxu0 0.0
      %v7868 = vand.u32 %v7662, 4294901760
      %7869 = vmatpush1.msra.mxu0 %v7868
      %7870 = vmatprep.subr.mxu0 0.0
      %v7871 = vand.u32 %v7663, 4294901760
      %7872 = vmatpush1.msra.mxu0 %v7871
      %7873 = vmatprep.subr.mxu0 0.0
      %v7874 = vand.u32 %v7664, 4294901760
      %7875 = vmatpush1.msra.mxu0 %v7874
      %7876 = vmatprep.subr.mxu0 0.0
      %7877 = vmatpush1.msra.mxu0 0.0
      %7878 = vmatprep.subr.mxu0 0.0
      %7879 = vmatpush1.msra.mxu0 0.0
      %7880 = vmatprep.subr.mxu0 0.0
      %7881 = vmatpush1.msra.mxu0 0.0
      %7882 = vmatprep.subr.mxu0 0.0
      %7883 = vmatpush1.msra.mxu0 0.0
      %7884 = vmatprep.subr.mxu0 0.0
      %7885 = vmatpush1.msra.mxu0 0.0
      %7886 = vmatprep.subr.mxu0 0.0
      %7887 = vmatpush1.msra.mxu0 0.0
      %7888 = vmatprep.subr.mxu0 0.0
      %7889 = vmatpush1.msra.mxu0 0.0
      %7890 = vmatprep.subr.mxu0 0.0
      %7891 = vmatpush1.msra.mxu0 0.0
      %7892 = vmatprep.subr.mxu0 0.0
      %7893 = vmatpush1.msra.mxu0 0.0
      %7894 = vmatprep.subr.mxu0 0.0
      %7895 = vmatpush1.msra.mxu0 0.0
      %7896 = vmatprep.subr.mxu0 0.0
      %7897 = vmatpush1.msra.mxu0 0.0
      %7898 = vmatprep.subr.mxu0 0.0
      %7899 = vmatpush1.msra.mxu0 0.0
      %7900 = vmatprep.subr.mxu0 0.0
      %7901 = vmatpush1.msra.mxu0 0.0
      %7902 = vmatprep.subr.mxu0 0.0
      %7903 = vmatpush1.msra.mxu0 0.0
      %7904 = vmatprep.subr.mxu0 0.0
      %7905 = vmatpush1.msra.mxu0 0.0
      %7906 = vmatprep.subr.mxu0 0.0
      %7907 = vmatpush1.msra.mxu0 0.0
      %7908 = vmatprep.subr.mxu0 0.0
      %7909 = vmatpush1.msra.mxu0 0.0
      %7910 = vmatprep.subr.mxu0 0.0
      %7911 = vmatpush1.msra.mxu0 0.0
      %7912 = vmatprep.subr.mxu0 0.0
      %7913 = vmatpush1.msra.mxu0 0.0
      %7914 = vmatprep.subr.mxu0 0.0
      %7915 = vmatpush1.msra.mxu0 0.0
      %7916 = vmatprep.subr.mxu0 0.0
      %7917 = vmatpush1.msra.mxu0 0.0
      %7918 = vmatprep.subr.mxu0 0.0
      %7919 = vmatpush1.msra.mxu0 0.0
      %7920 = vmatprep.subr.mxu0 0.0
      %7921 = vmatpush1.msra.mxu0 0.0
      %7922 = vmatprep.subr.mxu0 0.0
      %7923 = vmatpush1.msra.mxu0 0.0
      %7924 = vmatprep.subr.mxu0 0.0
      %7925 = vmatpush1.msra.mxu0 0.0
      %7926 = vmatprep.subr.mxu0 0.0
      %7927 = vmatpush1.msra.mxu0 0.0
      %7928 = vmatprep.mubr.f32.mxu0 0.0
      %v7929 = vand.u32 %v7667, 4294901760
      %v7930 = vsub.f32 %v7667, %v7929
      %v7931 = vand.u32 %v7930, 4294901760
      %v7932 = vsub.f32 %v7930, %v7931
      %v7933 = vand.u32 %v7932, 4294901760
      %7934 = vmatmul.mubr.f32.gmra.mrb[0].mxu0 %v7933
      %v7935 = vpop.f32.mrb[0].mxu0
      %v7936 = vadd.f32 0.0, %v7935
      %v7937 = vpop.f32.mrb[0].mxu0
      %7938 = vmatprep.mubr.f32.mxu0 0.0
      %v7939 = vand.u32 %v7670, 4294901760
      %v7940 = vsub.f32 %v7670, %v7939
      %v7941 = vand.u32 %v7940, 4294901760
      %v7942 = vsub.f32 %v7940, %v7941
      %v7943 = vand.u32 %v7942, 4294901760
      %7944 = vmatmul.mubr.f32.gmra.mrb[0].mxu0 %v7943
      %v7945 = vpop.f32.mrb[0].mxu0
      %v7946 = vadd.f32 0.0, %v7945
      %v7947 = vpop.f32.mrb[0].mxu0
      %7948 = vmatprep.mubr.f32.mxu0 0.0
      %v7949 = vand.u32 %v7673, 4294901760
      %v7950 = vsub.f32 %v7673, %v7949
      %v7951 = vand.u32 %v7950, 4294901760
      %v7952 = vsub.f32 %v7950, %v7951
      %v7953 = vand.u32 %v7952, 4294901760
      %7954 = vmatmul.mubr.f32.gmra.mrb[0].mxu0 %v7953
      %v7955 = vpop.f32.mrb[0].mxu0
      %v7956 = vadd.f32 0.0, %v7955
      %v7957 = vpop.f32.mrb[0].mxu0
      %7958 = vmatprep.mubr.f32.mxu0 0.0
      %v7959 = vand.u32 %v7676, 4294901760
      %v7960 = vsub.f32 %v7676, %v7959
      %v7961 = vand.u32 %v7960, 4294901760
      %v7962 = vsub.f32 %v7960, %v7961
      %v7963 = vand.u32 %v7962, 4294901760
      %7964 = vmatmul.mubr.f32.gmra.mrb[0].mxu0 %v7963
      %v7965 = vpop.f32.mrb[0].mxu0
      %v7966 = vadd.f32 0.0, %v7965
      %v7967 = vpop.f32.mrb[0].mxu0
      %7968 = vmatprep.mubr.f32.mxu0 0.0
      %v7969 = vand.u32 %v7679, 4294901760
      %v7970 = vsub.f32 %v7679, %v7969
      %v7971 = vand.u32 %v7970, 4294901760
      %v7972 = vsub.f32 %v7970, %v7971
      %v7973 = vand.u32 %v7972, 4294901760
      %7974 = vmatmul.mubr.f32.gmra.mrb[0].mxu0 %v7973
      %v7975 = vpop.f32.mrb[0].mxu0
      %v7976 = vadd.f32 0.0, %v7975
      %v7977 = vpop.f32.mrb[0].mxu0
      %7978 = vmatprep.mubr.f32.mxu0 0.0
      %v7979 = vand.u32 %v7682, 4294901760
      %v7980 = vsub.f32 %v7682, %v7979
      %v7981 = vand.u32 %v7980, 4294901760
      %v7982 = vsub.f32 %v7980, %v7981
      %v7983 = vand.u32 %v7982, 4294901760
      %7984 = vmatmul.mubr.f32.gmra.mrb[0].mxu0 %v7983
      %v7985 = vpop.f32.mrb[0].mxu0
      %v7986 = vadd.f32 0.0, %v7985
      %v7987 = vpop.f32.mrb[0].mxu0
      %7988 = vmatprep.mubr.f32.mxu0 0.0
      %v7989 = vand.u32 %v7685, 4294901760
      %v7990 = vsub.f32 %v7685, %v7989
      %v7991 = vand.u32 %v7990, 4294901760
      %v7992 = vsub.f32 %v7990, %v7991
      %v7993 = vand.u32 %v7992, 4294901760
      %7994 = vmatmul.mubr.f32.gmra.mrb[0].mxu0 %v7993
      %v7995 = vpop.f32.mrb[0].mxu0
      %v7996 = vadd.f32 0.0, %v7995
      %v7997 = vpop.f32.mrb[0].mxu0
      %7998 = vmatprep.mubr.f32.mxu0 0.0
      %v7999 = vand.u32 %v7688, 4294901760
      %v8000 = vsub.f32 %v7688, %v7999
      %v8001 = vand.u32 %v8000, 4294901760
      %v8002 = vsub.f32 %v8000, %v8001
      %v8003 = vand.u32 %v8002, 4294901760
      %8004 = vmatmul.mubr.f32.gmra.mrb[0].mxu0 %v8003
      %v8005 = vpop.f32.mrb[0].mxu0
      %v8006 = vadd.f32 0.0, %v8005
      %v8007 = vpop.f32.mrb[0].mxu0
      %8008 = vmatprep.mubr.f32.mxu0 0.0
      %v8009 = vand.u32 %v7691, 4294901760
      %v8010 = vsub.f32 %v7691, %v8009
      %v8011 = vand.u32 %v8010, 4294901760
      %v8012 = vsub.f32 %v8010, %v8011
      %v8013 = vand.u32 %v8012, 4294901760
      %8014 = vmatmul.mubr.f32.gmra.mrb[0].mxu0 %v8013
      %v8015 = vpop.f32.mrb[0].mxu0
      %v8016 = vadd.f32 0.0, %v8015
      %v8017 = vpop.f32.mrb[0].mxu0
      %8018 = vmatprep.mubr.f32.mxu0 0.0
      %v8019 = vand.u32 %v7694, 4294901760
      %v8020 = vsub.f32 %v7694, %v8019
      %v8021 = vand.u32 %v8020, 4294901760
      %v8022 = vsub.f32 %v8020, %v8021
      %v8023 = vand.u32 %v8022, 4294901760
      %8024 = vmatmul.mubr.f32.gmra.mrb[0].mxu0 %v8023
      %v8025 = vpop.f32.mrb[0].mxu0
      %v8026 = vadd.f32 0.0, %v8025
      %v8027 = vpop.f32.mrb[0].mxu0
      %8028 = vmatprep.mubr.f32.mxu0 0.0
      %v8029 = vand.u32 %v7697, 4294901760
      %v8030 = vsub.f32 %v7697, %v8029
      %v8031 = vand.u32 %v8030, 4294901760
      %v8032 = vsub.f32 %v8030, %v8031
      %v8033 = vand.u32 %v8032, 4294901760
      %8034 = vmatmul.mubr.f32.gmra.mrb[0].mxu0 %v8033
      %v8035 = vpop.f32.mrb[0].mxu0
      %v8036 = vadd.f32 0.0, %v8035
      %v8037 = vpop.f32.mrb[0].mxu0
      %8038 = vmatprep.mubr.f32.mxu0 0.0
      %v8039 = vand.u32 %v7700, 4294901760
      %v8040 = vsub.f32 %v7700, %v8039
      %v8041 = vand.u32 %v8040, 4294901760
      %v8042 = vsub.f32 %v8040, %v8041
      %v8043 = vand.u32 %v8042, 4294901760
      %8044 = vmatmul.mubr.f32.gmra.mrb[0].mxu0 %v8043
      %v8045 = vpop.f32.mrb[0].mxu0
      %v8046 = vadd.f32 0.0, %v8045
      %v8047 = vpop.f32.mrb[0].mxu0
      %8048 = vmatprep.mubr.f32.mxu0 0.0
      %v8049 = vand.u32 %v7703, 4294901760
      %v8050 = vsub.f32 %v7703, %v8049
      %v8051 = vand.u32 %v8050, 4294901760
      %v8052 = vsub.f32 %v8050, %v8051
      %v8053 = vand.u32 %v8052, 4294901760
      %8054 = vmatmul.mubr.f32.gmra.mrb[0].mxu0 %v8053
      %v8055 = vpop.f32.mrb[0].mxu0
      %v8056 = vadd.f32 0.0, %v8055
      %v8057 = vpop.f32.mrb[0].mxu0
      %8058 = vmatprep.mubr.f32.mxu0 0.0
      %v8059 = vand.u32 %v7706, 4294901760
      %v8060 = vsub.f32 %v7706, %v8059
      %v8061 = vand.u32 %v8060, 4294901760
      %v8062 = vsub.f32 %v8060, %v8061
      %v8063 = vand.u32 %v8062, 4294901760
      %8064 = vmatmul.mubr.f32.gmra.mrb[0].mxu0 %v8063
      %v8065 = vpop.f32.mrb[0].mxu0
      %v8066 = vadd.f32 0.0, %v8065
      %v8067 = vpop.f32.mrb[0].mxu0
      %8068 = vmatprep.mubr.f32.mxu0 0.0
      %v8069 = vand.u32 %v7709, 4294901760
      %v8070 = vsub.f32 %v7709, %v8069
      %v8071 = vand.u32 %v8070, 4294901760
      %v8072 = vsub.f32 %v8070, %v8071
      %v8073 = vand.u32 %v8072, 4294901760
      %8074 = vmatmul.mubr.f32.gmra.mrb[0].mxu0 %v8073
      %v8075 = vpop.f32.mrb[0].mxu0
      %v8076 = vadd.f32 0.0, %v8075
      %v8077 = vpop.f32.mrb[0].mxu0
      %8078 = vmatprep.mubr.f32.mxu0 0.0
      %v8079 = vand.u32 %v7712, 4294901760
      %v8080 = vsub.f32 %v7712, %v8079
      %v8081 = vand.u32 %v8080, 4294901760
      %v8082 = vsub.f32 %v8080, %v8081
      %v8083 = vand.u32 %v8082, 4294901760
      %8084 = vmatmul.mubr.f32.gmra.mrb[0].mxu0 %v8083
      %v8085 = vpop.f32.mrb[0].mxu0
      %v8086 = vadd.f32 0.0, %v8085
      %v8087 = vpop.f32.mrb[0].mxu0
      %8088 = vmatprep.mubr.f32.mxu0 0.0
      %v8089 = vand.u32 %v7715, 4294901760
      %v8090 = vsub.f32 %v7715, %v8089
      %v8091 = vand.u32 %v8090, 4294901760
      %v8092 = vsub.f32 %v8090, %v8091
      %v8093 = vand.u32 %v8092, 4294901760
      %8094 = vmatmul.mubr.f32.gmra.mrb[0].mxu0 %v8093
      %v8095 = vpop.f32.mrb[0].mxu0
      %v8096 = vadd.f32 0.0, %v8095
      %v8097 = vpop.f32.mrb[0].mxu0
      %8098 = vmatprep.mubr.f32.mxu0 0.0
      %v8099 = vand.u32 %v7718, 4294901760
      %v8100 = vsub.f32 %v7718, %v8099
      %v8101 = vand.u32 %v8100, 4294901760
      %v8102 = vsub.f32 %v8100, %v8101
      %v8103 = vand.u32 %v8102, 4294901760
      %8104 = vmatmul.mubr.f32.gmra.mrb[0].mxu0 %v8103
      %v8105 = vpop.f32.mrb[0].mxu0
      %v8106 = vadd.f32 0.0, %v8105
      %v8107 = vpop.f32.mrb[0].mxu0
      %8108 = vmatprep.mubr.f32.mxu0 0.0
      %v8109 = vand.u32 %v7721, 4294901760
      %v8110 = vsub.f32 %v7721, %v8109
      %v8111 = vand.u32 %v8110, 4294901760
      %v8112 = vsub.f32 %v8110, %v8111
      %v8113 = vand.u32 %v8112, 4294901760
      %8114 = vmatmul.mubr.f32.gmra.mrb[0].mxu0 %v8113
      %v8115 = vpop.f32.mrb[0].mxu0
      %v8116 = vadd.f32 0.0, %v8115
      %v8117 = vpop.f32.mrb[0].mxu0
      %8118 = vmatprep.mubr.f32.mxu0 0.0
      %v8119 = vand.u32 %v7724, 4294901760
      %v8120 = vsub.f32 %v7724, %v8119
      %v8121 = vand.u32 %v8120, 4294901760
      %v8122 = vsub.f32 %v8120, %v8121
      %v8123 = vand.u32 %v8122, 4294901760
      %8124 = vmatmul.mubr.f32.gmra.mrb[0].mxu0 %v8123
      %v8125 = vpop.f32.mrb[0].mxu0
      %v8126 = vadd.f32 0.0, %v8125
      %v8127 = vpop.f32.mrb[0].mxu0
      %8128 = vmatprep.mubr.f32.mxu0 0.0
      %v8129 = vand.u32 %v7727, 4294901760
      %v8130 = vsub.f32 %v7727, %v8129
      %v8131 = vand.u32 %v8130, 4294901760
      %v8132 = vsub.f32 %v8130, %v8131
      %v8133 = vand.u32 %v8132, 4294901760
      %8134 = vmatmul.mubr.f32.gmra.mrb[0].mxu0 %v8133
      %v8135 = vpop.f32.mrb[0].mxu0
      %v8136 = vadd.f32 0.0, %v8135
      %v8137 = vpop.f32.mrb[0].mxu0
      %8138 = vmatprep.mubr.f32.mxu0 0.0
      %v8139 = vand.u32 %v7730, 4294901760
      %v8140 = vsub.f32 %v7730, %v8139
      %v8141 = vand.u32 %v8140, 4294901760
      %v8142 = vsub.f32 %v8140, %v8141
      %v8143 = vand.u32 %v8142, 4294901760
      %8144 = vmatmul.mubr.f32.gmra.mrb[0].mxu0 %v8143
      %v8145 = vpop.f32.mrb[0].mxu0
      %v8146 = vadd.f32 0.0, %v8145
      %v8147 = vpop.f32.mrb[0].mxu0
      %8148 = vmatprep.mubr.f32.mxu0 0.0
      %v8149 = vand.u32 %v7733, 4294901760
      %v8150 = vsub.f32 %v7733, %v8149
      %v8151 = vand.u32 %v8150, 4294901760
      %v8152 = vsub.f32 %v8150, %v8151
      %v8153 = vand.u32 %v8152, 4294901760
      %8154 = vmatmul.mubr.f32.gmra.mrb[0].mxu0 %v8153
      %v8155 = vpop.f32.mrb[0].mxu0
      %v8156 = vadd.f32 0.0, %v8155
      %v8157 = vpop.f32.mrb[0].mxu0
      %8158 = vmatprep.mubr.f32.mxu0 0.0
      %v8159 = vand.u32 %v7736, 4294901760
      %v8160 = vsub.f32 %v7736, %v8159
      %v8161 = vand.u32 %v8160, 4294901760
      %v8162 = vsub.f32 %v8160, %v8161
      %v8163 = vand.u32 %v8162, 4294901760
      %8164 = vmatmul.mubr.f32.gmra.mrb[0].mxu0 %v8163
      %v8165 = vpop.f32.mrb[0].mxu0
      %v8166 = vadd.f32 0.0, %v8165
      %v8167 = vpop.f32.mrb[0].mxu0
      %8168 = vmatprep.mubr.f32.mxu0 0.0
      %v8169 = vand.u32 %v7739, 4294901760
      %v8170 = vsub.f32 %v7739, %v8169
      %v8171 = vand.u32 %v8170, 4294901760
      %v8172 = vsub.f32 %v8170, %v8171
      %v8173 = vand.u32 %v8172, 4294901760
      %8174 = vmatmul.mubr.f32.gmra.mrb[0].mxu0 %v8173
      %v8175 = vpop.f32.mrb[0].mxu0
      %v8176 = vadd.f32 0.0, %v8175
      %v8177 = vpop.f32.mrb[0].mxu0
      %8178 = vmatprep.mubr.f32.mxu0 0.0
      %v8179 = vand.u32 %v7742, 4294901760
      %v8180 = vsub.f32 %v7742, %v8179
      %v8181 = vand.u32 %v8180, 4294901760
      %v8182 = vsub.f32 %v8180, %v8181
      %v8183 = vand.u32 %v8182, 4294901760
      %8184 = vmatmul.mubr.f32.gmra.mrb[0].mxu0 %v8183
      %v8185 = vpop.f32.mrb[0].mxu0
      %v8186 = vadd.f32 0.0, %v8185
      %v8187 = vpop.f32.mrb[0].mxu0
      %8188 = vmatprep.mubr.f32.mxu0 0.0
      %v8189 = vand.u32 %v7745, 4294901760
      %v8190 = vsub.f32 %v7745, %v8189
      %v8191 = vand.u32 %v8190, 4294901760
      %v8192 = vsub.f32 %v8190, %v8191
      %v8193 = vand.u32 %v8192, 4294901760
      %8194 = vmatmul.mubr.f32.gmra.mrb[0].mxu0 %v8193
      %v8195 = vpop.f32.mrb[0].mxu0
      %v8196 = vadd.f32 0.0, %v8195
      %v8197 = vpop.f32.mrb[0].mxu0
      %8198 = vmatprep.mubr.f32.mxu0 0.0
      %v8199 = vand.u32 %v7748, 4294901760
      %v8200 = vsub.f32 %v7748, %v8199
      %v8201 = vand.u32 %v8200, 4294901760
      %v8202 = vsub.f32 %v8200, %v8201
      %v8203 = vand.u32 %v8202, 4294901760
      %8204 = vmatmul.mubr.f32.gmra.mrb[0].mxu0 %v8203
      %v8205 = vpop.f32.mrb[0].mxu0
      %v8206 = vadd.f32 0.0, %v8205
      %v8207 = vpop.f32.mrb[0].mxu0
      %8208 = vmatprep.mubr.f32.mxu0 0.0
      %v8209 = vand.u32 %v7751, 4294901760
      %v8210 = vsub.f32 %v7751, %v8209
      %v8211 = vand.u32 %v8210, 4294901760
      %v8212 = vsub.f32 %v8210, %v8211
      %v8213 = vand.u32 %v8212, 4294901760
      %8214 = vmatmul.mubr.f32.gmra.mrb[0].mxu0 %v8213
      %v8215 = vpop.f32.mrb[0].mxu0
      %v8216 = vadd.f32 0.0, %v8215
      %v8217 = vpop.f32.mrb[0].mxu0
      %8218 = vmatprep.mubr.f32.mxu0 0.0
      %v8219 = vand.u32 %v7754, 4294901760
      %v8220 = vsub.f32 %v7754, %v8219
      %v8221 = vand.u32 %v8220, 4294901760
      %v8222 = vsub.f32 %v8220, %v8221
      %v8223 = vand.u32 %v8222, 4294901760
      %8224 = vmatmul.mubr.f32.gmra.mrb[0].mxu0 %v8223
      %v8225 = vpop.f32.mrb[0].mxu0
      %v8226 = vadd.f32 0.0, %v8225
      %v8227 = vpop.f32.mrb[0].mxu0
      %8228 = vmatprep.mubr.f32.mxu0 0.0
      %v8229 = vand.u32 %v7757, 4294901760
      %v8230 = vsub.f32 %v7757, %v8229
      %v8231 = vand.u32 %v8230, 4294901760
      %v8232 = vsub.f32 %v8230, %v8231
      %v8233 = vand.u32 %v8232, 4294901760
      %8234 = vmatmul.mubr.f32.gmra.mrb[0].mxu0 %v8233
      %v8235 = vpop.f32.mrb[0].mxu0
      %v8236 = vadd.f32 0.0, %v8235
      %v8237 = vpop.f32.mrb[0].mxu0
      %8238 = vmatprep.mubr.f32.mxu0 0.0
      %v8239 = vand.u32 %v7760, 4294901760
      %v8240 = vsub.f32 %v7760, %v8239
      %v8241 = vand.u32 %v8240, 4294901760
      %v8242 = vsub.f32 %v8240, %v8241
      %v8243 = vand.u32 %v8242, 4294901760
      %8244 = vmatmul.mubr.f32.gmra.mrb[0].mxu0 %v8243
      %v8245 = vpop.f32.mrb[0].mxu0
      %v8246 = vadd.f32 0.0, %v8245
      %v8247 = vpop.f32.mrb[0].mxu0
      %8248 = vmatprep.mubr.f32.mxu0 0.0
      %v8249 = vand.u32 %v7763, 4294901760
      %v8250 = vsub.f32 %v7763, %v8249
      %v8251 = vand.u32 %v8250, 4294901760
      %v8252 = vsub.f32 %v8250, %v8251
      %v8253 = vand.u32 %v8252, 4294901760
      %8254 = vmatmul.mubr.f32.gmra.mrb[0].mxu0 %v8253
      %v8255 = vpop.f32.mrb[0].mxu0
      %v8256 = vadd.f32 0.0, %v8255
      %v8257 = vpop.f32.mrb[0].mxu0
      %8258 = vmatprep.mubr.f32.mxu0 0.0
      %v8259 = vand.u32 %v7766, 4294901760
      %v8260 = vsub.f32 %v7766, %v8259
      %v8261 = vand.u32 %v8260, 4294901760
      %v8262 = vsub.f32 %v8260, %v8261
      %v8263 = vand.u32 %v8262, 4294901760
      %8264 = vmatmul.mubr.f32.gmra.mrb[0].mxu0 %v8263
      %v8265 = vpop.f32.mrb[0].mxu0
      %v8266 = vadd.f32 0.0, %v8265
      %v8267 = vpop.f32.mrb[0].mxu0
      %8268 = vmatprep.mubr.f32.mxu0 0.0
      %v8269 = vand.u32 %v7769, 4294901760
      %v8270 = vsub.f32 %v7769, %v8269
      %v8271 = vand.u32 %v8270, 4294901760
      %v8272 = vsub.f32 %v8270, %v8271
      %v8273 = vand.u32 %v8272, 4294901760
      %8274 = vmatmul.mubr.f32.gmra.mrb[0].mxu0 %v8273
      %v8275 = vpop.f32.mrb[0].mxu0
      %v8276 = vadd.f32 0.0, %v8275
      %v8277 = vpop.f32.mrb[0].mxu0
      %8278 = vmatprep.mubr.f32.mxu0 0.0
      %v8279 = vand.u32 %v7772, 4294901760
      %v8280 = vsub.f32 %v7772, %v8279
      %v8281 = vand.u32 %v8280, 4294901760
      %v8282 = vsub.f32 %v8280, %v8281
      %v8283 = vand.u32 %v8282, 4294901760
      %8284 = vmatmul.mubr.f32.gmra.mrb[0].mxu0 %v8283
      %v8285 = vpop.f32.mrb[0].mxu0
      %v8286 = vadd.f32 0.0, %v8285
      %v8287 = vpop.f32.mrb[0].mxu0
      %8288 = vmatprep.mubr.f32.mxu0 0.0
      %v8289 = vand.u32 %v7775, 4294901760
      %v8290 = vsub.f32 %v7775, %v8289
      %v8291 = vand.u32 %v8290, 4294901760
      %v8292 = vsub.f32 %v8290, %v8291
      %v8293 = vand.u32 %v8292, 4294901760
      %8294 = vmatmul.mubr.f32.gmra.mrb[0].mxu0 %v8293
      %v8295 = vpop.f32.mrb[0].mxu0
      %v8296 = vadd.f32 0.0, %v8295
      %v8297 = vpop.f32.mrb[0].mxu0
      %8298 = vmatprep.mubr.f32.mxu0 0.0
      %v8299 = vand.u32 %v7778, 4294901760
      %v8300 = vsub.f32 %v7778, %v8299
      %v8301 = vand.u32 %v8300, 4294901760
      %v8302 = vsub.f32 %v8300, %v8301
      %v8303 = vand.u32 %v8302, 4294901760
      %8304 = vmatmul.mubr.f32.gmra.mrb[0].mxu0 %v8303
      %v8305 = vpop.f32.mrb[0].mxu0
      %v8306 = vadd.f32 0.0, %v8305
      %v8307 = vpop.f32.mrb[0].mxu0
      %8308 = vmatprep.mubr.f32.mxu0 0.0
      %v8309 = vand.u32 %v7781, 4294901760
      %v8310 = vsub.f32 %v7781, %v8309
      %v8311 = vand.u32 %v8310, 4294901760
      %v8312 = vsub.f32 %v8310, %v8311
      %v8313 = vand.u32 %v8312, 4294901760
      %8314 = vmatmul.mubr.f32.gmra.mrb[0].mxu0 %v8313
      %v8315 = vpop.f32.mrb[0].mxu0
      %v8316 = vadd.f32 0.0, %v8315
      %v8317 = vpop.f32.mrb[0].mxu0
      %8318 = vmatprep.mubr.f32.mxu0 0.0
      %v8319 = vand.u32 %v7784, 4294901760
      %v8320 = vsub.f32 %v7784, %v8319
      %v8321 = vand.u32 %v8320, 4294901760
      %v8322 = vsub.f32 %v8320, %v8321
      %v8323 = vand.u32 %v8322, 4294901760
      %8324 = vmatmul.mubr.f32.gmra.mrb[0].mxu0 %v8323
      %v8325 = vpop.f32.mrb[0].mxu0
      %v8326 = vadd.f32 0.0, %v8325
      %v8327 = vpop.f32.mrb[0].mxu0
      %8328 = vmatprep.mubr.f32.mxu0 0.0
      %v8329 = vand.u32 %v7787, 4294901760
      %v8330 = vsub.f32 %v7787, %v8329
      %v8331 = vand.u32 %v8330, 4294901760
      %v8332 = vsub.f32 %v8330, %v8331
      %v8333 = vand.u32 %v8332, 4294901760
      %8334 = vmatmul.mubr.f32.gmra.mrb[0].mxu0 %v8333
      %v8335 = vpop.f32.mrb[0].mxu0
      %v8336 = vadd.f32 0.0, %v8335
      %v8337 = vpop.f32.mrb[0].mxu0
      %8338 = vmatprep.mubr.f32.mxu0 0.0
      %v8339 = vand.u32 %v7790, 4294901760
      %v8340 = vsub.f32 %v7790, %v8339
      %v8341 = vand.u32 %v8340, 4294901760
      %v8342 = vsub.f32 %v8340, %v8341
      %v8343 = vand.u32 %v8342, 4294901760
      %8344 = vmatmul.mubr.f32.gmra.mrb[0].mxu0 %v8343
      %v8345 = vpop.f32.mrb[0].mxu0
      %v8346 = vadd.f32 0.0, %v8345
      %v8347 = vpop.f32.mrb[0].mxu0
      %8348 = vmatprep.mubr.f32.mxu0 0.0
      %v8349 = vand.u32 %v7793, 4294901760
      %v8350 = vsub.f32 %v7793, %v8349
      %v8351 = vand.u32 %v8350, 4294901760
      %v8352 = vsub.f32 %v8350, %v8351
      %v8353 = vand.u32 %v8352, 4294901760
      %8354 = vmatmul.mubr.f32.gmra.mrb[0].mxu0 %v8353
      %v8355 = vpop.f32.mrb[0].mxu0
      %v8356 = vadd.f32 0.0, %v8355
      %v8357 = vpop.f32.mrb[0].mxu0
      %8358 = vmatprep.mubr.f32.mxu0 0.0
      %v8359 = vand.u32 %v7796, 4294901760
      %v8360 = vsub.f32 %v7796, %v8359
      %v8361 = vand.u32 %v8360, 4294901760
      %v8362 = vsub.f32 %v8360, %v8361
      %v8363 = vand.u32 %v8362, 4294901760
      %8364 = vmatmul.mubr.f32.gmra.mrb[0].mxu0 %v8363
      %v8365 = vpop.f32.mrb[0].mxu0
      %v8366 = vadd.f32 0.0, %v8365
      %v8367 = vpop.f32.mrb[0].mxu0
      %8368 = vmatprep.mubr.f32.mxu0 0.0
      %v8369 = vand.u32 %v7799, 4294901760
      %v8370 = vsub.f32 %v7799, %v8369
      %v8371 = vand.u32 %v8370, 4294901760
      %v8372 = vsub.f32 %v8370, %v8371
      %v8373 = vand.u32 %v8372, 4294901760
      %8374 = vmatmul.mubr.f32.gmra.mrb[0].mxu0 %v8373
      %v8375 = vpop.f32.mrb[0].mxu0
      %v8376 = vadd.f32 0.0, %v8375
      %v8377 = vpop.f32.mrb[0].mxu0
      %8378 = vmatprep.mubr.f32.mxu0 0.0
      %v8379 = vand.u32 %v7802, 4294901760
      %v8380 = vsub.f32 %v7802, %v8379
      %v8381 = vand.u32 %v8380, 4294901760
      %v8382 = vsub.f32 %v8380, %v8381
      %v8383 = vand.u32 %v8382, 4294901760
      %8384 = vmatmul.mubr.f32.gmra.mrb[0].mxu0 %v8383
      %v8385 = vpop.f32.mrb[0].mxu0
      %v8386 = vadd.f32 0.0, %v8385
      %v8387 = vpop.f32.mrb[0].mxu0
      %8388 = vmatprep.mubr.f32.mxu0 0.0
      %v8389 = vand.u32 %v7805, 4294901760
      %v8390 = vsub.f32 %v7805, %v8389
      %v8391 = vand.u32 %v8390, 4294901760
      %v8392 = vsub.f32 %v8390, %v8391
      %v8393 = vand.u32 %v8392, 4294901760
      %8394 = vmatmul.mubr.f32.gmra.mrb[0].mxu0 %v8393
      %v8395 = vpop.f32.mrb[0].mxu0
      %v8396 = vadd.f32 0.0, %v8395
      %v8397 = vpop.f32.mrb[0].mxu0
      %8398 = vmatprep.mubr.f32.mxu0 0.0
      %v8399 = vand.u32 %v7808, 4294901760
      %v8400 = vsub.f32 %v7808, %v8399
      %v8401 = vand.u32 %v8400, 4294901760
      %v8402 = vsub.f32 %v8400, %v8401
      %v8403 = vand.u32 %v8402, 4294901760
      %8404 = vmatmul.mubr.f32.gmra.mrb[0].mxu0 %v8403
      %v8405 = vpop.f32.mrb[0].mxu0
      %v8406 = vadd.f32 0.0, %v8405
      %v8407 = vpop.f32.mrb[0].mxu0
      %8408 = vmatprep.mubr.f32.mxu0 0.0
      %v8409 = vand.u32 %v7811, 4294901760
      %v8410 = vsub.f32 %v7811, %v8409
      %v8411 = vand.u32 %v8410, 4294901760
      %v8412 = vsub.f32 %v8410, %v8411
      %v8413 = vand.u32 %v8412, 4294901760
      %8414 = vmatmul.mubr.f32.gmra.mrb[0].mxu0 %v8413
      %v8415 = vpop.f32.mrb[0].mxu0
      %v8416 = vadd.f32 0.0, %v8415
      %v8417 = vpop.f32.mrb[0].mxu0
      %8418 = vmatprep.mubr.f32.mxu0 0.0
      %v8419 = vand.u32 %v7814, 4294901760
      %v8420 = vsub.f32 %v7814, %v8419
      %v8421 = vand.u32 %v8420, 4294901760
      %v8422 = vsub.f32 %v8420, %v8421
      %v8423 = vand.u32 %v8422, 4294901760
      %8424 = vmatmul.mubr.f32.gmra.mrb[0].mxu0 %v8423
      %v8425 = vpop.f32.mrb[0].mxu0
      %v8426 = vadd.f32 0.0, %v8425
      %v8427 = vpop.f32.mrb[0].mxu0
      %8428 = vmatprep.mubr.f32.mxu0 0.0
      %v8429 = vand.u32 %v7817, 4294901760
      %v8430 = vsub.f32 %v7817, %v8429
      %v8431 = vand.u32 %v8430, 4294901760
      %v8432 = vsub.f32 %v8430, %v8431
      %v8433 = vand.u32 %v8432, 4294901760
      %8434 = vmatmul.mubr.f32.gmra.mrb[0].mxu0 %v8433
      %v8435 = vpop.f32.mrb[0].mxu0
      %v8436 = vadd.f32 0.0, %v8435
      %v8437 = vpop.f32.mrb[0].mxu0
      %8438 = vmatprep.mubr.f32.mxu0 0.0
      %v8439 = vand.u32 %v7820, 4294901760
      %v8440 = vsub.f32 %v7820, %v8439
      %v8441 = vand.u32 %v8440, 4294901760
      %v8442 = vsub.f32 %v8440, %v8441
      %v8443 = vand.u32 %v8442, 4294901760
      %8444 = vmatmul.mubr.f32.gmra.mrb[0].mxu0 %v8443
      %v8445 = vpop.f32.mrb[0].mxu0
      %v8446 = vadd.f32 0.0, %v8445
      %v8447 = vpop.f32.mrb[0].mxu0
      %8448 = vmatprep.mubr.f32.mxu0 0.0
      %v8449 = vand.u32 %v7823, 4294901760
      %v8450 = vsub.f32 %v7823, %v8449
      %v8451 = vand.u32 %v8450, 4294901760
      %v8452 = vsub.f32 %v8450, %v8451
      %v8453 = vand.u32 %v8452, 4294901760
      %8454 = vmatmul.mubr.f32.gmra.mrb[0].mxu0 %v8453
      %v8455 = vpop.f32.mrb[0].mxu0
      %v8456 = vadd.f32 0.0, %v8455
      %v8457 = vpop.f32.mrb[0].mxu0
      %8458 = vmatprep.mubr.f32.mxu0 0.0
      %v8459 = vand.u32 %v7826, 4294901760
      %v8460 = vsub.f32 %v7826, %v8459
      %v8461 = vand.u32 %v8460, 4294901760
      %v8462 = vsub.f32 %v8460, %v8461
      %v8463 = vand.u32 %v8462, 4294901760
      %8464 = vmatmul.mubr.f32.gmra.mrb[0].mxu0 %v8463
      %v8465 = vpop.f32.mrb[0].mxu0
      %v8466 = vadd.f32 0.0, %v8465
      %v8467 = vpop.f32.mrb[0].mxu0
      %8468 = vmatprep.mubr.f32.mxu0 0.0
      %v8469 = vand.u32 %v7829, 4294901760
      %v8470 = vsub.f32 %v7829, %v8469
      %v8471 = vand.u32 %v8470, 4294901760
      %v8472 = vsub.f32 %v8470, %v8471
      %v8473 = vand.u32 %v8472, 4294901760
      %8474 = vmatmul.mubr.f32.gmra.mrb[0].mxu0 %v8473
      %v8475 = vpop.f32.mrb[0].mxu0
      %v8476 = vadd.f32 0.0, %v8475
      %v8477 = vpop.f32.mrb[0].mxu0
      %8478 = vmatprep.mubr.f32.mxu0 0.0
      %v8479 = vand.u32 %v7832, 4294901760
      %v8480 = vsub.f32 %v7832, %v8479
      %v8481 = vand.u32 %v8480, 4294901760
      %v8482 = vsub.f32 %v8480, %v8481
      %v8483 = vand.u32 %v8482, 4294901760
      %8484 = vmatmul.mubr.f32.gmra.mrb[0].mxu0 %v8483
      %v8485 = vpop.f32.mrb[0].mxu0
      %v8486 = vadd.f32 0.0, %v8485
      %v8487 = vpop.f32.mrb[0].mxu0
      %8488 = vmatprep.mubr.f32.mxu0 0.0
      %v8489 = vand.u32 %v7835, 4294901760
      %v8490 = vsub.f32 %v7835, %v8489
      %v8491 = vand.u32 %v8490, 4294901760
      %v8492 = vsub.f32 %v8490, %v8491
      %v8493 = vand.u32 %v8492, 4294901760
      %8494 = vmatmul.mubr.f32.gmra.mrb[0].mxu0 %v8493
      %v8495 = vpop.f32.mrb[0].mxu0
      %v8496 = vadd.f32 0.0, %v8495
      %v8497 = vpop.f32.mrb[0].mxu0
      %8498 = vmatprep.mubr.f32.mxu0 0.0
      %v8499 = vand.u32 %v7838, 4294901760
      %v8500 = vsub.f32 %v7838, %v8499
      %v8501 = vand.u32 %v8500, 4294901760
      %v8502 = vsub.f32 %v8500, %v8501
      %v8503 = vand.u32 %v8502, 4294901760
      %8504 = vmatmul.mubr.f32.gmra.mrb[0].mxu0 %v8503
      %v8505 = vpop.f32.mrb[0].mxu0
      %v8506 = vadd.f32 0.0, %v8505
      %v8507 = vpop.f32.mrb[0].mxu0
      %8508 = vmatprep.mubr.f32.mxu0 0.0
      %v8509 = vand.u32 %v7841, 4294901760
      %v8510 = vsub.f32 %v7841, %v8509
      %v8511 = vand.u32 %v8510, 4294901760
      %v8512 = vsub.f32 %v8510, %v8511
      %v8513 = vand.u32 %v8512, 4294901760
      %8514 = vmatmul.mubr.f32.gmra.mrb[0].mxu0 %v8513
      %v8515 = vpop.f32.mrb[0].mxu0
      %v8516 = vadd.f32 0.0, %v8515
      %v8517 = vpop.f32.mrb[0].mxu0
      %8518 = vmatprep.mubr.f32.mxu0 0.0
      %v8519 = vand.u32 %v7844, 4294901760
      %v8520 = vsub.f32 %v7844, %v8519
      %v8521 = vand.u32 %v8520, 4294901760
      %v8522 = vsub.f32 %v8520, %v8521
      %v8523 = vand.u32 %v8522, 4294901760
      %8524 = vmatmul.mubr.f32.gmra.mrb[0].mxu0 %v8523
      %v8525 = vpop.f32.mrb[0].mxu0
      %v8526 = vadd.f32 0.0, %v8525
      %v8527 = vpop.f32.mrb[0].mxu0
      %8528 = vmatprep.mubr.f32.mxu0 0.0
      %v8529 = vand.u32 %v7847, 4294901760
      %v8530 = vsub.f32 %v7847, %v8529
      %v8531 = vand.u32 %v8530, 4294901760
      %v8532 = vsub.f32 %v8530, %v8531
      %v8533 = vand.u32 %v8532, 4294901760
      %8534 = vmatmul.mubr.f32.gmra.mrb[0].mxu0 %v8533
      %v8535 = vpop.f32.mrb[0].mxu0
      %v8536 = vadd.f32 0.0, %v8535
      %v8537 = vpop.f32.mrb[0].mxu0
      %8538 = vmatprep.mubr.f32.mxu0 0.0
      %v8539 = vand.u32 %v7850, 4294901760
      %v8540 = vsub.f32 %v7850, %v8539
      %v8541 = vand.u32 %v8540, 4294901760
      %v8542 = vsub.f32 %v8540, %v8541
      %v8543 = vand.u32 %v8542, 4294901760
      %8544 = vmatmul.mubr.f32.gmra.mrb[0].mxu0 %v8543
      %v8545 = vpop.f32.mrb[0].mxu0
      %v8546 = vadd.f32 0.0, %v8545
      %v8547 = vpop.f32.mrb[0].mxu0
      %8548 = vmatprep.mubr.f32.mxu0 0.0
      %v8549 = vand.u32 %v7853, 4294901760
      %v8550 = vsub.f32 %v7853, %v8549
      %v8551 = vand.u32 %v8550, 4294901760
      %v8552 = vsub.f32 %v8550, %v8551
      %v8553 = vand.u32 %v8552, 4294901760
      %8554 = vmatmul.mubr.f32.gmra.mrb[0].mxu0 %v8553
      %v8555 = vpop.f32.mrb[0].mxu0
      %v8556 = vadd.f32 0.0, %v8555
      %v8557 = vpop.f32.mrb[0].mxu0
      %8558 = vmatprep.mubr.f32.mxu0 0.0
      %v8559 = vand.u32 %v7856, 4294901760
      %v8560 = vsub.f32 %v7856, %v8559
      %v8561 = vand.u32 %v8560, 4294901760
      %v8562 = vsub.f32 %v8560, %v8561
      %v8563 = vand.u32 %v8562, 4294901760
      %8564 = vmatmul.mubr.f32.gmra.mrb[0].mxu0 %v8563
      %v8565 = vpop.f32.mrb[0].mxu0
      %v8566 = vadd.f32 0.0, %v8565
      %v8567 = vpop.f32.mrb[0].mxu0
      %8568 = vdwg.mxu0
      %8569 = vmatprep.subr.mxu0 0.0
      %v8570 = vand.u32 %v7659, 4294901760
      %v8571 = vsub.f32 %v7659, %v8570
      %v8572 = vand.u32 %v8571, 4294901760
      %v8573 = vsub.f32 %v8571, %v8572
      %v8574 = vand.u32 %v8573, 4294901760
      %8575 = vmatpush1.msra.mxu0 %v8574
      %8576 = vmatprep.subr.mxu0 0.0
      %v8577 = vand.u32 %v7660, 4294901760
      %v8578 = vsub.f32 %v7660, %v8577
      %v8579 = vand.u32 %v8578, 4294901760
      %v8580 = vsub.f32 %v8578, %v8579
      %v8581 = vand.u32 %v8580, 4294901760
      %8582 = vmatpush1.msra.mxu0 %v8581
      %8583 = vmatprep.subr.mxu0 0.0
      %v8584 = vand.u32 %v7661, 4294901760
      %v8585 = vsub.f32 %v7661, %v8584
      %v8586 = vand.u32 %v8585, 4294901760
      %v8587 = vsub.f32 %v8585, %v8586
      %v8588 = vand.u32 %v8587, 4294901760
      %8589 = vmatpush1.msra.mxu0 %v8588
      %8590 = vmatprep.subr.mxu0 0.0
      %v8591 = vand.u32 %v7662, 4294901760
      %v8592 = vsub.f32 %v7662, %v8591
      %v8593 = vand.u32 %v8592, 4294901760
      %v8594 = vsub.f32 %v8592, %v8593
      %v8595 = vand.u32 %v8594, 4294901760
      %8596 = vmatpush1.msra.mxu0 %v8595
      %8597 = vmatprep.subr.mxu0 0.0
      %v8598 = vand.u32 %v7663, 4294901760
      %v8599 = vsub.f32 %v7663, %v8598
      %v8600 = vand.u32 %v8599, 4294901760
      %v8601 = vsub.f32 %v8599, %v8600
      %v8602 = vand.u32 %v8601, 4294901760
      %8603 = vmatpush1.msra.mxu0 %v8602
      %8604 = vmatprep.subr.mxu0 0.0
      %v8605 = vand.u32 %v7664, 4294901760
      %v8606 = vsub.f32 %v7664, %v8605
      %v8607 = vand.u32 %v8606, 4294901760
      %v8608 = vsub.f32 %v8606, %v8607
      %v8609 = vand.u32 %v8608, 4294901760
      %8610 = vmatpush1.msra.mxu0 %v8609
      %8611 = vmatprep.subr.mxu0 0.0
      %8612 = vmatpush1.msra.mxu0 0.0
      %8613 = vmatprep.subr.mxu0 0.0
      %8614 = vmatpush1.msra.mxu0 0.0
      %8615 = vmatprep.subr.mxu0 0.0
      %8616 = vmatpush1.msra.mxu0 0.0
      %8617 = vmatprep.subr.mxu0 0.0
      %8618 = vmatpush1.msra.mxu0 0.0
      %8619 = vmatprep.subr.mxu0 0.0
      %8620 = vmatpush1.msra.mxu0 0.0
      %8621 = vmatprep.subr.mxu0 0.0
      %8622 = vmatpush1.msra.mxu0 0.0
      %8623 = vmatprep.subr.mxu0 0.0
      %8624 = vmatpush1.msra.mxu0 0.0
      %8625 = vmatprep.subr.mxu0 0.0
      %8626 = vmatpush1.msra.mxu0 0.0
      %8627 = vmatprep.subr.mxu0 0.0
      %8628 = vmatpush1.msra.mxu0 0.0
      %8629 = vmatprep.subr.mxu0 0.0
      %8630 = vmatpush1.msra.mxu0 0.0
      %8631 = vmatprep.subr.mxu0 0.0
      %8632 = vmatpush1.msra.mxu0 0.0
      %8633 = vmatprep.subr.mxu0 0.0
      %8634 = vmatpush1.msra.mxu0 0.0
      %8635 = vmatprep.subr.mxu0 0.0
      %8636 = vmatpush1.msra.mxu0 0.0
      %8637 = vmatprep.subr.mxu0 0.0
      %8638 = vmatpush1.msra.mxu0 0.0
      %8639 = vmatprep.subr.mxu0 0.0
      %8640 = vmatpush1.msra.mxu0 0.0
      %8641 = vmatprep.subr.mxu0 0.0
      %8642 = vmatpush1.msra.mxu0 0.0
      %8643 = vmatprep.subr.mxu0 0.0
      %8644 = vmatpush1.msra.mxu0 0.0
      %8645 = vmatprep.subr.mxu0 0.0
      %8646 = vmatpush1.msra.mxu0 0.0
      %8647 = vmatprep.subr.mxu0 0.0
      %8648 = vmatpush1.msra.mxu0 0.0
      %8649 = vmatprep.subr.mxu0 0.0
      %8650 = vmatpush1.msra.mxu0 0.0
      %8651 = vmatprep.subr.mxu0 0.0
      %8652 = vmatpush1.msra.mxu0 0.0
      %8653 = vmatprep.subr.mxu0 0.0
      %8654 = vmatpush1.msra.mxu0 0.0
      %8655 = vmatprep.subr.mxu0 0.0
      %8656 = vmatpush1.msra.mxu0 0.0
      %8657 = vmatprep.subr.mxu0 0.0
      %8658 = vmatpush1.msra.mxu0 0.0
      %8659 = vmatprep.subr.mxu0 0.0
      %8660 = vmatpush1.msra.mxu0 0.0
      %8661 = vmatprep.subr.mxu0 0.0
      %8662 = vmatpush1.msra.mxu0 0.0
      %8663 = vmatprep.mubr.f32.mxu0 0.0
      %v8664 = vand.u32 %v7667, 4294901760
      %8665 = vmatmul.mubr.f32.gmra.mrb[0].mxu0 %v8664
      %v8666 = vpop.f32.mrb[0].mxu0
      %v8667 = vadd.f32 %v7936, %v8666
      %v8668 = vpop.f32.mrb[0].mxu0
      %8669 = vmatprep.mubr.f32.mxu0 0.0
      %v8670 = vand.u32 %v7670, 4294901760
      %8671 = vmatmul.mubr.f32.gmra.mrb[0].mxu0 %v8670
      %v8672 = vpop.f32.mrb[0].mxu0
      %v8673 = vadd.f32 %v7946, %v8672
      %v8674 = vpop.f32.mrb[0].mxu0
      %8675 = vmatprep.mubr.f32.mxu0 0.0
      %v8676 = vand.u32 %v7673, 4294901760
      %8677 = vmatmul.mubr.f32.gmra.mrb[0].mxu0 %v8676
      %v8678 = vpop.f32.mrb[0].mxu0
      %v8679 = vadd.f32 %v7956, %v8678
      %v8680 = vpop.f32.mrb[0].mxu0
      %8681 = vmatprep.mubr.f32.mxu0 0.0
      %v8682 = vand.u32 %v7676, 4294901760
      %8683 = vmatmul.mubr.f32.gmra.mrb[0].mxu0 %v8682
      %v8684 = vpop.f32.mrb[0].mxu0
      %v8685 = vadd.f32 %v7966, %v8684
      %v8686 = vpop.f32.mrb[0].mxu0
      %8687 = vmatprep.mubr.f32.mxu0 0.0
      %v8688 = vand.u32 %v7679, 4294901760
      %8689 = vmatmul.mubr.f32.gmra.mrb[0].mxu0 %v8688
      %v8690 = vpop.f32.mrb[0].mxu0
      %v8691 = vadd.f32 %v7976, %v8690
      %v8692 = vpop.f32.mrb[0].mxu0
      %8693 = vmatprep.mubr.f32.mxu0 0.0
      %v8694 = vand.u32 %v7682, 4294901760
      %8695 = vmatmul.mubr.f32.gmra.mrb[0].mxu0 %v8694
      %v8696 = vpop.f32.mrb[0].mxu0
      %v8697 = vadd.f32 %v7986, %v8696
      %v8698 = vpop.f32.mrb[0].mxu0
      %8699 = vmatprep.mubr.f32.mxu0 0.0
      %v8700 = vand.u32 %v7685, 4294901760
      %8701 = vmatmul.mubr.f32.gmra.mrb[0].mxu0 %v8700
      %v8702 = vpop.f32.mrb[0].mxu0
      %v8703 = vadd.f32 %v7996, %v8702
      %v8704 = vpop.f32.mrb[0].mxu0
      %8705 = vmatprep.mubr.f32.mxu0 0.0
      %v8706 = vand.u32 %v7688, 4294901760
      %8707 = vmatmul.mubr.f32.gmra.mrb[0].mxu0 %v8706
      %v8708 = vpop.f32.mrb[0].mxu0
      %v8709 = vadd.f32 %v8006, %v8708
      %v8710 = vpop.f32.mrb[0].mxu0
      %8711 = vmatprep.mubr.f32.mxu0 0.0
      %v8712 = vand.u32 %v7691, 4294901760
      %8713 = vmatmul.mubr.f32.gmra.mrb[0].mxu0 %v8712
      %v8714 = vpop.f32.mrb[0].mxu0
      %v8715 = vadd.f32 %v8016, %v8714
      %v8716 = vpop.f32.mrb[0].mxu0
      %8717 = vmatprep.mubr.f32.mxu0 0.0
      %v8718 = vand.u32 %v7694, 4294901760
      %8719 = vmatmul.mubr.f32.gmra.mrb[0].mxu0 %v8718
      %v8720 = vpop.f32.mrb[0].mxu0
      %v8721 = vadd.f32 %v8026, %v8720
      %v8722 = vpop.f32.mrb[0].mxu0
      %8723 = vmatprep.mubr.f32.mxu0 0.0
      %v8724 = vand.u32 %v7697, 4294901760
      %8725 = vmatmul.mubr.f32.gmra.mrb[0].mxu0 %v8724
      %v8726 = vpop.f32.mrb[0].mxu0
      %v8727 = vadd.f32 %v8036, %v8726
      %v8728 = vpop.f32.mrb[0].mxu0
      %8729 = vmatprep.mubr.f32.mxu0 0.0
      %v8730 = vand.u32 %v7700, 4294901760
      %8731 = vmatmul.mubr.f32.gmra.mrb[0].mxu0 %v8730
      %v8732 = vpop.f32.mrb[0].mxu0
      %v8733 = vadd.f32 %v8046, %v8732
      %v8734 = vpop.f32.mrb[0].mxu0
      %8735 = vmatprep.mubr.f32.mxu0 0.0
      %v8736 = vand.u32 %v7703, 4294901760
      %8737 = vmatmul.mubr.f32.gmra.mrb[0].mxu0 %v8736
      %v8738 = vpop.f32.mrb[0].mxu0
      %v8739 = vadd.f32 %v8056, %v8738
      %v8740 = vpop.f32.mrb[0].mxu0
      %8741 = vmatprep.mubr.f32.mxu0 0.0
      %v8742 = vand.u32 %v7706, 4294901760
      %8743 = vmatmul.mubr.f32.gmra.mrb[0].mxu0 %v8742
      %v8744 = vpop.f32.mrb[0].mxu0
      %v8745 = vadd.f32 %v8066, %v8744
      %v8746 = vpop.f32.mrb[0].mxu0
      %8747 = vmatprep.mubr.f32.mxu0 0.0
      %v8748 = vand.u32 %v7709, 4294901760
      %8749 = vmatmul.mubr.f32.gmra.mrb[0].mxu0 %v8748
      %v8750 = vpop.f32.mrb[0].mxu0
      %v8751 = vadd.f32 %v8076, %v8750
      %v8752 = vpop.f32.mrb[0].mxu0
      %8753 = vmatprep.mubr.f32.mxu0 0.0
      %v8754 = vand.u32 %v7712, 4294901760
      %8755 = vmatmul.mubr.f32.gmra.mrb[0].mxu0 %v8754
      %v8756 = vpop.f32.mrb[0].mxu0
      %v8757 = vadd.f32 %v8086, %v8756
      %v8758 = vpop.f32.mrb[0].mxu0
      %8759 = vmatprep.mubr.f32.mxu0 0.0
      %v8760 = vand.u32 %v7715, 4294901760
      %8761 = vmatmul.mubr.f32.gmra.mrb[0].mxu0 %v8760
      %v8762 = vpop.f32.mrb[0].mxu0
      %v8763 = vadd.f32 %v8096, %v8762
      %v8764 = vpop.f32.mrb[0].mxu0
      %8765 = vmatprep.mubr.f32.mxu0 0.0
      %v8766 = vand.u32 %v7718, 4294901760
      %8767 = vmatmul.mubr.f32.gmra.mrb[0].mxu0 %v8766
      %v8768 = vpop.f32.mrb[0].mxu0
      %v8769 = vadd.f32 %v8106, %v8768
      %v8770 = vpop.f32.mrb[0].mxu0
      %8771 = vmatprep.mubr.f32.mxu0 0.0
      %v8772 = vand.u32 %v7721, 4294901760
      %8773 = vmatmul.mubr.f32.gmra.mrb[0].mxu0 %v8772
      %v8774 = vpop.f32.mrb[0].mxu0
      %v8775 = vadd.f32 %v8116, %v8774
      %v8776 = vpop.f32.mrb[0].mxu0
      %8777 = vmatprep.mubr.f32.mxu0 0.0
      %v8778 = vand.u32 %v7724, 4294901760
      %8779 = vmatmul.mubr.f32.gmra.mrb[0].mxu0 %v8778
      %v8780 = vpop.f32.mrb[0].mxu0
      %v8781 = vadd.f32 %v8126, %v8780
      %v8782 = vpop.f32.mrb[0].mxu0
      %8783 = vmatprep.mubr.f32.mxu0 0.0
      %v8784 = vand.u32 %v7727, 4294901760
      %8785 = vmatmul.mubr.f32.gmra.mrb[0].mxu0 %v8784
      %v8786 = vpop.f32.mrb[0].mxu0
      %v8787 = vadd.f32 %v8136, %v8786
      %v8788 = vpop.f32.mrb[0].mxu0
      %8789 = vmatprep.mubr.f32.mxu0 0.0
      %v8790 = vand.u32 %v7730, 4294901760
      %8791 = vmatmul.mubr.f32.gmra.mrb[0].mxu0 %v8790
      %v8792 = vpop.f32.mrb[0].mxu0
      %v8793 = vadd.f32 %v8146, %v8792
      %v8794 = vpop.f32.mrb[0].mxu0
      %8795 = vmatprep.mubr.f32.mxu0 0.0
      %v8796 = vand.u32 %v7733, 4294901760
      %8797 = vmatmul.mubr.f32.gmra.mrb[0].mxu0 %v8796
      %v8798 = vpop.f32.mrb[0].mxu0
      %v8799 = vadd.f32 %v8156, %v8798
      %v8800 = vpop.f32.mrb[0].mxu0
      %8801 = vmatprep.mubr.f32.mxu0 0.0
      %v8802 = vand.u32 %v7736, 4294901760
      %8803 = vmatmul.mubr.f32.gmra.mrb[0].mxu0 %v8802
      %v8804 = vpop.f32.mrb[0].mxu0
      %v8805 = vadd.f32 %v8166, %v8804
      %v8806 = vpop.f32.mrb[0].mxu0
      %8807 = vmatprep.mubr.f32.mxu0 0.0
      %v8808 = vand.u32 %v7739, 4294901760
      %8809 = vmatmul.mubr.f32.gmra.mrb[0].mxu0 %v8808
      %v8810 = vpop.f32.mrb[0].mxu0
      %v8811 = vadd.f32 %v8176, %v8810
      %v8812 = vpop.f32.mrb[0].mxu0
      %8813 = vmatprep.mubr.f32.mxu0 0.0
      %v8814 = vand.u32 %v7742, 4294901760
      %8815 = vmatmul.mubr.f32.gmra.mrb[0].mxu0 %v8814
      %v8816 = vpop.f32.mrb[0].mxu0
      %v8817 = vadd.f32 %v8186, %v8816
      %v8818 = vpop.f32.mrb[0].mxu0
      %8819 = vmatprep.mubr.f32.mxu0 0.0
      %v8820 = vand.u32 %v7745, 4294901760
      %8821 = vmatmul.mubr.f32.gmra.mrb[0].mxu0 %v8820
      %v8822 = vpop.f32.mrb[0].mxu0
      %v8823 = vadd.f32 %v8196, %v8822
      %v8824 = vpop.f32.mrb[0].mxu0
      %8825 = vmatprep.mubr.f32.mxu0 0.0
      %v8826 = vand.u32 %v7748, 4294901760
      %8827 = vmatmul.mubr.f32.gmra.mrb[0].mxu0 %v8826
      %v8828 = vpop.f32.mrb[0].mxu0
      %v8829 = vadd.f32 %v8206, %v8828
      %v8830 = vpop.f32.mrb[0].mxu0
      %8831 = vmatprep.mubr.f32.mxu0 0.0
      %v8832 = vand.u32 %v7751, 4294901760
      %8833 = vmatmul.mubr.f32.gmra.mrb[0].mxu0 %v8832
      %v8834 = vpop.f32.mrb[0].mxu0
      %v8835 = vadd.f32 %v8216, %v8834
      %v8836 = vpop.f32.mrb[0].mxu0
      %8837 = vmatprep.mubr.f32.mxu0 0.0
      %v8838 = vand.u32 %v7754, 4294901760
      %8839 = vmatmul.mubr.f32.gmra.mrb[0].mxu0 %v8838
      %v8840 = vpop.f32.mrb[0].mxu0
      %v8841 = vadd.f32 %v8226, %v8840
      %v8842 = vpop.f32.mrb[0].mxu0
      %8843 = vmatprep.mubr.f32.mxu0 0.0
      %v8844 = vand.u32 %v7757, 4294901760
      %8845 = vmatmul.mubr.f32.gmra.mrb[0].mxu0 %v8844
      %v8846 = vpop.f32.mrb[0].mxu0
      %v8847 = vadd.f32 %v8236, %v8846
      %v8848 = vpop.f32.mrb[0].mxu0
      %8849 = vmatprep.mubr.f32.mxu0 0.0
      %v8850 = vand.u32 %v7760, 4294901760
      %8851 = vmatmul.mubr.f32.gmra.mrb[0].mxu0 %v8850
      %v8852 = vpop.f32.mrb[0].mxu0
      %v8853 = vadd.f32 %v8246, %v8852
      %v8854 = vpop.f32.mrb[0].mxu0
      %8855 = vmatprep.mubr.f32.mxu0 0.0
      %v8856 = vand.u32 %v7763, 4294901760
      %8857 = vmatmul.mubr.f32.gmra.mrb[0].mxu0 %v8856
      %v8858 = vpop.f32.mrb[0].mxu0
      %v8859 = vadd.f32 %v8256, %v8858
      %v8860 = vpop.f32.mrb[0].mxu0
      %8861 = vmatprep.mubr.f32.mxu0 0.0
      %v8862 = vand.u32 %v7766, 4294901760
      %8863 = vmatmul.mubr.f32.gmra.mrb[0].mxu0 %v8862
      %v8864 = vpop.f32.mrb[0].mxu0
      %v8865 = vadd.f32 %v8266, %v8864
      %v8866 = vpop.f32.mrb[0].mxu0
      %8867 = vmatprep.mubr.f32.mxu0 0.0
      %v8868 = vand.u32 %v7769, 4294901760
      %8869 = vmatmul.mubr.f32.gmra.mrb[0].mxu0 %v8868
      %v8870 = vpop.f32.mrb[0].mxu0
      %v8871 = vadd.f32 %v8276, %v8870
      %v8872 = vpop.f32.mrb[0].mxu0
      %8873 = vmatprep.mubr.f32.mxu0 0.0
      %v8874 = vand.u32 %v7772, 4294901760
      %8875 = vmatmul.mubr.f32.gmra.mrb[0].mxu0 %v8874
      %v8876 = vpop.f32.mrb[0].mxu0
      %v8877 = vadd.f32 %v8286, %v8876
      %v8878 = vpop.f32.mrb[0].mxu0
      %8879 = vmatprep.mubr.f32.mxu0 0.0
      %v8880 = vand.u32 %v7775, 4294901760
      %8881 = vmatmul.mubr.f32.gmra.mrb[0].mxu0 %v8880
      %v8882 = vpop.f32.mrb[0].mxu0
      %v8883 = vadd.f32 %v8296, %v8882
      %v8884 = vpop.f32.mrb[0].mxu0
      %8885 = vmatprep.mubr.f32.mxu0 0.0
      %v8886 = vand.u32 %v7778, 4294901760
      %8887 = vmatmul.mubr.f32.gmra.mrb[0].mxu0 %v8886
      %v8888 = vpop.f32.mrb[0].mxu0
      %v8889 = vadd.f32 %v8306, %v8888
      %v8890 = vpop.f32.mrb[0].mxu0
      %8891 = vmatprep.mubr.f32.mxu0 0.0
      %v8892 = vand.u32 %v7781, 4294901760
      %8893 = vmatmul.mubr.f32.gmra.mrb[0].mxu0 %v8892
      %v8894 = vpop.f32.mrb[0].mxu0
      %v8895 = vadd.f32 %v8316, %v8894
      %v8896 = vpop.f32.mrb[0].mxu0
      %8897 = vmatprep.mubr.f32.mxu0 0.0
      %v8898 = vand.u32 %v7784, 4294901760
      %8899 = vmatmul.mubr.f32.gmra.mrb[0].mxu0 %v8898
      %v8900 = vpop.f32.mrb[0].mxu0
      %v8901 = vadd.f32 %v8326, %v8900
      %v8902 = vpop.f32.mrb[0].mxu0
      %8903 = vmatprep.mubr.f32.mxu0 0.0
      %v8904 = vand.u32 %v7787, 4294901760
      %8905 = vmatmul.mubr.f32.gmra.mrb[0].mxu0 %v8904
      %v8906 = vpop.f32.mrb[0].mxu0
      %v8907 = vadd.f32 %v8336, %v8906
      %v8908 = vpop.f32.mrb[0].mxu0
      %8909 = vmatprep.mubr.f32.mxu0 0.0
      %v8910 = vand.u32 %v7790, 4294901760
      %8911 = vmatmul.mubr.f32.gmra.mrb[0].mxu0 %v8910
      %v8912 = vpop.f32.mrb[0].mxu0
      %v8913 = vadd.f32 %v8346, %v8912
      %v8914 = vpop.f32.mrb[0].mxu0
      %8915 = vmatprep.mubr.f32.mxu0 0.0
      %v8916 = vand.u32 %v7793, 4294901760
      %8917 = vmatmul.mubr.f32.gmra.mrb[0].mxu0 %v8916
      %v8918 = vpop.f32.mrb[0].mxu0
      %v8919 = vadd.f32 %v8356, %v8918
      %v8920 = vpop.f32.mrb[0].mxu0
      %8921 = vmatprep.mubr.f32.mxu0 0.0
      %v8922 = vand.u32 %v7796, 4294901760
      %8923 = vmatmul.mubr.f32.gmra.mrb[0].mxu0 %v8922
      %v8924 = vpop.f32.mrb[0].mxu0
      %v8925 = vadd.f32 %v8366, %v8924
      %v8926 = vpop.f32.mrb[0].mxu0
      %8927 = vmatprep.mubr.f32.mxu0 0.0
      %v8928 = vand.u32 %v7799, 4294901760
      %8929 = vmatmul.mubr.f32.gmra.mrb[0].mxu0 %v8928
      %v8930 = vpop.f32.mrb[0].mxu0
      %v8931 = vadd.f32 %v8376, %v8930
      %v8932 = vpop.f32.mrb[0].mxu0
      %8933 = vmatprep.mubr.f32.mxu0 0.0
      %v8934 = vand.u32 %v7802, 4294901760
      %8935 = vmatmul.mubr.f32.gmra.mrb[0].mxu0 %v8934
      %v8936 = vpop.f32.mrb[0].mxu0
      %v8937 = vadd.f32 %v8386, %v8936
      %v8938 = vpop.f32.mrb[0].mxu0
      %8939 = vmatprep.mubr.f32.mxu0 0.0
      %v8940 = vand.u32 %v7805, 4294901760
      %8941 = vmatmul.mubr.f32.gmra.mrb[0].mxu0 %v8940
      %v8942 = vpop.f32.mrb[0].mxu0
      %v8943 = vadd.f32 %v8396, %v8942
      %v8944 = vpop.f32.mrb[0].mxu0
      %8945 = vmatprep.mubr.f32.mxu0 0.0
      %v8946 = vand.u32 %v7808, 4294901760
      %8947 = vmatmul.mubr.f32.gmra.mrb[0].mxu0 %v8946
      %v8948 = vpop.f32.mrb[0].mxu0
      %v8949 = vadd.f32 %v8406, %v8948
      %v8950 = vpop.f32.mrb[0].mxu0
      %8951 = vmatprep.mubr.f32.mxu0 0.0
      %v8952 = vand.u32 %v7811, 4294901760
      %8953 = vmatmul.mubr.f32.gmra.mrb[0].mxu0 %v8952
      %v8954 = vpop.f32.mrb[0].mxu0
      %v8955 = vadd.f32 %v8416, %v8954
      %v8956 = vpop.f32.mrb[0].mxu0
      %8957 = vmatprep.mubr.f32.mxu0 0.0
      %v8958 = vand.u32 %v7814, 4294901760
      %8959 = vmatmul.mubr.f32.gmra.mrb[0].mxu0 %v8958
      %v8960 = vpop.f32.mrb[0].mxu0
      %v8961 = vadd.f32 %v8426, %v8960
      %v8962 = vpop.f32.mrb[0].mxu0
      %8963 = vmatprep.mubr.f32.mxu0 0.0
      %v8964 = vand.u32 %v7817, 4294901760
      %8965 = vmatmul.mubr.f32.gmra.mrb[0].mxu0 %v8964
      %v8966 = vpop.f32.mrb[0].mxu0
      %v8967 = vadd.f32 %v8436, %v8966
      %v8968 = vpop.f32.mrb[0].mxu0
      %8969 = vmatprep.mubr.f32.mxu0 0.0
      %v8970 = vand.u32 %v7820, 4294901760
      %8971 = vmatmul.mubr.f32.gmra.mrb[0].mxu0 %v8970
      %v8972 = vpop.f32.mrb[0].mxu0
      %v8973 = vadd.f32 %v8446, %v8972
      %v8974 = vpop.f32.mrb[0].mxu0
      %8975 = vmatprep.mubr.f32.mxu0 0.0
      %v8976 = vand.u32 %v7823, 4294901760
      %8977 = vmatmul.mubr.f32.gmra.mrb[0].mxu0 %v8976
      %v8978 = vpop.f32.mrb[0].mxu0
      %v8979 = vadd.f32 %v8456, %v8978
      %v8980 = vpop.f32.mrb[0].mxu0
      %8981 = vmatprep.mubr.f32.mxu0 0.0
      %v8982 = vand.u32 %v7826, 4294901760
      %8983 = vmatmul.mubr.f32.gmra.mrb[0].mxu0 %v8982
      %v8984 = vpop.f32.mrb[0].mxu0
      %v8985 = vadd.f32 %v8466, %v8984
      %v8986 = vpop.f32.mrb[0].mxu0
      %8987 = vmatprep.mubr.f32.mxu0 0.0
      %v8988 = vand.u32 %v7829, 4294901760
      %8989 = vmatmul.mubr.f32.gmra.mrb[0].mxu0 %v8988
      %v8990 = vpop.f32.mrb[0].mxu0
      %v8991 = vadd.f32 %v8476, %v8990
      %v8992 = vpop.f32.mrb[0].mxu0
      %8993 = vmatprep.mubr.f32.mxu0 0.0
      %v8994 = vand.u32 %v7832, 4294901760
      %8995 = vmatmul.mubr.f32.gmra.mrb[0].mxu0 %v8994
      %v8996 = vpop.f32.mrb[0].mxu0
      %v8997 = vadd.f32 %v8486, %v8996
      %v8998 = vpop.f32.mrb[0].mxu0
      %8999 = vmatprep.mubr.f32.mxu0 0.0
      %v9000 = vand.u32 %v7835, 4294901760
      %9001 = vmatmul.mubr.f32.gmra.mrb[0].mxu0 %v9000
      %v9002 = vpop.f32.mrb[0].mxu0
      %v9003 = vadd.f32 %v8496, %v9002
      %v9004 = vpop.f32.mrb[0].mxu0
      %9005 = vmatprep.mubr.f32.mxu0 0.0
      %v9006 = vand.u32 %v7838, 4294901760
      %9007 = vmatmul.mubr.f32.gmra.mrb[0].mxu0 %v9006
      %v9008 = vpop.f32.mrb[0].mxu0
      %v9009 = vadd.f32 %v8506, %v9008
      %v9010 = vpop.f32.mrb[0].mxu0
      %9011 = vmatprep.mubr.f32.mxu0 0.0
      %v9012 = vand.u32 %v7841, 4294901760
      %9013 = vmatmul.mubr.f32.gmra.mrb[0].mxu0 %v9012
      %v9014 = vpop.f32.mrb[0].mxu0
      %v9015 = vadd.f32 %v8516, %v9014
      %v9016 = vpop.f32.mrb[0].mxu0
      %9017 = vmatprep.mubr.f32.mxu0 0.0
      %v9018 = vand.u32 %v7844, 4294901760
      %9019 = vmatmul.mubr.f32.gmra.mrb[0].mxu0 %v9018
      %v9020 = vpop.f32.mrb[0].mxu0
      %v9021 = vadd.f32 %v8526, %v9020
      %v9022 = vpop.f32.mrb[0].mxu0
      %9023 = vmatprep.mubr.f32.mxu0 0.0
      %v9024 = vand.u32 %v7847, 4294901760
      %9025 = vmatmul.mubr.f32.gmra.mrb[0].mxu0 %v9024
      %v9026 = vpop.f32.mrb[0].mxu0
      %v9027 = vadd.f32 %v8536, %v9026
      %v9028 = vpop.f32.mrb[0].mxu0
      %9029 = vmatprep.mubr.f32.mxu0 0.0
      %v9030 = vand.u32 %v7850, 4294901760
      %9031 = vmatmul.mubr.f32.gmra.mrb[0].mxu0 %v9030
      %v9032 = vpop.f32.mrb[0].mxu0
      %v9033 = vadd.f32 %v8546, %v9032
      %v9034 = vpop.f32.mrb[0].mxu0
      %9035 = vmatprep.mubr.f32.mxu0 0.0
      %v9036 = vand.u32 %v7853, 4294901760
      %9037 = vmatmul.mubr.f32.gmra.mrb[0].mxu0 %v9036
      %v9038 = vpop.f32.mrb[0].mxu0
      %v9039 = vadd.f32 %v8556, %v9038
      %v9040 = vpop.f32.mrb[0].mxu0
      %9041 = vmatprep.mubr.f32.mxu0 0.0
      %v9042 = vand.u32 %v7856, 4294901760
      %9043 = vmatmul.mubr.f32.gmra.mrb[0].mxu0 %v9042
      %v9044 = vpop.f32.mrb[0].mxu0
      %v9045 = vadd.f32 %v8566, %v9044
      %v9046 = vpop.f32.mrb[0].mxu0
      %9047 = vdwg.mxu0
      %9048 = vmatprep.subr.mxu0 0.0
      %v9049 = vand.u32 %v7659, 4294901760
      %v9050 = vsub.f32 %v7659, %v9049
      %9051 = vmatpush1.msra.mxu0 %v9050
      %9052 = vmatprep.subr.mxu0 0.0
      %v9053 = vand.u32 %v7660, 4294901760
      %v9054 = vsub.f32 %v7660, %v9053
      %9055 = vmatpush1.msra.mxu0 %v9054
      %9056 = vmatprep.subr.mxu0 0.0
      %v9057 = vand.u32 %v7661, 4294901760
      %v9058 = vsub.f32 %v7661, %v9057
      %9059 = vmatpush1.msra.mxu0 %v9058
      %9060 = vmatprep.subr.mxu0 0.0
      %v9061 = vand.u32 %v7662, 4294901760
      %v9062 = vsub.f32 %v7662, %v9061
      %9063 = vmatpush1.msra.mxu0 %v9062
      %9064 = vmatprep.subr.mxu0 0.0
      %v9065 = vand.u32 %v7663, 4294901760
      %v9066 = vsub.f32 %v7663, %v9065
      %9067 = vmatpush1.msra.mxu0 %v9066
      %9068 = vmatprep.subr.mxu0 0.0
      %v9069 = vand.u32 %v7664, 4294901760
      %v9070 = vsub.f32 %v7664, %v9069
      %9071 = vmatpush1.msra.mxu0 %v9070
      %9072 = vmatprep.subr.mxu0 0.0
      %9073 = vmatpush1.msra.mxu0 0.0
      %9074 = vmatprep.subr.mxu0 0.0
      %9075 = vmatpush1.msra.mxu0 0.0
      %9076 = vmatprep.subr.mxu0 0.0
      %9077 = vmatpush1.msra.mxu0 0.0
      %9078 = vmatprep.subr.mxu0 0.0
      %9079 = vmatpush1.msra.mxu0 0.0
      %9080 = vmatprep.subr.mxu0 0.0
      %9081 = vmatpush1.msra.mxu0 0.0
      %9082 = vmatprep.subr.mxu0 0.0
      %9083 = vmatpush1.msra.mxu0 0.0
      %9084 = vmatprep.subr.mxu0 0.0
      %9085 = vmatpush1.msra.mxu0 0.0
      %9086 = vmatprep.subr.mxu0 0.0
      %9087 = vmatpush1.msra.mxu0 0.0
      %9088 = vmatprep.subr.mxu0 0.0
      %9089 = vmatpush1.msra.mxu0 0.0
      %9090 = vmatprep.subr.mxu0 0.0
      %9091 = vmatpush1.msra.mxu0 0.0
      %9092 = vmatprep.subr.mxu0 0.0
      %9093 = vmatpush1.msra.mxu0 0.0
      %9094 = vmatprep.subr.mxu0 0.0
      %9095 = vmatpush1.msra.mxu0 0.0
      %9096 = vmatprep.subr.mxu0 0.0
      %9097 = vmatpush1.msra.mxu0 0.0
      %9098 = vmatprep.subr.mxu0 0.0
      %9099 = vmatpush1.msra.mxu0 0.0
      %9100 = vmatprep.subr.mxu0 0.0
      %9101 = vmatpush1.msra.mxu0 0.0
      %9102 = vmatprep.subr.mxu0 0.0
      %9103 = vmatpush1.msra.mxu0 0.0
      %9104 = vmatprep.subr.mxu0 0.0
      %9105 = vmatpush1.msra.mxu0 0.0
      %9106 = vmatprep.subr.mxu0 0.0
      %9107 = vmatpush1.msra.mxu0 0.0
      %9108 = vmatprep.subr.mxu0 0.0
      %9109 = vmatpush1.msra.mxu0 0.0
      %9110 = vmatprep.subr.mxu0 0.0
      %9111 = vmatpush1.msra.mxu0 0.0
      %9112 = vmatprep.subr.mxu0 0.0
      %9113 = vmatpush1.msra.mxu0 0.0
      %9114 = vmatprep.subr.mxu0 0.0
      %9115 = vmatpush1.msra.mxu0 0.0
      %9116 = vmatprep.subr.mxu0 0.0
      %9117 = vmatpush1.msra.mxu0 0.0
      %9118 = vmatprep.subr.mxu0 0.0
      %9119 = vmatpush1.msra.mxu0 0.0
      %9120 = vmatprep.subr.mxu0 0.0
      %9121 = vmatpush1.msra.mxu0 0.0
      %9122 = vmatprep.subr.mxu0 0.0
      %9123 = vmatpush1.msra.mxu0 0.0
      %9124 = vmatprep.mubr.f32.mxu0 0.0
      %v9125 = vand.u32 %v7667, 4294901760
      %v9126 = vsub.f32 %v7667, %v9125
      %9127 = vmatmul.mubr.f32.gmra.mrb[0].mxu0 %v9126
      %v9128 = vpop.f32.mrb[0].mxu0
      %v9129 = vadd.f32 %v8667, %v9128
      %v9130 = vpop.f32.mrb[0].mxu0
      %9131 = vmatprep.mubr.f32.mxu0 0.0
      %v9132 = vand.u32 %v7670, 4294901760
      %v9133 = vsub.f32 %v7670, %v9132
      %9134 = vmatmul.mubr.f32.gmra.mrb[0].mxu0 %v9133
      %v9135 = vpop.f32.mrb[0].mxu0
      %v9136 = vadd.f32 %v8673, %v9135
      %v9137 = vpop.f32.mrb[0].mxu0
      %9138 = vmatprep.mubr.f32.mxu0 0.0
      %v9139 = vand.u32 %v7673, 4294901760
      %v9140 = vsub.f32 %v7673, %v9139
      %9141 = vmatmul.mubr.f32.gmra.mrb[0].mxu0 %v9140
      %v9142 = vpop.f32.mrb[0].mxu0
      %v9143 = vadd.f32 %v8679, %v9142
      %v9144 = vpop.f32.mrb[0].mxu0
      %9145 = vmatprep.mubr.f32.mxu0 0.0
      %v9146 = vand.u32 %v7676, 4294901760
      %v9147 = vsub.f32 %v7676, %v9146
      %9148 = vmatmul.mubr.f32.gmra.mrb[0].mxu0 %v9147
      %v9149 = vpop.f32.mrb[0].mxu0
      %v9150 = vadd.f32 %v8685, %v9149
      %v9151 = vpop.f32.mrb[0].mxu0
      %9152 = vmatprep.mubr.f32.mxu0 0.0
      %v9153 = vand.u32 %v7679, 4294901760
      %v9154 = vsub.f32 %v7679, %v9153
      %9155 = vmatmul.mubr.f32.gmra.mrb[0].mxu0 %v9154
      %v9156 = vpop.f32.mrb[0].mxu0
      %v9157 = vadd.f32 %v8691, %v9156
      %v9158 = vpop.f32.mrb[0].mxu0
      %9159 = vmatprep.mubr.f32.mxu0 0.0
      %v9160 = vand.u32 %v7682, 4294901760
      %v9161 = vsub.f32 %v7682, %v9160
      %9162 = vmatmul.mubr.f32.gmra.mrb[0].mxu0 %v9161
      %v9163 = vpop.f32.mrb[0].mxu0
      %v9164 = vadd.f32 %v8697, %v9163
      %v9165 = vpop.f32.mrb[0].mxu0
      %9166 = vmatprep.mubr.f32.mxu0 0.0
      %v9167 = vand.u32 %v7685, 4294901760
      %v9168 = vsub.f32 %v7685, %v9167
      %9169 = vmatmul.mubr.f32.gmra.mrb[0].mxu0 %v9168
      %v9170 = vpop.f32.mrb[0].mxu0
      %v9171 = vadd.f32 %v8703, %v9170
      %v9172 = vpop.f32.mrb[0].mxu0
      %9173 = vmatprep.mubr.f32.mxu0 0.0
      %v9174 = vand.u32 %v7688, 4294901760
      %v9175 = vsub.f32 %v7688, %v9174
      %9176 = vmatmul.mubr.f32.gmra.mrb[0].mxu0 %v9175
      %v9177 = vpop.f32.mrb[0].mxu0
      %v9178 = vadd.f32 %v8709, %v9177
      %v9179 = vpop.f32.mrb[0].mxu0
      %9180 = vmatprep.mubr.f32.mxu0 0.0
      %v9181 = vand.u32 %v7691, 4294901760
      %v9182 = vsub.f32 %v7691, %v9181
      %9183 = vmatmul.mubr.f32.gmra.mrb[0].mxu0 %v9182
      %v9184 = vpop.f32.mrb[0].mxu0
      %v9185 = vadd.f32 %v8715, %v9184
      %v9186 = vpop.f32.mrb[0].mxu0
      %9187 = vmatprep.mubr.f32.mxu0 0.0
      %v9188 = vand.u32 %v7694, 4294901760
      %v9189 = vsub.f32 %v7694, %v9188
      %9190 = vmatmul.mubr.f32.gmra.mrb[0].mxu0 %v9189
      %v9191 = vpop.f32.mrb[0].mxu0
      %v9192 = vadd.f32 %v8721, %v9191
      %v9193 = vpop.f32.mrb[0].mxu0
      %9194 = vmatprep.mubr.f32.mxu0 0.0
      %v9195 = vand.u32 %v7697, 4294901760
      %v9196 = vsub.f32 %v7697, %v9195
      %9197 = vmatmul.mubr.f32.gmra.mrb[0].mxu0 %v9196
      %v9198 = vpop.f32.mrb[0].mxu0
      %v9199 = vadd.f32 %v8727, %v9198
      %v9200 = vpop.f32.mrb[0].mxu0
      %9201 = vmatprep.mubr.f32.mxu0 0.0
      %v9202 = vand.u32 %v7700, 4294901760
      %v9203 = vsub.f32 %v7700, %v9202
      %9204 = vmatmul.mubr.f32.gmra.mrb[0].mxu0 %v9203
      %v9205 = vpop.f32.mrb[0].mxu0
      %v9206 = vadd.f32 %v8733, %v9205
      %v9207 = vpop.f32.mrb[0].mxu0
      %9208 = vmatprep.mubr.f32.mxu0 0.0
      %v9209 = vand.u32 %v7703, 4294901760
      %v9210 = vsub.f32 %v7703, %v9209
      %9211 = vmatmul.mubr.f32.gmra.mrb[0].mxu0 %v9210
      %v9212 = vpop.f32.mrb[0].mxu0
      %v9213 = vadd.f32 %v8739, %v9212
      %v9214 = vpop.f32.mrb[0].mxu0
      %9215 = vmatprep.mubr.f32.mxu0 0.0
      %v9216 = vand.u32 %v7706, 4294901760
      %v9217 = vsub.f32 %v7706, %v9216
      %9218 = vmatmul.mubr.f32.gmra.mrb[0].mxu0 %v9217
      %v9219 = vpop.f32.mrb[0].mxu0
      %v9220 = vadd.f32 %v8745, %v9219
      %v9221 = vpop.f32.mrb[0].mxu0
      %9222 = vmatprep.mubr.f32.mxu0 0.0
      %v9223 = vand.u32 %v7709, 4294901760
      %v9224 = vsub.f32 %v7709, %v9223
      %9225 = vmatmul.mubr.f32.gmra.mrb[0].mxu0 %v9224
      %v9226 = vpop.f32.mrb[0].mxu0
      %v9227 = vadd.f32 %v8751, %v9226
      %v9228 = vpop.f32.mrb[0].mxu0
      %9229 = vmatprep.mubr.f32.mxu0 0.0
      %v9230 = vand.u32 %v7712, 4294901760
      %v9231 = vsub.f32 %v7712, %v9230
      %9232 = vmatmul.mubr.f32.gmra.mrb[0].mxu0 %v9231
      %v9233 = vpop.f32.mrb[0].mxu0
      %v9234 = vadd.f32 %v8757, %v9233
      %v9235 = vpop.f32.mrb[0].mxu0
      %9236 = vmatprep.mubr.f32.mxu0 0.0
      %v9237 = vand.u32 %v7715, 4294901760
      %v9238 = vsub.f32 %v7715, %v9237
      %9239 = vmatmul.mubr.f32.gmra.mrb[0].mxu0 %v9238
      %v9240 = vpop.f32.mrb[0].mxu0
      %v9241 = vadd.f32 %v8763, %v9240
      %v9242 = vpop.f32.mrb[0].mxu0
      %9243 = vmatprep.mubr.f32.mxu0 0.0
      %v9244 = vand.u32 %v7718, 4294901760
      %v9245 = vsub.f32 %v7718, %v9244
      %9246 = vmatmul.mubr.f32.gmra.mrb[0].mxu0 %v9245
      %v9247 = vpop.f32.mrb[0].mxu0
      %v9248 = vadd.f32 %v8769, %v9247
      %v9249 = vpop.f32.mrb[0].mxu0
      %9250 = vmatprep.mubr.f32.mxu0 0.0
      %v9251 = vand.u32 %v7721, 4294901760
      %v9252 = vsub.f32 %v7721, %v9251
      %9253 = vmatmul.mubr.f32.gmra.mrb[0].mxu0 %v9252
      %v9254 = vpop.f32.mrb[0].mxu0
      %v9255 = vadd.f32 %v8775, %v9254
      %v9256 = vpop.f32.mrb[0].mxu0
      %9257 = vmatprep.mubr.f32.mxu0 0.0
      %v9258 = vand.u32 %v7724, 4294901760
      %v9259 = vsub.f32 %v7724, %v9258
      %9260 = vmatmul.mubr.f32.gmra.mrb[0].mxu0 %v9259
      %v9261 = vpop.f32.mrb[0].mxu0
      %v9262 = vadd.f32 %v8781, %v9261
      %v9263 = vpop.f32.mrb[0].mxu0
      %9264 = vmatprep.mubr.f32.mxu0 0.0
      %v9265 = vand.u32 %v7727, 4294901760
      %v9266 = vsub.f32 %v7727, %v9265
      %9267 = vmatmul.mubr.f32.gmra.mrb[0].mxu0 %v9266
      %v9268 = vpop.f32.mrb[0].mxu0
      %v9269 = vadd.f32 %v8787, %v9268
      %v9270 = vpop.f32.mrb[0].mxu0
      %9271 = vmatprep.mubr.f32.mxu0 0.0
      %v9272 = vand.u32 %v7730, 4294901760
      %v9273 = vsub.f32 %v7730, %v9272
      %9274 = vmatmul.mubr.f32.gmra.mrb[0].mxu0 %v9273
      %v9275 = vpop.f32.mrb[0].mxu0
      %v9276 = vadd.f32 %v8793, %v9275
      %v9277 = vpop.f32.mrb[0].mxu0
      %9278 = vmatprep.mubr.f32.mxu0 0.0
      %v9279 = vand.u32 %v7733, 4294901760
      %v9280 = vsub.f32 %v7733, %v9279
      %9281 = vmatmul.mubr.f32.gmra.mrb[0].mxu0 %v9280
      %v9282 = vpop.f32.mrb[0].mxu0
      %v9283 = vadd.f32 %v8799, %v9282
      %v9284 = vpop.f32.mrb[0].mxu0
      %9285 = vmatprep.mubr.f32.mxu0 0.0
      %v9286 = vand.u32 %v7736, 4294901760
      %v9287 = vsub.f32 %v7736, %v9286
      %9288 = vmatmul.mubr.f32.gmra.mrb[0].mxu0 %v9287
      %v9289 = vpop.f32.mrb[0].mxu0
      %v9290 = vadd.f32 %v8805, %v9289
      %v9291 = vpop.f32.mrb[0].mxu0
      %9292 = vmatprep.mubr.f32.mxu0 0.0
      %v9293 = vand.u32 %v7739, 4294901760
      %v9294 = vsub.f32 %v7739, %v9293
      %9295 = vmatmul.mubr.f32.gmra.mrb[0].mxu0 %v9294
      %v9296 = vpop.f32.mrb[0].mxu0
      %v9297 = vadd.f32 %v8811, %v9296
      %v9298 = vpop.f32.mrb[0].mxu0
      %9299 = vmatprep.mubr.f32.mxu0 0.0
      %v9300 = vand.u32 %v7742, 4294901760
      %v9301 = vsub.f32 %v7742, %v9300
      %9302 = vmatmul.mubr.f32.gmra.mrb[0].mxu0 %v9301
      %v9303 = vpop.f32.mrb[0].mxu0
      %v9304 = vadd.f32 %v8817, %v9303
      %v9305 = vpop.f32.mrb[0].mxu0
      %9306 = vmatprep.mubr.f32.mxu0 0.0
      %v9307 = vand.u32 %v7745, 4294901760
      %v9308 = vsub.f32 %v7745, %v9307
      %9309 = vmatmul.mubr.f32.gmra.mrb[0].mxu0 %v9308
      %v9310 = vpop.f32.mrb[0].mxu0
      %v9311 = vadd.f32 %v8823, %v9310
      %v9312 = vpop.f32.mrb[0].mxu0
      %9313 = vmatprep.mubr.f32.mxu0 0.0
      %v9314 = vand.u32 %v7748, 4294901760
      %v9315 = vsub.f32 %v7748, %v9314
      %9316 = vmatmul.mubr.f32.gmra.mrb[0].mxu0 %v9315
      %v9317 = vpop.f32.mrb[0].mxu0
      %v9318 = vadd.f32 %v8829, %v9317
      %v9319 = vpop.f32.mrb[0].mxu0
      %9320 = vmatprep.mubr.f32.mxu0 0.0
      %v9321 = vand.u32 %v7751, 4294901760
      %v9322 = vsub.f32 %v7751, %v9321
      %9323 = vmatmul.mubr.f32.gmra.mrb[0].mxu0 %v9322
      %v9324 = vpop.f32.mrb[0].mxu0
      %v9325 = vadd.f32 %v8835, %v9324
      %v9326 = vpop.f32.mrb[0].mxu0
      %9327 = vmatprep.mubr.f32.mxu0 0.0
      %v9328 = vand.u32 %v7754, 4294901760
      %v9329 = vsub.f32 %v7754, %v9328
      %9330 = vmatmul.mubr.f32.gmra.mrb[0].mxu0 %v9329
      %v9331 = vpop.f32.mrb[0].mxu0
      %v9332 = vadd.f32 %v8841, %v9331
      %v9333 = vpop.f32.mrb[0].mxu0
      %9334 = vmatprep.mubr.f32.mxu0 0.0
      %v9335 = vand.u32 %v7757, 4294901760
      %v9336 = vsub.f32 %v7757, %v9335
      %9337 = vmatmul.mubr.f32.gmra.mrb[0].mxu0 %v9336
      %v9338 = vpop.f32.mrb[0].mxu0
      %v9339 = vadd.f32 %v8847, %v9338
      %v9340 = vpop.f32.mrb[0].mxu0
      %9341 = vmatprep.mubr.f32.mxu0 0.0
      %v9342 = vand.u32 %v7760, 4294901760
      %v9343 = vsub.f32 %v7760, %v9342
      %9344 = vmatmul.mubr.f32.gmra.mrb[0].mxu0 %v9343
      %v9345 = vpop.f32.mrb[0].mxu0
      %v9346 = vadd.f32 %v8853, %v9345
      %v9347 = vpop.f32.mrb[0].mxu0
      %9348 = vmatprep.mubr.f32.mxu0 0.0
      %v9349 = vand.u32 %v7763, 4294901760
      %v9350 = vsub.f32 %v7763, %v9349
      %9351 = vmatmul.mubr.f32.gmra.mrb[0].mxu0 %v9350
      %v9352 = vpop.f32.mrb[0].mxu0
      %v9353 = vadd.f32 %v8859, %v9352
      %v9354 = vpop.f32.mrb[0].mxu0
      %9355 = vmatprep.mubr.f32.mxu0 0.0
      %v9356 = vand.u32 %v7766, 4294901760
      %v9357 = vsub.f32 %v7766, %v9356
      %9358 = vmatmul.mubr.f32.gmra.mrb[0].mxu0 %v9357
      %v9359 = vpop.f32.mrb[0].mxu0
      %v9360 = vadd.f32 %v8865, %v9359
      %v9361 = vpop.f32.mrb[0].mxu0
      %9362 = vmatprep.mubr.f32.mxu0 0.0
      %v9363 = vand.u32 %v7769, 4294901760
      %v9364 = vsub.f32 %v7769, %v9363
      %9365 = vmatmul.mubr.f32.gmra.mrb[0].mxu0 %v9364
      %v9366 = vpop.f32.mrb[0].mxu0
      %v9367 = vadd.f32 %v8871, %v9366
      %v9368 = vpop.f32.mrb[0].mxu0
      %9369 = vmatprep.mubr.f32.mxu0 0.0
      %v9370 = vand.u32 %v7772, 4294901760
      %v9371 = vsub.f32 %v7772, %v9370
      %9372 = vmatmul.mubr.f32.gmra.mrb[0].mxu0 %v9371
      %v9373 = vpop.f32.mrb[0].mxu0
      %v9374 = vadd.f32 %v8877, %v9373
      %v9375 = vpop.f32.mrb[0].mxu0
      %9376 = vmatprep.mubr.f32.mxu0 0.0
      %v9377 = vand.u32 %v7775, 4294901760
      %v9378 = vsub.f32 %v7775, %v9377
      %9379 = vmatmul.mubr.f32.gmra.mrb[0].mxu0 %v9378
      %v9380 = vpop.f32.mrb[0].mxu0
      %v9381 = vadd.f32 %v8883, %v9380
      %v9382 = vpop.f32.mrb[0].mxu0
      %9383 = vmatprep.mubr.f32.mxu0 0.0
      %v9384 = vand.u32 %v7778, 4294901760
      %v9385 = vsub.f32 %v7778, %v9384
      %9386 = vmatmul.mubr.f32.gmra.mrb[0].mxu0 %v9385
      %v9387 = vpop.f32.mrb[0].mxu0
      %v9388 = vadd.f32 %v8889, %v9387
      %v9389 = vpop.f32.mrb[0].mxu0
      %9390 = vmatprep.mubr.f32.mxu0 0.0
      %v9391 = vand.u32 %v7781, 4294901760
      %v9392 = vsub.f32 %v7781, %v9391
      %9393 = vmatmul.mubr.f32.gmra.mrb[0].mxu0 %v9392
      %v9394 = vpop.f32.mrb[0].mxu0
      %v9395 = vadd.f32 %v8895, %v9394
      %v9396 = vpop.f32.mrb[0].mxu0
      %9397 = vmatprep.mubr.f32.mxu0 0.0
      %v9398 = vand.u32 %v7784, 4294901760
      %v9399 = vsub.f32 %v7784, %v9398
      %9400 = vmatmul.mubr.f32.gmra.mrb[0].mxu0 %v9399
      %v9401 = vpop.f32.mrb[0].mxu0
      %v9402 = vadd.f32 %v8901, %v9401
      %v9403 = vpop.f32.mrb[0].mxu0
      %9404 = vmatprep.mubr.f32.mxu0 0.0
      %v9405 = vand.u32 %v7787, 4294901760
      %v9406 = vsub.f32 %v7787, %v9405
      %9407 = vmatmul.mubr.f32.gmra.mrb[0].mxu0 %v9406
      %v9408 = vpop.f32.mrb[0].mxu0
      %v9409 = vadd.f32 %v8907, %v9408
      %v9410 = vpop.f32.mrb[0].mxu0
      %9411 = vmatprep.mubr.f32.mxu0 0.0
      %v9412 = vand.u32 %v7790, 4294901760
      %v9413 = vsub.f32 %v7790, %v9412
      %9414 = vmatmul.mubr.f32.gmra.mrb[0].mxu0 %v9413
      %v9415 = vpop.f32.mrb[0].mxu0
      %v9416 = vadd.f32 %v8913, %v9415
      %v9417 = vpop.f32.mrb[0].mxu0
      %9418 = vmatprep.mubr.f32.mxu0 0.0
      %v9419 = vand.u32 %v7793, 4294901760
      %v9420 = vsub.f32 %v7793, %v9419
      %9421 = vmatmul.mubr.f32.gmra.mrb[0].mxu0 %v9420
      %v9422 = vpop.f32.mrb[0].mxu0
      %v9423 = vadd.f32 %v8919, %v9422
      %v9424 = vpop.f32.mrb[0].mxu0
      %9425 = vmatprep.mubr.f32.mxu0 0.0
      %v9426 = vand.u32 %v7796, 4294901760
      %v9427 = vsub.f32 %v7796, %v9426
      %9428 = vmatmul.mubr.f32.gmra.mrb[0].mxu0 %v9427
      %v9429 = vpop.f32.mrb[0].mxu0
      %v9430 = vadd.f32 %v8925, %v9429
      %v9431 = vpop.f32.mrb[0].mxu0
      %9432 = vmatprep.mubr.f32.mxu0 0.0
      %v9433 = vand.u32 %v7799, 4294901760
      %v9434 = vsub.f32 %v7799, %v9433
      %9435 = vmatmul.mubr.f32.gmra.mrb[0].mxu0 %v9434
      %v9436 = vpop.f32.mrb[0].mxu0
      %v9437 = vadd.f32 %v8931, %v9436
      %v9438 = vpop.f32.mrb[0].mxu0
      %9439 = vmatprep.mubr.f32.mxu0 0.0
      %v9440 = vand.u32 %v7802, 4294901760
      %v9441 = vsub.f32 %v7802, %v9440
      %9442 = vmatmul.mubr.f32.gmra.mrb[0].mxu0 %v9441
      %v9443 = vpop.f32.mrb[0].mxu0
      %v9444 = vadd.f32 %v8937, %v9443
      %v9445 = vpop.f32.mrb[0].mxu0
      %9446 = vmatprep.mubr.f32.mxu0 0.0
      %v9447 = vand.u32 %v7805, 4294901760
      %v9448 = vsub.f32 %v7805, %v9447
      %9449 = vmatmul.mubr.f32.gmra.mrb[0].mxu0 %v9448
      %v9450 = vpop.f32.mrb[0].mxu0
      %v9451 = vadd.f32 %v8943, %v9450
      %v9452 = vpop.f32.mrb[0].mxu0
      %9453 = vmatprep.mubr.f32.mxu0 0.0
      %v9454 = vand.u32 %v7808, 4294901760
      %v9455 = vsub.f32 %v7808, %v9454
      %9456 = vmatmul.mubr.f32.gmra.mrb[0].mxu0 %v9455
      %v9457 = vpop.f32.mrb[0].mxu0
      %v9458 = vadd.f32 %v8949, %v9457
      %v9459 = vpop.f32.mrb[0].mxu0
      %9460 = vmatprep.mubr.f32.mxu0 0.0
      %v9461 = vand.u32 %v7811, 4294901760
      %v9462 = vsub.f32 %v7811, %v9461
      %9463 = vmatmul.mubr.f32.gmra.mrb[0].mxu0 %v9462
      %v9464 = vpop.f32.mrb[0].mxu0
      %v9465 = vadd.f32 %v8955, %v9464
      %v9466 = vpop.f32.mrb[0].mxu0
      %9467 = vmatprep.mubr.f32.mxu0 0.0
      %v9468 = vand.u32 %v7814, 4294901760
      %v9469 = vsub.f32 %v7814, %v9468
      %9470 = vmatmul.mubr.f32.gmra.mrb[0].mxu0 %v9469
      %v9471 = vpop.f32.mrb[0].mxu0
      %v9472 = vadd.f32 %v8961, %v9471
      %v9473 = vpop.f32.mrb[0].mxu0
      %9474 = vmatprep.mubr.f32.mxu0 0.0
      %v9475 = vand.u32 %v7817, 4294901760
      %v9476 = vsub.f32 %v7817, %v9475
      %9477 = vmatmul.mubr.f32.gmra.mrb[0].mxu0 %v9476
      %v9478 = vpop.f32.mrb[0].mxu0
      %v9479 = vadd.f32 %v8967, %v9478
      %v9480 = vpop.f32.mrb[0].mxu0
      %9481 = vmatprep.mubr.f32.mxu0 0.0
      %v9482 = vand.u32 %v7820, 4294901760
      %v9483 = vsub.f32 %v7820, %v9482
      %9484 = vmatmul.mubr.f32.gmra.mrb[0].mxu0 %v9483
      %v9485 = vpop.f32.mrb[0].mxu0
      %v9486 = vadd.f32 %v8973, %v9485
      %v9487 = vpop.f32.mrb[0].mxu0
      %9488 = vmatprep.mubr.f32.mxu0 0.0
      %v9489 = vand.u32 %v7823, 4294901760
      %v9490 = vsub.f32 %v7823, %v9489
      %9491 = vmatmul.mubr.f32.gmra.mrb[0].mxu0 %v9490
      %v9492 = vpop.f32.mrb[0].mxu0
      %v9493 = vadd.f32 %v8979, %v9492
      %v9494 = vpop.f32.mrb[0].mxu0
      %9495 = vmatprep.mubr.f32.mxu0 0.0
      %v9496 = vand.u32 %v7826, 4294901760
      %v9497 = vsub.f32 %v7826, %v9496
      %9498 = vmatmul.mubr.f32.gmra.mrb[0].mxu0 %v9497
      %v9499 = vpop.f32.mrb[0].mxu0
      %v9500 = vadd.f32 %v8985, %v9499
      %v9501 = vpop.f32.mrb[0].mxu0
      %9502 = vmatprep.mubr.f32.mxu0 0.0
      %v9503 = vand.u32 %v7829, 4294901760
      %v9504 = vsub.f32 %v7829, %v9503
      %9505 = vmatmul.mubr.f32.gmra.mrb[0].mxu0 %v9504
      %v9506 = vpop.f32.mrb[0].mxu0
      %v9507 = vadd.f32 %v8991, %v9506
      %v9508 = vpop.f32.mrb[0].mxu0
      %9509 = vmatprep.mubr.f32.mxu0 0.0
      %v9510 = vand.u32 %v7832, 4294901760
      %v9511 = vsub.f32 %v7832, %v9510
      %9512 = vmatmul.mubr.f32.gmra.mrb[0].mxu0 %v9511
      %v9513 = vpop.f32.mrb[0].mxu0
      %v9514 = vadd.f32 %v8997, %v9513
      %v9515 = vpop.f32.mrb[0].mxu0
      %9516 = vmatprep.mubr.f32.mxu0 0.0
      %v9517 = vand.u32 %v7835, 4294901760
      %v9518 = vsub.f32 %v7835, %v9517
      %9519 = vmatmul.mubr.f32.gmra.mrb[0].mxu0 %v9518
      %v9520 = vpop.f32.mrb[0].mxu0
      %v9521 = vadd.f32 %v9003, %v9520
      %v9522 = vpop.f32.mrb[0].mxu0
      %9523 = vmatprep.mubr.f32.mxu0 0.0
      %v9524 = vand.u32 %v7838, 4294901760
      %v9525 = vsub.f32 %v7838, %v9524
      %9526 = vmatmul.mubr.f32.gmra.mrb[0].mxu0 %v9525
      %v9527 = vpop.f32.mrb[0].mxu0
      %v9528 = vadd.f32 %v9009, %v9527
      %v9529 = vpop.f32.mrb[0].mxu0
      %9530 = vmatprep.mubr.f32.mxu0 0.0
      %v9531 = vand.u32 %v7841, 4294901760
      %v9532 = vsub.f32 %v7841, %v9531
      %9533 = vmatmul.mubr.f32.gmra.mrb[0].mxu0 %v9532
      %v9534 = vpop.f32.mrb[0].mxu0
      %v9535 = vadd.f32 %v9015, %v9534
      %v9536 = vpop.f32.mrb[0].mxu0
      %9537 = vmatprep.mubr.f32.mxu0 0.0
      %v9538 = vand.u32 %v7844, 4294901760
      %v9539 = vsub.f32 %v7844, %v9538
      %9540 = vmatmul.mubr.f32.gmra.mrb[0].mxu0 %v9539
      %v9541 = vpop.f32.mrb[0].mxu0
      %v9542 = vadd.f32 %v9021, %v9541
      %v9543 = vpop.f32.mrb[0].mxu0
      %9544 = vmatprep.mubr.f32.mxu0 0.0
      %v9545 = vand.u32 %v7847, 4294901760
      %v9546 = vsub.f32 %v7847, %v9545
      %9547 = vmatmul.mubr.f32.gmra.mrb[0].mxu0 %v9546
      %v9548 = vpop.f32.mrb[0].mxu0
      %v9549 = vadd.f32 %v9027, %v9548
      %v9550 = vpop.f32.mrb[0].mxu0
      %9551 = vmatprep.mubr.f32.mxu0 0.0
      %v9552 = vand.u32 %v7850, 4294901760
      %v9553 = vsub.f32 %v7850, %v9552
      %9554 = vmatmul.mubr.f32.gmra.mrb[0].mxu0 %v9553
      %v9555 = vpop.f32.mrb[0].mxu0
      %v9556 = vadd.f32 %v9033, %v9555
      %v9557 = vpop.f32.mrb[0].mxu0
      %9558 = vmatprep.mubr.f32.mxu0 0.0
      %v9559 = vand.u32 %v7853, 4294901760
      %v9560 = vsub.f32 %v7853, %v9559
      %9561 = vmatmul.mubr.f32.gmra.mrb[0].mxu0 %v9560
      %v9562 = vpop.f32.mrb[0].mxu0
      %v9563 = vadd.f32 %v9039, %v9562
      %v9564 = vpop.f32.mrb[0].mxu0
      %9565 = vmatprep.mubr.f32.mxu0 0.0
      %v9566 = vand.u32 %v7856, 4294901760
      %v9567 = vsub.f32 %v7856, %v9566
      %9568 = vmatmul.mubr.f32.gmra.mrb[0].mxu0 %v9567
      %v9569 = vpop.f32.mrb[0].mxu0
      %v9570 = vadd.f32 %v9045, %v9569
      %v9571 = vpop.f32.mrb[0].mxu0
      %9572 = vdwg.mxu0
      %9573 = vmatprep.subr.mxu0 0.0
      %v9574 = vand.u32 %v7659, 4294901760
      %9575 = vmatpush1.msra.mxu0 %v9574
      %9576 = vmatprep.subr.mxu0 0.0
      %v9577 = vand.u32 %v7660, 4294901760
      %9578 = vmatpush1.msra.mxu0 %v9577
      %9579 = vmatprep.subr.mxu0 0.0
      %v9580 = vand.u32 %v7661, 4294901760
      %9581 = vmatpush1.msra.mxu0 %v9580
      %9582 = vmatprep.subr.mxu0 0.0
      %v9583 = vand.u32 %v7662, 4294901760
      %9584 = vmatpush1.msra.mxu0 %v9583
      %9585 = vmatprep.subr.mxu0 0.0
      %v9586 = vand.u32 %v7663, 4294901760
      %9587 = vmatpush1.msra.mxu0 %v9586
      %9588 = vmatprep.subr.mxu0 0.0
      %v9589 = vand.u32 %v7664, 4294901760
      %9590 = vmatpush1.msra.mxu0 %v9589
      %9591 = vmatprep.subr.mxu0 0.0
      %9592 = vmatpush1.msra.mxu0 0.0
      %9593 = vmatprep.subr.mxu0 0.0
      %9594 = vmatpush1.msra.mxu0 0.0
      %9595 = vmatprep.subr.mxu0 0.0
      %9596 = vmatpush1.msra.mxu0 0.0
      %9597 = vmatprep.subr.mxu0 0.0
      %9598 = vmatpush1.msra.mxu0 0.0
      %9599 = vmatprep.subr.mxu0 0.0
      %9600 = vmatpush1.msra.mxu0 0.0
      %9601 = vmatprep.subr.mxu0 0.0
      %9602 = vmatpush1.msra.mxu0 0.0
      %9603 = vmatprep.subr.mxu0 0.0
      %9604 = vmatpush1.msra.mxu0 0.0
      %9605 = vmatprep.subr.mxu0 0.0
      %9606 = vmatpush1.msra.mxu0 0.0
      %9607 = vmatprep.subr.mxu0 0.0
      %9608 = vmatpush1.msra.mxu0 0.0
      %9609 = vmatprep.subr.mxu0 0.0
      %9610 = vmatpush1.msra.mxu0 0.0
      %9611 = vmatprep.subr.mxu0 0.0
      %9612 = vmatpush1.msra.mxu0 0.0
      %9613 = vmatprep.subr.mxu0 0.0
      %9614 = vmatpush1.msra.mxu0 0.0
      %9615 = vmatprep.subr.mxu0 0.0
      %9616 = vmatpush1.msra.mxu0 0.0
      %9617 = vmatprep.subr.mxu0 0.0
      %9618 = vmatpush1.msra.mxu0 0.0
      %9619 = vmatprep.subr.mxu0 0.0
      %9620 = vmatpush1.msra.mxu0 0.0
      %9621 = vmatprep.subr.mxu0 0.0
      %9622 = vmatpush1.msra.mxu0 0.0
      %9623 = vmatprep.subr.mxu0 0.0
      %9624 = vmatpush1.msra.mxu0 0.0
      %9625 = vmatprep.subr.mxu0 0.0
      %9626 = vmatpush1.msra.mxu0 0.0
      %9627 = vmatprep.subr.mxu0 0.0
      %9628 = vmatpush1.msra.mxu0 0.0
      %9629 = vmatprep.subr.mxu0 0.0
      %9630 = vmatpush1.msra.mxu0 0.0
      %9631 = vmatprep.subr.mxu0 0.0
      %9632 = vmatpush1.msra.mxu0 0.0
      %9633 = vmatprep.subr.mxu0 0.0
      %9634 = vmatpush1.msra.mxu0 0.0
      %9635 = vmatprep.subr.mxu0 0.0
      %9636 = vmatpush1.msra.mxu0 0.0
      %9637 = vmatprep.subr.mxu0 0.0
      %9638 = vmatpush1.msra.mxu0 0.0
      %9639 = vmatprep.subr.mxu0 0.0
      %9640 = vmatpush1.msra.mxu0 0.0
      %9641 = vmatprep.subr.mxu0 0.0
      %9642 = vmatpush1.msra.mxu0 0.0
      %9643 = vmatprep.mubr.f32.mxu0 0.0
      %v9644 = vand.u32 %v7667, 4294901760
      %v9645 = vsub.f32 %v7667, %v9644
      %v9646 = vand.u32 %v9645, 4294901760
      %9647 = vmatmul.mubr.f32.gmra.mrb[0].mxu0 %v9646
      %v9648 = vpop.f32.mrb[0].mxu0
      %v9649 = vadd.f32 %v9129, %v9648
      %v9650 = vpop.f32.mrb[0].mxu0
      %9651 = vmatprep.mubr.f32.mxu0 0.0
      %v9652 = vand.u32 %v7670, 4294901760
      %v9653 = vsub.f32 %v7670, %v9652
      %v9654 = vand.u32 %v9653, 4294901760
      %9655 = vmatmul.mubr.f32.gmra.mrb[0].mxu0 %v9654
      %v9656 = vpop.f32.mrb[0].mxu0
      %v9657 = vadd.f32 %v9136, %v9656
      %v9658 = vpop.f32.mrb[0].mxu0
      %9659 = vmatprep.mubr.f32.mxu0 0.0
      %v9660 = vand.u32 %v7673, 4294901760
      %v9661 = vsub.f32 %v7673, %v9660
      %v9662 = vand.u32 %v9661, 4294901760
      %9663 = vmatmul.mubr.f32.gmra.mrb[0].mxu0 %v9662
      %v9664 = vpop.f32.mrb[0].mxu0
      %v9665 = vadd.f32 %v9143, %v9664
      %v9666 = vpop.f32.mrb[0].mxu0
      %9667 = vmatprep.mubr.f32.mxu0 0.0
      %v9668 = vand.u32 %v7676, 4294901760
      %v9669 = vsub.f32 %v7676, %v9668
      %v9670 = vand.u32 %v9669, 4294901760
      %9671 = vmatmul.mubr.f32.gmra.mrb[0].mxu0 %v9670
      %v9672 = vpop.f32.mrb[0].mxu0
      %v9673 = vadd.f32 %v9150, %v9672
      %v9674 = vpop.f32.mrb[0].mxu0
      %9675 = vmatprep.mubr.f32.mxu0 0.0
      %v9676 = vand.u32 %v7679, 4294901760
      %v9677 = vsub.f32 %v7679, %v9676
      %v9678 = vand.u32 %v9677, 4294901760
      %9679 = vmatmul.mubr.f32.gmra.mrb[0].mxu0 %v9678
      %v9680 = vpop.f32.mrb[0].mxu0
      %v9681 = vadd.f32 %v9157, %v9680
      %v9682 = vpop.f32.mrb[0].mxu0
      %9683 = vmatprep.mubr.f32.mxu0 0.0
      %v9684 = vand.u32 %v7682, 4294901760
      %v9685 = vsub.f32 %v7682, %v9684
      %v9686 = vand.u32 %v9685, 4294901760
      %9687 = vmatmul.mubr.f32.gmra.mrb[0].mxu0 %v9686
      %v9688 = vpop.f32.mrb[0].mxu0
      %v9689 = vadd.f32 %v9164, %v9688
      %v9690 = vpop.f32.mrb[0].mxu0
      %9691 = vmatprep.mubr.f32.mxu0 0.0
      %v9692 = vand.u32 %v7685, 4294901760
      %v9693 = vsub.f32 %v7685, %v9692
      %v9694 = vand.u32 %v9693, 4294901760
      %9695 = vmatmul.mubr.f32.gmra.mrb[0].mxu0 %v9694
      %v9696 = vpop.f32.mrb[0].mxu0
      %v9697 = vadd.f32 %v9171, %v9696
      %v9698 = vpop.f32.mrb[0].mxu0
      %9699 = vmatprep.mubr.f32.mxu0 0.0
      %v9700 = vand.u32 %v7688, 4294901760
      %v9701 = vsub.f32 %v7688, %v9700
      %v9702 = vand.u32 %v9701, 4294901760
      %9703 = vmatmul.mubr.f32.gmra.mrb[0].mxu0 %v9702
      %v9704 = vpop.f32.mrb[0].mxu0
      %v9705 = vadd.f32 %v9178, %v9704
      %v9706 = vpop.f32.mrb[0].mxu0
      %9707 = vmatprep.mubr.f32.mxu0 0.0
      %v9708 = vand.u32 %v7691, 4294901760
      %v9709 = vsub.f32 %v7691, %v9708
      %v9710 = vand.u32 %v9709, 4294901760
      %9711 = vmatmul.mubr.f32.gmra.mrb[0].mxu0 %v9710
      %v9712 = vpop.f32.mrb[0].mxu0
      %v9713 = vadd.f32 %v9185, %v9712
      %v9714 = vpop.f32.mrb[0].mxu0
      %9715 = vmatprep.mubr.f32.mxu0 0.0
      %v9716 = vand.u32 %v7694, 4294901760
      %v9717 = vsub.f32 %v7694, %v9716
      %v9718 = vand.u32 %v9717, 4294901760
      %9719 = vmatmul.mubr.f32.gmra.mrb[0].mxu0 %v9718
      %v9720 = vpop.f32.mrb[0].mxu0
      %v9721 = vadd.f32 %v9192, %v9720
      %v9722 = vpop.f32.mrb[0].mxu0
      %9723 = vmatprep.mubr.f32.mxu0 0.0
      %v9724 = vand.u32 %v7697, 4294901760
      %v9725 = vsub.f32 %v7697, %v9724
      %v9726 = vand.u32 %v9725, 4294901760
      %9727 = vmatmul.mubr.f32.gmra.mrb[0].mxu0 %v9726
      %v9728 = vpop.f32.mrb[0].mxu0
      %v9729 = vadd.f32 %v9199, %v9728
      %v9730 = vpop.f32.mrb[0].mxu0
      %9731 = vmatprep.mubr.f32.mxu0 0.0
      %v9732 = vand.u32 %v7700, 4294901760
      %v9733 = vsub.f32 %v7700, %v9732
      %v9734 = vand.u32 %v9733, 4294901760
      %9735 = vmatmul.mubr.f32.gmra.mrb[0].mxu0 %v9734
      %v9736 = vpop.f32.mrb[0].mxu0
      %v9737 = vadd.f32 %v9206, %v9736
      %v9738 = vpop.f32.mrb[0].mxu0
      %9739 = vmatprep.mubr.f32.mxu0 0.0
      %v9740 = vand.u32 %v7703, 4294901760
      %v9741 = vsub.f32 %v7703, %v9740
      %v9742 = vand.u32 %v9741, 4294901760
      %9743 = vmatmul.mubr.f32.gmra.mrb[0].mxu0 %v9742
      %v9744 = vpop.f32.mrb[0].mxu0
      %v9745 = vadd.f32 %v9213, %v9744
      %v9746 = vpop.f32.mrb[0].mxu0
      %9747 = vmatprep.mubr.f32.mxu0 0.0
      %v9748 = vand.u32 %v7706, 4294901760
      %v9749 = vsub.f32 %v7706, %v9748
      %v9750 = vand.u32 %v9749, 4294901760
      %9751 = vmatmul.mubr.f32.gmra.mrb[0].mxu0 %v9750
      %v9752 = vpop.f32.mrb[0].mxu0
      %v9753 = vadd.f32 %v9220, %v9752
      %v9754 = vpop.f32.mrb[0].mxu0
      %9755 = vmatprep.mubr.f32.mxu0 0.0
      %v9756 = vand.u32 %v7709, 4294901760
      %v9757 = vsub.f32 %v7709, %v9756
      %v9758 = vand.u32 %v9757, 4294901760
      %9759 = vmatmul.mubr.f32.gmra.mrb[0].mxu0 %v9758
      %v9760 = vpop.f32.mrb[0].mxu0
      %v9761 = vadd.f32 %v9227, %v9760
      %v9762 = vpop.f32.mrb[0].mxu0
      %9763 = vmatprep.mubr.f32.mxu0 0.0
      %v9764 = vand.u32 %v7712, 4294901760
      %v9765 = vsub.f32 %v7712, %v9764
      %v9766 = vand.u32 %v9765, 4294901760
      %9767 = vmatmul.mubr.f32.gmra.mrb[0].mxu0 %v9766
      %v9768 = vpop.f32.mrb[0].mxu0
      %v9769 = vadd.f32 %v9234, %v9768
      %v9770 = vpop.f32.mrb[0].mxu0
      %9771 = vmatprep.mubr.f32.mxu0 0.0
      %v9772 = vand.u32 %v7715, 4294901760
      %v9773 = vsub.f32 %v7715, %v9772
      %v9774 = vand.u32 %v9773, 4294901760
      %9775 = vmatmul.mubr.f32.gmra.mrb[0].mxu0 %v9774
      %v9776 = vpop.f32.mrb[0].mxu0
      %v9777 = vadd.f32 %v9241, %v9776
      %v9778 = vpop.f32.mrb[0].mxu0
      %9779 = vmatprep.mubr.f32.mxu0 0.0
      %v9780 = vand.u32 %v7718, 4294901760
      %v9781 = vsub.f32 %v7718, %v9780
      %v9782 = vand.u32 %v9781, 4294901760
      %9783 = vmatmul.mubr.f32.gmra.mrb[0].mxu0 %v9782
      %v9784 = vpop.f32.mrb[0].mxu0
      %v9785 = vadd.f32 %v9248, %v9784
      %v9786 = vpop.f32.mrb[0].mxu0
      %9787 = vmatprep.mubr.f32.mxu0 0.0
      %v9788 = vand.u32 %v7721, 4294901760
      %v9789 = vsub.f32 %v7721, %v9788
      %v9790 = vand.u32 %v9789, 4294901760
      %9791 = vmatmul.mubr.f32.gmra.mrb[0].mxu0 %v9790
      %v9792 = vpop.f32.mrb[0].mxu0
      %v9793 = vadd.f32 %v9255, %v9792
      %v9794 = vpop.f32.mrb[0].mxu0
      %9795 = vmatprep.mubr.f32.mxu0 0.0
      %v9796 = vand.u32 %v7724, 4294901760
      %v9797 = vsub.f32 %v7724, %v9796
      %v9798 = vand.u32 %v9797, 4294901760
      %9799 = vmatmul.mubr.f32.gmra.mrb[0].mxu0 %v9798
      %v9800 = vpop.f32.mrb[0].mxu0
      %v9801 = vadd.f32 %v9262, %v9800
      %v9802 = vpop.f32.mrb[0].mxu0
      %9803 = vmatprep.mubr.f32.mxu0 0.0
      %v9804 = vand.u32 %v7727, 4294901760
      %v9805 = vsub.f32 %v7727, %v9804
      %v9806 = vand.u32 %v9805, 4294901760
      %9807 = vmatmul.mubr.f32.gmra.mrb[0].mxu0 %v9806
      %v9808 = vpop.f32.mrb[0].mxu0
      %v9809 = vadd.f32 %v9269, %v9808
      %v9810 = vpop.f32.mrb[0].mxu0
      %9811 = vmatprep.mubr.f32.mxu0 0.0
      %v9812 = vand.u32 %v7730, 4294901760
      %v9813 = vsub.f32 %v7730, %v9812
      %v9814 = vand.u32 %v9813, 4294901760
      %9815 = vmatmul.mubr.f32.gmra.mrb[0].mxu0 %v9814
      %v9816 = vpop.f32.mrb[0].mxu0
      %v9817 = vadd.f32 %v9276, %v9816
      %v9818 = vpop.f32.mrb[0].mxu0
      %9819 = vmatprep.mubr.f32.mxu0 0.0
      %v9820 = vand.u32 %v7733, 4294901760
      %v9821 = vsub.f32 %v7733, %v9820
      %v9822 = vand.u32 %v9821, 4294901760
      %9823 = vmatmul.mubr.f32.gmra.mrb[0].mxu0 %v9822
      %v9824 = vpop.f32.mrb[0].mxu0
      %v9825 = vadd.f32 %v9283, %v9824
      %v9826 = vpop.f32.mrb[0].mxu0
      %9827 = vmatprep.mubr.f32.mxu0 0.0
      %v9828 = vand.u32 %v7736, 4294901760
      %v9829 = vsub.f32 %v7736, %v9828
      %v9830 = vand.u32 %v9829, 4294901760
      %9831 = vmatmul.mubr.f32.gmra.mrb[0].mxu0 %v9830
      %v9832 = vpop.f32.mrb[0].mxu0
      %v9833 = vadd.f32 %v9290, %v9832
      %v9834 = vpop.f32.mrb[0].mxu0
      %9835 = vmatprep.mubr.f32.mxu0 0.0
      %v9836 = vand.u32 %v7739, 4294901760
      %v9837 = vsub.f32 %v7739, %v9836
      %v9838 = vand.u32 %v9837, 4294901760
      %9839 = vmatmul.mubr.f32.gmra.mrb[0].mxu0 %v9838
      %v9840 = vpop.f32.mrb[0].mxu0
      %v9841 = vadd.f32 %v9297, %v9840
      %v9842 = vpop.f32.mrb[0].mxu0
      %9843 = vmatprep.mubr.f32.mxu0 0.0
      %v9844 = vand.u32 %v7742, 4294901760
      %v9845 = vsub.f32 %v7742, %v9844
      %v9846 = vand.u32 %v9845, 4294901760
      %9847 = vmatmul.mubr.f32.gmra.mrb[0].mxu0 %v9846
      %v9848 = vpop.f32.mrb[0].mxu0
      %v9849 = vadd.f32 %v9304, %v9848
      %v9850 = vpop.f32.mrb[0].mxu0
      %9851 = vmatprep.mubr.f32.mxu0 0.0
      %v9852 = vand.u32 %v7745, 4294901760
      %v9853 = vsub.f32 %v7745, %v9852
      %v9854 = vand.u32 %v9853, 4294901760
      %9855 = vmatmul.mubr.f32.gmra.mrb[0].mxu0 %v9854
      %v9856 = vpop.f32.mrb[0].mxu0
      %v9857 = vadd.f32 %v9311, %v9856
      %v9858 = vpop.f32.mrb[0].mxu0
      %9859 = vmatprep.mubr.f32.mxu0 0.0
      %v9860 = vand.u32 %v7748, 4294901760
      %v9861 = vsub.f32 %v7748, %v9860
      %v9862 = vand.u32 %v9861, 4294901760
      %9863 = vmatmul.mubr.f32.gmra.mrb[0].mxu0 %v9862
      %v9864 = vpop.f32.mrb[0].mxu0
      %v9865 = vadd.f32 %v9318, %v9864
      %v9866 = vpop.f32.mrb[0].mxu0
      %9867 = vmatprep.mubr.f32.mxu0 0.0
      %v9868 = vand.u32 %v7751, 4294901760
      %v9869 = vsub.f32 %v7751, %v9868
      %v9870 = vand.u32 %v9869, 4294901760
      %9871 = vmatmul.mubr.f32.gmra.mrb[0].mxu0 %v9870
      %v9872 = vpop.f32.mrb[0].mxu0
      %v9873 = vadd.f32 %v9325, %v9872
      %v9874 = vpop.f32.mrb[0].mxu0
      %9875 = vmatprep.mubr.f32.mxu0 0.0
      %v9876 = vand.u32 %v7754, 4294901760
      %v9877 = vsub.f32 %v7754, %v9876
      %v9878 = vand.u32 %v9877, 4294901760
      %9879 = vmatmul.mubr.f32.gmra.mrb[0].mxu0 %v9878
      %v9880 = vpop.f32.mrb[0].mxu0
      %v9881 = vadd.f32 %v9332, %v9880
      %v9882 = vpop.f32.mrb[0].mxu0
      %9883 = vmatprep.mubr.f32.mxu0 0.0
      %v9884 = vand.u32 %v7757, 4294901760
      %v9885 = vsub.f32 %v7757, %v9884
      %v9886 = vand.u32 %v9885, 4294901760
      %9887 = vmatmul.mubr.f32.gmra.mrb[0].mxu0 %v9886
      %v9888 = vpop.f32.mrb[0].mxu0
      %v9889 = vadd.f32 %v9339, %v9888
      %v9890 = vpop.f32.mrb[0].mxu0
      %9891 = vmatprep.mubr.f32.mxu0 0.0
      %v9892 = vand.u32 %v7760, 4294901760
      %v9893 = vsub.f32 %v7760, %v9892
      %v9894 = vand.u32 %v9893, 4294901760
      %9895 = vmatmul.mubr.f32.gmra.mrb[0].mxu0 %v9894
      %v9896 = vpop.f32.mrb[0].mxu0
      %v9897 = vadd.f32 %v9346, %v9896
      %v9898 = vpop.f32.mrb[0].mxu0
      %9899 = vmatprep.mubr.f32.mxu0 0.0
      %v9900 = vand.u32 %v7763, 4294901760
      %v9901 = vsub.f32 %v7763, %v9900
      %v9902 = vand.u32 %v9901, 4294901760
      %9903 = vmatmul.mubr.f32.gmra.mrb[0].mxu0 %v9902
      %v9904 = vpop.f32.mrb[0].mxu0
      %v9905 = vadd.f32 %v9353, %v9904
      %v9906 = vpop.f32.mrb[0].mxu0
      %9907 = vmatprep.mubr.f32.mxu0 0.0
      %v9908 = vand.u32 %v7766, 4294901760
      %v9909 = vsub.f32 %v7766, %v9908
      %v9910 = vand.u32 %v9909, 4294901760
      %9911 = vmatmul.mubr.f32.gmra.mrb[0].mxu0 %v9910
      %v9912 = vpop.f32.mrb[0].mxu0
      %v9913 = vadd.f32 %v9360, %v9912
      %v9914 = vpop.f32.mrb[0].mxu0
      %9915 = vmatprep.mubr.f32.mxu0 0.0
      %v9916 = vand.u32 %v7769, 4294901760
      %v9917 = vsub.f32 %v7769, %v9916
      %v9918 = vand.u32 %v9917, 4294901760
      %9919 = vmatmul.mubr.f32.gmra.mrb[0].mxu0 %v9918
      %v9920 = vpop.f32.mrb[0].mxu0
      %v9921 = vadd.f32 %v9367, %v9920
      %v9922 = vpop.f32.mrb[0].mxu0
      %9923 = vmatprep.mubr.f32.mxu0 0.0
      %v9924 = vand.u32 %v7772, 4294901760
      %v9925 = vsub.f32 %v7772, %v9924
      %v9926 = vand.u32 %v9925, 4294901760
      %9927 = vmatmul.mubr.f32.gmra.mrb[0].mxu0 %v9926
      %v9928 = vpop.f32.mrb[0].mxu0
      %v9929 = vadd.f32 %v9374, %v9928
      %v9930 = vpop.f32.mrb[0].mxu0
      %9931 = vmatprep.mubr.f32.mxu0 0.0
      %v9932 = vand.u32 %v7775, 4294901760
      %v9933 = vsub.f32 %v7775, %v9932
      %v9934 = vand.u32 %v9933, 4294901760
      %9935 = vmatmul.mubr.f32.gmra.mrb[0].mxu0 %v9934
      %v9936 = vpop.f32.mrb[0].mxu0
      %v9937 = vadd.f32 %v9381, %v9936
      %v9938 = vpop.f32.mrb[0].mxu0
      %9939 = vmatprep.mubr.f32.mxu0 0.0
      %v9940 = vand.u32 %v7778, 4294901760
      %v9941 = vsub.f32 %v7778, %v9940
      %v9942 = vand.u32 %v9941, 4294901760
      %9943 = vmatmul.mubr.f32.gmra.mrb[0].mxu0 %v9942
      %v9944 = vpop.f32.mrb[0].mxu0
      %v9945 = vadd.f32 %v9388, %v9944
      %v9946 = vpop.f32.mrb[0].mxu0
      %9947 = vmatprep.mubr.f32.mxu0 0.0
      %v9948 = vand.u32 %v7781, 4294901760
      %v9949 = vsub.f32 %v7781, %v9948
      %v9950 = vand.u32 %v9949, 4294901760
      %9951 = vmatmul.mubr.f32.gmra.mrb[0].mxu0 %v9950
      %v9952 = vpop.f32.mrb[0].mxu0
      %v9953 = vadd.f32 %v9395, %v9952
      %v9954 = vpop.f32.mrb[0].mxu0
      %9955 = vmatprep.mubr.f32.mxu0 0.0
      %v9956 = vand.u32 %v7784, 4294901760
      %v9957 = vsub.f32 %v7784, %v9956
      %v9958 = vand.u32 %v9957, 4294901760
      %9959 = vmatmul.mubr.f32.gmra.mrb[0].mxu0 %v9958
      %v9960 = vpop.f32.mrb[0].mxu0
      %v9961 = vadd.f32 %v9402, %v9960
      %v9962 = vpop.f32.mrb[0].mxu0
      %9963 = vmatprep.mubr.f32.mxu0 0.0
      %v9964 = vand.u32 %v7787, 4294901760
      %v9965 = vsub.f32 %v7787, %v9964
      %v9966 = vand.u32 %v9965, 4294901760
      %9967 = vmatmul.mubr.f32.gmra.mrb[0].mxu0 %v9966
      %v9968 = vpop.f32.mrb[0].mxu0
      %v9969 = vadd.f32 %v9409, %v9968
      %v9970 = vpop.f32.mrb[0].mxu0
      %9971 = vmatprep.mubr.f32.mxu0 0.0
      %v9972 = vand.u32 %v7790, 4294901760
      %v9973 = vsub.f32 %v7790, %v9972
      %v9974 = vand.u32 %v9973, 4294901760
      %9975 = vmatmul.mubr.f32.gmra.mrb[0].mxu0 %v9974
      %v9976 = vpop.f32.mrb[0].mxu0
      %v9977 = vadd.f32 %v9416, %v9976
      %v9978 = vpop.f32.mrb[0].mxu0
      %9979 = vmatprep.mubr.f32.mxu0 0.0
      %v9980 = vand.u32 %v7793, 4294901760
      %v9981 = vsub.f32 %v7793, %v9980
      %v9982 = vand.u32 %v9981, 4294901760
      %9983 = vmatmul.mubr.f32.gmra.mrb[0].mxu0 %v9982
      %v9984 = vpop.f32.mrb[0].mxu0
      %v9985 = vadd.f32 %v9423, %v9984
      %v9986 = vpop.f32.mrb[0].mxu0
      %9987 = vmatprep.mubr.f32.mxu0 0.0
      %v9988 = vand.u32 %v7796, 4294901760
      %v9989 = vsub.f32 %v7796, %v9988
      %v9990 = vand.u32 %v9989, 4294901760
      %9991 = vmatmul.mubr.f32.gmra.mrb[0].mxu0 %v9990
      %v9992 = vpop.f32.mrb[0].mxu0
      %v9993 = vadd.f32 %v9430, %v9992
      %v9994 = vpop.f32.mrb[0].mxu0
      %9995 = vmatprep.mubr.f32.mxu0 0.0
      %v9996 = vand.u32 %v7799, 4294901760
      %v9997 = vsub.f32 %v7799, %v9996
      %v9998 = vand.u32 %v9997, 4294901760
      %9999 = vmatmul.mubr.f32.gmra.mrb[0].mxu0 %v9998
      %v10000 = vpop.f32.mrb[0].mxu0
      %v10001 = vadd.f32 %v9437, %v10000
      %v10002 = vpop.f32.mrb[0].mxu0
      %10003 = vmatprep.mubr.f32.mxu0 0.0
      %v10004 = vand.u32 %v7802, 4294901760
      %v10005 = vsub.f32 %v7802, %v10004
      %v10006 = vand.u32 %v10005, 4294901760
      %10007 = vmatmul.mubr.f32.gmra.mrb[0].mxu0 %v10006
      %v10008 = vpop.f32.mrb[0].mxu0
      %v10009 = vadd.f32 %v9444, %v10008
      %v10010 = vpop.f32.mrb[0].mxu0
      %10011 = vmatprep.mubr.f32.mxu0 0.0
      %v10012 = vand.u32 %v7805, 4294901760
      %v10013 = vsub.f32 %v7805, %v10012
      %v10014 = vand.u32 %v10013, 4294901760
      %10015 = vmatmul.mubr.f32.gmra.mrb[0].mxu0 %v10014
      %v10016 = vpop.f32.mrb[0].mxu0
      %v10017 = vadd.f32 %v9451, %v10016
      %v10018 = vpop.f32.mrb[0].mxu0
      %10019 = vmatprep.mubr.f32.mxu0 0.0
      %v10020 = vand.u32 %v7808, 4294901760
      %v10021 = vsub.f32 %v7808, %v10020
      %v10022 = vand.u32 %v10021, 4294901760
      %10023 = vmatmul.mubr.f32.gmra.mrb[0].mxu0 %v10022
      %v10024 = vpop.f32.mrb[0].mxu0
      %v10025 = vadd.f32 %v9458, %v10024
      %v10026 = vpop.f32.mrb[0].mxu0
      %10027 = vmatprep.mubr.f32.mxu0 0.0
      %v10028 = vand.u32 %v7811, 4294901760
      %v10029 = vsub.f32 %v7811, %v10028
      %v10030 = vand.u32 %v10029, 4294901760
      %10031 = vmatmul.mubr.f32.gmra.mrb[0].mxu0 %v10030
      %v10032 = vpop.f32.mrb[0].mxu0
      %v10033 = vadd.f32 %v9465, %v10032
      %v10034 = vpop.f32.mrb[0].mxu0
      %10035 = vmatprep.mubr.f32.mxu0 0.0
      %v10036 = vand.u32 %v7814, 4294901760
      %v10037 = vsub.f32 %v7814, %v10036
      %v10038 = vand.u32 %v10037, 4294901760
      %10039 = vmatmul.mubr.f32.gmra.mrb[0].mxu0 %v10038
      %v10040 = vpop.f32.mrb[0].mxu0
      %v10041 = vadd.f32 %v9472, %v10040
      %v10042 = vpop.f32.mrb[0].mxu0
      %10043 = vmatprep.mubr.f32.mxu0 0.0
      %v10044 = vand.u32 %v7817, 4294901760
      %v10045 = vsub.f32 %v7817, %v10044
      %v10046 = vand.u32 %v10045, 4294901760
      %10047 = vmatmul.mubr.f32.gmra.mrb[0].mxu0 %v10046
      %v10048 = vpop.f32.mrb[0].mxu0
      %v10049 = vadd.f32 %v9479, %v10048
      %v10050 = vpop.f32.mrb[0].mxu0
      %10051 = vmatprep.mubr.f32.mxu0 0.0
      %v10052 = vand.u32 %v7820, 4294901760
      %v10053 = vsub.f32 %v7820, %v10052
      %v10054 = vand.u32 %v10053, 4294901760
      %10055 = vmatmul.mubr.f32.gmra.mrb[0].mxu0 %v10054
      %v10056 = vpop.f32.mrb[0].mxu0
      %v10057 = vadd.f32 %v9486, %v10056
      %v10058 = vpop.f32.mrb[0].mxu0
      %10059 = vmatprep.mubr.f32.mxu0 0.0
      %v10060 = vand.u32 %v7823, 4294901760
      %v10061 = vsub.f32 %v7823, %v10060
      %v10062 = vand.u32 %v10061, 4294901760
      %10063 = vmatmul.mubr.f32.gmra.mrb[0].mxu0 %v10062
      %v10064 = vpop.f32.mrb[0].mxu0
      %v10065 = vadd.f32 %v9493, %v10064
      %v10066 = vpop.f32.mrb[0].mxu0
      %10067 = vmatprep.mubr.f32.mxu0 0.0
      %v10068 = vand.u32 %v7826, 4294901760
      %v10069 = vsub.f32 %v7826, %v10068
      %v10070 = vand.u32 %v10069, 4294901760
      %10071 = vmatmul.mubr.f32.gmra.mrb[0].mxu0 %v10070
      %v10072 = vpop.f32.mrb[0].mxu0
      %v10073 = vadd.f32 %v9500, %v10072
      %v10074 = vpop.f32.mrb[0].mxu0
      %10075 = vmatprep.mubr.f32.mxu0 0.0
      %v10076 = vand.u32 %v7829, 4294901760
      %v10077 = vsub.f32 %v7829, %v10076
      %v10078 = vand.u32 %v10077, 4294901760
      %10079 = vmatmul.mubr.f32.gmra.mrb[0].mxu0 %v10078
      %v10080 = vpop.f32.mrb[0].mxu0
      %v10081 = vadd.f32 %v9507, %v10080
      %v10082 = vpop.f32.mrb[0].mxu0
      %10083 = vmatprep.mubr.f32.mxu0 0.0
      %v10084 = vand.u32 %v7832, 4294901760
      %v10085 = vsub.f32 %v7832, %v10084
      %v10086 = vand.u32 %v10085, 4294901760
      %10087 = vmatmul.mubr.f32.gmra.mrb[0].mxu0 %v10086
      %v10088 = vpop.f32.mrb[0].mxu0
      %v10089 = vadd.f32 %v9514, %v10088
      %v10090 = vpop.f32.mrb[0].mxu0
      %10091 = vmatprep.mubr.f32.mxu0 0.0
      %v10092 = vand.u32 %v7835, 4294901760
      %v10093 = vsub.f32 %v7835, %v10092
      %v10094 = vand.u32 %v10093, 4294901760
      %10095 = vmatmul.mubr.f32.gmra.mrb[0].mxu0 %v10094
      %v10096 = vpop.f32.mrb[0].mxu0
      %v10097 = vadd.f32 %v9521, %v10096
      %v10098 = vpop.f32.mrb[0].mxu0
      %10099 = vmatprep.mubr.f32.mxu0 0.0
      %v10100 = vand.u32 %v7838, 4294901760
      %v10101 = vsub.f32 %v7838, %v10100
      %v10102 = vand.u32 %v10101, 4294901760
      %10103 = vmatmul.mubr.f32.gmra.mrb[0].mxu0 %v10102
      %v10104 = vpop.f32.mrb[0].mxu0
      %v10105 = vadd.f32 %v9528, %v10104
      %v10106 = vpop.f32.mrb[0].mxu0
      %10107 = vmatprep.mubr.f32.mxu0 0.0
      %v10108 = vand.u32 %v7841, 4294901760
      %v10109 = vsub.f32 %v7841, %v10108
      %v10110 = vand.u32 %v10109, 4294901760
      %10111 = vmatmul.mubr.f32.gmra.mrb[0].mxu0 %v10110
      %v10112 = vpop.f32.mrb[0].mxu0
      %v10113 = vadd.f32 %v9535, %v10112
      %v10114 = vpop.f32.mrb[0].mxu0
      %10115 = vmatprep.mubr.f32.mxu0 0.0
      %v10116 = vand.u32 %v7844, 4294901760
      %v10117 = vsub.f32 %v7844, %v10116
      %v10118 = vand.u32 %v10117, 4294901760
      %10119 = vmatmul.mubr.f32.gmra.mrb[0].mxu0 %v10118
      %v10120 = vpop.f32.mrb[0].mxu0
      %v10121 = vadd.f32 %v9542, %v10120
      %v10122 = vpop.f32.mrb[0].mxu0
      %10123 = vmatprep.mubr.f32.mxu0 0.0
      %v10124 = vand.u32 %v7847, 4294901760
      %v10125 = vsub.f32 %v7847, %v10124
      %v10126 = vand.u32 %v10125, 4294901760
      %10127 = vmatmul.mubr.f32.gmra.mrb[0].mxu0 %v10126
      %v10128 = vpop.f32.mrb[0].mxu0
      %v10129 = vadd.f32 %v9549, %v10128
      %v10130 = vpop.f32.mrb[0].mxu0
      %10131 = vmatprep.mubr.f32.mxu0 0.0
      %v10132 = vand.u32 %v7850, 4294901760
      %v10133 = vsub.f32 %v7850, %v10132
      %v10134 = vand.u32 %v10133, 4294901760
      %10135 = vmatmul.mubr.f32.gmra.mrb[0].mxu0 %v10134
      %v10136 = vpop.f32.mrb[0].mxu0
      %v10137 = vadd.f32 %v9556, %v10136
      %v10138 = vpop.f32.mrb[0].mxu0
      %10139 = vmatprep.mubr.f32.mxu0 0.0
      %v10140 = vand.u32 %v7853, 4294901760
      %v10141 = vsub.f32 %v7853, %v10140
      %v10142 = vand.u32 %v10141, 4294901760
      %10143 = vmatmul.mubr.f32.gmra.mrb[0].mxu0 %v10142
      %v10144 = vpop.f32.mrb[0].mxu0
      %v10145 = vadd.f32 %v9563, %v10144
      %v10146 = vpop.f32.mrb[0].mxu0
      %10147 = vmatprep.mubr.f32.mxu0 0.0
      %v10148 = vand.u32 %v7856, 4294901760
      %v10149 = vsub.f32 %v7856, %v10148
      %v10150 = vand.u32 %v10149, 4294901760
      %10151 = vmatmul.mubr.f32.gmra.mrb[0].mxu0 %v10150
      %v10152 = vpop.f32.mrb[0].mxu0
      %v10153 = vadd.f32 %v9570, %v10152
      %v10154 = vpop.f32.mrb[0].mxu0
      %10155 = vdwg.mxu0
      %10156 = vmatprep.subr.mxu0 0.0
      %v10157 = vand.u32 %v7659, 4294901760
      %v10158 = vsub.f32 %v7659, %v10157
      %v10159 = vand.u32 %v10158, 4294901760
      %10160 = vmatpush1.msra.mxu0 %v10159
      %10161 = vmatprep.subr.mxu0 0.0
      %v10162 = vand.u32 %v7660, 4294901760
      %v10163 = vsub.f32 %v7660, %v10162
      %v10164 = vand.u32 %v10163, 4294901760
      %10165 = vmatpush1.msra.mxu0 %v10164
      %10166 = vmatprep.subr.mxu0 0.0
      %v10167 = vand.u32 %v7661, 4294901760
      %v10168 = vsub.f32 %v7661, %v10167
      %v10169 = vand.u32 %v10168, 4294901760
      %10170 = vmatpush1.msra.mxu0 %v10169
      %10171 = vmatprep.subr.mxu0 0.0
      %v10172 = vand.u32 %v7662, 4294901760
      %v10173 = vsub.f32 %v7662, %v10172
      %v10174 = vand.u32 %v10173, 4294901760
      %10175 = vmatpush1.msra.mxu0 %v10174
      %10176 = vmatprep.subr.mxu0 0.0
      %v10177 = vand.u32 %v7663, 4294901760
      %v10178 = vsub.f32 %v7663, %v10177
      %v10179 = vand.u32 %v10178, 4294901760
      %10180 = vmatpush1.msra.mxu0 %v10179
      %10181 = vmatprep.subr.mxu0 0.0
      %v10182 = vand.u32 %v7664, 4294901760
      %v10183 = vsub.f32 %v7664, %v10182
      %v10184 = vand.u32 %v10183, 4294901760
      %10185 = vmatpush1.msra.mxu0 %v10184
      %10186 = vmatprep.subr.mxu0 0.0
      %10187 = vmatpush1.msra.mxu0 0.0
      %10188 = vmatprep.subr.mxu0 0.0
      %10189 = vmatpush1.msra.mxu0 0.0
      %10190 = vmatprep.subr.mxu0 0.0
      %10191 = vmatpush1.msra.mxu0 0.0
      %10192 = vmatprep.subr.mxu0 0.0
      %10193 = vmatpush1.msra.mxu0 0.0
      %10194 = vmatprep.subr.mxu0 0.0
      %10195 = vmatpush1.msra.mxu0 0.0
      %10196 = vmatprep.subr.mxu0 0.0
      %10197 = vmatpush1.msra.mxu0 0.0
      %10198 = vmatprep.subr.mxu0 0.0
      %10199 = vmatpush1.msra.mxu0 0.0
      %10200 = vmatprep.subr.mxu0 0.0
      %10201 = vmatpush1.msra.mxu0 0.0
      %10202 = vmatprep.subr.mxu0 0.0
      %10203 = vmatpush1.msra.mxu0 0.0
      %10204 = vmatprep.subr.mxu0 0.0
      %10205 = vmatpush1.msra.mxu0 0.0
      %10206 = vmatprep.subr.mxu0 0.0
      %10207 = vmatpush1.msra.mxu0 0.0
      %10208 = vmatprep.subr.mxu0 0.0
      %10209 = vmatpush1.msra.mxu0 0.0
      %10210 = vmatprep.subr.mxu0 0.0
      %10211 = vmatpush1.msra.mxu0 0.0
      %10212 = vmatprep.subr.mxu0 0.0
      %10213 = vmatpush1.msra.mxu0 0.0
      %10214 = vmatprep.subr.mxu0 0.0
      %10215 = vmatpush1.msra.mxu0 0.0
      %10216 = vmatprep.subr.mxu0 0.0
      %10217 = vmatpush1.msra.mxu0 0.0
      %10218 = vmatprep.subr.mxu0 0.0
      %10219 = vmatpush1.msra.mxu0 0.0
      %10220 = vmatprep.subr.mxu0 0.0
      %10221 = vmatpush1.msra.mxu0 0.0
      %10222 = vmatprep.subr.mxu0 0.0
      %10223 = vmatpush1.msra.mxu0 0.0
      %10224 = vmatprep.subr.mxu0 0.0
      %10225 = vmatpush1.msra.mxu0 0.0
      %10226 = vmatprep.subr.mxu0 0.0
      %10227 = vmatpush1.msra.mxu0 0.0
      %10228 = vmatprep.subr.mxu0 0.0
      %10229 = vmatpush1.msra.mxu0 0.0
      %10230 = vmatprep.subr.mxu0 0.0
      %10231 = vmatpush1.msra.mxu0 0.0
      %10232 = vmatprep.subr.mxu0 0.0
      %10233 = vmatpush1.msra.mxu0 0.0
      %10234 = vmatprep.subr.mxu0 0.0
      %10235 = vmatpush1.msra.mxu0 0.0
      %10236 = vmatprep.subr.mxu0 0.0
      %10237 = vmatpush1.msra.mxu0 0.0
      %10238 = vmatprep.mubr.f32.mxu0 0.0
      %v10239 = vand.u32 %v7667, 4294901760
      %10240 = vmatmul.mubr.f32.gmra.mrb[0].mxu0 %v10239
      %v10241 = vpop.f32.mrb[0].mxu0
      %v10242 = vadd.f32 %v9649, %v10241
      %v10243 = vpop.f32.mrb[0].mxu0
      %10244 = vmatprep.mubr.f32.mxu0 0.0
      %v10245 = vand.u32 %v7670, 4294901760
      %10246 = vmatmul.mubr.f32.gmra.mrb[0].mxu0 %v10245
      %v10247 = vpop.f32.mrb[0].mxu0
      %v10248 = vadd.f32 %v9657, %v10247
      %v10249 = vpop.f32.mrb[0].mxu0
      %10250 = vmatprep.mubr.f32.mxu0 0.0
      %v10251 = vand.u32 %v7673, 4294901760
      %10252 = vmatmul.mubr.f32.gmra.mrb[0].mxu0 %v10251
      %v10253 = vpop.f32.mrb[0].mxu0
      %v10254 = vadd.f32 %v9665, %v10253
      %v10255 = vpop.f32.mrb[0].mxu0
      %10256 = vmatprep.mubr.f32.mxu0 0.0
      %v10257 = vand.u32 %v7676, 4294901760
      %10258 = vmatmul.mubr.f32.gmra.mrb[0].mxu0 %v10257
      %v10259 = vpop.f32.mrb[0].mxu0
      %v10260 = vadd.f32 %v9673, %v10259
      %v10261 = vpop.f32.mrb[0].mxu0
      %10262 = vmatprep.mubr.f32.mxu0 0.0
      %v10263 = vand.u32 %v7679, 4294901760
      %10264 = vmatmul.mubr.f32.gmra.mrb[0].mxu0 %v10263
      %v10265 = vpop.f32.mrb[0].mxu0
      %v10266 = vadd.f32 %v9681, %v10265
      %v10267 = vpop.f32.mrb[0].mxu0
      %10268 = vmatprep.mubr.f32.mxu0 0.0
      %v10269 = vand.u32 %v7682, 4294901760
      %10270 = vmatmul.mubr.f32.gmra.mrb[0].mxu0 %v10269
      %v10271 = vpop.f32.mrb[0].mxu0
      %v10272 = vadd.f32 %v9689, %v10271
      %v10273 = vpop.f32.mrb[0].mxu0
      %10274 = vmatprep.mubr.f32.mxu0 0.0
      %v10275 = vand.u32 %v7685, 4294901760
      %10276 = vmatmul.mubr.f32.gmra.mrb[0].mxu0 %v10275
      %v10277 = vpop.f32.mrb[0].mxu0
      %v10278 = vadd.f32 %v9697, %v10277
      %v10279 = vpop.f32.mrb[0].mxu0
      %10280 = vmatprep.mubr.f32.mxu0 0.0
      %v10281 = vand.u32 %v7688, 4294901760
      %10282 = vmatmul.mubr.f32.gmra.mrb[0].mxu0 %v10281
      %v10283 = vpop.f32.mrb[0].mxu0
      %v10284 = vadd.f32 %v9705, %v10283
      %v10285 = vpop.f32.mrb[0].mxu0
      %10286 = vmatprep.mubr.f32.mxu0 0.0
      %v10287 = vand.u32 %v7691, 4294901760
      %10288 = vmatmul.mubr.f32.gmra.mrb[0].mxu0 %v10287
      %v10289 = vpop.f32.mrb[0].mxu0
      %v10290 = vadd.f32 %v9713, %v10289
      %v10291 = vpop.f32.mrb[0].mxu0
      %10292 = vmatprep.mubr.f32.mxu0 0.0
      %v10293 = vand.u32 %v7694, 4294901760
      %10294 = vmatmul.mubr.f32.gmra.mrb[0].mxu0 %v10293
      %v10295 = vpop.f32.mrb[0].mxu0
      %v10296 = vadd.f32 %v9721, %v10295
      %v10297 = vpop.f32.mrb[0].mxu0
      %10298 = vmatprep.mubr.f32.mxu0 0.0
      %v10299 = vand.u32 %v7697, 4294901760
      %10300 = vmatmul.mubr.f32.gmra.mrb[0].mxu0 %v10299
      %v10301 = vpop.f32.mrb[0].mxu0
      %v10302 = vadd.f32 %v9729, %v10301
      %v10303 = vpop.f32.mrb[0].mxu0
      %10304 = vmatprep.mubr.f32.mxu0 0.0
      %v10305 = vand.u32 %v7700, 4294901760
      %10306 = vmatmul.mubr.f32.gmra.mrb[0].mxu0 %v10305
      %v10307 = vpop.f32.mrb[0].mxu0
      %v10308 = vadd.f32 %v9737, %v10307
      %v10309 = vpop.f32.mrb[0].mxu0
      %10310 = vmatprep.mubr.f32.mxu0 0.0
      %v10311 = vand.u32 %v7703, 4294901760
      %10312 = vmatmul.mubr.f32.gmra.mrb[0].mxu0 %v10311
      %v10313 = vpop.f32.mrb[0].mxu0
      %v10314 = vadd.f32 %v9745, %v10313
      %v10315 = vpop.f32.mrb[0].mxu0
      %10316 = vmatprep.mubr.f32.mxu0 0.0
      %v10317 = vand.u32 %v7706, 4294901760
      %10318 = vmatmul.mubr.f32.gmra.mrb[0].mxu0 %v10317
      %v10319 = vpop.f32.mrb[0].mxu0
      %v10320 = vadd.f32 %v9753, %v10319
      %v10321 = vpop.f32.mrb[0].mxu0
      %10322 = vmatprep.mubr.f32.mxu0 0.0
      %v10323 = vand.u32 %v7709, 4294901760
      %10324 = vmatmul.mubr.f32.gmra.mrb[0].mxu0 %v10323
      %v10325 = vpop.f32.mrb[0].mxu0
      %v10326 = vadd.f32 %v9761, %v10325
      %v10327 = vpop.f32.mrb[0].mxu0
      %10328 = vmatprep.mubr.f32.mxu0 0.0
      %v10329 = vand.u32 %v7712, 4294901760
      %10330 = vmatmul.mubr.f32.gmra.mrb[0].mxu0 %v10329
      %v10331 = vpop.f32.mrb[0].mxu0
      %v10332 = vadd.f32 %v9769, %v10331
      %v10333 = vpop.f32.mrb[0].mxu0
      %10334 = vmatprep.mubr.f32.mxu0 0.0
      %v10335 = vand.u32 %v7715, 4294901760
      %10336 = vmatmul.mubr.f32.gmra.mrb[0].mxu0 %v10335
      %v10337 = vpop.f32.mrb[0].mxu0
      %v10338 = vadd.f32 %v9777, %v10337
      %v10339 = vpop.f32.mrb[0].mxu0
      %10340 = vmatprep.mubr.f32.mxu0 0.0
      %v10341 = vand.u32 %v7718, 4294901760
      %10342 = vmatmul.mubr.f32.gmra.mrb[0].mxu0 %v10341
      %v10343 = vpop.f32.mrb[0].mxu0
      %v10344 = vadd.f32 %v9785, %v10343
      %v10345 = vpop.f32.mrb[0].mxu0
      %10346 = vmatprep.mubr.f32.mxu0 0.0
      %v10347 = vand.u32 %v7721, 4294901760
      %10348 = vmatmul.mubr.f32.gmra.mrb[0].mxu0 %v10347
      %v10349 = vpop.f32.mrb[0].mxu0
      %v10350 = vadd.f32 %v9793, %v10349
      %v10351 = vpop.f32.mrb[0].mxu0
      %10352 = vmatprep.mubr.f32.mxu0 0.0
      %v10353 = vand.u32 %v7724, 4294901760
      %10354 = vmatmul.mubr.f32.gmra.mrb[0].mxu0 %v10353
      %v10355 = vpop.f32.mrb[0].mxu0
      %v10356 = vadd.f32 %v9801, %v10355
      %v10357 = vpop.f32.mrb[0].mxu0
      %10358 = vmatprep.mubr.f32.mxu0 0.0
      %v10359 = vand.u32 %v7727, 4294901760
      %10360 = vmatmul.mubr.f32.gmra.mrb[0].mxu0 %v10359
      %v10361 = vpop.f32.mrb[0].mxu0
      %v10362 = vadd.f32 %v9809, %v10361
      %v10363 = vpop.f32.mrb[0].mxu0
      %10364 = vmatprep.mubr.f32.mxu0 0.0
      %v10365 = vand.u32 %v7730, 4294901760
      %10366 = vmatmul.mubr.f32.gmra.mrb[0].mxu0 %v10365
      %v10367 = vpop.f32.mrb[0].mxu0
      %v10368 = vadd.f32 %v9817, %v10367
      %v10369 = vpop.f32.mrb[0].mxu0
      %10370 = vmatprep.mubr.f32.mxu0 0.0
      %v10371 = vand.u32 %v7733, 4294901760
      %10372 = vmatmul.mubr.f32.gmra.mrb[0].mxu0 %v10371
      %v10373 = vpop.f32.mrb[0].mxu0
      %v10374 = vadd.f32 %v9825, %v10373
      %v10375 = vpop.f32.mrb[0].mxu0
      %10376 = vmatprep.mubr.f32.mxu0 0.0
      %v10377 = vand.u32 %v7736, 4294901760
      %10378 = vmatmul.mubr.f32.gmra.mrb[0].mxu0 %v10377
      %v10379 = vpop.f32.mrb[0].mxu0
      %v10380 = vadd.f32 %v9833, %v10379
      %v10381 = vpop.f32.mrb[0].mxu0
      %10382 = vmatprep.mubr.f32.mxu0 0.0
      %v10383 = vand.u32 %v7739, 4294901760
      %10384 = vmatmul.mubr.f32.gmra.mrb[0].mxu0 %v10383
      %v10385 = vpop.f32.mrb[0].mxu0
      %v10386 = vadd.f32 %v9841, %v10385
      %v10387 = vpop.f32.mrb[0].mxu0
      %10388 = vmatprep.mubr.f32.mxu0 0.0
      %v10389 = vand.u32 %v7742, 4294901760
      %10390 = vmatmul.mubr.f32.gmra.mrb[0].mxu0 %v10389
      %v10391 = vpop.f32.mrb[0].mxu0
      %v10392 = vadd.f32 %v9849, %v10391
      %v10393 = vpop.f32.mrb[0].mxu0
      %10394 = vmatprep.mubr.f32.mxu0 0.0
      %v10395 = vand.u32 %v7745, 4294901760
      %10396 = vmatmul.mubr.f32.gmra.mrb[0].mxu0 %v10395
      %v10397 = vpop.f32.mrb[0].mxu0
      %v10398 = vadd.f32 %v9857, %v10397
      %v10399 = vpop.f32.mrb[0].mxu0
      %10400 = vmatprep.mubr.f32.mxu0 0.0
      %v10401 = vand.u32 %v7748, 4294901760
      %10402 = vmatmul.mubr.f32.gmra.mrb[0].mxu0 %v10401
      %v10403 = vpop.f32.mrb[0].mxu0
      %v10404 = vadd.f32 %v9865, %v10403
      %v10405 = vpop.f32.mrb[0].mxu0
      %10406 = vmatprep.mubr.f32.mxu0 0.0
      %v10407 = vand.u32 %v7751, 4294901760
      %10408 = vmatmul.mubr.f32.gmra.mrb[0].mxu0 %v10407
      %v10409 = vpop.f32.mrb[0].mxu0
      %v10410 = vadd.f32 %v9873, %v10409
      %v10411 = vpop.f32.mrb[0].mxu0
      %10412 = vmatprep.mubr.f32.mxu0 0.0
      %v10413 = vand.u32 %v7754, 4294901760
      %10414 = vmatmul.mubr.f32.gmra.mrb[0].mxu0 %v10413
      %v10415 = vpop.f32.mrb[0].mxu0
      %v10416 = vadd.f32 %v9881, %v10415
      %v10417 = vpop.f32.mrb[0].mxu0
      %10418 = vmatprep.mubr.f32.mxu0 0.0
      %v10419 = vand.u32 %v7757, 4294901760
      %10420 = vmatmul.mubr.f32.gmra.mrb[0].mxu0 %v10419
      %v10421 = vpop.f32.mrb[0].mxu0
      %v10422 = vadd.f32 %v9889, %v10421
      %v10423 = vpop.f32.mrb[0].mxu0
      %10424 = vmatprep.mubr.f32.mxu0 0.0
      %v10425 = vand.u32 %v7760, 4294901760
      %10426 = vmatmul.mubr.f32.gmra.mrb[0].mxu0 %v10425
      %v10427 = vpop.f32.mrb[0].mxu0
      %v10428 = vadd.f32 %v9897, %v10427
      %v10429 = vpop.f32.mrb[0].mxu0
      %10430 = vmatprep.mubr.f32.mxu0 0.0
      %v10431 = vand.u32 %v7763, 4294901760
      %10432 = vmatmul.mubr.f32.gmra.mrb[0].mxu0 %v10431
      %v10433 = vpop.f32.mrb[0].mxu0
      %v10434 = vadd.f32 %v9905, %v10433
      %v10435 = vpop.f32.mrb[0].mxu0
      %10436 = vmatprep.mubr.f32.mxu0 0.0
      %v10437 = vand.u32 %v7766, 4294901760
      %10438 = vmatmul.mubr.f32.gmra.mrb[0].mxu0 %v10437
      %v10439 = vpop.f32.mrb[0].mxu0
      %v10440 = vadd.f32 %v9913, %v10439
      %v10441 = vpop.f32.mrb[0].mxu0
      %10442 = vmatprep.mubr.f32.mxu0 0.0
      %v10443 = vand.u32 %v7769, 4294901760
      %10444 = vmatmul.mubr.f32.gmra.mrb[0].mxu0 %v10443
      %v10445 = vpop.f32.mrb[0].mxu0
      %v10446 = vadd.f32 %v9921, %v10445
      %v10447 = vpop.f32.mrb[0].mxu0
      %10448 = vmatprep.mubr.f32.mxu0 0.0
      %v10449 = vand.u32 %v7772, 4294901760
      %10450 = vmatmul.mubr.f32.gmra.mrb[0].mxu0 %v10449
      %v10451 = vpop.f32.mrb[0].mxu0
      %v10452 = vadd.f32 %v9929, %v10451
      %v10453 = vpop.f32.mrb[0].mxu0
      %10454 = vmatprep.mubr.f32.mxu0 0.0
      %v10455 = vand.u32 %v7775, 4294901760
      %10456 = vmatmul.mubr.f32.gmra.mrb[0].mxu0 %v10455
      %v10457 = vpop.f32.mrb[0].mxu0
      %v10458 = vadd.f32 %v9937, %v10457
      %v10459 = vpop.f32.mrb[0].mxu0
      %10460 = vmatprep.mubr.f32.mxu0 0.0
      %v10461 = vand.u32 %v7778, 4294901760
      %10462 = vmatmul.mubr.f32.gmra.mrb[0].mxu0 %v10461
      %v10463 = vpop.f32.mrb[0].mxu0
      %v10464 = vadd.f32 %v9945, %v10463
      %v10465 = vpop.f32.mrb[0].mxu0
      %10466 = vmatprep.mubr.f32.mxu0 0.0
      %v10467 = vand.u32 %v7781, 4294901760
      %10468 = vmatmul.mubr.f32.gmra.mrb[0].mxu0 %v10467
      %v10469 = vpop.f32.mrb[0].mxu0
      %v10470 = vadd.f32 %v9953, %v10469
      %v10471 = vpop.f32.mrb[0].mxu0
      %10472 = vmatprep.mubr.f32.mxu0 0.0
      %v10473 = vand.u32 %v7784, 4294901760
      %10474 = vmatmul.mubr.f32.gmra.mrb[0].mxu0 %v10473
      %v10475 = vpop.f32.mrb[0].mxu0
      %v10476 = vadd.f32 %v9961, %v10475
      %v10477 = vpop.f32.mrb[0].mxu0
      %10478 = vmatprep.mubr.f32.mxu0 0.0
      %v10479 = vand.u32 %v7787, 4294901760
      %10480 = vmatmul.mubr.f32.gmra.mrb[0].mxu0 %v10479
      %v10481 = vpop.f32.mrb[0].mxu0
      %v10482 = vadd.f32 %v9969, %v10481
      %v10483 = vpop.f32.mrb[0].mxu0
      %10484 = vmatprep.mubr.f32.mxu0 0.0
      %v10485 = vand.u32 %v7790, 4294901760
      %10486 = vmatmul.mubr.f32.gmra.mrb[0].mxu0 %v10485
      %v10487 = vpop.f32.mrb[0].mxu0
      %v10488 = vadd.f32 %v9977, %v10487
      %v10489 = vpop.f32.mrb[0].mxu0
      %10490 = vmatprep.mubr.f32.mxu0 0.0
      %v10491 = vand.u32 %v7793, 4294901760
      %10492 = vmatmul.mubr.f32.gmra.mrb[0].mxu0 %v10491
      %v10493 = vpop.f32.mrb[0].mxu0
      %v10494 = vadd.f32 %v9985, %v10493
      %v10495 = vpop.f32.mrb[0].mxu0
      %10496 = vmatprep.mubr.f32.mxu0 0.0
      %v10497 = vand.u32 %v7796, 4294901760
      %10498 = vmatmul.mubr.f32.gmra.mrb[0].mxu0 %v10497
      %v10499 = vpop.f32.mrb[0].mxu0
      %v10500 = vadd.f32 %v9993, %v10499
      %v10501 = vpop.f32.mrb[0].mxu0
      %10502 = vmatprep.mubr.f32.mxu0 0.0
      %v10503 = vand.u32 %v7799, 4294901760
      %10504 = vmatmul.mubr.f32.gmra.mrb[0].mxu0 %v10503
      %v10505 = vpop.f32.mrb[0].mxu0
      %v10506 = vadd.f32 %v10001, %v10505
      %v10507 = vpop.f32.mrb[0].mxu0
      %10508 = vmatprep.mubr.f32.mxu0 0.0
      %v10509 = vand.u32 %v7802, 4294901760
      %10510 = vmatmul.mubr.f32.gmra.mrb[0].mxu0 %v10509
      %v10511 = vpop.f32.mrb[0].mxu0
      %v10512 = vadd.f32 %v10009, %v10511
      %v10513 = vpop.f32.mrb[0].mxu0
      %10514 = vmatprep.mubr.f32.mxu0 0.0
      %v10515 = vand.u32 %v7805, 4294901760
      %10516 = vmatmul.mubr.f32.gmra.mrb[0].mxu0 %v10515
      %v10517 = vpop.f32.mrb[0].mxu0
      %v10518 = vadd.f32 %v10017, %v10517
      %v10519 = vpop.f32.mrb[0].mxu0
      %10520 = vmatprep.mubr.f32.mxu0 0.0
      %v10521 = vand.u32 %v7808, 4294901760
      %10522 = vmatmul.mubr.f32.gmra.mrb[0].mxu0 %v10521
      %v10523 = vpop.f32.mrb[0].mxu0
      %v10524 = vadd.f32 %v10025, %v10523
      %v10525 = vpop.f32.mrb[0].mxu0
      %10526 = vmatprep.mubr.f32.mxu0 0.0
      %v10527 = vand.u32 %v7811, 4294901760
      %10528 = vmatmul.mubr.f32.gmra.mrb[0].mxu0 %v10527
      %v10529 = vpop.f32.mrb[0].mxu0
      %v10530 = vadd.f32 %v10033, %v10529
      %v10531 = vpop.f32.mrb[0].mxu0
      %10532 = vmatprep.mubr.f32.mxu0 0.0
      %v10533 = vand.u32 %v7814, 4294901760
      %10534 = vmatmul.mubr.f32.gmra.mrb[0].mxu0 %v10533
      %v10535 = vpop.f32.mrb[0].mxu0
      %v10536 = vadd.f32 %v10041, %v10535
      %v10537 = vpop.f32.mrb[0].mxu0
      %10538 = vmatprep.mubr.f32.mxu0 0.0
      %v10539 = vand.u32 %v7817, 4294901760
      %10540 = vmatmul.mubr.f32.gmra.mrb[0].mxu0 %v10539
      %v10541 = vpop.f32.mrb[0].mxu0
      %v10542 = vadd.f32 %v10049, %v10541
      %v10543 = vpop.f32.mrb[0].mxu0
      %10544 = vmatprep.mubr.f32.mxu0 0.0
      %v10545 = vand.u32 %v7820, 4294901760
      %10546 = vmatmul.mubr.f32.gmra.mrb[0].mxu0 %v10545
      %v10547 = vpop.f32.mrb[0].mxu0
      %v10548 = vadd.f32 %v10057, %v10547
      %v10549 = vpop.f32.mrb[0].mxu0
      %10550 = vmatprep.mubr.f32.mxu0 0.0
      %v10551 = vand.u32 %v7823, 4294901760
      %10552 = vmatmul.mubr.f32.gmra.mrb[0].mxu0 %v10551
      %v10553 = vpop.f32.mrb[0].mxu0
      %v10554 = vadd.f32 %v10065, %v10553
      %v10555 = vpop.f32.mrb[0].mxu0
      %10556 = vmatprep.mubr.f32.mxu0 0.0
      %v10557 = vand.u32 %v7826, 4294901760
      %10558 = vmatmul.mubr.f32.gmra.mrb[0].mxu0 %v10557
      %v10559 = vpop.f32.mrb[0].mxu0
      %v10560 = vadd.f32 %v10073, %v10559
      %v10561 = vpop.f32.mrb[0].mxu0
      %10562 = vmatprep.mubr.f32.mxu0 0.0
      %v10563 = vand.u32 %v7829, 4294901760
      %10564 = vmatmul.mubr.f32.gmra.mrb[0].mxu0 %v10563
      %v10565 = vpop.f32.mrb[0].mxu0
      %v10566 = vadd.f32 %v10081, %v10565
      %v10567 = vpop.f32.mrb[0].mxu0
      %10568 = vmatprep.mubr.f32.mxu0 0.0
      %v10569 = vand.u32 %v7832, 4294901760
      %10570 = vmatmul.mubr.f32.gmra.mrb[0].mxu0 %v10569
      %v10571 = vpop.f32.mrb[0].mxu0
      %v10572 = vadd.f32 %v10089, %v10571
      %v10573 = vpop.f32.mrb[0].mxu0
      %10574 = vmatprep.mubr.f32.mxu0 0.0
      %v10575 = vand.u32 %v7835, 4294901760
      %10576 = vmatmul.mubr.f32.gmra.mrb[0].mxu0 %v10575
      %v10577 = vpop.f32.mrb[0].mxu0
      %v10578 = vadd.f32 %v10097, %v10577
      %v10579 = vpop.f32.mrb[0].mxu0
      %10580 = vmatprep.mubr.f32.mxu0 0.0
      %v10581 = vand.u32 %v7838, 4294901760
      %10582 = vmatmul.mubr.f32.gmra.mrb[0].mxu0 %v10581
      %v10583 = vpop.f32.mrb[0].mxu0
      %v10584 = vadd.f32 %v10105, %v10583
      %v10585 = vpop.f32.mrb[0].mxu0
      %10586 = vmatprep.mubr.f32.mxu0 0.0
      %v10587 = vand.u32 %v7841, 4294901760
      %10588 = vmatmul.mubr.f32.gmra.mrb[0].mxu0 %v10587
      %v10589 = vpop.f32.mrb[0].mxu0
      %v10590 = vadd.f32 %v10113, %v10589
      %v10591 = vpop.f32.mrb[0].mxu0
      %10592 = vmatprep.mubr.f32.mxu0 0.0
      %v10593 = vand.u32 %v7844, 4294901760
      %10594 = vmatmul.mubr.f32.gmra.mrb[0].mxu0 %v10593
      %v10595 = vpop.f32.mrb[0].mxu0
      %v10596 = vadd.f32 %v10121, %v10595
      %v10597 = vpop.f32.mrb[0].mxu0
      %10598 = vmatprep.mubr.f32.mxu0 0.0
      %v10599 = vand.u32 %v7847, 4294901760
      %10600 = vmatmul.mubr.f32.gmra.mrb[0].mxu0 %v10599
      %v10601 = vpop.f32.mrb[0].mxu0
      %v10602 = vadd.f32 %v10129, %v10601
      %v10603 = vpop.f32.mrb[0].mxu0
      %10604 = vmatprep.mubr.f32.mxu0 0.0
      %v10605 = vand.u32 %v7850, 4294901760
      %10606 = vmatmul.mubr.f32.gmra.mrb[0].mxu0 %v10605
      %v10607 = vpop.f32.mrb[0].mxu0
      %v10608 = vadd.f32 %v10137, %v10607
      %v10609 = vpop.f32.mrb[0].mxu0
      %10610 = vmatprep.mubr.f32.mxu0 0.0
      %v10611 = vand.u32 %v7853, 4294901760
      %10612 = vmatmul.mubr.f32.gmra.mrb[0].mxu0 %v10611
      %v10613 = vpop.f32.mrb[0].mxu0
      %v10614 = vadd.f32 %v10145, %v10613
      %v10615 = vpop.f32.mrb[0].mxu0
      %10616 = vmatprep.mubr.f32.mxu0 0.0
      %v10617 = vand.u32 %v7856, 4294901760
      %10618 = vmatmul.mubr.f32.gmra.mrb[0].mxu0 %v10617
      %v10619 = vpop.f32.mrb[0].mxu0
      %v10620 = vadd.f32 %v10153, %v10619
      %v10621 = vpop.f32.mrb[0].mxu0
      %10622 = vdwg.mxu0
      %10623 = vmatprep.subr.mxu0 0.0
      %v10624 = vand.u32 %v7659, 4294901760
      %10625 = vmatpush1.msra.mxu0 %v10624
      %10626 = vmatprep.subr.mxu0 0.0
      %v10627 = vand.u32 %v7660, 4294901760
      %10628 = vmatpush1.msra.mxu0 %v10627
      %10629 = vmatprep.subr.mxu0 0.0
      %v10630 = vand.u32 %v7661, 4294901760
      %10631 = vmatpush1.msra.mxu0 %v10630
      %10632 = vmatprep.subr.mxu0 0.0
      %v10633 = vand.u32 %v7662, 4294901760
      %10634 = vmatpush1.msra.mxu0 %v10633
      %10635 = vmatprep.subr.mxu0 0.0
      %v10636 = vand.u32 %v7663, 4294901760
      %10637 = vmatpush1.msra.mxu0 %v10636
      %10638 = vmatprep.subr.mxu0 0.0
      %v10639 = vand.u32 %v7664, 4294901760
      %10640 = vmatpush1.msra.mxu0 %v10639
      %10641 = vmatprep.subr.mxu0 0.0
      %10642 = vmatpush1.msra.mxu0 0.0
      %10643 = vmatprep.subr.mxu0 0.0
      %10644 = vmatpush1.msra.mxu0 0.0
      %10645 = vmatprep.subr.mxu0 0.0
      %10646 = vmatpush1.msra.mxu0 0.0
      %10647 = vmatprep.subr.mxu0 0.0
      %10648 = vmatpush1.msra.mxu0 0.0
      %10649 = vmatprep.subr.mxu0 0.0
      %10650 = vmatpush1.msra.mxu0 0.0
      %10651 = vmatprep.subr.mxu0 0.0
      %10652 = vmatpush1.msra.mxu0 0.0
      %10653 = vmatprep.subr.mxu0 0.0
      %10654 = vmatpush1.msra.mxu0 0.0
      %10655 = vmatprep.subr.mxu0 0.0
      %10656 = vmatpush1.msra.mxu0 0.0
      %10657 = vmatprep.subr.mxu0 0.0
      %10658 = vmatpush1.msra.mxu0 0.0
      %10659 = vmatprep.subr.mxu0 0.0
      %10660 = vmatpush1.msra.mxu0 0.0
      %10661 = vmatprep.subr.mxu0 0.0
      %10662 = vmatpush1.msra.mxu0 0.0
      %10663 = vmatprep.subr.mxu0 0.0
      %10664 = vmatpush1.msra.mxu0 0.0
      %10665 = vmatprep.subr.mxu0 0.0
      %10666 = vmatpush1.msra.mxu0 0.0
      %10667 = vmatprep.subr.mxu0 0.0
      %10668 = vmatpush1.msra.mxu0 0.0
      %10669 = vmatprep.subr.mxu0 0.0
      %10670 = vmatpush1.msra.mxu0 0.0
      %10671 = vmatprep.subr.mxu0 0.0
      %10672 = vmatpush1.msra.mxu0 0.0
      %10673 = vmatprep.subr.mxu0 0.0
      %10674 = vmatpush1.msra.mxu0 0.0
      %10675 = vmatprep.subr.mxu0 0.0
      %10676 = vmatpush1.msra.mxu0 0.0
      %10677 = vmatprep.subr.mxu0 0.0
      %10678 = vmatpush1.msra.mxu0 0.0
      %10679 = vmatprep.subr.mxu0 0.0
      %10680 = vmatpush1.msra.mxu0 0.0
      %10681 = vmatprep.subr.mxu0 0.0
      %10682 = vmatpush1.msra.mxu0 0.0
      %10683 = vmatprep.subr.mxu0 0.0
      %10684 = vmatpush1.msra.mxu0 0.0
      %10685 = vmatprep.subr.mxu0 0.0
      %10686 = vmatpush1.msra.mxu0 0.0
      %10687 = vmatprep.subr.mxu0 0.0
      %10688 = vmatpush1.msra.mxu0 0.0
      %10689 = vmatprep.subr.mxu0 0.0
      %10690 = vmatpush1.msra.mxu0 0.0
      %10691 = vmatprep.subr.mxu0 0.0
      %10692 = vmatpush1.msra.mxu0 0.0
      %10693 = vmatprep.mubr.f32.mxu0 0.0
      %v10694 = vand.u32 %v7667, 4294901760
      %10695 = vmatmul.mubr.f32.gmra.mrb[0].mxu0 %v10694
      %v10696 = vpop.f32.mrb[0].mxu0
      %v10697 = vadd.f32 %v10242, %v10696
      %v10698 = vpop.f32.mrb[0].mxu0
      %10699 = vmatprep.mubr.f32.mxu0 0.0
      %v10700 = vand.u32 %v7670, 4294901760
      %10701 = vmatmul.mubr.f32.gmra.mrb[0].mxu0 %v10700
      %v10702 = vpop.f32.mrb[0].mxu0
      %v10703 = vadd.f32 %v10248, %v10702
      %v10704 = vpop.f32.mrb[0].mxu0
      %10705 = vmatprep.mubr.f32.mxu0 0.0
      %v10706 = vand.u32 %v7673, 4294901760
      %10707 = vmatmul.mubr.f32.gmra.mrb[0].mxu0 %v10706
      %v10708 = vpop.f32.mrb[0].mxu0
      %v10709 = vadd.f32 %v10254, %v10708
      %v10710 = vpop.f32.mrb[0].mxu0
      %10711 = vmatprep.mubr.f32.mxu0 0.0
      %v10712 = vand.u32 %v7676, 4294901760
      %10713 = vmatmul.mubr.f32.gmra.mrb[0].mxu0 %v10712
      %v10714 = vpop.f32.mrb[0].mxu0
      %v10715 = vadd.f32 %v10260, %v10714
      %v10716 = vpop.f32.mrb[0].mxu0
      %10717 = vmatprep.mubr.f32.mxu0 0.0
      %v10718 = vand.u32 %v7679, 4294901760
      %10719 = vmatmul.mubr.f32.gmra.mrb[0].mxu0 %v10718
      %v10720 = vpop.f32.mrb[0].mxu0
      %v10721 = vadd.f32 %v10266, %v10720
      %v10722 = vpop.f32.mrb[0].mxu0
      %10723 = vmatprep.mubr.f32.mxu0 0.0
      %v10724 = vand.u32 %v7682, 4294901760
      %10725 = vmatmul.mubr.f32.gmra.mrb[0].mxu0 %v10724
      %v10726 = vpop.f32.mrb[0].mxu0
      %v10727 = vadd.f32 %v10272, %v10726
      %v10728 = vpop.f32.mrb[0].mxu0
      %10729 = vmatprep.mubr.f32.mxu0 0.0
      %v10730 = vand.u32 %v7685, 4294901760
      %10731 = vmatmul.mubr.f32.gmra.mrb[0].mxu0 %v10730
      %v10732 = vpop.f32.mrb[0].mxu0
      %v10733 = vadd.f32 %v10278, %v10732
      %v10734 = vpop.f32.mrb[0].mxu0
      %10735 = vmatprep.mubr.f32.mxu0 0.0
      %v10736 = vand.u32 %v7688, 4294901760
      %10737 = vmatmul.mubr.f32.gmra.mrb[0].mxu0 %v10736
      %v10738 = vpop.f32.mrb[0].mxu0
      %v10739 = vadd.f32 %v10284, %v10738
      %v10740 = vpop.f32.mrb[0].mxu0
      %10741 = vmatprep.mubr.f32.mxu0 0.0
      %v10742 = vand.u32 %v7691, 4294901760
      %10743 = vmatmul.mubr.f32.gmra.mrb[0].mxu0 %v10742
      %v10744 = vpop.f32.mrb[0].mxu0
      %v10745 = vadd.f32 %v10290, %v10744
      %v10746 = vpop.f32.mrb[0].mxu0
      %10747 = vmatprep.mubr.f32.mxu0 0.0
      %v10748 = vand.u32 %v7694, 4294901760
      %10749 = vmatmul.mubr.f32.gmra.mrb[0].mxu0 %v10748
      %v10750 = vpop.f32.mrb[0].mxu0
      %v10751 = vadd.f32 %v10296, %v10750
      %v10752 = vpop.f32.mrb[0].mxu0
      %10753 = vmatprep.mubr.f32.mxu0 0.0
      %v10754 = vand.u32 %v7697, 4294901760
      %10755 = vmatmul.mubr.f32.gmra.mrb[0].mxu0 %v10754
      %v10756 = vpop.f32.mrb[0].mxu0
      %v10757 = vadd.f32 %v10302, %v10756
      %v10758 = vpop.f32.mrb[0].mxu0
      %10759 = vmatprep.mubr.f32.mxu0 0.0
      %v10760 = vand.u32 %v7700, 4294901760
      %10761 = vmatmul.mubr.f32.gmra.mrb[0].mxu0 %v10760
      %v10762 = vpop.f32.mrb[0].mxu0
      %v10763 = vadd.f32 %v10308, %v10762
      %v10764 = vpop.f32.mrb[0].mxu0
      %10765 = vmatprep.mubr.f32.mxu0 0.0
      %v10766 = vand.u32 %v7703, 4294901760
      %10767 = vmatmul.mubr.f32.gmra.mrb[0].mxu0 %v10766
      %v10768 = vpop.f32.mrb[0].mxu0
      %v10769 = vadd.f32 %v10314, %v10768
      %v10770 = vpop.f32.mrb[0].mxu0
      %10771 = vmatprep.mubr.f32.mxu0 0.0
      %v10772 = vand.u32 %v7706, 4294901760
      %10773 = vmatmul.mubr.f32.gmra.mrb[0].mxu0 %v10772
      %v10774 = vpop.f32.mrb[0].mxu0
      %v10775 = vadd.f32 %v10320, %v10774
      %v10776 = vpop.f32.mrb[0].mxu0
      %10777 = vmatprep.mubr.f32.mxu0 0.0
      %v10778 = vand.u32 %v7709, 4294901760
      %10779 = vmatmul.mubr.f32.gmra.mrb[0].mxu0 %v10778
      %v10780 = vpop.f32.mrb[0].mxu0
      %v10781 = vadd.f32 %v10326, %v10780
      %v10782 = vpop.f32.mrb[0].mxu0
      %10783 = vmatprep.mubr.f32.mxu0 0.0
      %v10784 = vand.u32 %v7712, 4294901760
      %10785 = vmatmul.mubr.f32.gmra.mrb[0].mxu0 %v10784
      %v10786 = vpop.f32.mrb[0].mxu0
      %v10787 = vadd.f32 %v10332, %v10786
      %v10788 = vpop.f32.mrb[0].mxu0
      %10789 = vmatprep.mubr.f32.mxu0 0.0
      %v10790 = vand.u32 %v7715, 4294901760
      %10791 = vmatmul.mubr.f32.gmra.mrb[0].mxu0 %v10790
      %v10792 = vpop.f32.mrb[0].mxu0
      %v10793 = vadd.f32 %v10338, %v10792
      %v10794 = vpop.f32.mrb[0].mxu0
      %10795 = vmatprep.mubr.f32.mxu0 0.0
      %v10796 = vand.u32 %v7718, 4294901760
      %10797 = vmatmul.mubr.f32.gmra.mrb[0].mxu0 %v10796
      %v10798 = vpop.f32.mrb[0].mxu0
      %v10799 = vadd.f32 %v10344, %v10798
      %v10800 = vpop.f32.mrb[0].mxu0
      %10801 = vmatprep.mubr.f32.mxu0 0.0
      %v10802 = vand.u32 %v7721, 4294901760
      %10803 = vmatmul.mubr.f32.gmra.mrb[0].mxu0 %v10802
      %v10804 = vpop.f32.mrb[0].mxu0
      %v10805 = vadd.f32 %v10350, %v10804
      %v10806 = vpop.f32.mrb[0].mxu0
      %10807 = vmatprep.mubr.f32.mxu0 0.0
      %v10808 = vand.u32 %v7724, 4294901760
      %10809 = vmatmul.mubr.f32.gmra.mrb[0].mxu0 %v10808
      %v10810 = vpop.f32.mrb[0].mxu0
      %v10811 = vadd.f32 %v10356, %v10810
      %v10812 = vpop.f32.mrb[0].mxu0
      %10813 = vmatprep.mubr.f32.mxu0 0.0
      %v10814 = vand.u32 %v7727, 4294901760
      %10815 = vmatmul.mubr.f32.gmra.mrb[0].mxu0 %v10814
      %v10816 = vpop.f32.mrb[0].mxu0
      %v10817 = vadd.f32 %v10362, %v10816
      %v10818 = vpop.f32.mrb[0].mxu0
      %10819 = vmatprep.mubr.f32.mxu0 0.0
      %v10820 = vand.u32 %v7730, 4294901760
      %10821 = vmatmul.mubr.f32.gmra.mrb[0].mxu0 %v10820
      %v10822 = vpop.f32.mrb[0].mxu0
      %v10823 = vadd.f32 %v10368, %v10822
      %v10824 = vpop.f32.mrb[0].mxu0
      %10825 = vmatprep.mubr.f32.mxu0 0.0
      %v10826 = vand.u32 %v7733, 4294901760
      %10827 = vmatmul.mubr.f32.gmra.mrb[0].mxu0 %v10826
      %v10828 = vpop.f32.mrb[0].mxu0
      %v10829 = vadd.f32 %v10374, %v10828
      %v10830 = vpop.f32.mrb[0].mxu0
      %10831 = vmatprep.mubr.f32.mxu0 0.0
      %v10832 = vand.u32 %v7736, 4294901760
      %10833 = vmatmul.mubr.f32.gmra.mrb[0].mxu0 %v10832
      %v10834 = vpop.f32.mrb[0].mxu0
      %v10835 = vadd.f32 %v10380, %v10834
      %v10836 = vpop.f32.mrb[0].mxu0
      %10837 = vmatprep.mubr.f32.mxu0 0.0
      %v10838 = vand.u32 %v7739, 4294901760
      %10839 = vmatmul.mubr.f32.gmra.mrb[0].mxu0 %v10838
      %v10840 = vpop.f32.mrb[0].mxu0
      %v10841 = vadd.f32 %v10386, %v10840
      %v10842 = vpop.f32.mrb[0].mxu0
      %10843 = vmatprep.mubr.f32.mxu0 0.0
      %v10844 = vand.u32 %v7742, 4294901760
      %10845 = vmatmul.mubr.f32.gmra.mrb[0].mxu0 %v10844
      %v10846 = vpop.f32.mrb[0].mxu0
      %v10847 = vadd.f32 %v10392, %v10846
      %v10848 = vpop.f32.mrb[0].mxu0
      %10849 = vmatprep.mubr.f32.mxu0 0.0
      %v10850 = vand.u32 %v7745, 4294901760
      %10851 = vmatmul.mubr.f32.gmra.mrb[0].mxu0 %v10850
      %v10852 = vpop.f32.mrb[0].mxu0
      %v10853 = vadd.f32 %v10398, %v10852
      %v10854 = vpop.f32.mrb[0].mxu0
      %10855 = vmatprep.mubr.f32.mxu0 0.0
      %v10856 = vand.u32 %v7748, 4294901760
      %10857 = vmatmul.mubr.f32.gmra.mrb[0].mxu0 %v10856
      %v10858 = vpop.f32.mrb[0].mxu0
      %v10859 = vadd.f32 %v10404, %v10858
      %v10860 = vpop.f32.mrb[0].mxu0
      %10861 = vmatprep.mubr.f32.mxu0 0.0
      %v10862 = vand.u32 %v7751, 4294901760
      %10863 = vmatmul.mubr.f32.gmra.mrb[0].mxu0 %v10862
      %v10864 = vpop.f32.mrb[0].mxu0
      %v10865 = vadd.f32 %v10410, %v10864
      %v10866 = vpop.f32.mrb[0].mxu0
      %10867 = vmatprep.mubr.f32.mxu0 0.0
      %v10868 = vand.u32 %v7754, 4294901760
      %10869 = vmatmul.mubr.f32.gmra.mrb[0].mxu0 %v10868
      %v10870 = vpop.f32.mrb[0].mxu0
      %v10871 = vadd.f32 %v10416, %v10870
      %v10872 = vpop.f32.mrb[0].mxu0
      %10873 = vmatprep.mubr.f32.mxu0 0.0
      %v10874 = vand.u32 %v7757, 4294901760
      %10875 = vmatmul.mubr.f32.gmra.mrb[0].mxu0 %v10874
      %v10876 = vpop.f32.mrb[0].mxu0
      %v10877 = vadd.f32 %v10422, %v10876
      %v10878 = vpop.f32.mrb[0].mxu0
      %10879 = vmatprep.mubr.f32.mxu0 0.0
      %v10880 = vand.u32 %v7760, 4294901760
      %10881 = vmatmul.mubr.f32.gmra.mrb[0].mxu0 %v10880
      %v10882 = vpop.f32.mrb[0].mxu0
      %v10883 = vadd.f32 %v10428, %v10882
      %v10884 = vpop.f32.mrb[0].mxu0
      %10885 = vmatprep.mubr.f32.mxu0 0.0
      %v10886 = vand.u32 %v7763, 4294901760
      %10887 = vmatmul.mubr.f32.gmra.mrb[0].mxu0 %v10886
      %v10888 = vpop.f32.mrb[0].mxu0
      %v10889 = vadd.f32 %v10434, %v10888
      %v10890 = vpop.f32.mrb[0].mxu0
      %10891 = vmatprep.mubr.f32.mxu0 0.0
      %v10892 = vand.u32 %v7766, 4294901760
      %10893 = vmatmul.mubr.f32.gmra.mrb[0].mxu0 %v10892
      %v10894 = vpop.f32.mrb[0].mxu0
      %v10895 = vadd.f32 %v10440, %v10894
      %v10896 = vpop.f32.mrb[0].mxu0
      %10897 = vmatprep.mubr.f32.mxu0 0.0
      %v10898 = vand.u32 %v7769, 4294901760
      %10899 = vmatmul.mubr.f32.gmra.mrb[0].mxu0 %v10898
      %v10900 = vpop.f32.mrb[0].mxu0
      %v10901 = vadd.f32 %v10446, %v10900
      %v10902 = vpop.f32.mrb[0].mxu0
      %10903 = vmatprep.mubr.f32.mxu0 0.0
      %v10904 = vand.u32 %v7772, 4294901760
      %10905 = vmatmul.mubr.f32.gmra.mrb[0].mxu0 %v10904
      %v10906 = vpop.f32.mrb[0].mxu0
      %v10907 = vadd.f32 %v10452, %v10906
      %v10908 = vpop.f32.mrb[0].mxu0
      %10909 = vmatprep.mubr.f32.mxu0 0.0
      %v10910 = vand.u32 %v7775, 4294901760
      %10911 = vmatmul.mubr.f32.gmra.mrb[0].mxu0 %v10910
      %v10912 = vpop.f32.mrb[0].mxu0
      %v10913 = vadd.f32 %v10458, %v10912
      %v10914 = vpop.f32.mrb[0].mxu0
      %10915 = vmatprep.mubr.f32.mxu0 0.0
      %v10916 = vand.u32 %v7778, 4294901760
      %10917 = vmatmul.mubr.f32.gmra.mrb[0].mxu0 %v10916
      %v10918 = vpop.f32.mrb[0].mxu0
      %v10919 = vadd.f32 %v10464, %v10918
      %v10920 = vpop.f32.mrb[0].mxu0
      %10921 = vmatprep.mubr.f32.mxu0 0.0
      %v10922 = vand.u32 %v7781, 4294901760
      %10923 = vmatmul.mubr.f32.gmra.mrb[0].mxu0 %v10922
      %v10924 = vpop.f32.mrb[0].mxu0
      %v10925 = vadd.f32 %v10470, %v10924
      %v10926 = vpop.f32.mrb[0].mxu0
      %10927 = vmatprep.mubr.f32.mxu0 0.0
      %v10928 = vand.u32 %v7784, 4294901760
      %10929 = vmatmul.mubr.f32.gmra.mrb[0].mxu0 %v10928
      %v10930 = vpop.f32.mrb[0].mxu0
      %v10931 = vadd.f32 %v10476, %v10930
      %v10932 = vpop.f32.mrb[0].mxu0
      %10933 = vmatprep.mubr.f32.mxu0 0.0
      %v10934 = vand.u32 %v7787, 4294901760
      %10935 = vmatmul.mubr.f32.gmra.mrb[0].mxu0 %v10934
      %v10936 = vpop.f32.mrb[0].mxu0
      %v10937 = vadd.f32 %v10482, %v10936
      %v10938 = vpop.f32.mrb[0].mxu0
      %10939 = vmatprep.mubr.f32.mxu0 0.0
      %v10940 = vand.u32 %v7790, 4294901760
      %10941 = vmatmul.mubr.f32.gmra.mrb[0].mxu0 %v10940
      %v10942 = vpop.f32.mrb[0].mxu0
      %v10943 = vadd.f32 %v10488, %v10942
      %v10944 = vpop.f32.mrb[0].mxu0
      %10945 = vmatprep.mubr.f32.mxu0 0.0
      %v10946 = vand.u32 %v7793, 4294901760
      %10947 = vmatmul.mubr.f32.gmra.mrb[0].mxu0 %v10946
      %v10948 = vpop.f32.mrb[0].mxu0
      %v10949 = vadd.f32 %v10494, %v10948
      %v10950 = vpop.f32.mrb[0].mxu0
      %10951 = vmatprep.mubr.f32.mxu0 0.0
      %v10952 = vand.u32 %v7796, 4294901760
      %10953 = vmatmul.mubr.f32.gmra.mrb[0].mxu0 %v10952
      %v10954 = vpop.f32.mrb[0].mxu0
      %v10955 = vadd.f32 %v10500, %v10954
      %v10956 = vpop.f32.mrb[0].mxu0
      %10957 = vmatprep.mubr.f32.mxu0 0.0
      %v10958 = vand.u32 %v7799, 4294901760
      %10959 = vmatmul.mubr.f32.gmra.mrb[0].mxu0 %v10958
      %v10960 = vpop.f32.mrb[0].mxu0
      %v10961 = vadd.f32 %v10506, %v10960
      %v10962 = vpop.f32.mrb[0].mxu0
      %10963 = vmatprep.mubr.f32.mxu0 0.0
      %v10964 = vand.u32 %v7802, 4294901760
      %10965 = vmatmul.mubr.f32.gmra.mrb[0].mxu0 %v10964
      %v10966 = vpop.f32.mrb[0].mxu0
      %v10967 = vadd.f32 %v10512, %v10966
      %v10968 = vpop.f32.mrb[0].mxu0
      %10969 = vmatprep.mubr.f32.mxu0 0.0
      %v10970 = vand.u32 %v7805, 4294901760
      %10971 = vmatmul.mubr.f32.gmra.mrb[0].mxu0 %v10970
      %v10972 = vpop.f32.mrb[0].mxu0
      %v10973 = vadd.f32 %v10518, %v10972
      %v10974 = vpop.f32.mrb[0].mxu0
      %10975 = vmatprep.mubr.f32.mxu0 0.0
      %v10976 = vand.u32 %v7808, 4294901760
      %10977 = vmatmul.mubr.f32.gmra.mrb[0].mxu0 %v10976
      %v10978 = vpop.f32.mrb[0].mxu0
      %v10979 = vadd.f32 %v10524, %v10978
      %v10980 = vpop.f32.mrb[0].mxu0
      %10981 = vmatprep.mubr.f32.mxu0 0.0
      %v10982 = vand.u32 %v7811, 4294901760
      %10983 = vmatmul.mubr.f32.gmra.mrb[0].mxu0 %v10982
      %v10984 = vpop.f32.mrb[0].mxu0
      %v10985 = vadd.f32 %v10530, %v10984
      %v10986 = vpop.f32.mrb[0].mxu0
      %10987 = vmatprep.mubr.f32.mxu0 0.0
      %v10988 = vand.u32 %v7814, 4294901760
      %10989 = vmatmul.mubr.f32.gmra.mrb[0].mxu0 %v10988
      %v10990 = vpop.f32.mrb[0].mxu0
      %v10991 = vadd.f32 %v10536, %v10990
      %v10992 = vpop.f32.mrb[0].mxu0
      %10993 = vmatprep.mubr.f32.mxu0 0.0
      %v10994 = vand.u32 %v7817, 4294901760
      %10995 = vmatmul.mubr.f32.gmra.mrb[0].mxu0 %v10994
      %v10996 = vpop.f32.mrb[0].mxu0
      %v10997 = vadd.f32 %v10542, %v10996
      %v10998 = vpop.f32.mrb[0].mxu0
      %10999 = vmatprep.mubr.f32.mxu0 0.0
      %v11000 = vand.u32 %v7820, 4294901760
      %11001 = vmatmul.mubr.f32.gmra.mrb[0].mxu0 %v11000
      %v11002 = vpop.f32.mrb[0].mxu0
      %v11003 = vadd.f32 %v10548, %v11002
      %v11004 = vpop.f32.mrb[0].mxu0
      %11005 = vmatprep.mubr.f32.mxu0 0.0
      %v11006 = vand.u32 %v7823, 4294901760
      %11007 = vmatmul.mubr.f32.gmra.mrb[0].mxu0 %v11006
      %v11008 = vpop.f32.mrb[0].mxu0
      %v11009 = vadd.f32 %v10554, %v11008
      %v11010 = vpop.f32.mrb[0].mxu0
      %11011 = vmatprep.mubr.f32.mxu0 0.0
      %v11012 = vand.u32 %v7826, 4294901760
      %11013 = vmatmul.mubr.f32.gmra.mrb[0].mxu0 %v11012
      %v11014 = vpop.f32.mrb[0].mxu0
      %v11015 = vadd.f32 %v10560, %v11014
      %v11016 = vpop.f32.mrb[0].mxu0
      %11017 = vmatprep.mubr.f32.mxu0 0.0
      %v11018 = vand.u32 %v7829, 4294901760
      %11019 = vmatmul.mubr.f32.gmra.mrb[0].mxu0 %v11018
      %v11020 = vpop.f32.mrb[0].mxu0
      %v11021 = vadd.f32 %v10566, %v11020
      %v11022 = vpop.f32.mrb[0].mxu0
      %11023 = vmatprep.mubr.f32.mxu0 0.0
      %v11024 = vand.u32 %v7832, 4294901760
      %11025 = vmatmul.mubr.f32.gmra.mrb[0].mxu0 %v11024
      %v11026 = vpop.f32.mrb[0].mxu0
      %v11027 = vadd.f32 %v10572, %v11026
      %v11028 = vpop.f32.mrb[0].mxu0
      %11029 = vmatprep.mubr.f32.mxu0 0.0
      %v11030 = vand.u32 %v7835, 4294901760
      %11031 = vmatmul.mubr.f32.gmra.mrb[0].mxu0 %v11030
      %v11032 = vpop.f32.mrb[0].mxu0
      %v11033 = vadd.f32 %v10578, %v11032
      %v11034 = vpop.f32.mrb[0].mxu0
      %11035 = vmatprep.mubr.f32.mxu0 0.0
      %v11036 = vand.u32 %v7838, 4294901760
      %11037 = vmatmul.mubr.f32.gmra.mrb[0].mxu0 %v11036
      %v11038 = vpop.f32.mrb[0].mxu0
      %v11039 = vadd.f32 %v10584, %v11038
      %v11040 = vpop.f32.mrb[0].mxu0
      %11041 = vmatprep.mubr.f32.mxu0 0.0
      %v11042 = vand.u32 %v7841, 4294901760
      %11043 = vmatmul.mubr.f32.gmra.mrb[0].mxu0 %v11042
      %v11044 = vpop.f32.mrb[0].mxu0
      %v11045 = vadd.f32 %v10590, %v11044
      %v11046 = vpop.f32.mrb[0].mxu0
      %11047 = vmatprep.mubr.f32.mxu0 0.0
      %v11048 = vand.u32 %v7844, 4294901760
      %11049 = vmatmul.mubr.f32.gmra.mrb[0].mxu0 %v11048
      %v11050 = vpop.f32.mrb[0].mxu0
      %v11051 = vadd.f32 %v10596, %v11050
      %v11052 = vpop.f32.mrb[0].mxu0
      %11053 = vmatprep.mubr.f32.mxu0 0.0
      %v11054 = vand.u32 %v7847, 4294901760
      %11055 = vmatmul.mubr.f32.gmra.mrb[0].mxu0 %v11054
      %v11056 = vpop.f32.mrb[0].mxu0
      %v11057 = vadd.f32 %v10602, %v11056
      %v11058 = vpop.f32.mrb[0].mxu0
      %11059 = vmatprep.mubr.f32.mxu0 0.0
      %v11060 = vand.u32 %v7850, 4294901760
      %11061 = vmatmul.mubr.f32.gmra.mrb[0].mxu0 %v11060
      %v11062 = vpop.f32.mrb[0].mxu0
      %v11063 = vadd.f32 %v10608, %v11062
      %v11064 = vpop.f32.mrb[0].mxu0
      %11065 = vmatprep.mubr.f32.mxu0 0.0
      %v11066 = vand.u32 %v7853, 4294901760
      %11067 = vmatmul.mubr.f32.gmra.mrb[0].mxu0 %v11066
      %v11068 = vpop.f32.mrb[0].mxu0
      %v11069 = vadd.f32 %v10614, %v11068
      %v11070 = vpop.f32.mrb[0].mxu0
      %11071 = vmatprep.mubr.f32.mxu0 0.0
      %v11072 = vand.u32 %v7856, 4294901760
      %11073 = vmatmul.mubr.f32.gmra.mrb[0].mxu0 %v11072
      %v11074 = vpop.f32.mrb[0].mxu0
      %v11075 = vadd.f32 %v10620, %v11074
      %v11076 = vpop.f32.mrb[0].mxu0
      %11077 = vdwg.mxu0
      %vm11078 = vcmask 23552
      %11079 = vst.msk [vmem:[%s344] sm:$0xff] %vm11078, %v10697
      %11080 = vst.msk [vmem:[%s344 + $0x8] sm:$0xff] %vm11078, %v10703
      %11081 = vst.msk [vmem:[%s344 + $0x10] sm:$0xff] %vm11078, %v10709
      %11082 = vst.msk [vmem:[%s344 + $0x18] sm:$0xff] %vm11078, %v10715
      %11083 = vst.msk [vmem:[%s344 + $0x20] sm:$0xff] %vm11078, %v10721
      %11084 = vst.msk [vmem:[%s344 + $0x28] sm:$0xff] %vm11078, %v10727
      %11085 = vst.msk [vmem:[%s344 + $0x30] sm:$0xff] %vm11078, %v10733
      %11086 = vst.msk [vmem:[%s344 + $0x38] sm:$0xff] %vm11078, %v10739
      %11087 = vst.msk [vmem:[%s344 + $0x40] sm:$0xff] %vm11078, %v10745
      %11088 = vst.msk [vmem:[%s344 + $0x48] sm:$0xff] %vm11078, %v10751
      %11089 = vst.msk [vmem:[%s344 + $0x50] sm:$0xff] %vm11078, %v10757
      %11090 = vst.msk [vmem:[%s344 + $0x58] sm:$0xff] %vm11078, %v10763
      %11091 = vst.msk [vmem:[%s344 + $0x60] sm:$0xff] %vm11078, %v10769
      %11092 = vst.msk [vmem:[%s344 + $0x68] sm:$0xff] %vm11078, %v10775
      %11093 = vst.msk [vmem:[%s344 + $0x70] sm:$0xff] %vm11078, %v10781
      %11094 = vst.msk [vmem:[%s344 + $0x78] sm:$0xff] %vm11078, %v10787
      %11095 = vst.msk [vmem:[%s344 + $0x80] sm:$0xff] %vm11078, %v10793
      %11096 = vst.msk [vmem:[%s344 + $0x88] sm:$0xff] %vm11078, %v10799
      %11097 = vst.msk [vmem:[%s344 + $0x90] sm:$0xff] %vm11078, %v10805
      %11098 = vst.msk [vmem:[%s344 + $0x98] sm:$0xff] %vm11078, %v10811
      %11099 = vst.msk [vmem:[%s344 + $0xa0] sm:$0xff] %vm11078, %v10817
      %11100 = vst.msk [vmem:[%s344 + $0xa8] sm:$0xff] %vm11078, %v10823
      %11101 = vst.msk [vmem:[%s344 + $0xb0] sm:$0xff] %vm11078, %v10829
      %11102 = vst.msk [vmem:[%s344 + $0xb8] sm:$0xff] %vm11078, %v10835
      %11103 = vst.msk [vmem:[%s344 + $0xc0] sm:$0xff] %vm11078, %v10841
      %11104 = vst.msk [vmem:[%s344 + $0xc8] sm:$0xff] %vm11078, %v10847
      %11105 = vst.msk [vmem:[%s344 + $0xd0] sm:$0xff] %vm11078, %v10853
      %11106 = vst.msk [vmem:[%s344 + $0xd8] sm:$0xff] %vm11078, %v10859
      %11107 = vst.msk [vmem:[%s344 + $0xe0] sm:$0xff] %vm11078, %v10865
      %11108 = vst.msk [vmem:[%s344 + $0xe8] sm:$0xff] %vm11078, %v10871
      %11109 = vst.msk [vmem:[%s344 + $0xf0] sm:$0xff] %vm11078, %v10877
      %11110 = vst.msk [vmem:[%s344 + $0xf8] sm:$0xff] %vm11078, %v10883
      %11111 = vst.msk [vmem:[%s344 + $0x100] sm:$0xff] %vm11078, %v10889
      %11112 = vst.msk [vmem:[%s344 + $0x108] sm:$0xff] %vm11078, %v10895
      %11113 = vst.msk [vmem:[%s344 + $0x110] sm:$0xff] %vm11078, %v10901
      %11114 = vst.msk [vmem:[%s344 + $0x118] sm:$0xff] %vm11078, %v10907
      %11115 = vst.msk [vmem:[%s344 + $0x120] sm:$0xff] %vm11078, %v10913
      %11116 = vst.msk [vmem:[%s344 + $0x128] sm:$0xff] %vm11078, %v10919
      %11117 = vst.msk [vmem:[%s344 + $0x130] sm:$0xff] %vm11078, %v10925
      %11118 = vst.msk [vmem:[%s344 + $0x138] sm:$0xff] %vm11078, %v10931
      %11119 = vst.msk [vmem:[%s344 + $0x140] sm:$0xff] %vm11078, %v10937
      %11120 = vst.msk [vmem:[%s344 + $0x148] sm:$0xff] %vm11078, %v10943
      %11121 = vst.msk [vmem:[%s344 + $0x150] sm:$0xff] %vm11078, %v10949
      %11122 = vst.msk [vmem:[%s344 + $0x158] sm:$0xff] %vm11078, %v10955
      %11123 = vst.msk [vmem:[%s344 + $0x160] sm:$0xff] %vm11078, %v10961
      %11124 = vst.msk [vmem:[%s344 + $0x168] sm:$0xff] %vm11078, %v10967
      %11125 = vst.msk [vmem:[%s344 + $0x170] sm:$0xff] %vm11078, %v10973
      %11126 = vst.msk [vmem:[%s344 + $0x178] sm:$0xff] %vm11078, %v10979
      %11127 = vst.msk [vmem:[%s344 + $0x180] sm:$0xff] %vm11078, %v10985
      %11128 = vst.msk [vmem:[%s344 + $0x188] sm:$0xff] %vm11078, %v10991
      %11129 = vst.msk [vmem:[%s344 + $0x190] sm:$0xff] %vm11078, %v10997
      %11130 = vst.msk [vmem:[%s344 + $0x198] sm:$0xff] %vm11078, %v11003
      %11131 = vst.msk [vmem:[%s344 + $0x1a0] sm:$0xff] %vm11078, %v11009
      %11132 = vst.msk [vmem:[%s344 + $0x1a8] sm:$0xff] %vm11078, %v11015
      %11133 = vst.msk [vmem:[%s344 + $0x1b0] sm:$0xff] %vm11078, %v11021
      %11134 = vst.msk [vmem:[%s344 + $0x1b8] sm:$0xff] %vm11078, %v11027
      %11135 = vst.msk [vmem:[%s344 + $0x1c0] sm:$0xff] %vm11078, %v11033
      %11136 = vst.msk [vmem:[%s344 + $0x1c8] sm:$0xff] %vm11078, %v11039
      %11137 = vst.msk [vmem:[%s344 + $0x1d0] sm:$0xff] %vm11078, %v11045
      %11138 = vst.msk [vmem:[%s344 + $0x1d8] sm:$0xff] %vm11078, %v11051
      %11139 = vst.msk [vmem:[%s344 + $0x1e0] sm:$0xff] %vm11078, %v11057
      %11140 = vst.msk [vmem:[%s344 + $0x1e8] sm:$0xff] %vm11078, %v11063
      %11141 = vst.msk [vmem:[%s344 + $0x1f0] sm:$0xff] %vm11078, %v11069
      %11142 = vst.msk [vmem:[%s344 + $0x1f8] sm:$0xff] %vm11078, %v11075
      %v11143 = vmul.f32 %v4042, %v486
      %v11144 = vmul.f32 %v4044, %v487
      %v11145 = vmul.f32 %v4046, %v488
      %v11146 = vmul.f32 %v4048, %v489
      %v11147 = vmul.f32 %v4050, %v490
      %v11148 = vmul.f32 %v4052, %v491
      %v11149 = vmul.f32 %v4054, %v492
      %v11150 = vmul.f32 %v4056, %v493
      %v11151 = vmul.f32 %v4058, %v494
      %v11152 = vmul.f32 %v4060, %v495
      %v11153 = vmul.f32 %v4062, %v496
      %v11154 = vmul.f32 %v4064, %v497
      %v11155 = vmul.f32 %v4066, %v498
      %v11156 = vmul.f32 %v4068, %v499
      %v11157 = vmul.f32 %v4070, %v500
      %v11158 = vmul.f32 %v4072, %v501
      %v11159 = vmul.f32 %v4074, %v502
      %v11160 = vmul.f32 %v4076, %v503
      %v11161 = vmul.f32 %v4078, %v504
      %v11162 = vmul.f32 %v4080, %v505
      %v11163 = vmul.f32 %v4082, %v506
      %v11164 = vmul.f32 %v4084, %v507
      %v11165 = vmul.f32 %v4086, %v508
      %v11166 = vmul.f32 %v4088, %v509
      %v11167 = vmul.f32 %v4090, %v510
      %v11168 = vmul.f32 %v4092, %v511
      %v11169 = vmul.f32 %v4094, %v512
      %v11170 = vmul.f32 %v4096, %v513
      %v11171 = vmul.f32 %v4098, %v514
      %v11172 = vmul.f32 %v4100, %v515
      %v11173 = vmul.f32 %v4102, %v516
      %v11174 = vmul.f32 %v4104, %v517
      %v11175 = vmul.f32 %v4106, %v518
      %v11176 = vmul.f32 %v4108, %v519
      %v11177 = vmul.f32 %v4110, %v520
      %v11178 = vmul.f32 %v4112, %v521
      %v11179 = vmul.f32 %v4114, %v522
      %v11180 = vmul.f32 %v4116, %v523
      %v11181 = vmul.f32 %v4118, %v524
      %v11182 = vmul.f32 %v4120, %v525
      %v11183 = vmul.f32 %v4122, %v526
      %v11184 = vmul.f32 %v4124, %v527
      %v11185 = vmul.f32 %v4126, %v528
      %v11186 = vmul.f32 %v4128, %v529
      %v11187 = vmul.f32 %v4130, %v530
      %v11188 = vmul.f32 %v4132, %v531
      %v11189 = vmul.f32 %v4134, %v532
      %v11190 = vmul.f32 %v4136, %v533
      %v11191 = vmul.f32 %v4138, %v534
      %v11192 = vmul.f32 %v4140, %v535
      %v11193 = vmul.f32 %v4142, %v536
      %v11194 = vmul.f32 %v4144, %v537
      %v11195 = vmul.f32 %v4146, %v538
      %v11196 = vmul.f32 %v4148, %v539
      %v11197 = vmul.f32 %v4150, %v540
      %v11198 = vmul.f32 %v4152, %v541
      %v11199 = vmul.f32 %v4154, %v542
      %v11200 = vmul.f32 %v4156, %v543
      %v11201 = vmul.f32 %v4158, %v544
      %v11202 = vmul.f32 %v4160, %v545
      %v11203 = vmul.f32 %v4162, %v546
      %v11204 = vmul.f32 %v4164, %v547
      %v11205 = vmul.f32 %v4166, %v548
      %v11206 = vmul.f32 %v4168, %v549
      %v11207 = vsub.f32 1.0, %v11143
      %v11208 = vsub.f32 1.0, %v11144
      %v11209 = vsub.f32 1.0, %v11145
      %v11210 = vsub.f32 1.0, %v11146
      %v11211 = vsub.f32 1.0, %v11147
      %v11212 = vsub.f32 1.0, %v11148
      %v11213 = vsub.f32 1.0, %v11149
      %v11214 = vsub.f32 1.0, %v11150
      %v11215 = vsub.f32 1.0, %v11151
      %v11216 = vsub.f32 1.0, %v11152
      %v11217 = vsub.f32 1.0, %v11153
      %v11218 = vsub.f32 1.0, %v11154
      %v11219 = vsub.f32 1.0, %v11155
      %v11220 = vsub.f32 1.0, %v11156
      %v11221 = vsub.f32 1.0, %v11157
      %v11222 = vsub.f32 1.0, %v11158
      %v11223 = vsub.f32 1.0, %v11159
      %v11224 = vsub.f32 1.0, %v11160
      %v11225 = vsub.f32 1.0, %v11161
      %v11226 = vsub.f32 1.0, %v11162
      %v11227 = vsub.f32 1.0, %v11163
      %v11228 = vsub.f32 1.0, %v11164
      %v11229 = vsub.f32 1.0, %v11165
      %v11230 = vsub.f32 1.0, %v11166
      %v11231 = vsub.f32 1.0, %v11167
      %v11232 = vsub.f32 1.0, %v11168
      %v11233 = vsub.f32 1.0, %v11169
      %v11234 = vsub.f32 1.0, %v11170
      %v11235 = vsub.f32 1.0, %v11171
      %v11236 = vsub.f32 1.0, %v11172
      %v11237 = vsub.f32 1.0, %v11173
      %v11238 = vsub.f32 1.0, %v11174
      %v11239 = vsub.f32 1.0, %v11175
      %v11240 = vsub.f32 1.0, %v11176
      %v11241 = vsub.f32 1.0, %v11177
      %v11242 = vsub.f32 1.0, %v11178
      %v11243 = vsub.f32 1.0, %v11179
      %v11244 = vsub.f32 1.0, %v11180
      %v11245 = vsub.f32 1.0, %v11181
      %v11246 = vsub.f32 1.0, %v11182
      %v11247 = vsub.f32 1.0, %v11183
      %v11248 = vsub.f32 1.0, %v11184
      %v11249 = vsub.f32 1.0, %v11185
      %v11250 = vsub.f32 1.0, %v11186
      %v11251 = vsub.f32 1.0, %v11187
      %v11252 = vsub.f32 1.0, %v11188
      %v11253 = vsub.f32 1.0, %v11189
      %v11254 = vsub.f32 1.0, %v11190
      %v11255 = vsub.f32 1.0, %v11191
      %v11256 = vsub.f32 1.0, %v11192
      %v11257 = vsub.f32 1.0, %v11193
      %v11258 = vsub.f32 1.0, %v11194
      %v11259 = vsub.f32 1.0, %v11195
      %v11260 = vsub.f32 1.0, %v11196
      %v11261 = vsub.f32 1.0, %v11197
      %v11262 = vsub.f32 1.0, %v11198
      %v11263 = vsub.f32 1.0, %v11199
      %v11264 = vsub.f32 1.0, %v11200
      %v11265 = vsub.f32 1.0, %v11201
      %v11266 = vsub.f32 1.0, %v11202
      %v11267 = vsub.f32 1.0, %v11203
      %v11268 = vsub.f32 1.0, %v11204
      %v11269 = vsub.f32 1.0, %v11205
      %v11270 = vsub.f32 1.0, %v11206
      %11335 = vrot.lane.b32.xlu0 %v11207, 113
      %v11336 = vpop.permute.xlu0 %11335
      %11337 = vrot.lane.b32.xlu0 %v11208, 113
      %v11338 = vpop.permute.xlu0 %11337
      %11339 = vrot.lane.b32.xlu0 %v11209, 113
      %v11340 = vpop.permute.xlu0 %11339
      %11341 = vrot.lane.b32.xlu0 %v11210, 113
      %v11342 = vpop.permute.xlu0 %11341
      %11343 = vrot.lane.b32.xlu0 %v11211, 113
      %v11344 = vpop.permute.xlu0 %11343
      %11345 = vrot.lane.b32.xlu0 %v11212, 113
      %v11346 = vpop.permute.xlu0 %11345
      %11347 = vrot.lane.b32.xlu0 %v11213, 113
      %v11348 = vpop.permute.xlu0 %11347
      %11349 = vrot.lane.b32.xlu0 %v11214, 113
      %v11350 = vpop.permute.xlu0 %11349
      %11351 = vrot.lane.b32.xlu0 %v11215, 113
      %v11352 = vpop.permute.xlu0 %11351
      %11353 = vrot.lane.b32.xlu0 %v11216, 113
      %v11354 = vpop.permute.xlu0 %11353
      %11355 = vrot.lane.b32.xlu0 %v11217, 113
      %v11356 = vpop.permute.xlu0 %11355
      %11357 = vrot.lane.b32.xlu0 %v11218, 113
      %v11358 = vpop.permute.xlu0 %11357
      %11359 = vrot.lane.b32.xlu0 %v11219, 113
      %v11360 = vpop.permute.xlu0 %11359
      %11361 = vrot.lane.b32.xlu0 %v11220, 113
      %v11362 = vpop.permute.xlu0 %11361
      %11363 = vrot.lane.b32.xlu0 %v11221, 113
      %v11364 = vpop.permute.xlu0 %11363
      %11365 = vrot.lane.b32.xlu0 %v11222, 113
      %v11366 = vpop.permute.xlu0 %11365
      %11367 = vrot.lane.b32.xlu0 %v11223, 113
      %v11368 = vpop.permute.xlu0 %11367
      %11369 = vrot.lane.b32.xlu0 %v11224, 113
      %v11370 = vpop.permute.xlu0 %11369
      %11371 = vrot.lane.b32.xlu0 %v11225, 113
      %v11372 = vpop.permute.xlu0 %11371
      %11373 = vrot.lane.b32.xlu0 %v11226, 113
      %v11374 = vpop.permute.xlu0 %11373
      %11375 = vrot.lane.b32.xlu0 %v11227, 113
      %v11376 = vpop.permute.xlu0 %11375
      %11377 = vrot.lane.b32.xlu0 %v11228, 113
      %v11378 = vpop.permute.xlu0 %11377
      %11379 = vrot.lane.b32.xlu0 %v11229, 113
      %v11380 = vpop.permute.xlu0 %11379
      %11381 = vrot.lane.b32.xlu0 %v11230, 113
      %v11382 = vpop.permute.xlu0 %11381
      %11383 = vrot.lane.b32.xlu0 %v11231, 113
      %v11384 = vpop.permute.xlu0 %11383
      %11385 = vrot.lane.b32.xlu0 %v11232, 113
      %v11386 = vpop.permute.xlu0 %11385
      %11387 = vrot.lane.b32.xlu0 %v11233, 113
      %v11388 = vpop.permute.xlu0 %11387
      %11389 = vrot.lane.b32.xlu0 %v11234, 113
      %v11390 = vpop.permute.xlu0 %11389
      %11391 = vrot.lane.b32.xlu0 %v11235, 113
      %v11392 = vpop.permute.xlu0 %11391
      %11393 = vrot.lane.b32.xlu0 %v11236, 113
      %v11394 = vpop.permute.xlu0 %11393
      %11395 = vrot.lane.b32.xlu0 %v11237, 113
      %v11396 = vpop.permute.xlu0 %11395
      %11397 = vrot.lane.b32.xlu0 %v11238, 113
      %v11398 = vpop.permute.xlu0 %11397
      %11399 = vrot.lane.b32.xlu0 %v11239, 113
      %v11400 = vpop.permute.xlu0 %11399
      %11401 = vrot.lane.b32.xlu0 %v11240, 113
      %v11402 = vpop.permute.xlu0 %11401
      %11403 = vrot.lane.b32.xlu0 %v11241, 113
      %v11404 = vpop.permute.xlu0 %11403
      %11405 = vrot.lane.b32.xlu0 %v11242, 113
      %v11406 = vpop.permute.xlu0 %11405
      %11407 = vrot.lane.b32.xlu0 %v11243, 113
      %v11408 = vpop.permute.xlu0 %11407
      %11409 = vrot.lane.b32.xlu0 %v11244, 113
      %v11410 = vpop.permute.xlu0 %11409
      %11411 = vrot.lane.b32.xlu0 %v11245, 113
      %v11412 = vpop.permute.xlu0 %11411
      %11413 = vrot.lane.b32.xlu0 %v11246, 113
      %v11414 = vpop.permute.xlu0 %11413
      %11415 = vrot.lane.b32.xlu0 %v11247, 113
      %v11416 = vpop.permute.xlu0 %11415
      %11417 = vrot.lane.b32.xlu0 %v11248, 113
      %v11418 = vpop.permute.xlu0 %11417
      %11419 = vrot.lane.b32.xlu0 %v11249, 113
      %v11420 = vpop.permute.xlu0 %11419
      %11421 = vrot.lane.b32.xlu0 %v11250, 113
      %v11422 = vpop.permute.xlu0 %11421
      %11423 = vrot.lane.b32.xlu0 %v11251, 113
      %v11424 = vpop.permute.xlu0 %11423
      %11425 = vrot.lane.b32.xlu0 %v11252, 113
      %v11426 = vpop.permute.xlu0 %11425
      %11427 = vrot.lane.b32.xlu0 %v11253, 113
      %v11428 = vpop.permute.xlu0 %11427
      %11429 = vrot.lane.b32.xlu0 %v11254, 113
      %v11430 = vpop.permute.xlu0 %11429
      %11431 = vrot.lane.b32.xlu0 %v11255, 113
      %v11432 = vpop.permute.xlu0 %11431
      %11433 = vrot.lane.b32.xlu0 %v11256, 113
      %v11434 = vpop.permute.xlu0 %11433
      %11435 = vrot.lane.b32.xlu0 %v11257, 113
      %v11436 = vpop.permute.xlu0 %11435
      %11437 = vrot.lane.b32.xlu0 %v11258, 113
      %v11438 = vpop.permute.xlu0 %11437
      %11439 = vrot.lane.b32.xlu0 %v11259, 113
      %v11440 = vpop.permute.xlu0 %11439
      %11441 = vrot.lane.b32.xlu0 %v11260, 113
      %v11442 = vpop.permute.xlu0 %11441
      %11443 = vrot.lane.b32.xlu0 %v11261, 113
      %v11444 = vpop.permute.xlu0 %11443
      %11445 = vrot.lane.b32.xlu0 %v11262, 113
      %v11446 = vpop.permute.xlu0 %11445
      %11447 = vrot.lane.b32.xlu0 %v11263, 113
      %v11448 = vpop.permute.xlu0 %11447
      %11449 = vrot.lane.b32.xlu0 %v11264, 113
      %v11450 = vpop.permute.xlu0 %11449
      %11451 = vrot.lane.b32.xlu0 %v11265, 113
      %v11452 = vpop.permute.xlu0 %11451
      %11453 = vrot.lane.b32.xlu0 %v11266, 113
      %v11454 = vpop.permute.xlu0 %11453
      %11455 = vrot.lane.b32.xlu0 %v11267, 113
      %v11456 = vpop.permute.xlu0 %11455
      %11457 = vrot.lane.b32.xlu0 %v11268, 113
      %v11458 = vpop.permute.xlu0 %11457
      %11459 = vrot.lane.b32.xlu0 %v11269, 113
      %v11460 = vpop.permute.xlu0 %11459
      %11461 = vrot.lane.b32.xlu0 %v11270, 113
      %v11462 = vpop.permute.xlu0 %11461
      %vm11527 = vcmask 7168
      %11528 = vst.msk [vmem:[%s350] sm:$0xff] %vm11527, %v11336
      %11529 = vst.msk [vmem:[%s350 + $0x8] sm:$0xff] %vm11527, %v11338
      %11530 = vst.msk [vmem:[%s350 + $0x10] sm:$0xff] %vm11527, %v11340
      %11531 = vst.msk [vmem:[%s350 + $0x18] sm:$0xff] %vm11527, %v11342
      %11532 = vst.msk [vmem:[%s350 + $0x20] sm:$0xff] %vm11527, %v11344
      %11533 = vst.msk [vmem:[%s350 + $0x28] sm:$0xff] %vm11527, %v11346
      %11534 = vst.msk [vmem:[%s350 + $0x30] sm:$0xff] %vm11527, %v11348
      %11535 = vst.msk [vmem:[%s350 + $0x38] sm:$0xff] %vm11527, %v11350
      %11536 = vst.msk [vmem:[%s350 + $0x40] sm:$0xff] %vm11527, %v11352
      %11537 = vst.msk [vmem:[%s350 + $0x48] sm:$0xff] %vm11527, %v11354
      %11538 = vst.msk [vmem:[%s350 + $0x50] sm:$0xff] %vm11527, %v11356
      %11539 = vst.msk [vmem:[%s350 + $0x58] sm:$0xff] %vm11527, %v11358
      %11540 = vst.msk [vmem:[%s350 + $0x60] sm:$0xff] %vm11527, %v11360
      %11541 = vst.msk [vmem:[%s350 + $0x68] sm:$0xff] %vm11527, %v11362
      %11542 = vst.msk [vmem:[%s350 + $0x70] sm:$0xff] %vm11527, %v11364
      %11543 = vst.msk [vmem:[%s350 + $0x78] sm:$0xff] %vm11527, %v11366
      %11544 = vst.msk [vmem:[%s350 + $0x80] sm:$0xff] %vm11527, %v11368
      %11545 = vst.msk [vmem:[%s350 + $0x88] sm:$0xff] %vm11527, %v11370
      %11546 = vst.msk [vmem:[%s350 + $0x90] sm:$0xff] %vm11527, %v11372
      %11547 = vst.msk [vmem:[%s350 + $0x98] sm:$0xff] %vm11527, %v11374
      %11548 = vst.msk [vmem:[%s350 + $0xa0] sm:$0xff] %vm11527, %v11376
      %11549 = vst.msk [vmem:[%s350 + $0xa8] sm:$0xff] %vm11527, %v11378
      %11550 = vst.msk [vmem:[%s350 + $0xb0] sm:$0xff] %vm11527, %v11380
      %11551 = vst.msk [vmem:[%s350 + $0xb8] sm:$0xff] %vm11527, %v11382
      %11552 = vst.msk [vmem:[%s350 + $0xc0] sm:$0xff] %vm11527, %v11384
      %11553 = vst.msk [vmem:[%s350 + $0xc8] sm:$0xff] %vm11527, %v11386
      %11554 = vst.msk [vmem:[%s350 + $0xd0] sm:$0xff] %vm11527, %v11388
      %11555 = vst.msk [vmem:[%s350 + $0xd8] sm:$0xff] %vm11527, %v11390
      %11556 = vst.msk [vmem:[%s350 + $0xe0] sm:$0xff] %vm11527, %v11392
      %11557 = vst.msk [vmem:[%s350 + $0xe8] sm:$0xff] %vm11527, %v11394
      %11558 = vst.msk [vmem:[%s350 + $0xf0] sm:$0xff] %vm11527, %v11396
      %11559 = vst.msk [vmem:[%s350 + $0xf8] sm:$0xff] %vm11527, %v11398
      %11560 = vst.msk [vmem:[%s350 + $0x100] sm:$0xff] %vm11527, %v11400
      %11561 = vst.msk [vmem:[%s350 + $0x108] sm:$0xff] %vm11527, %v11402
      %11562 = vst.msk [vmem:[%s350 + $0x110] sm:$0xff] %vm11527, %v11404
      %11563 = vst.msk [vmem:[%s350 + $0x118] sm:$0xff] %vm11527, %v11406
      %11564 = vst.msk [vmem:[%s350 + $0x120] sm:$0xff] %vm11527, %v11408
      %11565 = vst.msk [vmem:[%s350 + $0x128] sm:$0xff] %vm11527, %v11410
      %11566 = vst.msk [vmem:[%s350 + $0x130] sm:$0xff] %vm11527, %v11412
      %11567 = vst.msk [vmem:[%s350 + $0x138] sm:$0xff] %vm11527, %v11414
      %11568 = vst.msk [vmem:[%s350 + $0x140] sm:$0xff] %vm11527, %v11416
      %11569 = vst.msk [vmem:[%s350 + $0x148] sm:$0xff] %vm11527, %v11418
      %11570 = vst.msk [vmem:[%s350 + $0x150] sm:$0xff] %vm11527, %v11420
      %11571 = vst.msk [vmem:[%s350 + $0x158] sm:$0xff] %vm11527, %v11422
      %11572 = vst.msk [vmem:[%s350 + $0x160] sm:$0xff] %vm11527, %v11424
      %11573 = vst.msk [vmem:[%s350 + $0x168] sm:$0xff] %vm11527, %v11426
      %11574 = vst.msk [vmem:[%s350 + $0x170] sm:$0xff] %vm11527, %v11428
      %11575 = vst.msk [vmem:[%s350 + $0x178] sm:$0xff] %vm11527, %v11430
      %11576 = vst.msk [vmem:[%s350 + $0x180] sm:$0xff] %vm11527, %v11432
      %11577 = vst.msk [vmem:[%s350 + $0x188] sm:$0xff] %vm11527, %v11434
      %11578 = vst.msk [vmem:[%s350 + $0x190] sm:$0xff] %vm11527, %v11436
      %11579 = vst.msk [vmem:[%s350 + $0x198] sm:$0xff] %vm11527, %v11438
      %11580 = vst.msk [vmem:[%s350 + $0x1a0] sm:$0xff] %vm11527, %v11440
      %11581 = vst.msk [vmem:[%s350 + $0x1a8] sm:$0xff] %vm11527, %v11442
      %11582 = vst.msk [vmem:[%s350 + $0x1b0] sm:$0xff] %vm11527, %v11444
      %11583 = vst.msk [vmem:[%s350 + $0x1b8] sm:$0xff] %vm11527, %v11446
      %11584 = vst.msk [vmem:[%s350 + $0x1c0] sm:$0xff] %vm11527, %v11448
      %11585 = vst.msk [vmem:[%s350 + $0x1c8] sm:$0xff] %vm11527, %v11450
      %11586 = vst.msk [vmem:[%s350 + $0x1d0] sm:$0xff] %vm11527, %v11452
      %11587 = vst.msk [vmem:[%s350 + $0x1d8] sm:$0xff] %vm11527, %v11454
      %11588 = vst.msk [vmem:[%s350 + $0x1e0] sm:$0xff] %vm11527, %v11456
      %11589 = vst.msk [vmem:[%s350 + $0x1e8] sm:$0xff] %vm11527, %v11458
      %11590 = vst.msk [vmem:[%s350 + $0x1f0] sm:$0xff] %vm11527, %v11460
      %11591 = vst.msk [vmem:[%s350 + $0x1f8] sm:$0xff] %vm11527, %v11462
      %v11592 = vld [vmem:[%s3] sm:$0x1]
      %v11594 = vlaneseq
      %v11595 = vshrl.u32 %v11594, 7
      %v11596 = vsub.s32 0, %v11595
      %v11597 = vrot.slane %v11592, %v11596
      %v11599 = vmul.f32 %v4169, %v11597
      %v11600 = vmul.f32 %v4170, %v11597
      %v11601 = vmul.f32 %v4171, %v11597
      %v11602 = vmul.f32 %v4172, %v11597
      %v11603 = vmul.f32 %v4173, %v11597
      %v11604 = vmul.f32 %v4174, %v11597
      %v11605 = vmul.f32 %v4175, %v11597
      %v11606 = vmul.f32 %v4176, %v11597
      %v11607 = vmul.f32 %v4177, %v11597
      %v11608 = vmul.f32 %v4178, %v11597
      %v11609 = vmul.f32 %v4179, %v11597
      %v11610 = vmul.f32 %v4180, %v11597
      %v11611 = vmul.f32 %v4181, %v11597
      %v11612 = vmul.f32 %v4182, %v11597
      %v11613 = vmul.f32 %v4183, %v11597
      %v11614 = vmul.f32 %v4184, %v11597
      %v11615 = vmul.f32 %v4185, %v11597
      %v11616 = vmul.f32 %v4186, %v11597
      %v11617 = vmul.f32 %v4187, %v11597
      %v11618 = vmul.f32 %v4188, %v11597
      %v11619 = vmul.f32 %v4189, %v11597
      %v11620 = vmul.f32 %v4190, %v11597
      %v11621 = vmul.f32 %v4191, %v11597
      %v11622 = vmul.f32 %v4192, %v11597
      %v11623 = vmul.f32 %v4193, %v11597
      %v11624 = vmul.f32 %v4194, %v11597
      %v11625 = vmul.f32 %v4195, %v11597
      %v11626 = vmul.f32 %v4196, %v11597
      %v11627 = vmul.f32 %v4197, %v11597
      %v11628 = vmul.f32 %v4198, %v11597
      %v11629 = vmul.f32 %v4199, %v11597
      %v11630 = vmul.f32 %v4200, %v11597
      %v11631 = vmul.f32 %v4201, %v11597
      %v11632 = vmul.f32 %v4202, %v11597
      %v11633 = vmul.f32 %v4203, %v11597
      %v11634 = vmul.f32 %v4204, %v11597
      %v11635 = vmul.f32 %v4205, %v11597
      %v11636 = vmul.f32 %v4206, %v11597
      %v11637 = vmul.f32 %v4207, %v11597
      %v11638 = vmul.f32 %v4208, %v11597
      %v11639 = vmul.f32 %v4209, %v11597
      %v11640 = vmul.f32 %v4210, %v11597
      %v11641 = vmul.f32 %v4211, %v11597
      %v11642 = vmul.f32 %v4212, %v11597
      %v11643 = vmul.f32 %v4213, %v11597
      %v11644 = vmul.f32 %v4214, %v11597
      %v11645 = vmul.f32 %v4215, %v11597
      %v11646 = vmul.f32 %v4216, %v11597
      %v11647 = vmul.f32 %v4217, %v11597
      %v11648 = vmul.f32 %v4218, %v11597
      %v11649 = vmul.f32 %v4219, %v11597
      %v11650 = vmul.f32 %v4220, %v11597
      %v11651 = vmul.f32 %v4221, %v11597
      %v11652 = vmul.f32 %v4222, %v11597
      %v11653 = vmul.f32 %v4223, %v11597
      %v11654 = vmul.f32 %v4224, %v11597
      %v11655 = vmul.f32 %v4225, %v11597
      %v11656 = vmul.f32 %v4226, %v11597
      %v11657 = vmul.f32 %v4227, %v11597
      %v11658 = vmul.f32 %v4228, %v11597
      %v11659 = vmul.f32 %v4229, %v11597
      %v11660 = vmul.f32 %v4230, %v11597
      %v11661 = vmul.f32 %v4231, %v11597
      %v11662 = vmul.f32 %v4232, %v11597
      %v11663 = vsel %vm680, %v11599, 0.0
      %11664 = vadd.xlane.f32.xlu0 %v11663
      %v11665 = vpop.xlane.xlu0 %11664
      %v11666 = vsel %vm680, %v11600, 0.0
      %11667 = vadd.xlane.f32.xlu0 %v11666
      %v11668 = vpop.xlane.xlu0 %11667
      %v11669 = vsel %vm680, %v11601, 0.0
      %11670 = vadd.xlane.f32.xlu0 %v11669
      %v11671 = vpop.xlane.xlu0 %11670
      %v11672 = vsel %vm680, %v11602, 0.0
      %11673 = vadd.xlane.f32.xlu0 %v11672
      %v11674 = vpop.xlane.xlu0 %11673
      %v11675 = vsel %vm680, %v11603, 0.0
      %11676 = vadd.xlane.f32.xlu0 %v11675
      %v11677 = vpop.xlane.xlu0 %11676
      %v11678 = vsel %vm680, %v11604, 0.0
      %11679 = vadd.xlane.f32.xlu0 %v11678
      %v11680 = vpop.xlane.xlu0 %11679
      %v11681 = vsel %vm680, %v11605, 0.0
      %11682 = vadd.xlane.f32.xlu0 %v11681
      %v11683 = vpop.xlane.xlu0 %11682
      %v11684 = vsel %vm680, %v11606, 0.0
      %11685 = vadd.xlane.f32.xlu0 %v11684
      %v11686 = vpop.xlane.xlu0 %11685
      %v11687 = vsel %vm680, %v11607, 0.0
      %11688 = vadd.xlane.f32.xlu0 %v11687
      %v11689 = vpop.xlane.xlu0 %11688
      %v11690 = vsel %vm680, %v11608, 0.0
      %11691 = vadd.xlane.f32.xlu0 %v11690
      %v11692 = vpop.xlane.xlu0 %11691
      %v11693 = vsel %vm680, %v11609, 0.0
      %11694 = vadd.xlane.f32.xlu0 %v11693
      %v11695 = vpop.xlane.xlu0 %11694
      %v11696 = vsel %vm680, %v11610, 0.0
      %11697 = vadd.xlane.f32.xlu0 %v11696
      %v11698 = vpop.xlane.xlu0 %11697
      %v11699 = vsel %vm680, %v11611, 0.0
      %11700 = vadd.xlane.f32.xlu0 %v11699
      %v11701 = vpop.xlane.xlu0 %11700
      %v11702 = vsel %vm680, %v11612, 0.0
      %11703 = vadd.xlane.f32.xlu0 %v11702
      %v11704 = vpop.xlane.xlu0 %11703
      %v11705 = vsel %vm680, %v11613, 0.0
      %11706 = vadd.xlane.f32.xlu0 %v11705
      %v11707 = vpop.xlane.xlu0 %11706
      %v11708 = vsel %vm680, %v11614, 0.0
      %11709 = vadd.xlane.f32.xlu0 %v11708
      %v11710 = vpop.xlane.xlu0 %11709
      %v11711 = vsel %vm680, %v11615, 0.0
      %11712 = vadd.xlane.f32.xlu0 %v11711
      %v11713 = vpop.xlane.xlu0 %11712
      %v11714 = vsel %vm680, %v11616, 0.0
      %11715 = vadd.xlane.f32.xlu0 %v11714
      %v11716 = vpop.xlane.xlu0 %11715
      %v11717 = vsel %vm680, %v11617, 0.0
      %11718 = vadd.xlane.f32.xlu0 %v11717
      %v11719 = vpop.xlane.xlu0 %11718
      %v11720 = vsel %vm680, %v11618, 0.0
      %11721 = vadd.xlane.f32.xlu0 %v11720
      %v11722 = vpop.xlane.xlu0 %11721
      %v11723 = vsel %vm680, %v11619, 0.0
      %11724 = vadd.xlane.f32.xlu0 %v11723
      %v11725 = vpop.xlane.xlu0 %11724
      %v11726 = vsel %vm680, %v11620, 0.0
      %11727 = vadd.xlane.f32.xlu0 %v11726
      %v11728 = vpop.xlane.xlu0 %11727
      %v11729 = vsel %vm680, %v11621, 0.0
      %11730 = vadd.xlane.f32.xlu0 %v11729
      %v11731 = vpop.xlane.xlu0 %11730
      %v11732 = vsel %vm680, %v11622, 0.0
      %11733 = vadd.xlane.f32.xlu0 %v11732
      %v11734 = vpop.xlane.xlu0 %11733
      %v11735 = vsel %vm680, %v11623, 0.0
      %11736 = vadd.xlane.f32.xlu0 %v11735
      %v11737 = vpop.xlane.xlu0 %11736
      %v11738 = vsel %vm680, %v11624, 0.0
      %11739 = vadd.xlane.f32.xlu0 %v11738
      %v11740 = vpop.xlane.xlu0 %11739
      %v11741 = vsel %vm680, %v11625, 0.0
      %11742 = vadd.xlane.f32.xlu0 %v11741
      %v11743 = vpop.xlane.xlu0 %11742
      %v11744 = vsel %vm680, %v11626, 0.0
      %11745 = vadd.xlane.f32.xlu0 %v11744
      %v11746 = vpop.xlane.xlu0 %11745
      %v11747 = vsel %vm680, %v11627, 0.0
      %11748 = vadd.xlane.f32.xlu0 %v11747
      %v11749 = vpop.xlane.xlu0 %11748
      %v11750 = vsel %vm680, %v11628, 0.0
      %11751 = vadd.xlane.f32.xlu0 %v11750
      %v11752 = vpop.xlane.xlu0 %11751
      %v11753 = vsel %vm680, %v11629, 0.0
      %11754 = vadd.xlane.f32.xlu0 %v11753
      %v11755 = vpop.xlane.xlu0 %11754
      %v11756 = vsel %vm680, %v11630, 0.0
      %11757 = vadd.xlane.f32.xlu0 %v11756
      %v11758 = vpop.xlane.xlu0 %11757
      %v11759 = vsel %vm680, %v11631, 0.0
      %11760 = vadd.xlane.f32.xlu0 %v11759
      %v11761 = vpop.xlane.xlu0 %11760
      %v11762 = vsel %vm680, %v11632, 0.0
      %11763 = vadd.xlane.f32.xlu0 %v11762
      %v11764 = vpop.xlane.xlu0 %11763
      %v11765 = vsel %vm680, %v11633, 0.0
      %11766 = vadd.xlane.f32.xlu0 %v11765
      %v11767 = vpop.xlane.xlu0 %11766
      %v11768 = vsel %vm680, %v11634, 0.0
      %11769 = vadd.xlane.f32.xlu0 %v11768
      %v11770 = vpop.xlane.xlu0 %11769
      %v11771 = vsel %vm680, %v11635, 0.0
      %11772 = vadd.xlane.f32.xlu0 %v11771
      %v11773 = vpop.xlane.xlu0 %11772
      %v11774 = vsel %vm680, %v11636, 0.0
      %11775 = vadd.xlane.f32.xlu0 %v11774
      %v11776 = vpop.xlane.xlu0 %11775
      %v11777 = vsel %vm680, %v11637, 0.0
      %11778 = vadd.xlane.f32.xlu0 %v11777
      %v11779 = vpop.xlane.xlu0 %11778
      %v11780 = vsel %vm680, %v11638, 0.0
      %11781 = vadd.xlane.f32.xlu0 %v11780
      %v11782 = vpop.xlane.xlu0 %11781
      %v11783 = vsel %vm680, %v11639, 0.0
      %11784 = vadd.xlane.f32.xlu0 %v11783
      %v11785 = vpop.xlane.xlu0 %11784
      %v11786 = vsel %vm680, %v11640, 0.0
      %11787 = vadd.xlane.f32.xlu0 %v11786
      %v11788 = vpop.xlane.xlu0 %11787
      %v11789 = vsel %vm680, %v11641, 0.0
      %11790 = vadd.xlane.f32.xlu0 %v11789
      %v11791 = vpop.xlane.xlu0 %11790
      %v11792 = vsel %vm680, %v11642, 0.0
      %11793 = vadd.xlane.f32.xlu0 %v11792
      %v11794 = vpop.xlane.xlu0 %11793
      %v11795 = vsel %vm680, %v11643, 0.0
      %11796 = vadd.xlane.f32.xlu0 %v11795
      %v11797 = vpop.xlane.xlu0 %11796
      %v11798 = vsel %vm680, %v11644, 0.0
      %11799 = vadd.xlane.f32.xlu0 %v11798
      %v11800 = vpop.xlane.xlu0 %11799
      %v11801 = vsel %vm680, %v11645, 0.0
      %11802 = vadd.xlane.f32.xlu0 %v11801
      %v11803 = vpop.xlane.xlu0 %11802
      %v11804 = vsel %vm680, %v11646, 0.0
      %11805 = vadd.xlane.f32.xlu0 %v11804
      %v11806 = vpop.xlane.xlu0 %11805
      %v11807 = vsel %vm680, %v11647, 0.0
      %11808 = vadd.xlane.f32.xlu0 %v11807
      %v11809 = vpop.xlane.xlu0 %11808
      %v11810 = vsel %vm680, %v11648, 0.0
      %11811 = vadd.xlane.f32.xlu0 %v11810
      %v11812 = vpop.xlane.xlu0 %11811
      %v11813 = vsel %vm680, %v11649, 0.0
      %11814 = vadd.xlane.f32.xlu0 %v11813
      %v11815 = vpop.xlane.xlu0 %11814
      %v11816 = vsel %vm680, %v11650, 0.0
      %11817 = vadd.xlane.f32.xlu0 %v11816
      %v11818 = vpop.xlane.xlu0 %11817
      %v11819 = vsel %vm680, %v11651, 0.0
      %11820 = vadd.xlane.f32.xlu0 %v11819
      %v11821 = vpop.xlane.xlu0 %11820
      %v11822 = vsel %vm680, %v11652, 0.0
      %11823 = vadd.xlane.f32.xlu0 %v11822
      %v11824 = vpop.xlane.xlu0 %11823
      %v11825 = vsel %vm680, %v11653, 0.0
      %11826 = vadd.xlane.f32.xlu0 %v11825
      %v11827 = vpop.xlane.xlu0 %11826
      %v11828 = vsel %vm680, %v11654, 0.0
      %11829 = vadd.xlane.f32.xlu0 %v11828
      %v11830 = vpop.xlane.xlu0 %11829
      %v11831 = vsel %vm680, %v11655, 0.0
      %11832 = vadd.xlane.f32.xlu0 %v11831
      %v11833 = vpop.xlane.xlu0 %11832
      %v11834 = vsel %vm680, %v11656, 0.0
      %11835 = vadd.xlane.f32.xlu0 %v11834
      %v11836 = vpop.xlane.xlu0 %11835
      %v11837 = vsel %vm680, %v11657, 0.0
      %11838 = vadd.xlane.f32.xlu0 %v11837
      %v11839 = vpop.xlane.xlu0 %11838
      %v11840 = vsel %vm680, %v11658, 0.0
      %11841 = vadd.xlane.f32.xlu0 %v11840
      %v11842 = vpop.xlane.xlu0 %11841
      %v11843 = vsel %vm680, %v11659, 0.0
      %11844 = vadd.xlane.f32.xlu0 %v11843
      %v11845 = vpop.xlane.xlu0 %11844
      %v11846 = vsel %vm680, %v11660, 0.0
      %11847 = vadd.xlane.f32.xlu0 %v11846
      %v11848 = vpop.xlane.xlu0 %11847
      %v11849 = vsel %vm680, %v11661, 0.0
      %11850 = vadd.xlane.f32.xlu0 %v11849
      %v11851 = vpop.xlane.xlu0 %11850
      %v11852 = vsel %vm680, %v11662, 0.0
      %11853 = vadd.xlane.f32.xlu0 %v11852
      %v11854 = vpop.xlane.xlu0 %11853
      %11855 = vst.msk [vmem:[%s356] sm:$0xff] %vm11527, %v11665
      %11856 = vst.msk [vmem:[%s356 + $0x8] sm:$0xff] %vm11527, %v11668
      %11857 = vst.msk [vmem:[%s356 + $0x10] sm:$0xff] %vm11527, %v11671
      %11858 = vst.msk [vmem:[%s356 + $0x18] sm:$0xff] %vm11527, %v11674
      %11859 = vst.msk [vmem:[%s356 + $0x20] sm:$0xff] %vm11527, %v11677
      %11860 = vst.msk [vmem:[%s356 + $0x28] sm:$0xff] %vm11527, %v11680
      %11861 = vst.msk [vmem:[%s356 + $0x30] sm:$0xff] %vm11527, %v11683
      %11862 = vst.msk [vmem:[%s356 + $0x38] sm:$0xff] %vm11527, %v11686
      %11863 = vst.msk [vmem:[%s356 + $0x40] sm:$0xff] %vm11527, %v11689
      %11864 = vst.msk [vmem:[%s356 + $0x48] sm:$0xff] %vm11527, %v11692
      %11865 = vst.msk [vmem:[%s356 + $0x50] sm:$0xff] %vm11527, %v11695
      %11866 = vst.msk [vmem:[%s356 + $0x58] sm:$0xff] %vm11527, %v11698
      %11867 = vst.msk [vmem:[%s356 + $0x60] sm:$0xff] %vm11527, %v11701
      %11868 = vst.msk [vmem:[%s356 + $0x68] sm:$0xff] %vm11527, %v11704
      %11869 = vst.msk [vmem:[%s356 + $0x70] sm:$0xff] %vm11527, %v11707
      %11870 = vst.msk [vmem:[%s356 + $0x78] sm:$0xff] %vm11527, %v11710
      %11871 = vst.msk [vmem:[%s356 + $0x80] sm:$0xff] %vm11527, %v11713
      %11872 = vst.msk [vmem:[%s356 + $0x88] sm:$0xff] %vm11527, %v11716
      %11873 = vst.msk [vmem:[%s356 + $0x90] sm:$0xff] %vm11527, %v11719
      %11874 = vst.msk [vmem:[%s356 + $0x98] sm:$0xff] %vm11527, %v11722
      %11875 = vst.msk [vmem:[%s356 + $0xa0] sm:$0xff] %vm11527, %v11725
      %11876 = vst.msk [vmem:[%s356 + $0xa8] sm:$0xff] %vm11527, %v11728
      %11877 = vst.msk [vmem:[%s356 + $0xb0] sm:$0xff] %vm11527, %v11731
      %11878 = vst.msk [vmem:[%s356 + $0xb8] sm:$0xff] %vm11527, %v11734
      %11879 = vst.msk [vmem:[%s356 + $0xc0] sm:$0xff] %vm11527, %v11737
      %11880 = vst.msk [vmem:[%s356 + $0xc8] sm:$0xff] %vm11527, %v11740
      %11881 = vst.msk [vmem:[%s356 + $0xd0] sm:$0xff] %vm11527, %v11743
      %11882 = vst.msk [vmem:[%s356 + $0xd8] sm:$0xff] %vm11527, %v11746
      %11883 = vst.msk [vmem:[%s356 + $0xe0] sm:$0xff] %vm11527, %v11749
      %11884 = vst.msk [vmem:[%s356 + $0xe8] sm:$0xff] %vm11527, %v11752
      %11885 = vst.msk [vmem:[%s356 + $0xf0] sm:$0xff] %vm11527, %v11755
      %11886 = vst.msk [vmem:[%s356 + $0xf8] sm:$0xff] %vm11527, %v11758
      %11887 = vst.msk [vmem:[%s356 + $0x100] sm:$0xff] %vm11527, %v11761
      %11888 = vst.msk [vmem:[%s356 + $0x108] sm:$0xff] %vm11527, %v11764
      %11889 = vst.msk [vmem:[%s356 + $0x110] sm:$0xff] %vm11527, %v11767
      %11890 = vst.msk [vmem:[%s356 + $0x118] sm:$0xff] %vm11527, %v11770
      %11891 = vst.msk [vmem:[%s356 + $0x120] sm:$0xff] %vm11527, %v11773
      %11892 = vst.msk [vmem:[%s356 + $0x128] sm:$0xff] %vm11527, %v11776
      %11893 = vst.msk [vmem:[%s356 + $0x130] sm:$0xff] %vm11527, %v11779
      %11894 = vst.msk [vmem:[%s356 + $0x138] sm:$0xff] %vm11527, %v11782
      %11895 = vst.msk [vmem:[%s356 + $0x140] sm:$0xff] %vm11527, %v11785
      %11896 = vst.msk [vmem:[%s356 + $0x148] sm:$0xff] %vm11527, %v11788
      %11897 = vst.msk [vmem:[%s356 + $0x150] sm:$0xff] %vm11527, %v11791
      %11898 = vst.msk [vmem:[%s356 + $0x158] sm:$0xff] %vm11527, %v11794
      %11899 = vst.msk [vmem:[%s356 + $0x160] sm:$0xff] %vm11527, %v11797
      %11900 = vst.msk [vmem:[%s356 + $0x168] sm:$0xff] %vm11527, %v11800
      %11901 = vst.msk [vmem:[%s356 + $0x170] sm:$0xff] %vm11527, %v11803
      %11902 = vst.msk [vmem:[%s356 + $0x178] sm:$0xff] %vm11527, %v11806
      %11903 = vst.msk [vmem:[%s356 + $0x180] sm:$0xff] %vm11527, %v11809
      %11904 = vst.msk [vmem:[%s356 + $0x188] sm:$0xff] %vm11527, %v11812
      %11905 = vst.msk [vmem:[%s356 + $0x190] sm:$0xff] %vm11527, %v11815
      %11906 = vst.msk [vmem:[%s356 + $0x198] sm:$0xff] %vm11527, %v11818
      %11907 = vst.msk [vmem:[%s356 + $0x1a0] sm:$0xff] %vm11527, %v11821
      %11908 = vst.msk [vmem:[%s356 + $0x1a8] sm:$0xff] %vm11527, %v11824
      %11909 = vst.msk [vmem:[%s356 + $0x1b0] sm:$0xff] %vm11527, %v11827
      %11910 = vst.msk [vmem:[%s356 + $0x1b8] sm:$0xff] %vm11527, %v11830
      %11911 = vst.msk [vmem:[%s356 + $0x1c0] sm:$0xff] %vm11527, %v11833
      %11912 = vst.msk [vmem:[%s356 + $0x1c8] sm:$0xff] %vm11527, %v11836
      %11913 = vst.msk [vmem:[%s356 + $0x1d0] sm:$0xff] %vm11527, %v11839
      %11914 = vst.msk [vmem:[%s356 + $0x1d8] sm:$0xff] %vm11527, %v11842
      %11915 = vst.msk [vmem:[%s356 + $0x1e0] sm:$0xff] %vm11527, %v11845
      %11916 = vst.msk [vmem:[%s356 + $0x1e8] sm:$0xff] %vm11527, %v11848
      %11917 = vst.msk [vmem:[%s356 + $0x1f0] sm:$0xff] %vm11527, %v11851
      %11918 = vst.msk [vmem:[%s356 + $0x1f8] sm:$0xff] %vm11527, %v11854
      %s11919 = smul.u32 64, %s20
      %p11920 = scmp.lt.s32.totalorder %s11919, 127
      %s11921 = scalar_select %p11920, %s11919, 127
      %s11922 = smul.addr %s11921, 8
      %s11923 = scalar_lea.vmem %s6, %s11922
      %s11924 = smul.u32 64, %s20
      %p11925 = scmp.lt.s32.totalorder %s11924, 127
      %s11926 = scalar_select %p11925, %s11924, 127
      %s11927 = smul.addr %s11926, 8
      %s11928 = scalar_lea.vmem %s7, %s11927
      %s11929 = smul.u32 64, %s20
      %p11930 = scmp.lt.s32.totalorder %s11929, 127
      %s11931 = scalar_select %p11930, %s11929, 127
      %s11932 = smul.addr %s11931, 8
      %s11933 = scalar_lea.vmem %s8, %s11932
      // Predicated region
      $region45: #{ray_marcher.1} parent=43 // pred_check
        %p11934 = pneg %p174
      $region46: #{ray_marcher.1} parent=43 // pred_check_branch
        %11936 = sbr.rel (%p11934) target = $region48
      $region47: #{ray_marcher.1} parent=43 // pred_region
        %s11937 = smul.u32 64, %s20
      $region48: #{ray_marcher.1} parent=43 // pred_fallthru
        _
      // Predicated region
      $region49: #{ray_marcher.1} parent=43 // pred_check
        %p11938 = pneg %p200
      $region50: #{ray_marcher.1} parent=43 // pred_check_branch
        %11940 = sbr.rel (%p11938) target = $region52
      $region51: #{ray_marcher.1} parent=43 // pred_region
        %s11941 = smul.u32 64, %s20
      $region52: #{ray_marcher.1} parent=43 // pred_fallthru
        _
      // Predicated region
      $region53: #{ray_marcher.1} parent=43 // pred_check
        %p11942 = pneg %p226
      $region54: #{ray_marcher.1} parent=43 // pred_check_branch
        %11944 = sbr.rel (%p11942) target = $region56
      $region55: #{ray_marcher.1} parent=43 // pred_region
        %s11945 = smul.u32 64, %s20
      $region56: #{ray_marcher.1} parent=43 // pred_fallthru
        _
    $region44: #{ray_marcher.1} parent=5 // pred_fallthru
      _
    %p11946 = scmp.le.s32.totalorder 2, %s15
    // Predicated region
    $region57: #{ray_marcher.1} parent=5 // pred_check
      %p11947 = pneg %p11946
    $region58: #{ray_marcher.1} parent=5 // pred_check_branch
      %11949 = sbr.rel (%p11947) target = $region60
    $region59: #{ray_marcher.1} parent=5 // pred_region
      %s11950 = ssub.s32 %s15, 2
      // Predicated region
      $region61: #{ray_marcher.1} parent=59 // pred_check
        %p11951 = pneg %p180
      $region62: #{ray_marcher.1} parent=59 // pred_check_branch
        %11953 = sbr.rel (%p11951) target = $region64
      $region63: #{ray_marcher.1} parent=59 // pred_region
        %s11954 = smul.u32 64, %s21
        %p11955 = scmp.lt.s32.totalorder %s11954, 127
        %s11956 = scalar_select %p11955, %s11954, 127
        %s11957 = smul.addr %s11956, 8
        %s11958 = scalar_lea.vmem %s6, %s11957
      $region64: #{ray_marcher.1} parent=59 // pred_fallthru
        _
      // Predicated region
      $region65: #{ray_marcher.1} parent=59 // pred_check
        %p11959 = pneg %p206
      $region66: #{ray_marcher.1} parent=59 // pred_check_branch
        %11961 = sbr.rel (%p11959) target = $region68
      $region67: #{ray_marcher.1} parent=59 // pred_region
        %s11962 = smul.u32 64, %s21
        %p11963 = scmp.lt.s32.totalorder %s11962, 127
        %s11964 = scalar_select %p11963, %s11962, 127
        %s11965 = smul.addr %s11964, 8
        %s11966 = scalar_lea.vmem %s7, %s11965
      $region68: #{ray_marcher.1} parent=59 // pred_fallthru
        _
      // Predicated region
      $region69: #{ray_marcher.1} parent=59 // pred_check
        %p11967 = pneg %p232
      $region70: #{ray_marcher.1} parent=59 // pred_check_branch
        %11969 = sbr.rel (%p11967) target = $region72
      $region71: #{ray_marcher.1} parent=59 // pred_region
        %s11970 = smul.u32 64, %s21
        %p11971 = scmp.lt.s32.totalorder %s11970, 127
        %s11972 = scalar_select %p11971, %s11970, 127
        %s11973 = smul.addr %s11972, 8
        %s11974 = scalar_lea.vmem %s8, %s11973
      $region72: #{ray_marcher.1} parent=59 // pred_fallthru
        _
    $region60: #{ray_marcher.1} parent=5 // pred_fallthru
      _
  $region6: #{ray_marcher.1} parent=0 // loop_footer
    %s19 = sadd.s32 1, %s15
  $region7: #{ray_marcher.1} parent=0 // loop_footer_branch
    %14 = sbr.rel target = $region3
  $region8: #{ray_marcher.1} parent=0 // loop_exit
    _

</llo_original>
